<compile_context>
chip_gen: v6e
topology: v6e:2x2x1
jax: 0.10.0
libtpu: 0.0.40
codegen_flags: <defaults>
</compile_context>

<pallas_src>
import functools

import jax
import jax.numpy as jnp
from jax.experimental import pallas as pl
from jax.experimental.pallas import tpu as pltpu


def _round_up(x, m):
    return ((x + m - 1) // m) * m


def _pick_tm(M, tm_max=256):
    """Row-tile: multiple of 8, <= tm_max, and >=2 grid steps when cheap (v7x)."""
    tm = min(tm_max, _round_up(M, 8))
    if M > 8 and _round_up(M, tm) // tm < 2:
        tm = _round_up(_round_up(M, 16) // 2, 8)
    return tm


# ----------------------------------------------------------------------------
# Kernel 1: matmul + folded-BN affine + activation (single-K fast path).
# Input cast to bf16 in-kernel, f32 accumulate/epilogue, bf16 lane-dense output.
# ----------------------------------------------------------------------------
def _matmul_act_kernel(x_ref, w_ref, s_ref, b_ref, o_ref, *, act):
    x = x_ref[...].astype(jnp.bfloat16)
    y = jnp.dot(x, w_ref[...], preferred_element_type=jnp.float32)
    y = y * s_ref[...] + b_ref[...]
    if act == "relu":
        y = jnp.maximum(y, 0.0)
    elif act == "relu6":
        y = jnp.clip(y, 0.0, 6.0)
    elif act == "sigmoid":
        y = jax.nn.sigmoid(y)
    o_ref[...] = y.astype(o_ref.dtype)


def matmul_act(x, w, scale, bias, act="none", out_dtype=jnp.bfloat16, tm_max=256):
    """y = act(x @ w * scale + bias); x:(M,K) any float dtype, w:(K,N) f32."""
    M, K = x.shape
    _, N = w.shape
    N_pad = _round_up(N, 128)                 # lane-dense output stores
    tm = _pick_tm(M, tm_max)
    M_pad = _round_up(M, tm)

    x_p = jnp.pad(x, ((0, M_pad - M), (0, 0)))                       # cast in kernel
    w_p = jnp.pad(w, ((0, 0), (0, N_pad - N))).astype(jnp.bfloat16)
    s_p = jnp.pad(scale, (0, N_pad - N)).reshape(1, -1).astype(jnp.float32)
    b_p = jnp.pad(bias, (0, N_pad - N)).reshape(1, -1).astype(jnp.float32)

    out = pl.pallas_call(
        functools.partial(_matmul_act_kernel, act=act),
        out_shape=jax.ShapeDtypeStruct((M_pad, N_pad), out_dtype),
        grid=(M_pad // tm,),
        in_specs=[
            pl.BlockSpec((tm, K), lambda i: (i, 0)),
            pl.BlockSpec((K, N_pad), lambda i: (0, 0)),
            pl.BlockSpec((1, N_pad), lambda i: (0, 0)),
            pl.BlockSpec((1, N_pad), lambda i: (0, 0)),
        ],
        out_specs=pl.BlockSpec((tm, N_pad), lambda i: (i, 0)),
        compiler_params=pltpu.CompilerParams(dimension_semantics=("parallel",)),
    )(x_p, w_p, s_p, b_p)
    return out[:M, :N]


# ----------------------------------------------------------------------------
# Kernel 2: fused grouped 5x5 conv (block-diagonal densified weight) + BN +
#           ReLU6 + 1x1 project + BN + ReLU6.  One grid axis (M tiles),
#           lane-dense output, hidden activation never leaves VMEM.
# ----------------------------------------------------------------------------
def _grouped_project_kernel(p_ref, w2_ref, s2_ref, b2_ref,
                            w3_ref, s3_ref, b3_ref, o_ref):
    p = p_ref[...].astype(jnp.bfloat16)
    h = jnp.dot(p, w2_ref[...], preferred_element_type=jnp.float32)
    h = jnp.clip(h * s2_ref[...] + b2_ref[...], 0.0, 6.0)
    y = jnp.dot(h.astype(jnp.bfloat16), w3_ref[...],
                preferred_element_type=jnp.float32)
    y = jnp.clip(y * s3_ref[...] + b3_ref[...], 0.0, 6.0)
    o_ref[...] = y.astype(o_ref.dtype)


def grouped_conv_project(patches, w_g, s2, b2, w3, s3, b3, groups,
                         out_dtype=jnp.bfloat16, tm_max=256):
    """patches: (M, groups*Kg) (group columns contiguous, channel-major then
    kernel offset); w_g: (hid, cpg, 5, 5); w3: (hid, cout)."""
    M, Ktot = patches.shape
    hid, cpg, k, _ = w_g.shape
    Kg = cpg * k * k
    opg = hid // groups
    cout = w3.shape[1]
    hid_pad = _round_up(hid, 128)
    cout_pad = _round_up(cout, 128)

    # Block-diagonal densification of the grouped-conv weight -> (groups*Kg, hid).
    wg = w_g.reshape(groups, opg, Kg).astype(jnp.float32)
    eye = jnp.eye(groups, dtype=jnp.float32)
    w2bd = jnp.einsum("gok,gh->gkho", wg, eye).reshape(groups * Kg, hid)
    w2bd = jnp.pad(w2bd, ((0, 0), (0, hid_pad - hid))).astype(jnp.bfloat16)

    w3_p = jnp.pad(w3, ((0, hid_pad - hid), (0, cout_pad - cout))).astype(jnp.bfloat16)
    s2_p = jnp.pad(s2, (0, hid_pad - hid)).reshape(1, -1).astype(jnp.float32)
    b2_p = jnp.pad(b2, (0, hid_pad - hid)).reshape(1, -1).astype(jnp.float32)
    s3_p = jnp.pad(s3, (0, cout_pad - cout)).reshape(1, -1).astype(jnp.float32)
    b3_p = jnp.pad(b3, (0, cout_pad - cout)).reshape(1, -1).astype(jnp.float32)

    tm = _pick_tm(M, tm_max)
    M_pad = _round_up(M, tm)
    p_p = jnp.pad(patches, ((0, M_pad - M), (0, 0)))

    out = pl.pallas_call(
        _grouped_project_kernel,
        out_shape=jax.ShapeDtypeStruct((M_pad, cout_pad), out_dtype),
        grid=(M_pad // tm,),
        in_specs=[
            pl.BlockSpec((tm, Ktot), lambda i: (i, 0)),
            pl.BlockSpec((Ktot, hid_pad), lambda i: (0, 0)),
            pl.BlockSpec((1, hid_pad), lambda i: (0, 0)),
            pl.BlockSpec((1, hid_pad), lambda i: (0, 0)),
            pl.BlockSpec((hid_pad, cout_pad), lambda i: (0, 0)),
            pl.BlockSpec((1, cout_pad), lambda i: (0, 0)),
            pl.BlockSpec((1, cout_pad), lambda i: (0, 0)),
        ],
        out_specs=pl.BlockSpec((tm, cout_pad), lambda i: (i, 0)),
        compiler_params=pltpu.CompilerParams(dimension_semantics=("parallel",)),
    )(p_p, w2bd, s2_p, b2_p, w3_p, s3_p, b3_p)
    return out[:M, :cout]


# ----------------------------------------------------------------------------
# Kernel 3: fused decoder MLP with split first layer.
#   layer1 = relu(xy@W1a (per-pixel, precomputed) + (z@W1b + b1) (per-sample))
#   then Linear->ReLU, Linear->ReLU, Linear->Sigmoid, all weights VMEM-resident.
# ----------------------------------------------------------------------------
def _decoder_kernel(xyw_ref, zw_ref, w2_ref, b2_ref, w3_ref, b3_ref,
                    w4_ref, b4_ref, o_ref):
    h = jnp.maximum(xyw_ref[...] + zw_ref[0], 0.0)                       # (tm, d1)
    h = jnp.maximum(jnp.dot(h.astype(jnp.bfloat16), w2_ref[...],
                            preferred_element_type=jnp.float32) + b2_ref[...], 0.0)
    h = jnp.maximum(jnp.dot(h.astype(jnp.bfloat16), w3_ref[...],
                            preferred_element_type=jnp.float32) + b3_ref[...], 0.0)
    y = jax.nn.sigmoid(jnp.dot(h.astype(jnp.bfloat16), w4_ref[...],
                               preferred_element_type=jnp.float32) + b4_ref[...])
    o_ref[...] = y[jnp.newaxis].astype(o_ref.dtype)


def decoder_forward(z, dec_layers, H, W, tm_max=256):
    (w1, b1), (w2, b2), (w3, b3), (w4, b4) = dec_layers
    B, _ = z.shape
    HW = H * W
    d1 = w1.shape[1]
    n4 = w4.shape[1]
    n4_pad = _round_up(n4, 128)

    # split first Linear: per-pixel xy part (constant over batch) + per-sample z part
    xs = jnp.tile(jnp.linspace(0.0, 1.0, W), (H,))
    ys = jnp.repeat(jnp.linspace(0.0, 1.0, H), W)
    xy = jnp.stack([xs, ys], axis=1)                                    # (HW, 2)
    xyw = (xy @ w1[:2]).astype(jnp.float32)                             # (HW, d1)
    zw = (z @ w1[2:] + b1).astype(jnp.float32).reshape(B, 1, d1)        # (B, 1, d1)

    tm = min(tm_max, _round_up(HW, 8))
    HW_pad = _round_up(HW, tm)
    xyw_p = jnp.pad(xyw, ((0, HW_pad - HW), (0, 0)))
    w4p = jnp.pad(w4, ((0, 0), (0, n4_pad - n4))).astype(jnp.bfloat16)
    b4p = jnp.pad(b4, (0, n4_pad - n4)).reshape(1, -1).astype(jnp.float32)
    w2b = w2.astype(jnp.bfloat16)
    w3b = w3.astype(jnp.bfloat16)
    b2r = b2.reshape(1, -1).astype(jnp.float32)
    b3r = b3.reshape(1, -1).astype(jnp.float32)

    out = pl.pallas_call(
        _decoder_kernel,
        out_shape=jax.ShapeDtypeStruct((B, HW_pad, n4_pad), jnp.float32),
        grid=(B, HW_pad // tm),
        in_specs=[
            pl.BlockSpec((tm, d1), lambda b, i: (i, 0)),
            pl.BlockSpec((1, 1, d1), lambda b, i: (b, 0, 0)),
            pl.BlockSpec(w2b.shape, lambda b, i: (0, 0)),
            pl.BlockSpec(b2r.shape, lambda b, i: (0, 0)),
            pl.BlockSpec(w3b.shape, lambda b, i: (0, 0)),
            pl.BlockSpec(b3r.shape, lambda b, i: (0, 0)),
            pl.BlockSpec(w4p.shape, lambda b, i: (0, 0)),
            pl.BlockSpec(b4p.shape, lambda b, i: (0, 0)),
        ],
        out_specs=pl.BlockSpec((1, tm, n4_pad), lambda b, i: (b, i, 0)),
        compiler_params=pltpu.CompilerParams(
            dimension_semantics=("parallel", "parallel")),
    )(xyw_p, zw, w2b, b2r, w3b, b3r, w4p, b4p)

    img = out[:, :HW, :n4]                                              # (B, HW, n_ch)
    return img.transpose(0, 2, 1).reshape(B, n4, H, W)


# ----------------------------------------------------------------------------
# Plain-JAX glue: BN folding, NHWC im2col, small-M fallbacks
# ----------------------------------------------------------------------------
def bn_fold(gamma, beta, mean, var, eps=1e-5):
    scale = gamma / jnp.sqrt(var + eps)
    bias = beta - mean * scale
    return scale, bias


def _im2col_nhwc(x, k, stride, pad):
    """x: (B, H, W, C) -> patches (B*OH*OW, C*k*k), columns channel-major then
    kernel offset (matches PyTorch grouped weight (C_out, cpg, k, k) flattening)."""
    # TODO(synk): patch gather still materialized in XLA glue; an in-kernel DMA
    # gather would avoid the k*k duplication of the activation in HBM.
    B, H, W, C = x.shape
    xp = jnp.pad(x, ((0, 0), (pad, pad), (pad, pad), (0, 0)))
    OH = (H + 2 * pad - k) // stride + 1
    OW = (W + 2 * pad - k) // stride + 1
    cols = []
    for i in range(k):
        for j in range(k):
            cols.append(xp[:, i:i + stride * OH:stride, j:j + stride * OW:stride, :])
    patches = jnp.stack(cols, axis=-1)               # (B, OH, OW, C, k*k)
    return patches.reshape(B * OH * OW, C * k * k), OH, OW


def encoder_block(h, B, H, W, blk, min_pallas_m=64):
    """One InvertedResidual block (eval-mode BN) on a flat (B*H*W, C_in) input.
    Returns (flat (B*OH*OW, C_out), OH, OW)."""
    s1, b1 = bn_fold(*blk["bn1"])
    s2, b2 = bn_fold(*blk["bn2"])
    s3, b3 = bn_fold(*blk["bn3"])
    w1, w2, w3 = blk["w1"], blk["w2"], blk["w3"]
    cin, hid = w1.shape
    groups = cin
    M_in = B * H * W

    # 1x1 expand + BN + ReLU6
    if M_in >= min_pallas_m:
        x = matmul_act(h, w1, s1, b1, act="relu6")                 # bf16 (M_in, hid)
    else:
        x = jnp.clip(h.astype(jnp.float32) @ w1 * s1 + b1, 0.0, 6.0)

    # 5x5 / stride-2 / pad-2 grouped conv -> BN -> ReLU6 -> 1x1 project -> BN -> ReLU6
    patches, OH, OW = _im2col_nhwc(x.reshape(B, H, W, hid), 5, 2, 2)
    M_out = B * OH * OW
    if M_out >= min_pallas_m:
        out = grouped_conv_project(patches, w2, s2, b2, w3, s3, b3, groups)
    else:
        opg = hid // groups
        Kg = w2.shape[1] * 25
        pg = patches.astype(jnp.float32).reshape(M_out, groups, Kg)
        wg = w2.reshape(groups, opg, Kg)
        y = jnp.einsum("mgk,gok->mgo", pg, wg).reshape(M_out, hid)
        y = jnp.clip(y * s2 + b2, 0.0, 6.0)
        out = jnp.clip(y @ w3 * s3 + b3, 0.0, 6.0)
    return out, OH, OW


# ----------------------------------------------------------------------------
# Parameter init (deterministic, synthetic; mirrors the PyTorch module shapes)
# ----------------------------------------------------------------------------
def _bn_default(n):
    # fresh PyTorch BatchNorm2d state: gamma=1, beta=0, running_mean=0, running_var=1
    return (jnp.ones(n, jnp.float32), jnp.zeros(n, jnp.float32),
            jnp.zeros(n, jnp.float32), jnp.ones(n, jnp.float32))


def init_vae_params(key, z_dim, image_size, n_channel):
    channels = [n_channel, 8, 16, 32, 64, 128]
    keys = iter(jax.random.split(key, 64))

    def nrm(shape, fan_in):
        return jax.random.normal(next(keys), shape, jnp.float32) / jnp.sqrt(float(fan_in))

    enc_blocks = []
    for i in range(len(channels) - 1):
        cin, cout = channels[i], channels[i + 1]
        hid = cin * 6
        enc_blocks.append(dict(
            w1=nrm((cin, hid), cin),                               # 1x1 expand
            bn1=_bn_default(hid),
            w2=nrm((hid, hid // cin, 5, 5), (hid // cin) * 25),    # grouped 5x5 s2
            bn2=_bn_default(hid),
            w3=nrm((hid, cout), hid),                              # 1x1 project
            bn3=_bn_default(cout),
        ))

    feature_size = image_size // 2 ** (len(channels) - 1)
    feature_dim = channels[-1] * feature_size ** 2
    w_mean = nrm((feature_dim, z_dim), feature_dim)
    b_mean = jnp.zeros((z_dim,), jnp.float32)
    w_var = nrm((feature_dim, z_dim), feature_dim)
    b_var = jnp.zeros((z_dim,), jnp.float32)

    dec_units = [2 + z_dim, 128, 256, 128, n_channel]
    dec_layers = []
    for i in range(len(dec_units) - 1):
        w = nrm((dec_units[i], dec_units[i + 1]), dec_units[i])
        b = jax.random.normal(next(keys), (dec_units[i + 1],), jnp.float32) * 0.01
        dec_layers.append((w, b))

    return dict(enc_blocks=enc_blocks, w_mean=w_mean, b_mean=b_mean,
                w_var=w_var, b_var=b_var, dec_layers=dec_layers)


# ----------------------------------------------------------------------------
# VAE forward (encoder -> sample z -> coordinate-MLP decoder)
# ----------------------------------------------------------------------------
@functools.partial(jax.jit, static_argnames=("image_size",))
def vae_forward(params, x, z_key, image_size):
    # TODO(synk): nn.Dropout(0.01) and train-mode BatchNorm (batch statistics) are
    # stochastic / batch-dependent; implemented with eval-mode semantics
    # (identity dropout, folded running-stat BN).
    B, C, H, W = x.shape
    h = x.transpose(0, 2, 3, 1).reshape(B * H * W, C)       # NCHW -> flat NHWC once
    curH, curW = H, W
    for blk in params["enc_blocks"]:
        h, curH, curW = encoder_block(h, B, curH, curW, blk)

    C_last = params["enc_blocks"][-1]["w3"].shape[1]
    # nn.Flatten() is on NCHW -> channel-major flatten
    feat = (h.astype(jnp.float32)
            .reshape(B, curH, curW, C_last).transpose(0, 3, 1, 2).reshape(B, -1))

    # mean / var heads: M = B rows -> plain XLA (launch overhead > compute)
    mean = feat @ params["w_mean"] + params["b_mean"]
    std = jnp.maximum(feat @ params["w_var"] + params["b_var"], 0.0)

    eps = jax.random.normal(z_key, mean.shape, jnp.float32)
    z = mean + std * eps

    img = decoder_forward(z, params["dec_layers"], image_size, image_size)
    return img, mean, std


# ----------------------------------------------------------------------------
if __name__ == "__main__":
    key = jax.random.PRNGKey(0)
    pkey, xkey, zkey = jax.random.split(key, 3)

    z_dim, image_size, n_channel, batch = 2, 32, 3, 2
    params = init_vae_params(pkey, z_dim, image_size, n_channel)
    x = jax.random.normal(xkey, (batch, n_channel, image_size, image_size), jnp.float32)

    y, mean, std = vae_forward(params, x, zkey, image_size=image_size)
    (y, mean, std) = jax.block_until_ready((y, mean, std))

    assert y.shape == (batch, n_channel, image_size, image_size)
    assert mean.shape == (batch, z_dim)
    assert std.shape == (batch, z_dim)
    assert bool(jnp.all(jnp.isfinite(y)))
    assert bool(jnp.all(jnp.isfinite(mean)))
    assert bool(jnp.all(jnp.isfinite(std)))
    assert bool(jnp.all((y >= 0.0) & (y <= 1.0)))     # sigmoid output
    assert bool(jnp.all(std >= 0.0))                  # relu output
    print("KERNEL_OK")
</pallas_src>

<mosaic_0001>
module attributes {stable_mosaic.version = 11 : i64} {
  func.func @_matmul_act_kernel(%arg0: i32, %arg1: memref<256x3xf32, #tpu.memory_space<vmem>>, %arg2: memref<3x128xbf16, #tpu.memory_space<vmem>>, %arg3: memref<1x128xf32, #tpu.memory_space<vmem>>, %arg4: memref<1x128xf32, #tpu.memory_space<vmem>>, %arg5: memref<256x128xbf16, #tpu.memory_space<vmem>>) attributes {dimension_semantics = [#tpu.dimension_semantics<parallel>], iteration_bounds = array<i64: 8>, scalar_prefetch = 0 : i64, scratch_operands = 0 : i64, tpu.core_type = #tpu.core_type<tc>, window_params = [{transform_indices = @transform_0, window_bounds = array<i64: 256, 3>}, {pipeline_mode = #tpu.pipeline_mode<synchronous>, transform_indices = @transform_1, window_bounds = array<i64: 3, 128>}, {pipeline_mode = #tpu.pipeline_mode<synchronous>, transform_indices = @transform_2, window_bounds = array<i64: 1, 128>}, {pipeline_mode = #tpu.pipeline_mode<synchronous>, transform_indices = @transform_3, window_bounds = array<i64: 1, 128>}, {transform_indices = @transform_4, window_bounds = array<i64: 256, 128>}]} {
    %c0 = arith.constant 0 : index
    %c0_0 = arith.constant 0 : index
    %0 = vector.load %arg1[%c0, %c0_0] : memref<256x3xf32, #tpu.memory_space<vmem>>, vector<256x3xf32>
    %1 = arith.truncf %0 : vector<256x3xf32> to vector<256x3xbf16>
    %c0_1 = arith.constant 0 : index
    %c0_2 = arith.constant 0 : index
    %2 = vector.load %arg2[%c0_1, %c0_2] : memref<3x128xbf16, #tpu.memory_space<vmem>>, vector<3x128xbf16>
    %cst = arith.constant dense<0.000000e+00> : vector<256x128xf32>
    %3 = tpu.matmul %1, %2, %cst {dimension_numbers = #tpu.dot_dimension_numbers<[1], [0], [0], [1], [0, 0, 1, 1], [], []>} : vector<256x3xbf16>, vector<3x128xbf16>, vector<256x128xf32> -> vector<256x128xf32>
    %c0_3 = arith.constant 0 : index
    %c0_4 = arith.constant 0 : index
    %4 = vector.load %arg3[%c0_3, %c0_4] : memref<1x128xf32, #tpu.memory_space<vmem>>, vector<1x128xf32>
    %5 = vector.broadcast %4 : vector<1x128xf32> to vector<256x128xf32>
    %6 = arith.mulf %3, %5 : vector<256x128xf32>
    %c0_5 = arith.constant 0 : index
    %c0_6 = arith.constant 0 : index
    %7 = vector.load %arg4[%c0_5, %c0_6] : memref<1x128xf32, #tpu.memory_space<vmem>>, vector<1x128xf32>
    %8 = vector.broadcast %7 : vector<1x128xf32> to vector<256x128xf32>
    %9 = arith.addf %6, %8 : vector<256x128xf32>
    %cst_7 = arith.constant 0.000000e+00 : f32
    %cst_8 = arith.constant 6.000000e+00 : f32
    %10 = vector.broadcast %cst_7 : f32 to vector<256x128xf32>
    %11 = arith.maximumf %10, %9 : vector<256x128xf32>
    %12 = vector.broadcast %cst_8 : f32 to vector<256x128xf32>
    %13 = arith.minimumf %12, %11 : vector<256x128xf32>
    %14 = arith.truncf %13 : vector<256x128xf32> to vector<256x128xbf16>
    %c0_9 = arith.constant 0 : index
    %c0_10 = arith.constant 0 : index
    %15 = vector.load %arg5[%c0_9, %c0_10] : memref<256x128xbf16, #tpu.memory_space<vmem>>, vector<256x128xbf16>
    tpu.vector_store %arg5[%c0_9, %c0_10], %14 {strides = array<i32>} : memref<256x128xbf16, #tpu.memory_space<vmem>>, vector<256x128xbf16>,
    return
  }
  func.func @transform_0(%arg0: i32) -> (i32, i32) {
    %c0_i32 = arith.constant 0 : i32
    %c0_i32_0 = arith.constant 0 : i32
    return %arg0, %c0_i32 : i32, i32
  }
  func.func @transform_1(%arg0: i32) -> (i32, i32) {
    %c0_i32 = arith.constant 0 : i32
    %c0_i32_0 = arith.constant 0 : i32
    %c0_i32_1 = arith.constant 0 : i32
    return %c0_i32, %c0_i32_0 : i32, i32
  }
  func.func @transform_2(%arg0: i32) -> (i32, i32) {
    %c0_i32 = arith.constant 0 : i32
    %c0_i32_0 = arith.constant 0 : i32
    %c0_i32_1 = arith.constant 0 : i32
    return %c0_i32, %c0_i32_0 : i32, i32
  }
  func.func @transform_3(%arg0: i32) -> (i32, i32) {
    %c0_i32 = arith.constant 0 : i32
    %c0_i32_0 = arith.constant 0 : i32
    %c0_i32_1 = arith.constant 0 : i32
    return %c0_i32, %c0_i32_0 : i32, i32
  }
  func.func @transform_4(%arg0: i32) -> (i32, i32) {
    %c0_i32 = arith.constant 0 : i32
    %c0_i32_0 = arith.constant 0 : i32
    return %arg0, %c0_i32 : i32, i32
  }
}

module attributes {stable_mosaic.version = 11 : i64} {
  func.func @_grouped_project_kernel(%arg0: i32, %arg1: memref<256x450xbf16, #tpu.memory_space<vmem>>, %arg2: memref<450x128xbf16, #tpu.memory_space<vmem>>, %arg3: memref<1x128xf32, #tpu.memory_space<vmem>>, %arg4: memref<1x128xf32, #tpu.memory_space<vmem>>, %arg5: memref<128x128xbf16, #tpu.memory_space<vmem>>, %arg6: memref<1x128xf32, #tpu.memory_space<vmem>>, %arg7: memref<1x128xf32, #tpu.memory_space<vmem>>, %arg8: memref<256x128xbf16, #tpu.memory_space<vmem>>) attributes {dimension_semantics = [#tpu.dimension_semantics<parallel>], iteration_bounds = array<i64: 2>, scalar_prefetch = 0 : i64, scratch_operands = 0 : i64, tpu.core_type = #tpu.core_type<tc>, window_params = [{transform_indices = @transform_0, window_bounds = array<i64: 256, 450>}, {pipeline_mode = #tpu.pipeline_mode<synchronous>, transform_indices = @transform_1, window_bounds = array<i64: 450, 128>}, {pipeline_mode = #tpu.pipeline_mode<synchronous>, transform_indices = @transform_2, window_bounds = array<i64: 1, 128>}, {pipeline_mode = #tpu.pipeline_mode<synchronous>, transform_indices = @transform_3, window_bounds = array<i64: 1, 128>}, {pipeline_mode = #tpu.pipeline_mode<synchronous>, transform_indices = @transform_4, window_bounds = array<i64: 128, 128>}, {pipeline_mode = #tpu.pipeline_mode<synchronous>, transform_indices = @transform_5, window_bounds = array<i64: 1, 128>}, {pipeline_mode = #tpu.pipeline_mode<synchronous>, transform_indices = @transform_6, window_bounds = array<i64: 1, 128>}, {transform_indices = @transform_7, window_bounds = array<i64: 256, 128>}]} {
    %c0 = arith.constant 0 : index
    %c0_0 = arith.constant 0 : index
    %0 = vector.load %arg1[%c0, %c0_0] : memref<256x450xbf16, #tpu.memory_space<vmem>>, vector<256x450xbf16>
    %c0_1 = arith.constant 0 : index
    %c0_2 = arith.constant 0 : index
    %1 = vector.load %arg2[%c0_1, %c0_2] : memref<450x128xbf16, #tpu.memory_space<vmem>>, vector<450x128xbf16>
    %cst = arith.constant dense<0.000000e+00> : vector<256x128xf32>
    %2 = tpu.matmul %0, %1, %cst {dimension_numbers = #tpu.dot_dimension_numbers<[1], [0], [0], [1], [0, 0, 1, 1], [], []>} : vector<256x450xbf16>, vector<450x128xbf16>, vector<256x128xf32> -> vector<256x128xf32>
    %c0_3 = arith.constant 0 : index
    %c0_4 = arith.constant 0 : index
    %3 = vector.load %arg3[%c0_3, %c0_4] : memref<1x128xf32, #tpu.memory_space<vmem>>, vector<1x128xf32>
    %4 = vector.broadcast %3 : vector<1x128xf32> to vector<256x128xf32>
    %5 = arith.mulf %2, %4 : vector<256x128xf32>
    %c0_5 = arith.constant 0 : index
    %c0_6 = arith.constant 0 : index
    %6 = vector.load %arg4[%c0_5, %c0_6] : memref<1x128xf32, #tpu.memory_space<vmem>>, vector<1x128xf32>
    %7 = vector.broadcast %6 : vector<1x128xf32> to vector<256x128xf32>
    %8 = arith.addf %5, %7 : vector<256x128xf32>
    %cst_7 = arith.constant 0.000000e+00 : f32
    %cst_8 = arith.constant 6.000000e+00 : f32
    %9 = vector.broadcast %cst_7 : f32 to vector<256x128xf32>
    %10 = arith.maximumf %9, %8 : vector<256x128xf32>
    %11 = vector.broadcast %cst_8 : f32 to vector<256x128xf32>
    %12 = arith.minimumf %11, %10 : vector<256x128xf32>
    %13 = arith.truncf %12 : vector<256x128xf32> to vector<256x128xbf16>
    %c0_9 = arith.constant 0 : index
    %c0_10 = arith.constant 0 : index
    %14 = vector.load %arg5[%c0_9, %c0_10] : memref<128x128xbf16, #tpu.memory_space<vmem>>, vector<128x128xbf16>
    %cst_11 = arith.constant dense<0.000000e+00> : vector<256x128xf32>
    %15 = tpu.matmul %13, %14, %cst_11 {dimension_numbers = #tpu.dot_dimension_numbers<[1], [0], [0], [1], [0, 0, 1, 1], [], []>} : vector<256x128xbf16>, vector<128x128xbf16>, vector<256x128xf32> -> vector<256x128xf32>
    %c0_12 = arith.constant 0 : index
    %c0_13 = arith.constant 0 : index
    %16 = vector.load %arg6[%c0_12, %c0_13] : memref<1x128xf32, #tpu.memory_space<vmem>>, vector<1x128xf32>
    %17 = vector.broadcast %16 : vector<1x128xf32> to vector<256x128xf32>
    %18 = arith.mulf %15, %17 : vector<256x128xf32>
    %c0_14 = arith.constant 0 : index
    %c0_15 = arith.constant 0 : index
    %19 = vector.load %arg7[%c0_14, %c0_15] : memref<1x128xf32, #tpu.memory_space<vmem>>, vector<1x128xf32>
    %20 = vector.broadcast %19 : vector<1x128xf32> to vector<256x128xf32>
    %21 = arith.addf %18, %20 : vector<256x128xf32>
    %cst_16 = arith.constant 0.000000e+00 : f32
    %cst_17 = arith.constant 6.000000e+00 : f32
    %22 = vector.broadcast %cst_16 : f32 to vector<256x128xf32>
    %23 = arith.maximumf %22, %21 : vector<256x128xf32>
    %24 = vector.broadcast %cst_17 : f32 to vector<256x128xf32>
    %25 = arith.minimumf %24, %23 : vector<256x128xf32>
    %26 = arith.truncf %25 : vector<256x128xf32> to vector<256x128xbf16>
    %c0_18 = arith.constant 0 : index
    %c0_19 = arith.constant 0 : index
    %27 = vector.load %arg8[%c0_18, %c0_19] : memref<256x128xbf16, #tpu.memory_space<vmem>>, vector<256x128xbf16>
    tpu.vector_store %arg8[%c0_18, %c0_19], %26 {strides = array<i32>} : memref<256x128xbf16, #tpu.memory_space<vmem>>, vector<256x128xbf16>,
    return
  }
  func.func @transform_0(%arg0: i32) -> (i32, i32) {
    %c0_i32 = arith.constant 0 : i32
    %c0_i32_0 = arith.constant 0 : i32
    return %arg0, %c0_i32 : i32, i32
  }
  func.func @transform_1(%arg0: i32) -> (i32, i32) {
    %c0_i32 = arith.constant 0 : i32
    %c0_i32_0 = arith.constant 0 : i32
    %c0_i32_1 = arith.constant 0 : i32
    return %c0_i32, %c0_i32_0 : i32, i32
  }
  func.func @transform_2(%arg0: i32) -> (i32, i32) {
    %c0_i32 = arith.constant 0 : i32
    %c0_i32_0 = arith.constant 0 : i32
    %c0_i32_1 = arith.constant 0 : i32
    return %c0_i32, %c0_i32_0 : i32, i32
  }
  func.func @transform_3(%arg0: i32) -> (i32, i32) {
    %c0_i32 = arith.constant 0 : i32
    %c0_i32_0 = arith.constant 0 : i32
    %c0_i32_1 = arith.constant 0 : i32
    return %c0_i32, %c0_i32_0 : i32, i32
  }
  func.func @transform_4(%arg0: i32) -> (i32, i32) {
    %c0_i32 = arith.constant 0 : i32
    %c0_i32_0 = arith.constant 0 : i32
    %c0_i32_1 = arith.constant 0 : i32
    return %c0_i32, %c0_i32_0 : i32, i32
  }
  func.func @transform_5(%arg0: i32) -> (i32, i32) {
    %c0_i32 = arith.constant 0 : i32
    %c0_i32_0 = arith.constant 0 : i32
    %c0_i32_1 = arith.constant 0 : i32
    return %c0_i32, %c0_i32_0 : i32, i32
  }
  func.func @transform_6(%arg0: i32) -> (i32, i32) {
    %c0_i32 = arith.constant 0 : i32
    %c0_i32_0 = arith.constant 0 : i32
    %c0_i32_1 = arith.constant 0 : i32
    return %c0_i32, %c0_i32_0 : i32, i32
  }
  func.func @transform_7(%arg0: i32) -> (i32, i32) {
    %c0_i32 = arith.constant 0 : i32
    %c0_i32_0 = arith.constant 0 : i32
    return %arg0, %c0_i32 : i32, i32
  }
}

module attributes {stable_mosaic.version = 11 : i64} {
  func.func @_matmul_act_kernel(%arg0: i32, %arg1: memref<256x8xbf16, #tpu.memory_space<vmem>>, %arg2: memref<8x128xbf16, #tpu.memory_space<vmem>>, %arg3: memref<1x128xf32, #tpu.memory_space<vmem>>, %arg4: memref<1x128xf32, #tpu.memory_space<vmem>>, %arg5: memref<256x128xbf16, #tpu.memory_space<vmem>>) attributes {dimension_semantics = [#tpu.dimension_semantics<parallel>], iteration_bounds = array<i64: 2>, scalar_prefetch = 0 : i64, scratch_operands = 0 : i64, tpu.core_type = #tpu.core_type<tc>, window_params = [{transform_indices = @transform_0, window_bounds = array<i64: 256, 8>}, {pipeline_mode = #tpu.pipeline_mode<synchronous>, transform_indices = @transform_1, window_bounds = array<i64: 8, 128>}, {pipeline_mode = #tpu.pipeline_mode<synchronous>, transform_indices = @transform_2, window_bounds = array<i64: 1, 128>}, {pipeline_mode = #tpu.pipeline_mode<synchronous>, transform_indices = @transform_3, window_bounds = array<i64: 1, 128>}, {transform_indices = @transform_4, window_bounds = array<i64: 256, 128>}]} {
    %c0 = arith.constant 0 : index
    %c0_0 = arith.constant 0 : index
    %0 = vector.load %arg1[%c0, %c0_0] : memref<256x8xbf16, #tpu.memory_space<vmem>>, vector<256x8xbf16>
    %c0_1 = arith.constant 0 : index
    %c0_2 = arith.constant 0 : index
    %1 = vector.load %arg2[%c0_1, %c0_2] : memref<8x128xbf16, #tpu.memory_space<vmem>>, vector<8x128xbf16>
    %cst = arith.constant dense<0.000000e+00> : vector<256x128xf32>
    %2 = tpu.matmul %0, %1, %cst {dimension_numbers = #tpu.dot_dimension_numbers<[1], [0], [0], [1], [0, 0, 1, 1], [], []>} : vector<256x8xbf16>, vector<8x128xbf16>, vector<256x128xf32> -> vector<256x128xf32>
    %c0_3 = arith.constant 0 : index
    %c0_4 = arith.constant 0 : index
    %3 = vector.load %arg3[%c0_3, %c0_4] : memref<1x128xf32, #tpu.memory_space<vmem>>, vector<1x128xf32>
    %4 = vector.broadcast %3 : vector<1x128xf32> to vector<256x128xf32>
    %5 = arith.mulf %2, %4 : vector<256x128xf32>
    %c0_5 = arith.constant 0 : index
    %c0_6 = arith.constant 0 : index
    %6 = vector.load %arg4[%c0_5, %c0_6] : memref<1x128xf32, #tpu.memory_space<vmem>>, vector<1x128xf32>
    %7 = vector.broadcast %6 : vector<1x128xf32> to vector<256x128xf32>
    %8 = arith.addf %5, %7 : vector<256x128xf32>
    %cst_7 = arith.constant 0.000000e+00 : f32
    %cst_8 = arith.constant 6.000000e+00 : f32
    %9 = vector.broadcast %cst_7 : f32 to vector<256x128xf32>
    %10 = arith.maximumf %9, %8 : vector<256x128xf32>
    %11 = vector.broadcast %cst_8 : f32 to vector<256x128xf32>
    %12 = arith.minimumf %11, %10 : vector<256x128xf32>
    %13 = arith.truncf %12 : vector<256x128xf32> to vector<256x128xbf16>
    %c0_9 = arith.constant 0 : index
    %c0_10 = arith.constant 0 : index
    %14 = vector.load %arg5[%c0_9, %c0_10] : memref<256x128xbf16, #tpu.memory_space<vmem>>, vector<256x128xbf16>
    tpu.vector_store %arg5[%c0_9, %c0_10], %13 {strides = array<i32>} : memref<256x128xbf16, #tpu.memory_space<vmem>>, vector<256x128xbf16>,
    return
  }
  func.func @transform_0(%arg0: i32) -> (i32, i32) {
    %c0_i32 = arith.constant 0 : i32
    %c0_i32_0 = arith.constant 0 : i32
    return %arg0, %c0_i32 : i32, i32
  }
  func.func @transform_1(%arg0: i32) -> (i32, i32) {
    %c0_i32 = arith.constant 0 : i32
    %c0_i32_0 = arith.constant 0 : i32
    %c0_i32_1 = arith.constant 0 : i32
    return %c0_i32, %c0_i32_0 : i32, i32
  }
  func.func @transform_2(%arg0: i32) -> (i32, i32) {
    %c0_i32 = arith.constant 0 : i32
    %c0_i32_0 = arith.constant 0 : i32
    %c0_i32_1 = arith.constant 0 : i32
    return %c0_i32, %c0_i32_0 : i32, i32
  }
  func.func @transform_3(%arg0: i32) -> (i32, i32) {
    %c0_i32 = arith.constant 0 : i32
    %c0_i32_0 = arith.constant 0 : i32
    %c0_i32_1 = arith.constant 0 : i32
    return %c0_i32, %c0_i32_0 : i32, i32
  }
  func.func @transform_4(%arg0: i32) -> (i32, i32) {
    %c0_i32 = arith.constant 0 : i32
    %c0_i32_0 = arith.constant 0 : i32
    return %arg0, %c0_i32 : i32, i32
  }
}

module attributes {stable_mosaic.version = 11 : i64} {
  func.func @_grouped_project_kernel(%arg0: i32, %arg1: memref<64x1200xbf16, #tpu.memory_space<vmem>>, %arg2: memref<1200x128xbf16, #tpu.memory_space<vmem>>, %arg3: memref<1x128xf32, #tpu.memory_space<vmem>>, %arg4: memref<1x128xf32, #tpu.memory_space<vmem>>, %arg5: memref<128x128xbf16, #tpu.memory_space<vmem>>, %arg6: memref<1x128xf32, #tpu.memory_space<vmem>>, %arg7: memref<1x128xf32, #tpu.memory_space<vmem>>, %arg8: memref<64x128xbf16, #tpu.memory_space<vmem>>) attributes {dimension_semantics = [#tpu.dimension_semantics<parallel>], iteration_bounds = array<i64: 2>, scalar_prefetch = 0 : i64, scratch_operands = 0 : i64, tpu.core_type = #tpu.core_type<tc>, window_params = [{transform_indices = @transform_0, window_bounds = array<i64: 64, 1200>}, {pipeline_mode = #tpu.pipeline_mode<synchronous>, transform_indices = @transform_1, window_bounds = array<i64: 1200, 128>}, {pipeline_mode = #tpu.pipeline_mode<synchronous>, transform_indices = @transform_2, window_bounds = array<i64: 1, 128>}, {pipeline_mode = #tpu.pipeline_mode<synchronous>, transform_indices = @transform_3, window_bounds = array<i64: 1, 128>}, {pipeline_mode = #tpu.pipeline_mode<synchronous>, transform_indices = @transform_4, window_bounds = array<i64: 128, 128>}, {pipeline_mode = #tpu.pipeline_mode<synchronous>, transform_indices = @transform_5, window_bounds = array<i64: 1, 128>}, {pipeline_mode = #tpu.pipeline_mode<synchronous>, transform_indices = @transform_6, window_bounds = array<i64: 1, 128>}, {transform_indices = @transform_7, window_bounds = array<i64: 64, 128>}]} {
    %c0 = arith.constant 0 : index
    %c0_0 = arith.constant 0 : index
    %0 = vector.load %arg1[%c0, %c0_0] : memref<64x1200xbf16, #tpu.memory_space<vmem>>, vector<64x1200xbf16>
    %c0_1 = arith.constant 0 : index
    %c0_2 = arith.constant 0 : index
    %1 = vector.load %arg2[%c0_1, %c0_2] : memref<1200x128xbf16, #tpu.memory_space<vmem>>, vector<1200x128xbf16>
    %cst = arith.constant dense<0.000000e+00> : vector<64x128xf32>
    %2 = tpu.matmul %0, %1, %cst {dimension_numbers = #tpu.dot_dimension_numbers<[1], [0], [0], [1], [0, 0, 1, 1], [], []>} : vector<64x1200xbf16>, vector<1200x128xbf16>, vector<64x128xf32> -> vector<64x128xf32>
    %c0_3 = arith.constant 0 : index
    %c0_4 = arith.constant 0 : index
    %3 = vector.load %arg3[%c0_3, %c0_4] : memref<1x128xf32, #tpu.memory_space<vmem>>, vector<1x128xf32>
    %4 = vector.broadcast %3 : vector<1x128xf32> to vector<64x128xf32>
    %5 = arith.mulf %2, %4 : vector<64x128xf32>
    %c0_5 = arith.constant 0 : index
    %c0_6 = arith.constant 0 : index
    %6 = vector.load %arg4[%c0_5, %c0_6] : memref<1x128xf32, #tpu.memory_space<vmem>>, vector<1x128xf32>
    %7 = vector.broadcast %6 : vector<1x128xf32> to vector<64x128xf32>
    %8 = arith.addf %5, %7 : vector<64x128xf32>
    %cst_7 = arith.constant 0.000000e+00 : f32
    %cst_8 = arith.constant 6.000000e+00 : f32
    %9 = vector.broadcast %cst_7 : f32 to vector<64x128xf32>
    %10 = arith.maximumf %9, %8 : vector<64x128xf32>
    %11 = vector.broadcast %cst_8 : f32 to vector<64x128xf32>
    %12 = arith.minimumf %11, %10 : vector<64x128xf32>
    %13 = arith.truncf %12 : vector<64x128xf32> to vector<64x128xbf16>
    %c0_9 = arith.constant 0 : index
    %c0_10 = arith.constant 0 : index
    %14 = vector.load %arg5[%c0_9, %c0_10] : memref<128x128xbf16, #tpu.memory_space<vmem>>, vector<128x128xbf16>
    %cst_11 = arith.constant dense<0.000000e+00> : vector<64x128xf32>
    %15 = tpu.matmul %13, %14, %cst_11 {dimension_numbers = #tpu.dot_dimension_numbers<[1], [0], [0], [1], [0, 0, 1, 1], [], []>} : vector<64x128xbf16>, vector<128x128xbf16>, vector<64x128xf32> -> vector<64x128xf32>
    %c0_12 = arith.constant 0 : index
    %c0_13 = arith.constant 0 : index
    %16 = vector.load %arg6[%c0_12, %c0_13] : memref<1x128xf32, #tpu.memory_space<vmem>>, vector<1x128xf32>
    %17 = vector.broadcast %16 : vector<1x128xf32> to vector<64x128xf32>
    %18 = arith.mulf %15, %17 : vector<64x128xf32>
    %c0_14 = arith.constant 0 : index
    %c0_15 = arith.constant 0 : index
    %19 = vector.load %arg7[%c0_14, %c0_15] : memref<1x128xf32, #tpu.memory_space<vmem>>, vector<1x128xf32>
    %20 = vector.broadcast %19 : vector<1x128xf32> to vector<64x128xf32>
    %21 = arith.addf %18, %20 : vector<64x128xf32>
    %cst_16 = arith.constant 0.000000e+00 : f32
    %cst_17 = arith.constant 6.000000e+00 : f32
    %22 = vector.broadcast %cst_16 : f32 to vector<64x128xf32>
    %23 = arith.maximumf %22, %21 : vector<64x128xf32>
    %24 = vector.broadcast %cst_17 : f32 to vector<64x128xf32>
    %25 = arith.minimumf %24, %23 : vector<64x128xf32>
    %26 = arith.truncf %25 : vector<64x128xf32> to vector<64x128xbf16>
    %c0_18 = arith.constant 0 : index
    %c0_19 = arith.constant 0 : index
    %27 = vector.load %arg8[%c0_18, %c0_19] : memref<64x128xbf16, #tpu.memory_space<vmem>>, vector<64x128xbf16>
    tpu.vector_store %arg8[%c0_18, %c0_19], %26 {strides = array<i32>} : memref<64x128xbf16, #tpu.memory_space<vmem>>, vector<64x128xbf16>,
    return
  }
  func.func @transform_0(%arg0: i32) -> (i32, i32) {
    %c0_i32 = arith.constant 0 : i32
    %c0_i32_0 = arith.constant 0 : i32
    return %arg0, %c0_i32 : i32, i32
  }
  func.func @transform_1(%arg0: i32) -> (i32, i32) {
    %c0_i32 = arith.constant 0 : i32
    %c0_i32_0 = arith.constant 0 : i32
    %c0_i32_1 = arith.constant 0 : i32
    return %c0_i32, %c0_i32_0 : i32, i32
  }
  func.func @transform_2(%arg0: i32) -> (i32, i32) {
    %c0_i32 = arith.constant 0 : i32
    %c0_i32_0 = arith.constant 0 : i32
    %c0_i32_1 = arith.constant 0 : i32
    return %c0_i32, %c0_i32_0 : i32, i32
  }
  func.func @transform_3(%arg0: i32) -> (i32, i32) {
    %c0_i32 = arith.constant 0 : i32
    %c0_i32_0 = arith.constant 0 : i32
    %c0_i32_1 = arith.constant 0 : i32
    return %c0_i32, %c0_i32_0 : i32, i32
  }
  func.func @transform_4(%arg0: i32) -> (i32, i32) {
    %c0_i32 = arith.constant 0 : i32
    %c0_i32_0 = arith.constant 0 : i32
    %c0_i32_1 = arith.constant 0 : i32
    return %c0_i32, %c0_i32_0 : i32, i32
  }
  func.func @transform_5(%arg0: i32) -> (i32, i32) {
    %c0_i32 = arith.constant 0 : i32
    %c0_i32_0 = arith.constant 0 : i32
    %c0_i32_1 = arith.constant 0 : i32
    return %c0_i32, %c0_i32_0 : i32, i32
  }
  func.func @transform_6(%arg0: i32) -> (i32, i32) {
    %c0_i32 = arith.constant 0 : i32
    %c0_i32_0 = arith.constant 0 : i32
    %c0_i32_1 = arith.constant 0 : i32
    return %c0_i32, %c0_i32_0 : i32, i32
  }
  func.func @transform_7(%arg0: i32) -> (i32, i32) {
    %c0_i32 = arith.constant 0 : i32
    %c0_i32_0 = arith.constant 0 : i32
    return %arg0, %c0_i32 : i32, i32
  }
}

module attributes {stable_mosaic.version = 11 : i64} {
  func.func @_matmul_act_kernel(%arg0: i32, %arg1: memref<64x16xbf16, #tpu.memory_space<vmem>>, %arg2: memref<16x128xbf16, #tpu.memory_space<vmem>>, %arg3: memref<1x128xf32, #tpu.memory_space<vmem>>, %arg4: memref<1x128xf32, #tpu.memory_space<vmem>>, %arg5: memref<64x128xbf16, #tpu.memory_space<vmem>>) attributes {dimension_semantics = [#tpu.dimension_semantics<parallel>], iteration_bounds = array<i64: 2>, scalar_prefetch = 0 : i64, scratch_operands = 0 : i64, tpu.core_type = #tpu.core_type<tc>, window_params = [{transform_indices = @transform_0, window_bounds = array<i64: 64, 16>}, {pipeline_mode = #tpu.pipeline_mode<synchronous>, transform_indices = @transform_1, window_bounds = array<i64: 16, 128>}, {pipeline_mode = #tpu.pipeline_mode<synchronous>, transform_indices = @transform_2, window_bounds = array<i64: 1, 128>}, {pipeline_mode = #tpu.pipeline_mode<synchronous>, transform_indices = @transform_3, window_bounds = array<i64: 1, 128>}, {transform_indices = @transform_4, window_bounds = array<i64: 64, 128>}]} {
    %c0 = arith.constant 0 : index
    %c0_0 = arith.constant 0 : index
    %0 = vector.load %arg1[%c0, %c0_0] : memref<64x16xbf16, #tpu.memory_space<vmem>>, vector<64x16xbf16>
    %c0_1 = arith.constant 0 : index
    %c0_2 = arith.constant 0 : index
    %1 = vector.load %arg2[%c0_1, %c0_2] : memref<16x128xbf16, #tpu.memory_space<vmem>>, vector<16x128xbf16>
    %cst = arith.constant dense<0.000000e+00> : vector<64x128xf32>
    %2 = tpu.matmul %0, %1, %cst {dimension_numbers = #tpu.dot_dimension_numbers<[1], [0], [0], [1], [0, 0, 1, 1], [], []>} : vector<64x16xbf16>, vector<16x128xbf16>, vector<64x128xf32> -> vector<64x128xf32>
    %c0_3 = arith.constant 0 : index
    %c0_4 = arith.constant 0 : index
    %3 = vector.load %arg3[%c0_3, %c0_4] : memref<1x128xf32, #tpu.memory_space<vmem>>, vector<1x128xf32>
    %4 = vector.broadcast %3 : vector<1x128xf32> to vector<64x128xf32>
    %5 = arith.mulf %2, %4 : vector<64x128xf32>
    %c0_5 = arith.constant 0 : index
    %c0_6 = arith.constant 0 : index
    %6 = vector.load %arg4[%c0_5, %c0_6] : memref<1x128xf32, #tpu.memory_space<vmem>>, vector<1x128xf32>
    %7 = vector.broadcast %6 : vector<1x128xf32> to vector<64x128xf32>
    %8 = arith.addf %5, %7 : vector<64x128xf32>
    %cst_7 = arith.constant 0.000000e+00 : f32
    %cst_8 = arith.constant 6.000000e+00 : f32
    %9 = vector.broadcast %cst_7 : f32 to vector<64x128xf32>
    %10 = arith.maximumf %9, %8 : vector<64x128xf32>
    %11 = vector.broadcast %cst_8 : f32 to vector<64x128xf32>
    %12 = arith.minimumf %11, %10 : vector<64x128xf32>
    %13 = arith.truncf %12 : vector<64x128xf32> to vector<64x128xbf16>
    %c0_9 = arith.constant 0 : index
    %c0_10 = arith.constant 0 : index
    %14 = vector.load %arg5[%c0_9, %c0_10] : memref<64x128xbf16, #tpu.memory_space<vmem>>, vector<64x128xbf16>
    tpu.vector_store %arg5[%c0_9, %c0_10], %13 {strides = array<i32>} : memref<64x128xbf16, #tpu.memory_space<vmem>>, vector<64x128xbf16>,
    return
  }
  func.func @transform_0(%arg0: i32) -> (i32, i32) {
    %c0_i32 = arith.constant 0 : i32
    %c0_i32_0 = arith.constant 0 : i32
    return %arg0, %c0_i32 : i32, i32
  }
  func.func @transform_1(%arg0: i32) -> (i32, i32) {
    %c0_i32 = arith.constant 0 : i32
    %c0_i32_0 = arith.constant 0 : i32
    %c0_i32_1 = arith.constant 0 : i32
    return %c0_i32, %c0_i32_0 : i32, i32
  }
  func.func @transform_2(%arg0: i32) -> (i32, i32) {
    %c0_i32 = arith.constant 0 : i32
    %c0_i32_0 = arith.constant 0 : i32
    %c0_i32_1 = arith.constant 0 : i32
    return %c0_i32, %c0_i32_0 : i32, i32
  }
  func.func @transform_3(%arg0: i32) -> (i32, i32) {
    %c0_i32 = arith.constant 0 : i32
    %c0_i32_0 = arith.constant 0 : i32
    %c0_i32_1 = arith.constant 0 : i32
    return %c0_i32, %c0_i32_0 : i32, i32
  }
  func.func @transform_4(%arg0: i32) -> (i32, i32) {
    %c0_i32 = arith.constant 0 : i32
    %c0_i32_0 = arith.constant 0 : i32
    return %arg0, %c0_i32 : i32, i32
  }
}

module attributes {stable_mosaic.version = 11 : i64} {
  func.func @_decoder_kernel(%arg0: i32, %arg1: i32, %arg2: memref<256x128xf32, #tpu.memory_space<vmem>>, %arg3: memref<1x1x128xf32, #tpu.memory_space<vmem>>, %arg4: memref<128x256xbf16, #tpu.memory_space<vmem>>, %arg5: memref<1x256xf32, #tpu.memory_space<vmem>>, %arg6: memref<256x128xbf16, #tpu.memory_space<vmem>>, %arg7: memref<1x128xf32, #tpu.memory_space<vmem>>, %arg8: memref<128x128xbf16, #tpu.memory_space<vmem>>, %arg9: memref<1x128xf32, #tpu.memory_space<vmem>>, %arg10: memref<1x256x128xf32, #tpu.memory_space<vmem>>) attributes {dimension_semantics = [#tpu.dimension_semantics<parallel>, #tpu.dimension_semantics<parallel>], iteration_bounds = array<i64: 2, 4>, scalar_prefetch = 0 : i64, scratch_operands = 0 : i64, tpu.core_type = #tpu.core_type<tc>, window_params = [{transform_indices = @transform_0, window_bounds = array<i64: 256, 128>}, {transform_indices = @transform_1, window_bounds = array<i64: 1, 1, 128>}, {pipeline_mode = #tpu.pipeline_mode<synchronous>, transform_indices = @transform_2, window_bounds = array<i64: 128, 256>}, {pipeline_mode = #tpu.pipeline_mode<synchronous>, transform_indices = @transform_3, window_bounds = array<i64: 1, 256>}, {pipeline_mode = #tpu.pipeline_mode<synchronous>, transform_indices = @transform_4, window_bounds = array<i64: 256, 128>}, {pipeline_mode = #tpu.pipeline_mode<synchronous>, transform_indices = @transform_5, window_bounds = array<i64: 1, 128>}, {pipeline_mode = #tpu.pipeline_mode<synchronous>, transform_indices = @transform_6, window_bounds = array<i64: 128, 128>}, {pipeline_mode = #tpu.pipeline_mode<synchronous>, transform_indices = @transform_7, window_bounds = array<i64: 1, 128>}, {transform_indices = @transform_8, window_bounds = array<i64: 1, 256, 128>}]} {
    %c0 = arith.constant 0 : index
    %c0_0 = arith.constant 0 : index
    %0 = vector.load %arg2[%c0, %c0_0] : memref<256x128xf32, #tpu.memory_space<vmem>>, vector<256x128xf32>
    %c0_1 = arith.constant 0 : index
    %c0_2 = arith.constant 0 : index
    %c0_3 = arith.constant 0 : index
    %1 = vector.load %arg3[%c0_1, %c0_2, %c0_3] : memref<1x1x128xf32, #tpu.memory_space<vmem>>, vector<1x1x128xf32>
    %2 = vector.shape_cast %1 : vector<1x1x128xf32> to vector<1x128xf32>
    %3 = vector.broadcast %2 : vector<1x128xf32> to vector<256x128xf32>
    %4 = arith.addf %0, %3 : vector<256x128xf32>
    %cst = arith.constant 0.000000e+00 : f32
    %5 = vector.broadcast %cst : f32 to vector<256x128xf32>
    %6 = arith.maximumf %4, %5 : vector<256x128xf32>
    %7 = arith.truncf %6 : vector<256x128xf32> to vector<256x128xbf16>
    %c0_4 = arith.constant 0 : index
    %c0_5 = arith.constant 0 : index
    %8 = vector.load %arg4[%c0_4, %c0_5] : memref<128x256xbf16, #tpu.memory_space<vmem>>, vector<128x256xbf16>
    %cst_6 = arith.constant dense<0.000000e+00> : vector<256x256xf32>
    %9 = tpu.matmul %7, %8, %cst_6 {dimension_numbers = #tpu.dot_dimension_numbers<[1], [0], [0], [1], [0, 0, 1, 1], [], []>} : vector<256x128xbf16>, vector<128x256xbf16>, vector<256x256xf32> -> vector<256x256xf32>
    %c0_7 = arith.constant 0 : index
    %c0_8 = arith.constant 0 : index
    %10 = vector.load %arg5[%c0_7, %c0_8] : memref<1x256xf32, #tpu.memory_space<vmem>>, vector<1x256xf32>
    %11 = vector.broadcast %10 : vector<1x256xf32> to vector<256x256xf32>
    %12 = arith.addf %9, %11 : vector<256x256xf32>
    %cst_9 = arith.constant 0.000000e+00 : f32
    %13 = vector.broadcast %cst_9 : f32 to vector<256x256xf32>
    %14 = arith.maximumf %12, %13 : vector<256x256xf32>
    %15 = arith.truncf %14 : vector<256x256xf32> to vector<256x256xbf16>
    %c0_10 = arith.constant 0 : index
    %c0_11 = arith.constant 0 : index
    %16 = vector.load %arg6[%c0_10, %c0_11] : memref<256x128xbf16, #tpu.memory_space<vmem>>, vector<256x128xbf16>
    %cst_12 = arith.constant dense<0.000000e+00> : vector<256x128xf32>
    %17 = tpu.matmul %15, %16, %cst_12 {dimension_numbers = #tpu.dot_dimension_numbers<[1], [0], [0], [1], [0, 0, 1, 1], [], []>} : vector<256x256xbf16>, vector<256x128xbf16>, vector<256x128xf32> -> vector<256x128xf32>
    %c0_13 = arith.constant 0 : index
    %c0_14 = arith.constant 0 : index
    %18 = vector.load %arg7[%c0_13, %c0_14] : memref<1x128xf32, #tpu.memory_space<vmem>>, vector<1x128xf32>
    %19 = vector.broadcast %18 : vector<1x128xf32> to vector<256x128xf32>
    %20 = arith.addf %17, %19 : vector<256x128xf32>
    %cst_15 = arith.constant 0.000000e+00 : f32
    %21 = vector.broadcast %cst_15 : f32 to vector<256x128xf32>
    %22 = arith.maximumf %20, %21 : vector<256x128xf32>
    %23 = arith.truncf %22 : vector<256x128xf32> to vector<256x128xbf16>
    %c0_16 = arith.constant 0 : index
    %c0_17 = arith.constant 0 : index
    %24 = vector.load %arg8[%c0_16, %c0_17] : memref<128x128xbf16, #tpu.memory_space<vmem>>, vector<128x128xbf16>
    %cst_18 = arith.constant dense<0.000000e+00> : vector<256x128xf32>
    %25 = tpu.matmul %23, %24, %cst_18 {dimension_numbers = #tpu.dot_dimension_numbers<[1], [0], [0], [1], [0, 0, 1, 1], [], []>} : vector<256x128xbf16>, vector<128x128xbf16>, vector<256x128xf32> -> vector<256x128xf32>
    %c0_19 = arith.constant 0 : index
    %c0_20 = arith.constant 0 : index
    %26 = vector.load %arg9[%c0_19, %c0_20] : memref<1x128xf32, #tpu.memory_space<vmem>>, vector<1x128xf32>
    %27 = vector.broadcast %26 : vector<1x128xf32> to vector<256x128xf32>
    %28 = arith.addf %25, %27 : vector<256x128xf32>
    %29 = arith.negf %28 : vector<256x128xf32>
    %30 = math.exp %29 : vector<256x128xf32>
    %cst_21 = arith.constant 1.000000e+00 : f32
    %31 = vector.broadcast %cst_21 : f32 to vector<256x128xf32>
    %32 = arith.addf %31, %30 : vector<256x128xf32>
    %33 = arith.divf %31, %32 : vector<256x128xf32>
    %34 = vector.shape_cast %33 : vector<256x128xf32> to vector<1x256x128xf32>
    %c0_22 = arith.constant 0 : index
    %c0_23 = arith.constant 0 : index
    %c0_24 = arith.constant 0 : index
    %35 = vector.load %arg10[%c0_22, %c0_23, %c0_24] : memref<1x256x128xf32, #tpu.memory_space<vmem>>, vector<1x256x128xf32>
    tpu.vector_store %arg10[%c0_22, %c0_23, %c0_24], %34 {strides = array<i32>} : memref<1x256x128xf32, #tpu.memory_space<vmem>>, vector<1x256x128xf32>,
    return
  }
  func.func @transform_0(%arg0: i32, %arg1: i32) -> (i32, i32) {
    %c0_i32 = arith.constant 0 : i32
    %c0_i32_0 = arith.constant 0 : i32
    return %arg1, %c0_i32 : i32, i32
  }
  func.func @transform_1(%arg0: i32, %arg1: i32) -> (i32, i32, i32) {
    %c0_i32 = arith.constant 0 : i32
    %c0_i32_0 = arith.constant 0 : i32
    %c0_i32_1 = arith.constant 0 : i32
    return %arg0, %c0_i32, %c0_i32_0 : i32, i32, i32
  }
  func.func @transform_2(%arg0: i32, %arg1: i32) -> (i32, i32) {
    %c0_i32 = arith.constant 0 : i32
    %c0_i32_0 = arith.constant 0 : i32
    %c0_i32_1 = arith.constant 0 : i32
    return %c0_i32, %c0_i32_0 : i32, i32
  }
  func.func @transform_3(%arg0: i32, %arg1: i32) -> (i32, i32) {
    %c0_i32 = arith.constant 0 : i32
    %c0_i32_0 = arith.constant 0 : i32
    %c0_i32_1 = arith.constant 0 : i32
    return %c0_i32, %c0_i32_0 : i32, i32
  }
  func.func @transform_4(%arg0: i32, %arg1: i32) -> (i32, i32) {
    %c0_i32 = arith.constant 0 : i32
    %c0_i32_0 = arith.constant 0 : i32
    %c0_i32_1 = arith.constant 0 : i32
    return %c0_i32, %c0_i32_0 : i32, i32
  }
  func.func @transform_5(%arg0: i32, %arg1: i32) -> (i32, i32) {
    %c0_i32 = arith.constant 0 : i32
    %c0_i32_0 = arith.constant 0 : i32
    %c0_i32_1 = arith.constant 0 : i32
    return %c0_i32, %c0_i32_0 : i32, i32
  }
  func.func @transform_6(%arg0: i32, %arg1: i32) -> (i32, i32) {
    %c0_i32 = arith.constant 0 : i32
    %c0_i32_0 = arith.constant 0 : i32
    %c0_i32_1 = arith.constant 0 : i32
    return %c0_i32, %c0_i32_0 : i32, i32
  }
  func.func @transform_7(%arg0: i32, %arg1: i32) -> (i32, i32) {
    %c0_i32 = arith.constant 0 : i32
    %c0_i32_0 = arith.constant 0 : i32
    %c0_i32_1 = arith.constant 0 : i32
    return %c0_i32, %c0_i32_0 : i32, i32
  }
  func.func @transform_8(%arg0: i32, %arg1: i32) -> (i32, i32, i32) {
    %c0_i32 = arith.constant 0 : i32
    %c0_i32_0 = arith.constant 0 : i32
    return %arg0, %arg1, %c0_i32 : i32, i32, i32
  }
}

</mosaic_0001>

<llo_original>
// kernel: vae_forward.6
$region0: #{vae_forward.6}
  #allocation0 [shape = 'u32[]', space=smem, size = 0x4, offset = 0x4, fixed_abs, tag = 'smem constant byte address 0x4 - core index']
  #allocation1 [shape = 'u32[144,128]{1,0:T(1,128)}', space=vmem, size = 0x12000, scoped, tag = 'internal scratch']
  %s0 = inlined_call_operand.vmem [shape: f32[2048,3], index: 0, kind: input, shape index: {}]
  %s1 = inlined_call_operand.vmem [shape: bf16[3,128], index: 1, kind: input, shape index: {}]
  %s2 = inlined_call_operand.vmem [shape: f32[1,128], index: 2, kind: input, shape index: {}]
  %s3 = inlined_call_operand.vmem [shape: f32[1,128], index: 3, kind: input, shape index: {}]
  %s4 = inlined_call_operand.vmem [shape: bf16[2048,128], index: 4, kind: output, shape index: {}]
  %s5 = sld [smem:[#allocation0]]
  $region49: #{vae_forward.6} parent=0
    _
  %s7 = ssub.s32 1, %s5
  %s8 = scalar_select 0, %s7, %s5
  loop: start=0, step=1, limit=10
  $region2: #{vae_forward.6} parent=0 // loop_pre_header
    _
  $region3: #{vae_forward.6} parent=0 // loop_header
    %s10 = sphi 0, %s14
    %p11 = scmp.ge.s32.totalorder %s10, 10
    %s20 = sphi 0, %s22
    %s23 = sphi 0, %s20
    %s24 = sphi 0, %s23
    %s40 = sphi 0, %s24
    %s44 = sphi 0, %s44
    %s46 = sphi 0, %s44
    %s47 = sphi 0, %s46
    %s61 = sphi 0, %s47
    %s65 = sphi 0, %s65
    %s67 = sphi 0, %s65
    %s68 = sphi 0, %s67
    %s82 = sphi 0, %s68
    %s86 = sphi 0, %s86
    %s88 = sphi 0, %s86
    %s89 = sphi 0, %s88
    %s103 = sphi 0, %s89
    %s109 = sphi 0, %s111
    %s112 = sphi 0, %s109
    %s113 = sphi 0, %s112
    %s129 = sphi 0, %s113
  $region4: #{vae_forward.6} parent=0 // loop_header_branch
    %13 = sbr.rel (%p11) target = $region8
  $region5: #{vae_forward.6} parent=0 // loop_body
    %s15 = ssub.s32 %s10, 1
    %s16 = ssub.s32 %s10, 2
    %s17 = sadd.s32 %s10, 1
    %s18 = ssub.s32 %s10, %s17
    %p19 = scmp.eq.s32.totalorder %s18, 0
    %s21 = sadd.s32 %s20, 1
    %s22 = scalar_select %p19, %s20, %s21
    %p25 = pneg %p19
    %p26 = scmp.eq.s32.totalorder %s10, 7
    %p27 = por %p25, %p26
    %p28 = scmp.ne.s32.totalorder %s20, %s23
    %p29 = scmp.eq.s32.totalorder %s10, 0
    %p30 = por %p28, %p29
    %p31 = scmp.ne.s32.totalorder %s20, %s23
    %p32 = scmp.eq.s32.totalorder %s15, 7
    %p33 = por %p31, %p32
    %p34 = scmp.ne.s32.totalorder %s23, %s24
    %p35 = scmp.eq.s32.totalorder %s15, 0
    %p36 = por %p34, %p35
    %p37 = scmp.ne.s32.totalorder %s23, %s24
    %p38 = scmp.eq.s32.totalorder %s16, 7
    %p39 = por %p37, %p38
    %p41 = scmp.ne.s32.totalorder %s24, %s40
    %p42 = scmp.eq.s32.totalorder %s16, 0
    %p43 = por %p41, %p42
    %s45 = sadd.s32 %s44, 1
    %p48 = scmp.eq.s32.totalorder %s10, 7
    %p49 = scmp.ne.s32.totalorder %s44, %s46
    %p50 = scmp.eq.s32.totalorder %s10, 0
    %p51 = por %p49, %p50
    %p52 = scmp.ne.s32.totalorder %s44, %s46
    %p53 = scmp.eq.s32.totalorder %s15, 7
    %p54 = por %p52, %p53
    %p55 = scmp.ne.s32.totalorder %s46, %s47
    %p56 = scmp.eq.s32.totalorder %s15, 0
    %p57 = por %p55, %p56
    %p58 = scmp.ne.s32.totalorder %s46, %s47
    %p59 = scmp.eq.s32.totalorder %s16, 7
    %p60 = por %p58, %p59
    %p62 = scmp.ne.s32.totalorder %s47, %s61
    %p63 = scmp.eq.s32.totalorder %s16, 0
    %p64 = por %p62, %p63
    %s66 = sadd.s32 %s65, 1
    %p69 = scmp.eq.s32.totalorder %s10, 7
    %p70 = scmp.ne.s32.totalorder %s65, %s67
    %p71 = scmp.eq.s32.totalorder %s10, 0
    %p72 = por %p70, %p71
    %p73 = scmp.ne.s32.totalorder %s65, %s67
    %p74 = scmp.eq.s32.totalorder %s15, 7
    %p75 = por %p73, %p74
    %p76 = scmp.ne.s32.totalorder %s67, %s68
    %p77 = scmp.eq.s32.totalorder %s15, 0
    %p78 = por %p76, %p77
    %p79 = scmp.ne.s32.totalorder %s67, %s68
    %p80 = scmp.eq.s32.totalorder %s16, 7
    %p81 = por %p79, %p80
    %p83 = scmp.ne.s32.totalorder %s68, %s82
    %p84 = scmp.eq.s32.totalorder %s16, 0
    %p85 = por %p83, %p84
    %s87 = sadd.s32 %s86, 1
    %p90 = scmp.eq.s32.totalorder %s10, 7
    %p91 = scmp.ne.s32.totalorder %s86, %s88
    %p92 = scmp.eq.s32.totalorder %s10, 0
    %p93 = por %p91, %p92
    %p94 = scmp.ne.s32.totalorder %s86, %s88
    %p95 = scmp.eq.s32.totalorder %s15, 7
    %p96 = por %p94, %p95
    %p97 = scmp.ne.s32.totalorder %s88, %s89
    %p98 = scmp.eq.s32.totalorder %s15, 0
    %p99 = por %p97, %p98
    %p100 = scmp.ne.s32.totalorder %s88, %s89
    %p101 = scmp.eq.s32.totalorder %s16, 7
    %p102 = por %p100, %p101
    %p104 = scmp.ne.s32.totalorder %s89, %s103
    %p105 = scmp.eq.s32.totalorder %s16, 0
    %p106 = por %p104, %p105
    %s107 = ssub.s32 %s10, %s17
    %p108 = scmp.eq.s32.totalorder %s107, 0
    %s110 = sadd.s32 %s109, 1
    %s111 = scalar_select %p108, %s109, %s110
    %p114 = pneg %p108
    %p115 = scmp.eq.s32.totalorder %s10, 7
    %p116 = por %p114, %p115
    %p117 = scmp.ne.s32.totalorder %s109, %s112
    %p118 = scmp.eq.s32.totalorder %s10, 0
    %p119 = por %p117, %p118
    %p120 = scmp.ne.s32.totalorder %s109, %s112
    %p121 = scmp.eq.s32.totalorder %s15, 7
    %p122 = por %p120, %p121
    %p123 = scmp.ne.s32.totalorder %s112, %s113
    %p124 = scmp.eq.s32.totalorder %s15, 0
    %p125 = por %p123, %p124
    %p126 = scmp.ne.s32.totalorder %s112, %s113
    %p127 = scmp.eq.s32.totalorder %s16, 7
    %p128 = por %p126, %p127
    %p130 = scmp.ne.s32.totalorder %s113, %s129
    %p131 = scmp.eq.s32.totalorder %s16, 0
    %p132 = por %p130, %p131
    %p133 = scmp.le.s32.totalorder 1, %s10
    %p134 = scmp.lt.s32.totalorder %s10, 9
    %p135 = pnand %p133, %p134
    %p136 = pneg %p135
    // Predicated region
    $region9: #{vae_forward.6} parent=5 // pred_check
      _
    $region10: #{vae_forward.6} parent=5 // pred_check_branch
      %138 = sbr.rel (%p135) target = $region12
    $region11: #{vae_forward.6} parent=5 // pred_region
      %s139 = ssub.s32 %s10, 1
      // Predicated region
      $region13: #{vae_forward.6} parent=11 // pred_check
        %p140 = pneg %p57
      $region14: #{vae_forward.6} parent=11 // pred_check_branch
        %142 = sbr.rel (%p140) target = $region16
      $region15: #{vae_forward.6} parent=11 // pred_region
        _
      $region16: #{vae_forward.6} parent=11 // pred_fallthru
        _
      // Predicated region
      $region17: #{vae_forward.6} parent=11 // pred_check
        %p143 = pneg %p78
      $region18: #{vae_forward.6} parent=11 // pred_check_branch
        %145 = sbr.rel (%p143) target = $region20
      $region19: #{vae_forward.6} parent=11 // pred_region
        _
      $region20: #{vae_forward.6} parent=11 // pred_fallthru
        _
      // Predicated region
      $region21: #{vae_forward.6} parent=11 // pred_check
        %p146 = pneg %p99
      $region22: #{vae_forward.6} parent=11 // pred_check_branch
        %148 = sbr.rel (%p146) target = $region24
      $region23: #{vae_forward.6} parent=11 // pred_region
        _
      $region24: #{vae_forward.6} parent=11 // pred_fallthru
        _
    $region12: #{vae_forward.6} parent=5 // pred_fallthru
      _
    %p149 = scmp.lt.s32.totalorder %s10, 8
    // Predicated region
    $region25: #{vae_forward.6} parent=5 // pred_check
      %p150 = pneg %p149
    $region26: #{vae_forward.6} parent=5 // pred_check_branch
      %152 = sbr.rel (%p150) target = $region28
    $region27: #{vae_forward.6} parent=5 // pred_region
      // Predicated region
      $region29: #{vae_forward.6} parent=27 // pred_check
        %p153 = pneg %p30
      $region30: #{vae_forward.6} parent=27 // pred_check_branch
        %155 = sbr.rel (%p153) target = $region32
      $region31: #{vae_forward.6} parent=27 // pred_region
        %s156 = smul.u32 32, %s10
        %p157 = scmp.lt.s32.totalorder %s156, 255
        %s158 = scalar_select %p157, %s156, 255
        %s159 = smul.addr %s158, 8
        %s160 = scalar_lea.vmem %s0, %s159
        %s161 = smul.u32 32, %s10
      $region32: #{vae_forward.6} parent=27 // pred_fallthru
        _
    $region28: #{vae_forward.6} parent=5 // pred_fallthru
      _
    %p162 = scmp.le.s32.totalorder 1, %s10
    %p163 = scmp.lt.s32.totalorder %s10, 9
    %p164 = pnand %p162, %p163
    %p165 = pneg %p164
    // Predicated region
    $region33: #{vae_forward.6} parent=5 // pred_check
      _
    $region34: #{vae_forward.6} parent=5 // pred_check_branch
      %167 = sbr.rel (%p164) target = $region36
    $region35: #{vae_forward.6} parent=5 // pred_region
      %s168 = ssub.s32 %s10, 1
      %s169 = smul.u32 32, %s15
      %p170 = scmp.lt.s32.totalorder %s169, 255
      %s171 = scalar_select %p170, %s169, 255
      %s172 = smul.addr %s171, 8
      %s173 = scalar_lea.vmem %s0, %s172
      %p174 = pneg %p36
      %p175 = pneg %p33
      %p176 = pneg %p57
      %p177 = pneg %p54
      %p178 = pneg %p78
      %p179 = pneg %p75
      %p180 = pneg %p99
      %p181 = pneg %p96
      %p182 = pneg %p125
      %p183 = pneg %p122
      %s184 = smul.u32 32, %s15
      %p185 = scmp.lt.s32.totalorder %s184, 255
      %s186 = scalar_select %p185, %s184, 255
      %s187 = smul.addr %s186, 4
      %s188 = scalar_lea.vmem %s4, %s187
      %s189 = smul.u32 32, %s15
      %p190 = scmp.lt.s32.totalorder %s189, 255
      %s191 = scalar_select %p190, %s189, 255
      %s192 = smul.addr %s191, 8
      %s193 = scalar_lea.vmem %s0, %s192
      %s194 = smul.u32 32, %s15
      %s195 = smul.u32 32, %s15
      %p196 = scmp.lt.s32.totalorder %s195, 255
      %s197 = scalar_select %p196, %s195, 255
      %s198 = smul.addr %s197, 4
      %s199 = scalar_lea.vmem %s4, %s198
      %s200 = smul.u32 32, %s15
      %v202 = vld [vmem:[%s193] sm:$0xff]
      %v203 = vld [vmem:[%s193 + $0x8] sm:$0xff]
      %v204 = vld [vmem:[%s193 + $0x10] sm:$0xff]
      %v205 = vld [vmem:[%s193 + $0x18] sm:$0xff]
      %v206 = vld [vmem:[%s193 + $0x20] sm:$0xff]
      %v207 = vld [vmem:[%s193 + $0x28] sm:$0xff]
      %v208 = vld [vmem:[%s193 + $0x30] sm:$0xff]
      %v209 = vld [vmem:[%s193 + $0x38] sm:$0xff]
      %v210 = vld [vmem:[%s193 + $0x40] sm:$0xff]
      %v211 = vld [vmem:[%s193 + $0x48] sm:$0xff]
      %v212 = vld [vmem:[%s193 + $0x50] sm:$0xff]
      %v213 = vld [vmem:[%s193 + $0x58] sm:$0xff]
      %v214 = vld [vmem:[%s193 + $0x60] sm:$0xff]
      %v215 = vld [vmem:[%s193 + $0x68] sm:$0xff]
      %v216 = vld [vmem:[%s193 + $0x70] sm:$0xff]
      %v217 = vld [vmem:[%s193 + $0x78] sm:$0xff]
      %v218 = vld [vmem:[%s193 + $0x80] sm:$0xff]
      %v219 = vld [vmem:[%s193 + $0x88] sm:$0xff]
      %v220 = vld [vmem:[%s193 + $0x90] sm:$0xff]
      %v221 = vld [vmem:[%s193 + $0x98] sm:$0xff]
      %v222 = vld [vmem:[%s193 + $0xa0] sm:$0xff]
      %v223 = vld [vmem:[%s193 + $0xa8] sm:$0xff]
      %v224 = vld [vmem:[%s193 + $0xb0] sm:$0xff]
      %v225 = vld [vmem:[%s193 + $0xb8] sm:$0xff]
      %v226 = vld [vmem:[%s193 + $0xc0] sm:$0xff]
      %v227 = vld [vmem:[%s193 + $0xc8] sm:$0xff]
      %v228 = vld [vmem:[%s193 + $0xd0] sm:$0xff]
      %v229 = vld [vmem:[%s193 + $0xd8] sm:$0xff]
      %v230 = vld [vmem:[%s193 + $0xe0] sm:$0xff]
      %v231 = vld [vmem:[%s193 + $0xe8] sm:$0xff]
      %v232 = vld [vmem:[%s193 + $0xf0] sm:$0xff]
      %v233 = vld [vmem:[%s193 + $0xf8] sm:$0xff]
      %v234 = vpack.c.bf16 %v203, %v202
      %v235 = vpack.c.bf16 %v205, %v204
      %v236 = vpack.c.bf16 %v207, %v206
      %v237 = vpack.c.bf16 %v209, %v208
      %v238 = vpack.c.bf16 %v211, %v210
      %v239 = vpack.c.bf16 %v213, %v212
      %v240 = vpack.c.bf16 %v215, %v214
      %v241 = vpack.c.bf16 %v217, %v216
      %v242 = vpack.c.bf16 %v219, %v218
      %v243 = vpack.c.bf16 %v221, %v220
      %v244 = vpack.c.bf16 %v223, %v222
      %v245 = vpack.c.bf16 %v225, %v224
      %v246 = vpack.c.bf16 %v227, %v226
      %v247 = vpack.c.bf16 %v229, %v228
      %v248 = vpack.c.bf16 %v231, %v230
      %v249 = vpack.c.bf16 %v233, %v232
      %v250 = vld [vmem:[%s1] sm:$0x3]
      %vm251 = vcmask 23552
      %v253 = vsel %vm251, %v234, 0
      %v256 = vsel %vm251, %v235, 0
      %v259 = vsel %vm251, %v236, 0
      %v262 = vsel %vm251, %v237, 0
      %v265 = vsel %vm251, %v238, 0
      %v268 = vsel %vm251, %v239, 0
      %v271 = vsel %vm251, %v240, 0
      %v274 = vsel %vm251, %v241, 0
      %v277 = vsel %vm251, %v242, 0
      %v280 = vsel %vm251, %v243, 0
      %v283 = vsel %vm251, %v244, 0
      %v286 = vsel %vm251, %v245, 0
      %v289 = vsel %vm251, %v246, 0
      %v292 = vsel %vm251, %v247, 0
      %v295 = vsel %vm251, %v248, 0
      %v298 = vsel %vm251, %v249, 0
      %vm300 = vcmask 1040384
      %vm301 = vcmask 1041408
      %v302 = vsel %vm300, 4294967295, 65535
      %v303 = vsel %vm301, %v302, 0
      %v305 = vand.u32 %v250, %v303
      %307 = vmatprep.subr.bf16.mxu0 0
      %308 = vmatpush1.bf16.msra.mxu0 0
      %309 = vmatprep.subr.bf16.mxu0 0
      %310 = vmatpush1.bf16.msra.mxu0 0
      %311 = vmatprep.subr.bf16.mxu0 0
      %312 = vmatpush1.bf16.msra.mxu0 0
      %313 = vmatprep.subr.bf16.mxu0 0
      %314 = vmatpush1.bf16.msra.mxu0 0
      %315 = vmatprep.subr.bf16.mxu0 0
      %316 = vmatpush1.bf16.msra.mxu0 0
      %317 = vmatprep.subr.bf16.mxu0 0
      %318 = vmatpush1.bf16.msra.mxu0 0
      %319 = vmatprep.subr.bf16.mxu0 0
      %320 = vmatpush1.bf16.msra.mxu0 0
      %321 = vmatprep.subr.bf16.mxu0 0
      %322 = vmatpush1.bf16.msra.mxu0 %v305
      %323 = vmatprep.subr.bf16.mxu0 0
      %324 = vmatpush2.bf16.msra.mxu0 0
      %325 = vmatprep.subr.bf16.mxu0 0
      %326 = vmatpush2.bf16.msra.mxu0 0
      %327 = vmatprep.subr.bf16.mxu0 0
      %328 = vmatpush2.bf16.msra.mxu0 0
      %329 = vmatprep.subr.bf16.mxu0 0
      %330 = vmatpush2.bf16.msra.mxu0 0
      %331 = vmatprep.subr.bf16.mxu0 0
      %332 = vmatpush2.bf16.msra.mxu0 0
      %333 = vmatprep.subr.bf16.mxu0 0
      %334 = vmatpush2.bf16.msra.mxu0 0
      %335 = vmatprep.subr.bf16.mxu0 0
      %336 = vmatpush2.bf16.msra.mxu0 0
      %337 = vmatprep.subr.bf16.mxu0 0
      %338 = vmatpush2.bf16.msra.mxu0 0
      %339 = vmatprep.mubr.bf16.mxu0 0
      %340 = vmatmul.mubr.bf16.gmra.mxu0 %v253
      %v341 = vpop.f32.mrf.mxu0
      %v342 = vadd.f32 0.0, %v341
      %v343 = vpop.f32.mrf.mxu0
      %v344 = vpop.f32.mrf.mxu0
      %v345 = vadd.f32 0.0, %v344
      %v346 = vpop.f32.mrf.mxu0
      %347 = vmatprep.mubr.bf16.mxu0 0
      %348 = vmatmul.mubr.bf16.gmra.mxu0 %v256
      %v349 = vpop.f32.mrf.mxu0
      %v350 = vadd.f32 0.0, %v349
      %v351 = vpop.f32.mrf.mxu0
      %v352 = vpop.f32.mrf.mxu0
      %v353 = vadd.f32 0.0, %v352
      %v354 = vpop.f32.mrf.mxu0
      %355 = vmatprep.mubr.bf16.mxu0 0
      %356 = vmatmul.mubr.bf16.gmra.mxu0 %v259
      %v357 = vpop.f32.mrf.mxu0
      %v358 = vadd.f32 0.0, %v357
      %v359 = vpop.f32.mrf.mxu0
      %v360 = vpop.f32.mrf.mxu0
      %v361 = vadd.f32 0.0, %v360
      %v362 = vpop.f32.mrf.mxu0
      %363 = vmatprep.mubr.bf16.mxu0 0
      %364 = vmatmul.mubr.bf16.gmra.mxu0 %v262
      %v365 = vpop.f32.mrf.mxu0
      %v366 = vadd.f32 0.0, %v365
      %v367 = vpop.f32.mrf.mxu0
      %v368 = vpop.f32.mrf.mxu0
      %v369 = vadd.f32 0.0, %v368
      %v370 = vpop.f32.mrf.mxu0
      %371 = vmatprep.mubr.bf16.mxu0 0
      %372 = vmatmul.mubr.bf16.gmra.mxu0 %v265
      %v373 = vpop.f32.mrf.mxu0
      %v374 = vadd.f32 0.0, %v373
      %v375 = vpop.f32.mrf.mxu0
      %v376 = vpop.f32.mrf.mxu0
      %v377 = vadd.f32 0.0, %v376
      %v378 = vpop.f32.mrf.mxu0
      %379 = vmatprep.mubr.bf16.mxu0 0
      %380 = vmatmul.mubr.bf16.gmra.mxu0 %v268
      %v381 = vpop.f32.mrf.mxu0
      %v382 = vadd.f32 0.0, %v381
      %v383 = vpop.f32.mrf.mxu0
      %v384 = vpop.f32.mrf.mxu0
      %v385 = vadd.f32 0.0, %v384
      %v386 = vpop.f32.mrf.mxu0
      %387 = vmatprep.mubr.bf16.mxu0 0
      %388 = vmatmul.mubr.bf16.gmra.mxu0 %v271
      %v389 = vpop.f32.mrf.mxu0
      %v390 = vadd.f32 0.0, %v389
      %v391 = vpop.f32.mrf.mxu0
      %v392 = vpop.f32.mrf.mxu0
      %v393 = vadd.f32 0.0, %v392
      %v394 = vpop.f32.mrf.mxu0
      %395 = vmatprep.mubr.bf16.mxu0 0
      %396 = vmatmul.mubr.bf16.gmra.mxu0 %v274
      %v397 = vpop.f32.mrf.mxu0
      %v398 = vadd.f32 0.0, %v397
      %v399 = vpop.f32.mrf.mxu0
      %v400 = vpop.f32.mrf.mxu0
      %v401 = vadd.f32 0.0, %v400
      %v402 = vpop.f32.mrf.mxu0
      %403 = vmatprep.mubr.bf16.mxu0 0
      %404 = vmatmul.mubr.bf16.gmra.mxu0 %v277
      %v405 = vpop.f32.mrf.mxu0
      %v406 = vadd.f32 0.0, %v405
      %v407 = vpop.f32.mrf.mxu0
      %v408 = vpop.f32.mrf.mxu0
      %v409 = vadd.f32 0.0, %v408
      %v410 = vpop.f32.mrf.mxu0
      %411 = vmatprep.mubr.bf16.mxu0 0
      %412 = vmatmul.mubr.bf16.gmra.mxu0 %v280
      %v413 = vpop.f32.mrf.mxu0
      %v414 = vadd.f32 0.0, %v413
      %v415 = vpop.f32.mrf.mxu0
      %v416 = vpop.f32.mrf.mxu0
      %v417 = vadd.f32 0.0, %v416
      %v418 = vpop.f32.mrf.mxu0
      %419 = vmatprep.mubr.bf16.mxu0 0
      %420 = vmatmul.mubr.bf16.gmra.mxu0 %v283
      %v421 = vpop.f32.mrf.mxu0
      %v422 = vadd.f32 0.0, %v421
      %v423 = vpop.f32.mrf.mxu0
      %v424 = vpop.f32.mrf.mxu0
      %v425 = vadd.f32 0.0, %v424
      %v426 = vpop.f32.mrf.mxu0
      %427 = vmatprep.mubr.bf16.mxu0 0
      %428 = vmatmul.mubr.bf16.gmra.mxu0 %v286
      %v429 = vpop.f32.mrf.mxu0
      %v430 = vadd.f32 0.0, %v429
      %v431 = vpop.f32.mrf.mxu0
      %v432 = vpop.f32.mrf.mxu0
      %v433 = vadd.f32 0.0, %v432
      %v434 = vpop.f32.mrf.mxu0
      %435 = vmatprep.mubr.bf16.mxu0 0
      %436 = vmatmul.mubr.bf16.gmra.mxu0 %v289
      %v437 = vpop.f32.mrf.mxu0
      %v438 = vadd.f32 0.0, %v437
      %v439 = vpop.f32.mrf.mxu0
      %v440 = vpop.f32.mrf.mxu0
      %v441 = vadd.f32 0.0, %v440
      %v442 = vpop.f32.mrf.mxu0
      %443 = vmatprep.mubr.bf16.mxu0 0
      %444 = vmatmul.mubr.bf16.gmra.mxu0 %v292
      %v445 = vpop.f32.mrf.mxu0
      %v446 = vadd.f32 0.0, %v445
      %v447 = vpop.f32.mrf.mxu0
      %v448 = vpop.f32.mrf.mxu0
      %v449 = vadd.f32 0.0, %v448
      %v450 = vpop.f32.mrf.mxu0
      %451 = vmatprep.mubr.bf16.mxu0 0
      %452 = vmatmul.mubr.bf16.gmra.mxu0 %v295
      %v453 = vpop.f32.mrf.mxu0
      %v454 = vadd.f32 0.0, %v453
      %v455 = vpop.f32.mrf.mxu0
      %v456 = vpop.f32.mrf.mxu0
      %v457 = vadd.f32 0.0, %v456
      %v458 = vpop.f32.mrf.mxu0
      %459 = vmatprep.mubr.bf16.mxu0 0
      %460 = vmatmul.mubr.bf16.gmra.mxu0 %v298
      %v461 = vpop.f32.mrf.mxu0
      %v462 = vadd.f32 0.0, %v461
      %v463 = vpop.f32.mrf.mxu0
      %v464 = vpop.f32.mrf.mxu0
      %v465 = vadd.f32 0.0, %v464
      %v466 = vpop.f32.mrf.mxu0
      %467 = vdwg.mxu0
      %v468 = vld [vmem:[%s2] sm:$0x1]
      %v470 = vlaneseq
      %v471 = vshrl.u32 %v470, 7
      %v472 = vsub.s32 0, %v471
      %v473 = vrot.slane %v468, %v472
      %v475 = vmul.f32 %v342, %v473
      %v476 = vmul.f32 %v345, %v473
      %v477 = vmul.f32 %v350, %v473
      %v478 = vmul.f32 %v353, %v473
      %v479 = vmul.f32 %v358, %v473
      %v480 = vmul.f32 %v361, %v473
      %v481 = vmul.f32 %v366, %v473
      %v482 = vmul.f32 %v369, %v473
      %v483 = vmul.f32 %v374, %v473
      %v484 = vmul.f32 %v377, %v473
      %v485 = vmul.f32 %v382, %v473
      %v486 = vmul.f32 %v385, %v473
      %v487 = vmul.f32 %v390, %v473
      %v488 = vmul.f32 %v393, %v473
      %v489 = vmul.f32 %v398, %v473
      %v490 = vmul.f32 %v401, %v473
      %v491 = vmul.f32 %v406, %v473
      %v492 = vmul.f32 %v409, %v473
      %v493 = vmul.f32 %v414, %v473
      %v494 = vmul.f32 %v417, %v473
      %v495 = vmul.f32 %v422, %v473
      %v496 = vmul.f32 %v425, %v473
      %v497 = vmul.f32 %v430, %v473
      %v498 = vmul.f32 %v433, %v473
      %v499 = vmul.f32 %v438, %v473
      %v500 = vmul.f32 %v441, %v473
      %v501 = vmul.f32 %v446, %v473
      %v502 = vmul.f32 %v449, %v473
      %v503 = vmul.f32 %v454, %v473
      %v504 = vmul.f32 %v457, %v473
      %v505 = vmul.f32 %v462, %v473
      %v506 = vmul.f32 %v465, %v473
      %v507 = vld [vmem:[%s3] sm:$0x1]
      %v509 = vlaneseq
      %v510 = vshrl.u32 %v509, 7
      %v511 = vsub.s32 0, %v510
      %v512 = vrot.slane %v507, %v511
      %v514 = vadd.f32 %v475, %v512
      %v515 = vadd.f32 %v476, %v512
      %v516 = vadd.f32 %v477, %v512
      %v517 = vadd.f32 %v478, %v512
      %v518 = vadd.f32 %v479, %v512
      %v519 = vadd.f32 %v480, %v512
      %v520 = vadd.f32 %v481, %v512
      %v521 = vadd.f32 %v482, %v512
      %v522 = vadd.f32 %v483, %v512
      %v523 = vadd.f32 %v484, %v512
      %v524 = vadd.f32 %v485, %v512
      %v525 = vadd.f32 %v486, %v512
      %v526 = vadd.f32 %v487, %v512
      %v527 = vadd.f32 %v488, %v512
      %v528 = vadd.f32 %v489, %v512
      %v529 = vadd.f32 %v490, %v512
      %v530 = vadd.f32 %v491, %v512
      %v531 = vadd.f32 %v492, %v512
      %v532 = vadd.f32 %v493, %v512
      %v533 = vadd.f32 %v494, %v512
      %v534 = vadd.f32 %v495, %v512
      %v535 = vadd.f32 %v496, %v512
      %v536 = vadd.f32 %v497, %v512
      %v537 = vadd.f32 %v498, %v512
      %v538 = vadd.f32 %v499, %v512
      %v539 = vadd.f32 %v500, %v512
      %v540 = vadd.f32 %v501, %v512
      %v541 = vadd.f32 %v502, %v512
      %v542 = vadd.f32 %v503, %v512
      %v543 = vadd.f32 %v504, %v512
      %v544 = vadd.f32 %v505, %v512
      %v545 = vadd.f32 %v506, %v512
      %v546 = vmax.f32 %v514, 0.0
      %v547 = vmax.f32 %v515, 0.0
      %v548 = vmax.f32 %v516, 0.0
      %v549 = vmax.f32 %v517, 0.0
      %v550 = vmax.f32 %v518, 0.0
      %v551 = vmax.f32 %v519, 0.0
      %v552 = vmax.f32 %v520, 0.0
      %v553 = vmax.f32 %v521, 0.0
      %v554 = vmax.f32 %v522, 0.0
      %v555 = vmax.f32 %v523, 0.0
      %v556 = vmax.f32 %v524, 0.0
      %v557 = vmax.f32 %v525, 0.0
      %v558 = vmax.f32 %v526, 0.0
      %v559 = vmax.f32 %v527, 0.0
      %v560 = vmax.f32 %v528, 0.0
      %v561 = vmax.f32 %v529, 0.0
      %v562 = vmax.f32 %v530, 0.0
      %v563 = vmax.f32 %v531, 0.0
      %v564 = vmax.f32 %v532, 0.0
      %v565 = vmax.f32 %v533, 0.0
      %v566 = vmax.f32 %v534, 0.0
      %v567 = vmax.f32 %v535, 0.0
      %v568 = vmax.f32 %v536, 0.0
      %v569 = vmax.f32 %v537, 0.0
      %v570 = vmax.f32 %v538, 0.0
      %v571 = vmax.f32 %v539, 0.0
      %v572 = vmax.f32 %v540, 0.0
      %v573 = vmax.f32 %v541, 0.0
      %v574 = vmax.f32 %v542, 0.0
      %v575 = vmax.f32 %v543, 0.0
      %v576 = vmax.f32 %v544, 0.0
      %v577 = vmax.f32 %v545, 0.0
      %v578 = vmin.f32 %v546, 6.0
      %v579 = vmin.f32 %v547, 6.0
      %v580 = vmin.f32 %v548, 6.0
      %v581 = vmin.f32 %v549, 6.0
      %v582 = vmin.f32 %v550, 6.0
      %v583 = vmin.f32 %v551, 6.0
      %v584 = vmin.f32 %v552, 6.0
      %v585 = vmin.f32 %v553, 6.0
      %v586 = vmin.f32 %v554, 6.0
      %v587 = vmin.f32 %v555, 6.0
      %v588 = vmin.f32 %v556, 6.0
      %v589 = vmin.f32 %v557, 6.0
      %v590 = vmin.f32 %v558, 6.0
      %v591 = vmin.f32 %v559, 6.0
      %v592 = vmin.f32 %v560, 6.0
      %v593 = vmin.f32 %v561, 6.0
      %v594 = vmin.f32 %v562, 6.0
      %v595 = vmin.f32 %v563, 6.0
      %v596 = vmin.f32 %v564, 6.0
      %v597 = vmin.f32 %v565, 6.0
      %v598 = vmin.f32 %v566, 6.0
      %v599 = vmin.f32 %v567, 6.0
      %v600 = vmin.f32 %v568, 6.0
      %v601 = vmin.f32 %v569, 6.0
      %v602 = vmin.f32 %v570, 6.0
      %v603 = vmin.f32 %v571, 6.0
      %v604 = vmin.f32 %v572, 6.0
      %v605 = vmin.f32 %v573, 6.0
      %v606 = vmin.f32 %v574, 6.0
      %v607 = vmin.f32 %v575, 6.0
      %v608 = vmin.f32 %v576, 6.0
      %v609 = vmin.f32 %v577, 6.0
      %v610 = vpack.c.bf16 %v579, %v578
      %v611 = vpack.c.bf16 %v581, %v580
      %v612 = vpack.c.bf16 %v583, %v582
      %v613 = vpack.c.bf16 %v585, %v584
      %v614 = vpack.c.bf16 %v587, %v586
      %v615 = vpack.c.bf16 %v589, %v588
      %v616 = vpack.c.bf16 %v591, %v590
      %v617 = vpack.c.bf16 %v593, %v592
      %v618 = vpack.c.bf16 %v595, %v594
      %v619 = vpack.c.bf16 %v597, %v596
      %v620 = vpack.c.bf16 %v599, %v598
      %v621 = vpack.c.bf16 %v601, %v600
      %v622 = vpack.c.bf16 %v603, %v602
      %v623 = vpack.c.bf16 %v605, %v604
      %v624 = vpack.c.bf16 %v607, %v606
      %v625 = vpack.c.bf16 %v609, %v608
      %v642 = vunpack.c.l.b16 %v610
      %v643 = vunpack.c.h.b16 %v610
      %v644 = vunpack.c.l.b16 %v611
      %v645 = vunpack.c.h.b16 %v611
      %v646 = vunpack.c.l.b16 %v612
      %v647 = vunpack.c.h.b16 %v612
      %v648 = vunpack.c.l.b16 %v613
      %v649 = vunpack.c.h.b16 %v613
      %v650 = vunpack.c.l.b16 %v614
      %v651 = vunpack.c.h.b16 %v614
      %v652 = vunpack.c.l.b16 %v615
      %v653 = vunpack.c.h.b16 %v615
      %v654 = vunpack.c.l.b16 %v616
      %v655 = vunpack.c.h.b16 %v616
      %v656 = vunpack.c.l.b16 %v617
      %v657 = vunpack.c.h.b16 %v617
      %v658 = vunpack.c.l.b16 %v618
      %v659 = vunpack.c.h.b16 %v618
      %v660 = vunpack.c.l.b16 %v619
      %v661 = vunpack.c.h.b16 %v619
      %v662 = vunpack.c.l.b16 %v620
      %v663 = vunpack.c.h.b16 %v620
      %v664 = vunpack.c.l.b16 %v621
      %v665 = vunpack.c.h.b16 %v621
      %v666 = vunpack.c.l.b16 %v622
      %v667 = vunpack.c.h.b16 %v622
      %v668 = vunpack.c.l.b16 %v623
      %v669 = vunpack.c.h.b16 %v623
      %v670 = vunpack.c.l.b16 %v624
      %v671 = vunpack.c.h.b16 %v624
      %v672 = vunpack.c.l.b16 %v625
      %v673 = vunpack.c.h.b16 %v625
      %v674 = vpack.c.b16 %v642, %v642
      %v675 = vpack.c.b16 %v643, %v643
      %v676 = vpack.c.b16 %v644, %v644
      %v677 = vpack.c.b16 %v645, %v645
      %v678 = vpack.c.b16 %v646, %v646
      %v679 = vpack.c.b16 %v647, %v647
      %v680 = vpack.c.b16 %v648, %v648
      %v681 = vpack.c.b16 %v649, %v649
      %v682 = vpack.c.b16 %v650, %v650
      %v683 = vpack.c.b16 %v651, %v651
      %v684 = vpack.c.b16 %v652, %v652
      %v685 = vpack.c.b16 %v653, %v653
      %v686 = vpack.c.b16 %v654, %v654
      %v687 = vpack.c.b16 %v655, %v655
      %v688 = vpack.c.b16 %v656, %v656
      %v689 = vpack.c.b16 %v657, %v657
      %v690 = vpack.c.b16 %v658, %v658
      %v691 = vpack.c.b16 %v659, %v659
      %v692 = vpack.c.b16 %v660, %v660
      %v693 = vpack.c.b16 %v661, %v661
      %v694 = vpack.c.b16 %v662, %v662
      %v695 = vpack.c.b16 %v663, %v663
      %v696 = vpack.c.b16 %v664, %v664
      %v697 = vpack.c.b16 %v665, %v665
      %v698 = vpack.c.b16 %v666, %v666
      %v699 = vpack.c.b16 %v667, %v667
      %v700 = vpack.c.b16 %v668, %v668
      %v701 = vpack.c.b16 %v669, %v669
      %v702 = vpack.c.b16 %v670, %v670
      %v703 = vpack.c.b16 %v671, %v671
      %v704 = vpack.c.b16 %v672, %v672
      %v705 = vpack.c.b16 %v673, %v673
      %738 = vst [vmem:[%s199] sm:$0xf] %v674
      %739 = vst [vmem:[%s199 + $0x4] sm:$0xf] %v675
      %740 = vst [vmem:[%s199 + $0x8] sm:$0xf] %v676
      %741 = vst [vmem:[%s199 + $0xc] sm:$0xf] %v677
      %742 = vst [vmem:[%s199 + $0x10] sm:$0xf] %v678
      %743 = vst [vmem:[%s199 + $0x14] sm:$0xf] %v679
      %744 = vst [vmem:[%s199 + $0x18] sm:$0xf] %v680
      %745 = vst [vmem:[%s199 + $0x1c] sm:$0xf] %v681
      %746 = vst [vmem:[%s199 + $0x20] sm:$0xf] %v682
      %747 = vst [vmem:[%s199 + $0x24] sm:$0xf] %v683
      %748 = vst [vmem:[%s199 + $0x28] sm:$0xf] %v684
      %749 = vst [vmem:[%s199 + $0x2c] sm:$0xf] %v685
      %750 = vst [vmem:[%s199 + $0x30] sm:$0xf] %v686
      %751 = vst [vmem:[%s199 + $0x34] sm:$0xf] %v687
      %752 = vst [vmem:[%s199 + $0x38] sm:$0xf] %v688
      %753 = vst [vmem:[%s199 + $0x3c] sm:$0xf] %v689
      %754 = vst [vmem:[%s199 + $0x40] sm:$0xf] %v690
      %755 = vst [vmem:[%s199 + $0x44] sm:$0xf] %v691
      %756 = vst [vmem:[%s199 + $0x48] sm:$0xf] %v692
      %757 = vst [vmem:[%s199 + $0x4c] sm:$0xf] %v693
      %758 = vst [vmem:[%s199 + $0x50] sm:$0xf] %v694
      %759 = vst [vmem:[%s199 + $0x54] sm:$0xf] %v695
      %760 = vst [vmem:[%s199 + $0x58] sm:$0xf] %v696
      %761 = vst [vmem:[%s199 + $0x5c] sm:$0xf] %v697
      %762 = vst [vmem:[%s199 + $0x60] sm:$0xf] %v698
      %763 = vst [vmem:[%s199 + $0x64] sm:$0xf] %v699
      %764 = vst [vmem:[%s199 + $0x68] sm:$0xf] %v700
      %765 = vst [vmem:[%s199 + $0x6c] sm:$0xf] %v701
      %766 = vst [vmem:[%s199 + $0x70] sm:$0xf] %v702
      %767 = vst [vmem:[%s199 + $0x74] sm:$0xf] %v703
      %768 = vst [vmem:[%s199 + $0x78] sm:$0xf] %v704
      %769 = vst [vmem:[%s199 + $0x7c] sm:$0xf] %v705
      %s770 = smul.u32 32, %s15
      %p771 = scmp.lt.s32.totalorder %s770, 255
      %s772 = scalar_select %p771, %s770, 255
      %s773 = smul.addr %s772, 4
      %s774 = scalar_lea.vmem %s4, %s773
      // Predicated region
      $region37: #{vae_forward.6} parent=35 // pred_check
        %p775 = pneg %p122
      $region38: #{vae_forward.6} parent=35 // pred_check_branch
        %777 = sbr.rel (%p775) target = $region40
      $region39: #{vae_forward.6} parent=35 // pred_region
        %s778 = smul.u32 32, %s15
      $region40: #{vae_forward.6} parent=35 // pred_fallthru
        _
    $region36: #{vae_forward.6} parent=5 // pred_fallthru
      _
    %p779 = scmp.le.s32.totalorder 2, %s10
    // Predicated region
    $region41: #{vae_forward.6} parent=5 // pred_check
      %p780 = pneg %p779
    $region42: #{vae_forward.6} parent=5 // pred_check_branch
      %782 = sbr.rel (%p780) target = $region44
    $region43: #{vae_forward.6} parent=5 // pred_region
      %s783 = ssub.s32 %s10, 2
      // Predicated region
      $region45: #{vae_forward.6} parent=43 // pred_check
        %p784 = pneg %p128
      $region46: #{vae_forward.6} parent=43 // pred_check_branch
        %786 = sbr.rel (%p784) target = $region48
      $region47: #{vae_forward.6} parent=43 // pred_region
        %s787 = smul.u32 32, %s16
        %p788 = scmp.lt.s32.totalorder %s787, 255
        %s789 = scalar_select %p788, %s787, 255
        %s790 = smul.addr %s789, 4
        %s791 = scalar_lea.vmem %s4, %s790
      $region48: #{vae_forward.6} parent=43 // pred_fallthru
        _
    $region44: #{vae_forward.6} parent=5 // pred_fallthru
      _
  $region6: #{vae_forward.6} parent=0 // loop_footer
    %s14 = sadd.s32 1, %s10
  $region7: #{vae_forward.6} parent=0 // loop_footer_branch
    %9 = sbr.rel target = $region3
  $region8: #{vae_forward.6} parent=0 // loop_exit
    _

// kernel: vae_forward.8
$region0: #{vae_forward.8}
  #allocation0 [shape = 'u32[]', space=smem, size = 0x4, offset = 0x4, fixed_abs, tag = 'smem constant byte address 0x4 - core index']
  #allocation1 [shape = 'u32[144,128]{1,0:T(1,128)}', space=vmem, size = 0x12000, scoped, tag = 'internal scratch']
  %s0 = inlined_call_operand.vmem [shape: bf16[512,8], index: 0, kind: input, shape index: {}]
  %s1 = inlined_call_operand.vmem [shape: bf16[8,128], index: 1, kind: input, shape index: {}]
  %s2 = inlined_call_operand.vmem [shape: f32[1,128], index: 2, kind: input, shape index: {}]
  %s3 = inlined_call_operand.vmem [shape: f32[1,128], index: 3, kind: input, shape index: {}]
  %s4 = inlined_call_operand.vmem [shape: bf16[512,128], index: 4, kind: output, shape index: {}]
  %s5 = sld [smem:[#allocation0]]
  $region49: #{vae_forward.8} parent=0
    _
  %s7 = ssub.s32 1, %s5
  %s8 = scalar_select 0, %s7, %s5
  loop: start=0, step=1, limit=4
  $region2: #{vae_forward.8} parent=0 // loop_pre_header
    _
  $region3: #{vae_forward.8} parent=0 // loop_header
    %s10 = sphi 0, %s14
    %p11 = scmp.ge.s32.totalorder %s10, 4
    %s20 = sphi 0, %s22
    %s23 = sphi 0, %s20
    %s24 = sphi 0, %s23
    %s40 = sphi 0, %s24
    %s44 = sphi 0, %s44
    %s46 = sphi 0, %s44
    %s47 = sphi 0, %s46
    %s61 = sphi 0, %s47
    %s65 = sphi 0, %s65
    %s67 = sphi 0, %s65
    %s68 = sphi 0, %s67
    %s82 = sphi 0, %s68
    %s86 = sphi 0, %s86
    %s88 = sphi 0, %s86
    %s89 = sphi 0, %s88
    %s103 = sphi 0, %s89
    %s109 = sphi 0, %s111
    %s112 = sphi 0, %s109
    %s113 = sphi 0, %s112
    %s129 = sphi 0, %s113
  $region4: #{vae_forward.8} parent=0 // loop_header_branch
    %13 = sbr.rel (%p11) target = $region8
  $region5: #{vae_forward.8} parent=0 // loop_body
    %s15 = ssub.s32 %s10, 1
    %s16 = ssub.s32 %s10, 2
    %s17 = sadd.s32 %s10, 1
    %s18 = ssub.s32 %s10, %s17
    %p19 = scmp.eq.s32.totalorder %s18, 0
    %s21 = sadd.s32 %s20, 1
    %s22 = scalar_select %p19, %s20, %s21
    %p25 = pneg %p19
    %p26 = scmp.eq.s32.totalorder %s10, 1
    %p27 = por %p25, %p26
    %p28 = scmp.ne.s32.totalorder %s20, %s23
    %p29 = scmp.eq.s32.totalorder %s10, 0
    %p30 = por %p28, %p29
    %p31 = scmp.ne.s32.totalorder %s20, %s23
    %p32 = scmp.eq.s32.totalorder %s15, 1
    %p33 = por %p31, %p32
    %p34 = scmp.ne.s32.totalorder %s23, %s24
    %p35 = scmp.eq.s32.totalorder %s15, 0
    %p36 = por %p34, %p35
    %p37 = scmp.ne.s32.totalorder %s23, %s24
    %p38 = scmp.eq.s32.totalorder %s16, 1
    %p39 = por %p37, %p38
    %p41 = scmp.ne.s32.totalorder %s24, %s40
    %p42 = scmp.eq.s32.totalorder %s16, 0
    %p43 = por %p41, %p42
    %s45 = sadd.s32 %s44, 1
    %p48 = scmp.eq.s32.totalorder %s10, 1
    %p49 = scmp.ne.s32.totalorder %s44, %s46
    %p50 = scmp.eq.s32.totalorder %s10, 0
    %p51 = por %p49, %p50
    %p52 = scmp.ne.s32.totalorder %s44, %s46
    %p53 = scmp.eq.s32.totalorder %s15, 1
    %p54 = por %p52, %p53
    %p55 = scmp.ne.s32.totalorder %s46, %s47
    %p56 = scmp.eq.s32.totalorder %s15, 0
    %p57 = por %p55, %p56
    %p58 = scmp.ne.s32.totalorder %s46, %s47
    %p59 = scmp.eq.s32.totalorder %s16, 1
    %p60 = por %p58, %p59
    %p62 = scmp.ne.s32.totalorder %s47, %s61
    %p63 = scmp.eq.s32.totalorder %s16, 0
    %p64 = por %p62, %p63
    %s66 = sadd.s32 %s65, 1
    %p69 = scmp.eq.s32.totalorder %s10, 1
    %p70 = scmp.ne.s32.totalorder %s65, %s67
    %p71 = scmp.eq.s32.totalorder %s10, 0
    %p72 = por %p70, %p71
    %p73 = scmp.ne.s32.totalorder %s65, %s67
    %p74 = scmp.eq.s32.totalorder %s15, 1
    %p75 = por %p73, %p74
    %p76 = scmp.ne.s32.totalorder %s67, %s68
    %p77 = scmp.eq.s32.totalorder %s15, 0
    %p78 = por %p76, %p77
    %p79 = scmp.ne.s32.totalorder %s67, %s68
    %p80 = scmp.eq.s32.totalorder %s16, 1
    %p81 = por %p79, %p80
    %p83 = scmp.ne.s32.totalorder %s68, %s82
    %p84 = scmp.eq.s32.totalorder %s16, 0
    %p85 = por %p83, %p84
    %s87 = sadd.s32 %s86, 1
    %p90 = scmp.eq.s32.totalorder %s10, 1
    %p91 = scmp.ne.s32.totalorder %s86, %s88
    %p92 = scmp.eq.s32.totalorder %s10, 0
    %p93 = por %p91, %p92
    %p94 = scmp.ne.s32.totalorder %s86, %s88
    %p95 = scmp.eq.s32.totalorder %s15, 1
    %p96 = por %p94, %p95
    %p97 = scmp.ne.s32.totalorder %s88, %s89
    %p98 = scmp.eq.s32.totalorder %s15, 0
    %p99 = por %p97, %p98
    %p100 = scmp.ne.s32.totalorder %s88, %s89
    %p101 = scmp.eq.s32.totalorder %s16, 1
    %p102 = por %p100, %p101
    %p104 = scmp.ne.s32.totalorder %s89, %s103
    %p105 = scmp.eq.s32.totalorder %s16, 0
    %p106 = por %p104, %p105
    %s107 = ssub.s32 %s10, %s17
    %p108 = scmp.eq.s32.totalorder %s107, 0
    %s110 = sadd.s32 %s109, 1
    %s111 = scalar_select %p108, %s109, %s110
    %p114 = pneg %p108
    %p115 = scmp.eq.s32.totalorder %s10, 1
    %p116 = por %p114, %p115
    %p117 = scmp.ne.s32.totalorder %s109, %s112
    %p118 = scmp.eq.s32.totalorder %s10, 0
    %p119 = por %p117, %p118
    %p120 = scmp.ne.s32.totalorder %s109, %s112
    %p121 = scmp.eq.s32.totalorder %s15, 1
    %p122 = por %p120, %p121
    %p123 = scmp.ne.s32.totalorder %s112, %s113
    %p124 = scmp.eq.s32.totalorder %s15, 0
    %p125 = por %p123, %p124
    %p126 = scmp.ne.s32.totalorder %s112, %s113
    %p127 = scmp.eq.s32.totalorder %s16, 1
    %p128 = por %p126, %p127
    %p130 = scmp.ne.s32.totalorder %s113, %s129
    %p131 = scmp.eq.s32.totalorder %s16, 0
    %p132 = por %p130, %p131
    %p133 = scmp.le.s32.totalorder 1, %s10
    %p134 = scmp.lt.s32.totalorder %s10, 3
    %p135 = pnand %p133, %p134
    %p136 = pneg %p135
    // Predicated region
    $region9: #{vae_forward.8} parent=5 // pred_check
      _
    $region10: #{vae_forward.8} parent=5 // pred_check_branch
      %138 = sbr.rel (%p135) target = $region12
    $region11: #{vae_forward.8} parent=5 // pred_region
      %s139 = ssub.s32 %s10, 1
      // Predicated region
      $region13: #{vae_forward.8} parent=11 // pred_check
        %p140 = pneg %p57
      $region14: #{vae_forward.8} parent=11 // pred_check_branch
        %142 = sbr.rel (%p140) target = $region16
      $region15: #{vae_forward.8} parent=11 // pred_region
        _
      $region16: #{vae_forward.8} parent=11 // pred_fallthru
        _
      // Predicated region
      $region17: #{vae_forward.8} parent=11 // pred_check
        %p143 = pneg %p78
      $region18: #{vae_forward.8} parent=11 // pred_check_branch
        %145 = sbr.rel (%p143) target = $region20
      $region19: #{vae_forward.8} parent=11 // pred_region
        _
      $region20: #{vae_forward.8} parent=11 // pred_fallthru
        _
      // Predicated region
      $region21: #{vae_forward.8} parent=11 // pred_check
        %p146 = pneg %p99
      $region22: #{vae_forward.8} parent=11 // pred_check_branch
        %148 = sbr.rel (%p146) target = $region24
      $region23: #{vae_forward.8} parent=11 // pred_region
        _
      $region24: #{vae_forward.8} parent=11 // pred_fallthru
        _
    $region12: #{vae_forward.8} parent=5 // pred_fallthru
      _
    %p149 = scmp.lt.s32.totalorder %s10, 2
    // Predicated region
    $region25: #{vae_forward.8} parent=5 // pred_check
      %p150 = pneg %p149
    $region26: #{vae_forward.8} parent=5 // pred_check_branch
      %152 = sbr.rel (%p150) target = $region28
    $region27: #{vae_forward.8} parent=5 // pred_region
      // Predicated region
      $region29: #{vae_forward.8} parent=27 // pred_check
        %p153 = pneg %p30
      $region30: #{vae_forward.8} parent=27 // pred_check_branch
        %155 = sbr.rel (%p153) target = $region32
      $region31: #{vae_forward.8} parent=27 // pred_region
        %s156 = smul.u32 32, %s10
        %p157 = scmp.lt.s32.totalorder %s156, 63
        %s158 = scalar_select %p157, %s156, 63
        %s159 = smul.addr %s158, 4
        %s160 = scalar_lea.vmem %s0, %s159
        %s161 = smul.u32 32, %s10
      $region32: #{vae_forward.8} parent=27 // pred_fallthru
        _
    $region28: #{vae_forward.8} parent=5 // pred_fallthru
      _
    %p162 = scmp.le.s32.totalorder 1, %s10
    %p163 = scmp.lt.s32.totalorder %s10, 3
    %p164 = pnand %p162, %p163
    %p165 = pneg %p164
    // Predicated region
    $region33: #{vae_forward.8} parent=5 // pred_check
      _
    $region34: #{vae_forward.8} parent=5 // pred_check_branch
      %167 = sbr.rel (%p164) target = $region36
    $region35: #{vae_forward.8} parent=5 // pred_region
      %s168 = ssub.s32 %s10, 1
      %s169 = smul.u32 32, %s15
      %p170 = scmp.lt.s32.totalorder %s169, 63
      %s171 = scalar_select %p170, %s169, 63
      %s172 = smul.addr %s171, 4
      %s173 = scalar_lea.vmem %s0, %s172
      %p174 = pneg %p36
      %p175 = pneg %p33
      %p176 = pneg %p57
      %p177 = pneg %p54
      %p178 = pneg %p78
      %p179 = pneg %p75
      %p180 = pneg %p99
      %p181 = pneg %p96
      %p182 = pneg %p125
      %p183 = pneg %p122
      %s184 = smul.u32 32, %s15
      %p185 = scmp.lt.s32.totalorder %s184, 63
      %s186 = scalar_select %p185, %s184, 63
      %s187 = smul.addr %s186, 4
      %s188 = scalar_lea.vmem %s4, %s187
      %s189 = smul.u32 32, %s15
      %p190 = scmp.lt.s32.totalorder %s189, 63
      %s191 = scalar_select %p190, %s189, 63
      %s192 = smul.addr %s191, 4
      %s193 = scalar_lea.vmem %s0, %s192
      %s194 = smul.u32 32, %s15
      %s195 = smul.u32 32, %s15
      %p196 = scmp.lt.s32.totalorder %s195, 63
      %s197 = scalar_select %p196, %s195, 63
      %s198 = smul.addr %s197, 4
      %s199 = scalar_lea.vmem %s4, %s198
      %s200 = smul.u32 32, %s15
      %v202 = vld [vmem:[%s193] sm:$0xf]
      %v203 = vld [vmem:[%s193 + $0x4] sm:$0xf]
      %v204 = vld [vmem:[%s193 + $0x8] sm:$0xf]
      %v205 = vld [vmem:[%s193 + $0xc] sm:$0xf]
      %v206 = vld [vmem:[%s193 + $0x10] sm:$0xf]
      %v207 = vld [vmem:[%s193 + $0x14] sm:$0xf]
      %v208 = vld [vmem:[%s193 + $0x18] sm:$0xf]
      %v209 = vld [vmem:[%s193 + $0x1c] sm:$0xf]
      %v210 = vld [vmem:[%s193 + $0x20] sm:$0xf]
      %v211 = vld [vmem:[%s193 + $0x24] sm:$0xf]
      %v212 = vld [vmem:[%s193 + $0x28] sm:$0xf]
      %v213 = vld [vmem:[%s193 + $0x2c] sm:$0xf]
      %v214 = vld [vmem:[%s193 + $0x30] sm:$0xf]
      %v215 = vld [vmem:[%s193 + $0x34] sm:$0xf]
      %v216 = vld [vmem:[%s193 + $0x38] sm:$0xf]
      %v217 = vld [vmem:[%s193 + $0x3c] sm:$0xf]
      %v218 = vld [vmem:[%s193 + $0x40] sm:$0xf]
      %v219 = vld [vmem:[%s193 + $0x44] sm:$0xf]
      %v220 = vld [vmem:[%s193 + $0x48] sm:$0xf]
      %v221 = vld [vmem:[%s193 + $0x4c] sm:$0xf]
      %v222 = vld [vmem:[%s193 + $0x50] sm:$0xf]
      %v223 = vld [vmem:[%s193 + $0x54] sm:$0xf]
      %v224 = vld [vmem:[%s193 + $0x58] sm:$0xf]
      %v225 = vld [vmem:[%s193 + $0x5c] sm:$0xf]
      %v226 = vld [vmem:[%s193 + $0x60] sm:$0xf]
      %v227 = vld [vmem:[%s193 + $0x64] sm:$0xf]
      %v228 = vld [vmem:[%s193 + $0x68] sm:$0xf]
      %v229 = vld [vmem:[%s193 + $0x6c] sm:$0xf]
      %v230 = vld [vmem:[%s193 + $0x70] sm:$0xf]
      %v231 = vld [vmem:[%s193 + $0x74] sm:$0xf]
      %v232 = vld [vmem:[%s193 + $0x78] sm:$0xf]
      %v233 = vld [vmem:[%s193 + $0x7c] sm:$0xf]
      %v234 = vld [vmem:[%s1] sm:$0xf]
      %v267 = vunpack.c.l.b16 %v202
      %v268 = vunpack.c.l.b16 %v203
      %v269 = vunpack.c.l.b16 %v204
      %v270 = vunpack.c.l.b16 %v205
      %v271 = vunpack.c.l.b16 %v206
      %v272 = vunpack.c.l.b16 %v207
      %v273 = vunpack.c.l.b16 %v208
      %v274 = vunpack.c.l.b16 %v209
      %v275 = vunpack.c.l.b16 %v210
      %v276 = vunpack.c.l.b16 %v211
      %v277 = vunpack.c.l.b16 %v212
      %v278 = vunpack.c.l.b16 %v213
      %v279 = vunpack.c.l.b16 %v214
      %v280 = vunpack.c.l.b16 %v215
      %v281 = vunpack.c.l.b16 %v216
      %v282 = vunpack.c.l.b16 %v217
      %v283 = vunpack.c.l.b16 %v218
      %v284 = vunpack.c.l.b16 %v219
      %v285 = vunpack.c.l.b16 %v220
      %v286 = vunpack.c.l.b16 %v221
      %v287 = vunpack.c.l.b16 %v222
      %v288 = vunpack.c.l.b16 %v223
      %v289 = vunpack.c.l.b16 %v224
      %v290 = vunpack.c.l.b16 %v225
      %v291 = vunpack.c.l.b16 %v226
      %v292 = vunpack.c.l.b16 %v227
      %v293 = vunpack.c.l.b16 %v228
      %v294 = vunpack.c.l.b16 %v229
      %v295 = vunpack.c.l.b16 %v230
      %v296 = vunpack.c.l.b16 %v231
      %v297 = vunpack.c.l.b16 %v232
      %v298 = vunpack.c.l.b16 %v233
      %v299 = vpack.c.b16 %v268, %v267
      %v300 = vpack.c.b16 %v270, %v269
      %v301 = vpack.c.b16 %v272, %v271
      %v302 = vpack.c.b16 %v274, %v273
      %v303 = vpack.c.b16 %v276, %v275
      %v304 = vpack.c.b16 %v278, %v277
      %v305 = vpack.c.b16 %v280, %v279
      %v306 = vpack.c.b16 %v282, %v281
      %v307 = vpack.c.b16 %v284, %v283
      %v308 = vpack.c.b16 %v286, %v285
      %v309 = vpack.c.b16 %v288, %v287
      %v310 = vpack.c.b16 %v290, %v289
      %v311 = vpack.c.b16 %v292, %v291
      %v312 = vpack.c.b16 %v294, %v293
      %v313 = vpack.c.b16 %v296, %v295
      %v314 = vpack.c.b16 %v298, %v297
      %vm315 = vcmask 64512
      %v317 = vsel %vm315, %v299, 0
      %v320 = vsel %vm315, %v300, 0
      %v323 = vsel %vm315, %v301, 0
      %v326 = vsel %vm315, %v302, 0
      %v329 = vsel %vm315, %v303, 0
      %v332 = vsel %vm315, %v304, 0
      %v335 = vsel %vm315, %v305, 0
      %v338 = vsel %vm315, %v306, 0
      %v341 = vsel %vm315, %v307, 0
      %v344 = vsel %vm315, %v308, 0
      %v347 = vsel %vm315, %v309, 0
      %v350 = vsel %vm315, %v310, 0
      %v353 = vsel %vm315, %v311, 0
      %v356 = vsel %vm315, %v312, 0
      %v359 = vsel %vm315, %v313, 0
      %v362 = vsel %vm315, %v314, 0
      %vm364 = vcmask 1043456
      %v366 = vsel %vm364, %v234, 0
      %368 = vmatprep.subr.bf16.mxu0 0
      %369 = vmatpush1.bf16.msra.mxu0 0
      %370 = vmatprep.subr.bf16.mxu0 0
      %371 = vmatpush1.bf16.msra.mxu0 0
      %372 = vmatprep.subr.bf16.mxu0 0
      %373 = vmatpush1.bf16.msra.mxu0 0
      %374 = vmatprep.subr.bf16.mxu0 0
      %375 = vmatpush1.bf16.msra.mxu0 0
      %376 = vmatprep.subr.bf16.mxu0 0
      %377 = vmatpush1.bf16.msra.mxu0 0
      %378 = vmatprep.subr.bf16.mxu0 0
      %379 = vmatpush1.bf16.msra.mxu0 0
      %380 = vmatprep.subr.bf16.mxu0 0
      %381 = vmatpush1.bf16.msra.mxu0 0
      %382 = vmatprep.subr.bf16.mxu0 0
      %383 = vmatpush1.bf16.msra.mxu0 %v366
      %384 = vmatprep.subr.bf16.mxu0 0
      %385 = vmatpush2.bf16.msra.mxu0 0
      %386 = vmatprep.subr.bf16.mxu0 0
      %387 = vmatpush2.bf16.msra.mxu0 0
      %388 = vmatprep.subr.bf16.mxu0 0
      %389 = vmatpush2.bf16.msra.mxu0 0
      %390 = vmatprep.subr.bf16.mxu0 0
      %391 = vmatpush2.bf16.msra.mxu0 0
      %392 = vmatprep.subr.bf16.mxu0 0
      %393 = vmatpush2.bf16.msra.mxu0 0
      %394 = vmatprep.subr.bf16.mxu0 0
      %395 = vmatpush2.bf16.msra.mxu0 0
      %396 = vmatprep.subr.bf16.mxu0 0
      %397 = vmatpush2.bf16.msra.mxu0 0
      %398 = vmatprep.subr.bf16.mxu0 0
      %399 = vmatpush2.bf16.msra.mxu0 0
      %400 = vmatprep.mubr.bf16.mxu0 0
      %401 = vmatmul.mubr.bf16.gmra.mxu0 %v317
      %v402 = vpop.f32.mrf.mxu0
      %v403 = vadd.f32 0.0, %v402
      %v404 = vpop.f32.mrf.mxu0
      %v405 = vpop.f32.mrf.mxu0
      %v406 = vadd.f32 0.0, %v405
      %v407 = vpop.f32.mrf.mxu0
      %408 = vmatprep.mubr.bf16.mxu0 0
      %409 = vmatmul.mubr.bf16.gmra.mxu0 %v320
      %v410 = vpop.f32.mrf.mxu0
      %v411 = vadd.f32 0.0, %v410
      %v412 = vpop.f32.mrf.mxu0
      %v413 = vpop.f32.mrf.mxu0
      %v414 = vadd.f32 0.0, %v413
      %v415 = vpop.f32.mrf.mxu0
      %416 = vmatprep.mubr.bf16.mxu0 0
      %417 = vmatmul.mubr.bf16.gmra.mxu0 %v323
      %v418 = vpop.f32.mrf.mxu0
      %v419 = vadd.f32 0.0, %v418
      %v420 = vpop.f32.mrf.mxu0
      %v421 = vpop.f32.mrf.mxu0
      %v422 = vadd.f32 0.0, %v421
      %v423 = vpop.f32.mrf.mxu0
      %424 = vmatprep.mubr.bf16.mxu0 0
      %425 = vmatmul.mubr.bf16.gmra.mxu0 %v326
      %v426 = vpop.f32.mrf.mxu0
      %v427 = vadd.f32 0.0, %v426
      %v428 = vpop.f32.mrf.mxu0
      %v429 = vpop.f32.mrf.mxu0
      %v430 = vadd.f32 0.0, %v429
      %v431 = vpop.f32.mrf.mxu0
      %432 = vmatprep.mubr.bf16.mxu0 0
      %433 = vmatmul.mubr.bf16.gmra.mxu0 %v329
      %v434 = vpop.f32.mrf.mxu0
      %v435 = vadd.f32 0.0, %v434
      %v436 = vpop.f32.mrf.mxu0
      %v437 = vpop.f32.mrf.mxu0
      %v438 = vadd.f32 0.0, %v437
      %v439 = vpop.f32.mrf.mxu0
      %440 = vmatprep.mubr.bf16.mxu0 0
      %441 = vmatmul.mubr.bf16.gmra.mxu0 %v332
      %v442 = vpop.f32.mrf.mxu0
      %v443 = vadd.f32 0.0, %v442
      %v444 = vpop.f32.mrf.mxu0
      %v445 = vpop.f32.mrf.mxu0
      %v446 = vadd.f32 0.0, %v445
      %v447 = vpop.f32.mrf.mxu0
      %448 = vmatprep.mubr.bf16.mxu0 0
      %449 = vmatmul.mubr.bf16.gmra.mxu0 %v335
      %v450 = vpop.f32.mrf.mxu0
      %v451 = vadd.f32 0.0, %v450
      %v452 = vpop.f32.mrf.mxu0
      %v453 = vpop.f32.mrf.mxu0
      %v454 = vadd.f32 0.0, %v453
      %v455 = vpop.f32.mrf.mxu0
      %456 = vmatprep.mubr.bf16.mxu0 0
      %457 = vmatmul.mubr.bf16.gmra.mxu0 %v338
      %v458 = vpop.f32.mrf.mxu0
      %v459 = vadd.f32 0.0, %v458
      %v460 = vpop.f32.mrf.mxu0
      %v461 = vpop.f32.mrf.mxu0
      %v462 = vadd.f32 0.0, %v461
      %v463 = vpop.f32.mrf.mxu0
      %464 = vmatprep.mubr.bf16.mxu0 0
      %465 = vmatmul.mubr.bf16.gmra.mxu0 %v341
      %v466 = vpop.f32.mrf.mxu0
      %v467 = vadd.f32 0.0, %v466
      %v468 = vpop.f32.mrf.mxu0
      %v469 = vpop.f32.mrf.mxu0
      %v470 = vadd.f32 0.0, %v469
      %v471 = vpop.f32.mrf.mxu0
      %472 = vmatprep.mubr.bf16.mxu0 0
      %473 = vmatmul.mubr.bf16.gmra.mxu0 %v344
      %v474 = vpop.f32.mrf.mxu0
      %v475 = vadd.f32 0.0, %v474
      %v476 = vpop.f32.mrf.mxu0
      %v477 = vpop.f32.mrf.mxu0
      %v478 = vadd.f32 0.0, %v477
      %v479 = vpop.f32.mrf.mxu0
      %480 = vmatprep.mubr.bf16.mxu0 0
      %481 = vmatmul.mubr.bf16.gmra.mxu0 %v347
      %v482 = vpop.f32.mrf.mxu0
      %v483 = vadd.f32 0.0, %v482
      %v484 = vpop.f32.mrf.mxu0
      %v485 = vpop.f32.mrf.mxu0
      %v486 = vadd.f32 0.0, %v485
      %v487 = vpop.f32.mrf.mxu0
      %488 = vmatprep.mubr.bf16.mxu0 0
      %489 = vmatmul.mubr.bf16.gmra.mxu0 %v350
      %v490 = vpop.f32.mrf.mxu0
      %v491 = vadd.f32 0.0, %v490
      %v492 = vpop.f32.mrf.mxu0
      %v493 = vpop.f32.mrf.mxu0
      %v494 = vadd.f32 0.0, %v493
      %v495 = vpop.f32.mrf.mxu0
      %496 = vmatprep.mubr.bf16.mxu0 0
      %497 = vmatmul.mubr.bf16.gmra.mxu0 %v353
      %v498 = vpop.f32.mrf.mxu0
      %v499 = vadd.f32 0.0, %v498
      %v500 = vpop.f32.mrf.mxu0
      %v501 = vpop.f32.mrf.mxu0
      %v502 = vadd.f32 0.0, %v501
      %v503 = vpop.f32.mrf.mxu0
      %504 = vmatprep.mubr.bf16.mxu0 0
      %505 = vmatmul.mubr.bf16.gmra.mxu0 %v356
      %v506 = vpop.f32.mrf.mxu0
      %v507 = vadd.f32 0.0, %v506
      %v508 = vpop.f32.mrf.mxu0
      %v509 = vpop.f32.mrf.mxu0
      %v510 = vadd.f32 0.0, %v509
      %v511 = vpop.f32.mrf.mxu0
      %512 = vmatprep.mubr.bf16.mxu0 0
      %513 = vmatmul.mubr.bf16.gmra.mxu0 %v359
      %v514 = vpop.f32.mrf.mxu0
      %v515 = vadd.f32 0.0, %v514
      %v516 = vpop.f32.mrf.mxu0
      %v517 = vpop.f32.mrf.mxu0
      %v518 = vadd.f32 0.0, %v517
      %v519 = vpop.f32.mrf.mxu0
      %520 = vmatprep.mubr.bf16.mxu0 0
      %521 = vmatmul.mubr.bf16.gmra.mxu0 %v362
      %v522 = vpop.f32.mrf.mxu0
      %v523 = vadd.f32 0.0, %v522
      %v524 = vpop.f32.mrf.mxu0
      %v525 = vpop.f32.mrf.mxu0
      %v526 = vadd.f32 0.0, %v525
      %v527 = vpop.f32.mrf.mxu0
      %528 = vdwg.mxu0
      %v529 = vld [vmem:[%s2] sm:$0x1]
      %v531 = vlaneseq
      %v532 = vshrl.u32 %v531, 7
      %v533 = vsub.s32 0, %v532
      %v534 = vrot.slane %v529, %v533
      %v536 = vmul.f32 %v403, %v534
      %v537 = vmul.f32 %v406, %v534
      %v538 = vmul.f32 %v411, %v534
      %v539 = vmul.f32 %v414, %v534
      %v540 = vmul.f32 %v419, %v534
      %v541 = vmul.f32 %v422, %v534
      %v542 = vmul.f32 %v427, %v534
      %v543 = vmul.f32 %v430, %v534
      %v544 = vmul.f32 %v435, %v534
      %v545 = vmul.f32 %v438, %v534
      %v546 = vmul.f32 %v443, %v534
      %v547 = vmul.f32 %v446, %v534
      %v548 = vmul.f32 %v451, %v534
      %v549 = vmul.f32 %v454, %v534
      %v550 = vmul.f32 %v459, %v534
      %v551 = vmul.f32 %v462, %v534
      %v552 = vmul.f32 %v467, %v534
      %v553 = vmul.f32 %v470, %v534
      %v554 = vmul.f32 %v475, %v534
      %v555 = vmul.f32 %v478, %v534
      %v556 = vmul.f32 %v483, %v534
      %v557 = vmul.f32 %v486, %v534
      %v558 = vmul.f32 %v491, %v534
      %v559 = vmul.f32 %v494, %v534
      %v560 = vmul.f32 %v499, %v534
      %v561 = vmul.f32 %v502, %v534
      %v562 = vmul.f32 %v507, %v534
      %v563 = vmul.f32 %v510, %v534
      %v564 = vmul.f32 %v515, %v534
      %v565 = vmul.f32 %v518, %v534
      %v566 = vmul.f32 %v523, %v534
      %v567 = vmul.f32 %v526, %v534
      %v568 = vld [vmem:[%s3] sm:$0x1]
      %v570 = vlaneseq
      %v571 = vshrl.u32 %v570, 7
      %v572 = vsub.s32 0, %v571
      %v573 = vrot.slane %v568, %v572
      %v575 = vadd.f32 %v536, %v573
      %v576 = vadd.f32 %v537, %v573
      %v577 = vadd.f32 %v538, %v573
      %v578 = vadd.f32 %v539, %v573
      %v579 = vadd.f32 %v540, %v573
      %v580 = vadd.f32 %v541, %v573
      %v581 = vadd.f32 %v542, %v573
      %v582 = vadd.f32 %v543, %v573
      %v583 = vadd.f32 %v544, %v573
      %v584 = vadd.f32 %v545, %v573
      %v585 = vadd.f32 %v546, %v573
      %v586 = vadd.f32 %v547, %v573
      %v587 = vadd.f32 %v548, %v573
      %v588 = vadd.f32 %v549, %v573
      %v589 = vadd.f32 %v550, %v573
      %v590 = vadd.f32 %v551, %v573
      %v591 = vadd.f32 %v552, %v573
      %v592 = vadd.f32 %v553, %v573
      %v593 = vadd.f32 %v554, %v573
      %v594 = vadd.f32 %v555, %v573
      %v595 = vadd.f32 %v556, %v573
      %v596 = vadd.f32 %v557, %v573
      %v597 = vadd.f32 %v558, %v573
      %v598 = vadd.f32 %v559, %v573
      %v599 = vadd.f32 %v560, %v573
      %v600 = vadd.f32 %v561, %v573
      %v601 = vadd.f32 %v562, %v573
      %v602 = vadd.f32 %v563, %v573
      %v603 = vadd.f32 %v564, %v573
      %v604 = vadd.f32 %v565, %v573
      %v605 = vadd.f32 %v566, %v573
      %v606 = vadd.f32 %v567, %v573
      %v607 = vmax.f32 %v575, 0.0
      %v608 = vmax.f32 %v576, 0.0
      %v609 = vmax.f32 %v577, 0.0
      %v610 = vmax.f32 %v578, 0.0
      %v611 = vmax.f32 %v579, 0.0
      %v612 = vmax.f32 %v580, 0.0
      %v613 = vmax.f32 %v581, 0.0
      %v614 = vmax.f32 %v582, 0.0
      %v615 = vmax.f32 %v583, 0.0
      %v616 = vmax.f32 %v584, 0.0
      %v617 = vmax.f32 %v585, 0.0
      %v618 = vmax.f32 %v586, 0.0
      %v619 = vmax.f32 %v587, 0.0
      %v620 = vmax.f32 %v588, 0.0
      %v621 = vmax.f32 %v589, 0.0
      %v622 = vmax.f32 %v590, 0.0
      %v623 = vmax.f32 %v591, 0.0
      %v624 = vmax.f32 %v592, 0.0
      %v625 = vmax.f32 %v593, 0.0
      %v626 = vmax.f32 %v594, 0.0
      %v627 = vmax.f32 %v595, 0.0
      %v628 = vmax.f32 %v596, 0.0
      %v629 = vmax.f32 %v597, 0.0
      %v630 = vmax.f32 %v598, 0.0
      %v631 = vmax.f32 %v599, 0.0
      %v632 = vmax.f32 %v600, 0.0
      %v633 = vmax.f32 %v601, 0.0
      %v634 = vmax.f32 %v602, 0.0
      %v635 = vmax.f32 %v603, 0.0
      %v636 = vmax.f32 %v604, 0.0
      %v637 = vmax.f32 %v605, 0.0
      %v638 = vmax.f32 %v606, 0.0
      %v639 = vmin.f32 %v607, 6.0
      %v640 = vmin.f32 %v608, 6.0
      %v641 = vmin.f32 %v609, 6.0
      %v642 = vmin.f32 %v610, 6.0
      %v643 = vmin.f32 %v611, 6.0
      %v644 = vmin.f32 %v612, 6.0
      %v645 = vmin.f32 %v613, 6.0
      %v646 = vmin.f32 %v614, 6.0
      %v647 = vmin.f32 %v615, 6.0
      %v648 = vmin.f32 %v616, 6.0
      %v649 = vmin.f32 %v617, 6.0
      %v650 = vmin.f32 %v618, 6.0
      %v651 = vmin.f32 %v619, 6.0
      %v652 = vmin.f32 %v620, 6.0
      %v653 = vmin.f32 %v621, 6.0
      %v654 = vmin.f32 %v622, 6.0
      %v655 = vmin.f32 %v623, 6.0
      %v656 = vmin.f32 %v624, 6.0
      %v657 = vmin.f32 %v625, 6.0
      %v658 = vmin.f32 %v626, 6.0
      %v659 = vmin.f32 %v627, 6.0
      %v660 = vmin.f32 %v628, 6.0
      %v661 = vmin.f32 %v629, 6.0
      %v662 = vmin.f32 %v630, 6.0
      %v663 = vmin.f32 %v631, 6.0
      %v664 = vmin.f32 %v632, 6.0
      %v665 = vmin.f32 %v633, 6.0
      %v666 = vmin.f32 %v634, 6.0
      %v667 = vmin.f32 %v635, 6.0
      %v668 = vmin.f32 %v636, 6.0
      %v669 = vmin.f32 %v637, 6.0
      %v670 = vmin.f32 %v638, 6.0
      %v671 = vpack.c.bf16 %v640, %v639
      %v672 = vpack.c.bf16 %v642, %v641
      %v673 = vpack.c.bf16 %v644, %v643
      %v674 = vpack.c.bf16 %v646, %v645
      %v675 = vpack.c.bf16 %v648, %v647
      %v676 = vpack.c.bf16 %v650, %v649
      %v677 = vpack.c.bf16 %v652, %v651
      %v678 = vpack.c.bf16 %v654, %v653
      %v679 = vpack.c.bf16 %v656, %v655
      %v680 = vpack.c.bf16 %v658, %v657
      %v681 = vpack.c.bf16 %v660, %v659
      %v682 = vpack.c.bf16 %v662, %v661
      %v683 = vpack.c.bf16 %v664, %v663
      %v684 = vpack.c.bf16 %v666, %v665
      %v685 = vpack.c.bf16 %v668, %v667
      %v686 = vpack.c.bf16 %v670, %v669
      %v703 = vunpack.c.l.b16 %v671
      %v704 = vunpack.c.h.b16 %v671
      %v705 = vunpack.c.l.b16 %v672
      %v706 = vunpack.c.h.b16 %v672
      %v707 = vunpack.c.l.b16 %v673
      %v708 = vunpack.c.h.b16 %v673
      %v709 = vunpack.c.l.b16 %v674
      %v710 = vunpack.c.h.b16 %v674
      %v711 = vunpack.c.l.b16 %v675
      %v712 = vunpack.c.h.b16 %v675
      %v713 = vunpack.c.l.b16 %v676
      %v714 = vunpack.c.h.b16 %v676
      %v715 = vunpack.c.l.b16 %v677
      %v716 = vunpack.c.h.b16 %v677
      %v717 = vunpack.c.l.b16 %v678
      %v718 = vunpack.c.h.b16 %v678
      %v719 = vunpack.c.l.b16 %v679
      %v720 = vunpack.c.h.b16 %v679
      %v721 = vunpack.c.l.b16 %v680
      %v722 = vunpack.c.h.b16 %v680
      %v723 = vunpack.c.l.b16 %v681
      %v724 = vunpack.c.h.b16 %v681
      %v725 = vunpack.c.l.b16 %v682
      %v726 = vunpack.c.h.b16 %v682
      %v727 = vunpack.c.l.b16 %v683
      %v728 = vunpack.c.h.b16 %v683
      %v729 = vunpack.c.l.b16 %v684
      %v730 = vunpack.c.h.b16 %v684
      %v731 = vunpack.c.l.b16 %v685
      %v732 = vunpack.c.h.b16 %v685
      %v733 = vunpack.c.l.b16 %v686
      %v734 = vunpack.c.h.b16 %v686
      %v735 = vpack.c.b16 %v703, %v703
      %v736 = vpack.c.b16 %v704, %v704
      %v737 = vpack.c.b16 %v705, %v705
      %v738 = vpack.c.b16 %v706, %v706
      %v739 = vpack.c.b16 %v707, %v707
      %v740 = vpack.c.b16 %v708, %v708
      %v741 = vpack.c.b16 %v709, %v709
      %v742 = vpack.c.b16 %v710, %v710
      %v743 = vpack.c.b16 %v711, %v711
      %v744 = vpack.c.b16 %v712, %v712
      %v745 = vpack.c.b16 %v713, %v713
      %v746 = vpack.c.b16 %v714, %v714
      %v747 = vpack.c.b16 %v715, %v715
      %v748 = vpack.c.b16 %v716, %v716
      %v749 = vpack.c.b16 %v717, %v717
      %v750 = vpack.c.b16 %v718, %v718
      %v751 = vpack.c.b16 %v719, %v719
      %v752 = vpack.c.b16 %v720, %v720
      %v753 = vpack.c.b16 %v721, %v721
      %v754 = vpack.c.b16 %v722, %v722
      %v755 = vpack.c.b16 %v723, %v723
      %v756 = vpack.c.b16 %v724, %v724
      %v757 = vpack.c.b16 %v725, %v725
      %v758 = vpack.c.b16 %v726, %v726
      %v759 = vpack.c.b16 %v727, %v727
      %v760 = vpack.c.b16 %v728, %v728
      %v761 = vpack.c.b16 %v729, %v729
      %v762 = vpack.c.b16 %v730, %v730
      %v763 = vpack.c.b16 %v731, %v731
      %v764 = vpack.c.b16 %v732, %v732
      %v765 = vpack.c.b16 %v733, %v733
      %v766 = vpack.c.b16 %v734, %v734
      %799 = vst [vmem:[%s199] sm:$0xf] %v735
      %800 = vst [vmem:[%s199 + $0x4] sm:$0xf] %v736
      %801 = vst [vmem:[%s199 + $0x8] sm:$0xf] %v737
      %802 = vst [vmem:[%s199 + $0xc] sm:$0xf] %v738
      %803 = vst [vmem:[%s199 + $0x10] sm:$0xf] %v739
      %804 = vst [vmem:[%s199 + $0x14] sm:$0xf] %v740
      %805 = vst [vmem:[%s199 + $0x18] sm:$0xf] %v741
      %806 = vst [vmem:[%s199 + $0x1c] sm:$0xf] %v742
      %807 = vst [vmem:[%s199 + $0x20] sm:$0xf] %v743
      %808 = vst [vmem:[%s199 + $0x24] sm:$0xf] %v744
      %809 = vst [vmem:[%s199 + $0x28] sm:$0xf] %v745
      %810 = vst [vmem:[%s199 + $0x2c] sm:$0xf] %v746
      %811 = vst [vmem:[%s199 + $0x30] sm:$0xf] %v747
      %812 = vst [vmem:[%s199 + $0x34] sm:$0xf] %v748
      %813 = vst [vmem:[%s199 + $0x38] sm:$0xf] %v749
      %814 = vst [vmem:[%s199 + $0x3c] sm:$0xf] %v750
      %815 = vst [vmem:[%s199 + $0x40] sm:$0xf] %v751
      %816 = vst [vmem:[%s199 + $0x44] sm:$0xf] %v752
      %817 = vst [vmem:[%s199 + $0x48] sm:$0xf] %v753
      %818 = vst [vmem:[%s199 + $0x4c] sm:$0xf] %v754
      %819 = vst [vmem:[%s199 + $0x50] sm:$0xf] %v755
      %820 = vst [vmem:[%s199 + $0x54] sm:$0xf] %v756
      %821 = vst [vmem:[%s199 + $0x58] sm:$0xf] %v757
      %822 = vst [vmem:[%s199 + $0x5c] sm:$0xf] %v758
      %823 = vst [vmem:[%s199 + $0x60] sm:$0xf] %v759
      %824 = vst [vmem:[%s199 + $0x64] sm:$0xf] %v760
      %825 = vst [vmem:[%s199 + $0x68] sm:$0xf] %v761
      %826 = vst [vmem:[%s199 + $0x6c] sm:$0xf] %v762
      %827 = vst [vmem:[%s199 + $0x70] sm:$0xf] %v763
      %828 = vst [vmem:[%s199 + $0x74] sm:$0xf] %v764
      %829 = vst [vmem:[%s199 + $0x78] sm:$0xf] %v765
      %830 = vst [vmem:[%s199 + $0x7c] sm:$0xf] %v766
      %s831 = smul.u32 32, %s15
      %p832 = scmp.lt.s32.totalorder %s831, 63
      %s833 = scalar_select %p832, %s831, 63
      %s834 = smul.addr %s833, 4
      %s835 = scalar_lea.vmem %s4, %s834
      // Predicated region
      $region37: #{vae_forward.8} parent=35 // pred_check
        %p836 = pneg %p122
      $region38: #{vae_forward.8} parent=35 // pred_check_branch
        %838 = sbr.rel (%p836) target = $region40
      $region39: #{vae_forward.8} parent=35 // pred_region
        %s839 = smul.u32 32, %s15
      $region40: #{vae_forward.8} parent=35 // pred_fallthru
        _
    $region36: #{vae_forward.8} parent=5 // pred_fallthru
      _
    %p840 = scmp.le.s32.totalorder 2, %s10
    // Predicated region
    $region41: #{vae_forward.8} parent=5 // pred_check
      %p841 = pneg %p840
    $region42: #{vae_forward.8} parent=5 // pred_check_branch
      %843 = sbr.rel (%p841) target = $region44
    $region43: #{vae_forward.8} parent=5 // pred_region
      %s844 = ssub.s32 %s10, 2
      // Predicated region
      $region45: #{vae_forward.8} parent=43 // pred_check
        %p845 = pneg %p128
      $region46: #{vae_forward.8} parent=43 // pred_check_branch
        %847 = sbr.rel (%p845) target = $region48
      $region47: #{vae_forward.8} parent=43 // pred_region
        %s848 = smul.u32 32, %s16
        %p849 = scmp.lt.s32.totalorder %s848, 63
        %s850 = scalar_select %p849, %s848, 63
        %s851 = smul.addr %s850, 4
        %s852 = scalar_lea.vmem %s4, %s851
      $region48: #{vae_forward.8} parent=43 // pred_fallthru
        _
    $region44: #{vae_forward.8} parent=5 // pred_fallthru
      _
  $region6: #{vae_forward.8} parent=0 // loop_footer
    %s14 = sadd.s32 1, %s10
  $region7: #{vae_forward.8} parent=0 // loop_footer_branch
    %9 = sbr.rel target = $region3
  $region8: #{vae_forward.8} parent=0 // loop_exit
    _

// kernel: vae_forward.7
$region0: #{vae_forward.7}
  #allocation0 [shape = 'u32[]', space=smem, size = 0x4, offset = 0x4, fixed_abs, tag = 'smem constant byte address 0x4 - core index']
  #allocation1 [shape = 'u32[144,128]{1,0:T(1,128)}', space=vmem, size = 0x12000, scoped, tag = 'internal scratch']
  %s0 = inlined_call_operand.vmem [shape: bf16[512,450], index: 0, kind: input, shape index: {}]
  %s1 = inlined_call_operand.vmem [shape: bf16[450,128], index: 1, kind: input, shape index: {}]
  %s2 = inlined_call_operand.vmem [shape: f32[1,128], index: 2, kind: input, shape index: {}]
  %s3 = inlined_call_operand.vmem [shape: f32[1,128], index: 3, kind: input, shape index: {}]
  %s4 = inlined_call_operand.vmem [shape: bf16[128,128], index: 4, kind: input, shape index: {}]
  %s5 = inlined_call_operand.vmem [shape: f32[1,128], index: 5, kind: input, shape index: {}]
  %s6 = inlined_call_operand.vmem [shape: f32[1,128], index: 6, kind: input, shape index: {}]
  %s7 = inlined_call_operand.vmem [shape: bf16[512,128], index: 7, kind: output, shape index: {}]
  %s8 = sld [smem:[#allocation0]]
  $region61: #{vae_forward.7} parent=0
    _
  %s10 = ssub.s32 1, %s8
  %s11 = scalar_select 0, %s10, %s8
  loop: start=0, step=1, limit=4
  $region2: #{vae_forward.7} parent=0 // loop_pre_header
    _
  $region3: #{vae_forward.7} parent=0 // loop_header
    %s13 = sphi 0, %s17
    %p14 = scmp.ge.s32.totalorder %s13, 4
    %s23 = sphi 0, %s25
    %s26 = sphi 0, %s23
    %s27 = sphi 0, %s26
    %s43 = sphi 0, %s27
    %s47 = sphi 0, %s47
    %s49 = sphi 0, %s47
    %s50 = sphi 0, %s49
    %s64 = sphi 0, %s50
    %s68 = sphi 0, %s68
    %s70 = sphi 0, %s68
    %s71 = sphi 0, %s70
    %s85 = sphi 0, %s71
    %s89 = sphi 0, %s89
    %s91 = sphi 0, %s89
    %s92 = sphi 0, %s91
    %s106 = sphi 0, %s92
    %s110 = sphi 0, %s110
    %s112 = sphi 0, %s110
    %s113 = sphi 0, %s112
    %s127 = sphi 0, %s113
    %s131 = sphi 0, %s131
    %s133 = sphi 0, %s131
    %s134 = sphi 0, %s133
    %s148 = sphi 0, %s134
    %s152 = sphi 0, %s152
    %s154 = sphi 0, %s152
    %s155 = sphi 0, %s154
    %s169 = sphi 0, %s155
    %s175 = sphi 0, %s177
    %s178 = sphi 0, %s175
    %s179 = sphi 0, %s178
    %s195 = sphi 0, %s179
  $region4: #{vae_forward.7} parent=0 // loop_header_branch
    %16 = sbr.rel (%p14) target = $region8
  $region5: #{vae_forward.7} parent=0 // loop_body
    %s18 = ssub.s32 %s13, 1
    %s19 = ssub.s32 %s13, 2
    %s20 = sadd.s32 %s13, 1
    %s21 = ssub.s32 %s13, %s20
    %p22 = scmp.eq.s32.totalorder %s21, 0
    %s24 = sadd.s32 %s23, 1
    %s25 = scalar_select %p22, %s23, %s24
    %p28 = pneg %p22
    %p29 = scmp.eq.s32.totalorder %s13, 1
    %p30 = por %p28, %p29
    %p31 = scmp.ne.s32.totalorder %s23, %s26
    %p32 = scmp.eq.s32.totalorder %s13, 0
    %p33 = por %p31, %p32
    %p34 = scmp.ne.s32.totalorder %s23, %s26
    %p35 = scmp.eq.s32.totalorder %s18, 1
    %p36 = por %p34, %p35
    %p37 = scmp.ne.s32.totalorder %s26, %s27
    %p38 = scmp.eq.s32.totalorder %s18, 0
    %p39 = por %p37, %p38
    %p40 = scmp.ne.s32.totalorder %s26, %s27
    %p41 = scmp.eq.s32.totalorder %s19, 1
    %p42 = por %p40, %p41
    %p44 = scmp.ne.s32.totalorder %s27, %s43
    %p45 = scmp.eq.s32.totalorder %s19, 0
    %p46 = por %p44, %p45
    %s48 = sadd.s32 %s47, 1
    %p51 = scmp.eq.s32.totalorder %s13, 1
    %p52 = scmp.ne.s32.totalorder %s47, %s49
    %p53 = scmp.eq.s32.totalorder %s13, 0
    %p54 = por %p52, %p53
    %p55 = scmp.ne.s32.totalorder %s47, %s49
    %p56 = scmp.eq.s32.totalorder %s18, 1
    %p57 = por %p55, %p56
    %p58 = scmp.ne.s32.totalorder %s49, %s50
    %p59 = scmp.eq.s32.totalorder %s18, 0
    %p60 = por %p58, %p59
    %p61 = scmp.ne.s32.totalorder %s49, %s50
    %p62 = scmp.eq.s32.totalorder %s19, 1
    %p63 = por %p61, %p62
    %p65 = scmp.ne.s32.totalorder %s50, %s64
    %p66 = scmp.eq.s32.totalorder %s19, 0
    %p67 = por %p65, %p66
    %s69 = sadd.s32 %s68, 1
    %p72 = scmp.eq.s32.totalorder %s13, 1
    %p73 = scmp.ne.s32.totalorder %s68, %s70
    %p74 = scmp.eq.s32.totalorder %s13, 0
    %p75 = por %p73, %p74
    %p76 = scmp.ne.s32.totalorder %s68, %s70
    %p77 = scmp.eq.s32.totalorder %s18, 1
    %p78 = por %p76, %p77
    %p79 = scmp.ne.s32.totalorder %s70, %s71
    %p80 = scmp.eq.s32.totalorder %s18, 0
    %p81 = por %p79, %p80
    %p82 = scmp.ne.s32.totalorder %s70, %s71
    %p83 = scmp.eq.s32.totalorder %s19, 1
    %p84 = por %p82, %p83
    %p86 = scmp.ne.s32.totalorder %s71, %s85
    %p87 = scmp.eq.s32.totalorder %s19, 0
    %p88 = por %p86, %p87
    %s90 = sadd.s32 %s89, 1
    %p93 = scmp.eq.s32.totalorder %s13, 1
    %p94 = scmp.ne.s32.totalorder %s89, %s91
    %p95 = scmp.eq.s32.totalorder %s13, 0
    %p96 = por %p94, %p95
    %p97 = scmp.ne.s32.totalorder %s89, %s91
    %p98 = scmp.eq.s32.totalorder %s18, 1
    %p99 = por %p97, %p98
    %p100 = scmp.ne.s32.totalorder %s91, %s92
    %p101 = scmp.eq.s32.totalorder %s18, 0
    %p102 = por %p100, %p101
    %p103 = scmp.ne.s32.totalorder %s91, %s92
    %p104 = scmp.eq.s32.totalorder %s19, 1
    %p105 = por %p103, %p104
    %p107 = scmp.ne.s32.totalorder %s92, %s106
    %p108 = scmp.eq.s32.totalorder %s19, 0
    %p109 = por %p107, %p108
    %s111 = sadd.s32 %s110, 1
    %p114 = scmp.eq.s32.totalorder %s13, 1
    %p115 = scmp.ne.s32.totalorder %s110, %s112
    %p116 = scmp.eq.s32.totalorder %s13, 0
    %p117 = por %p115, %p116
    %p118 = scmp.ne.s32.totalorder %s110, %s112
    %p119 = scmp.eq.s32.totalorder %s18, 1
    %p120 = por %p118, %p119
    %p121 = scmp.ne.s32.totalorder %s112, %s113
    %p122 = scmp.eq.s32.totalorder %s18, 0
    %p123 = por %p121, %p122
    %p124 = scmp.ne.s32.totalorder %s112, %s113
    %p125 = scmp.eq.s32.totalorder %s19, 1
    %p126 = por %p124, %p125
    %p128 = scmp.ne.s32.totalorder %s113, %s127
    %p129 = scmp.eq.s32.totalorder %s19, 0
    %p130 = por %p128, %p129
    %s132 = sadd.s32 %s131, 1
    %p135 = scmp.eq.s32.totalorder %s13, 1
    %p136 = scmp.ne.s32.totalorder %s131, %s133
    %p137 = scmp.eq.s32.totalorder %s13, 0
    %p138 = por %p136, %p137
    %p139 = scmp.ne.s32.totalorder %s131, %s133
    %p140 = scmp.eq.s32.totalorder %s18, 1
    %p141 = por %p139, %p140
    %p142 = scmp.ne.s32.totalorder %s133, %s134
    %p143 = scmp.eq.s32.totalorder %s18, 0
    %p144 = por %p142, %p143
    %p145 = scmp.ne.s32.totalorder %s133, %s134
    %p146 = scmp.eq.s32.totalorder %s19, 1
    %p147 = por %p145, %p146
    %p149 = scmp.ne.s32.totalorder %s134, %s148
    %p150 = scmp.eq.s32.totalorder %s19, 0
    %p151 = por %p149, %p150
    %s153 = sadd.s32 %s152, 1
    %p156 = scmp.eq.s32.totalorder %s13, 1
    %p157 = scmp.ne.s32.totalorder %s152, %s154
    %p158 = scmp.eq.s32.totalorder %s13, 0
    %p159 = por %p157, %p158
    %p160 = scmp.ne.s32.totalorder %s152, %s154
    %p161 = scmp.eq.s32.totalorder %s18, 1
    %p162 = por %p160, %p161
    %p163 = scmp.ne.s32.totalorder %s154, %s155
    %p164 = scmp.eq.s32.totalorder %s18, 0
    %p165 = por %p163, %p164
    %p166 = scmp.ne.s32.totalorder %s154, %s155
    %p167 = scmp.eq.s32.totalorder %s19, 1
    %p168 = por %p166, %p167
    %p170 = scmp.ne.s32.totalorder %s155, %s169
    %p171 = scmp.eq.s32.totalorder %s19, 0
    %p172 = por %p170, %p171
    %s173 = ssub.s32 %s13, %s20
    %p174 = scmp.eq.s32.totalorder %s173, 0
    %s176 = sadd.s32 %s175, 1
    %s177 = scalar_select %p174, %s175, %s176
    %p180 = pneg %p174
    %p181 = scmp.eq.s32.totalorder %s13, 1
    %p182 = por %p180, %p181
    %p183 = scmp.ne.s32.totalorder %s175, %s178
    %p184 = scmp.eq.s32.totalorder %s13, 0
    %p185 = por %p183, %p184
    %p186 = scmp.ne.s32.totalorder %s175, %s178
    %p187 = scmp.eq.s32.totalorder %s18, 1
    %p188 = por %p186, %p187
    %p189 = scmp.ne.s32.totalorder %s178, %s179
    %p190 = scmp.eq.s32.totalorder %s18, 0
    %p191 = por %p189, %p190
    %p192 = scmp.ne.s32.totalorder %s178, %s179
    %p193 = scmp.eq.s32.totalorder %s19, 1
    %p194 = por %p192, %p193
    %p196 = scmp.ne.s32.totalorder %s179, %s195
    %p197 = scmp.eq.s32.totalorder %s19, 0
    %p198 = por %p196, %p197
    %p199 = scmp.le.s32.totalorder 1, %s13
    %p200 = scmp.lt.s32.totalorder %s13, 3
    %p201 = pnand %p199, %p200
    %p202 = pneg %p201
    // Predicated region
    $region9: #{vae_forward.7} parent=5 // pred_check
      _
    $region10: #{vae_forward.7} parent=5 // pred_check_branch
      %204 = sbr.rel (%p201) target = $region12
    $region11: #{vae_forward.7} parent=5 // pred_region
      %s205 = ssub.s32 %s13, 1
      // Predicated region
      $region13: #{vae_forward.7} parent=11 // pred_check
        %p206 = pneg %p60
      $region14: #{vae_forward.7} parent=11 // pred_check_branch
        %208 = sbr.rel (%p206) target = $region16
      $region15: #{vae_forward.7} parent=11 // pred_region
        _
      $region16: #{vae_forward.7} parent=11 // pred_fallthru
        _
      // Predicated region
      $region17: #{vae_forward.7} parent=11 // pred_check
        %p209 = pneg %p81
      $region18: #{vae_forward.7} parent=11 // pred_check_branch
        %211 = sbr.rel (%p209) target = $region20
      $region19: #{vae_forward.7} parent=11 // pred_region
        _
      $region20: #{vae_forward.7} parent=11 // pred_fallthru
        _
      // Predicated region
      $region21: #{vae_forward.7} parent=11 // pred_check
        %p212 = pneg %p102
      $region22: #{vae_forward.7} parent=11 // pred_check_branch
        %214 = sbr.rel (%p212) target = $region24
      $region23: #{vae_forward.7} parent=11 // pred_region
        _
      $region24: #{vae_forward.7} parent=11 // pred_fallthru
        _
      // Predicated region
      $region25: #{vae_forward.7} parent=11 // pred_check
        %p215 = pneg %p123
      $region26: #{vae_forward.7} parent=11 // pred_check_branch
        %217 = sbr.rel (%p215) target = $region28
      $region27: #{vae_forward.7} parent=11 // pred_region
        _
      $region28: #{vae_forward.7} parent=11 // pred_fallthru
        _
      // Predicated region
      $region29: #{vae_forward.7} parent=11 // pred_check
        %p218 = pneg %p144
      $region30: #{vae_forward.7} parent=11 // pred_check_branch
        %220 = sbr.rel (%p218) target = $region32
      $region31: #{vae_forward.7} parent=11 // pred_region
        _
      $region32: #{vae_forward.7} parent=11 // pred_fallthru
        _
      // Predicated region
      $region33: #{vae_forward.7} parent=11 // pred_check
        %p221 = pneg %p165
      $region34: #{vae_forward.7} parent=11 // pred_check_branch
        %223 = sbr.rel (%p221) target = $region36
      $region35: #{vae_forward.7} parent=11 // pred_region
        _
      $region36: #{vae_forward.7} parent=11 // pred_fallthru
        _
    $region12: #{vae_forward.7} parent=5 // pred_fallthru
      _
    %p224 = scmp.lt.s32.totalorder %s13, 2
    // Predicated region
    $region37: #{vae_forward.7} parent=5 // pred_check
      %p225 = pneg %p224
    $region38: #{vae_forward.7} parent=5 // pred_check_branch
      %227 = sbr.rel (%p225) target = $region40
    $region39: #{vae_forward.7} parent=5 // pred_region
      // Predicated region
      $region41: #{vae_forward.7} parent=39 // pred_check
        %p228 = pneg %p33
      $region42: #{vae_forward.7} parent=39 // pred_check_branch
        %230 = sbr.rel (%p228) target = $region44
      $region43: #{vae_forward.7} parent=39 // pred_region
        %s231 = smul.u32 32, %s13
        %p232 = scmp.lt.s32.totalorder %s231, 63
        %s233 = scalar_select %p232, %s231, 63
        %s234 = smul.addr %s233, 4
        %s235 = smul.addr %s234, 4
        %s236 = scalar_lea.vmem %s0, %s235
        %s237 = smul.u32 32, %s13
      $region44: #{vae_forward.7} parent=39 // pred_fallthru
        _
    $region40: #{vae_forward.7} parent=5 // pred_fallthru
      _
    %p238 = scmp.le.s32.totalorder 1, %s13
    %p239 = scmp.lt.s32.totalorder %s13, 3
    %p240 = pnand %p238, %p239
    %p241 = pneg %p240
    // Predicated region
    $region45: #{vae_forward.7} parent=5 // pred_check
      _
    $region46: #{vae_forward.7} parent=5 // pred_check_branch
      %243 = sbr.rel (%p240) target = $region48
    $region47: #{vae_forward.7} parent=5 // pred_region
      %s244 = ssub.s32 %s13, 1
      %s245 = smul.u32 32, %s18
      %p246 = scmp.lt.s32.totalorder %s245, 63
      %s247 = scalar_select %p246, %s245, 63
      %s248 = smul.addr %s247, 4
      %s249 = smul.addr %s248, 4
      %s250 = scalar_lea.vmem %s0, %s249
      %p251 = pneg %p39
      %p252 = pneg %p36
      %p253 = pneg %p60
      %p254 = pneg %p57
      %p255 = pneg %p81
      %p256 = pneg %p78
      %p257 = pneg %p102
      %p258 = pneg %p99
      %p259 = pneg %p123
      %p260 = pneg %p120
      %p261 = pneg %p144
      %p262 = pneg %p141
      %p263 = pneg %p165
      %p264 = pneg %p162
      %p265 = pneg %p191
      %p266 = pneg %p188
      %s267 = smul.u32 32, %s18
      %p268 = scmp.lt.s32.totalorder %s267, 63
      %s269 = scalar_select %p268, %s267, 63
      %s270 = smul.addr %s269, 4
      %s271 = scalar_lea.vmem %s7, %s270
      %s272 = smul.u32 32, %s18
      %p273 = scmp.lt.s32.totalorder %s272, 63
      %s274 = scalar_select %p273, %s272, 63
      %s275 = smul.addr %s274, 4
      %s276 = smul.addr %s275, 4
      %s277 = scalar_lea.vmem %s0, %s276
      %s278 = smul.u32 32, %s18
      %s279 = smul.u32 32, %s18
      %p280 = scmp.lt.s32.totalorder %s279, 63
      %s281 = scalar_select %p280, %s279, 63
      %s282 = smul.addr %s281, 4
      %s283 = scalar_lea.vmem %s7, %s282
      %s284 = smul.u32 32, %s18
      %v286 = vld [vmem:[%s277] sm:$0xff]
      %v287 = vld [vmem:[%s277 + $0x8] sm:$0xff]
      %v288 = vld [vmem:[%s277 + $0x10] sm:$0xff]
      %v289 = vld [vmem:[%s277 + $0x18] sm:$0xff]
      %v290 = vld [vmem:[%s277 + $0x20] sm:$0xff]
      %v291 = vld [vmem:[%s277 + $0x28] sm:$0xff]
      %v292 = vld [vmem:[%s277 + $0x30] sm:$0xff]
      %v293 = vld [vmem:[%s277 + $0x38] sm:$0xff]
      %v294 = vld [vmem:[%s277 + $0x40] sm:$0xff]
      %v295 = vld [vmem:[%s277 + $0x48] sm:$0xff]
      %v296 = vld [vmem:[%s277 + $0x50] sm:$0xff]
      %v297 = vld [vmem:[%s277 + $0x58] sm:$0xff]
      %v298 = vld [vmem:[%s277 + $0x60] sm:$0xff]
      %v299 = vld [vmem:[%s277 + $0x68] sm:$0xff]
      %v300 = vld [vmem:[%s277 + $0x70] sm:$0xff]
      %v301 = vld [vmem:[%s277 + $0x78] sm:$0xff]
      %v302 = vld [vmem:[%s277 + $0x80] sm:$0xff]
      %v303 = vld [vmem:[%s277 + $0x88] sm:$0xff]
      %v304 = vld [vmem:[%s277 + $0x90] sm:$0xff]
      %v305 = vld [vmem:[%s277 + $0x98] sm:$0xff]
      %v306 = vld [vmem:[%s277 + $0xa0] sm:$0xff]
      %v307 = vld [vmem:[%s277 + $0xa8] sm:$0xff]
      %v308 = vld [vmem:[%s277 + $0xb0] sm:$0xff]
      %v309 = vld [vmem:[%s277 + $0xb8] sm:$0xff]
      %v310 = vld [vmem:[%s277 + $0xc0] sm:$0xff]
      %v311 = vld [vmem:[%s277 + $0xc8] sm:$0xff]
      %v312 = vld [vmem:[%s277 + $0xd0] sm:$0xff]
      %v313 = vld [vmem:[%s277 + $0xd8] sm:$0xff]
      %v314 = vld [vmem:[%s277 + $0xe0] sm:$0xff]
      %v315 = vld [vmem:[%s277 + $0xe8] sm:$0xff]
      %v316 = vld [vmem:[%s277 + $0xf0] sm:$0xff]
      %v317 = vld [vmem:[%s277 + $0xf8] sm:$0xff]
      %v318 = vld [vmem:[%s277 + $0x100] sm:$0xff]
      %v319 = vld [vmem:[%s277 + $0x108] sm:$0xff]
      %v320 = vld [vmem:[%s277 + $0x110] sm:$0xff]
      %v321 = vld [vmem:[%s277 + $0x118] sm:$0xff]
      %v322 = vld [vmem:[%s277 + $0x120] sm:$0xff]
      %v323 = vld [vmem:[%s277 + $0x128] sm:$0xff]
      %v324 = vld [vmem:[%s277 + $0x130] sm:$0xff]
      %v325 = vld [vmem:[%s277 + $0x138] sm:$0xff]
      %v326 = vld [vmem:[%s277 + $0x140] sm:$0xff]
      %v327 = vld [vmem:[%s277 + $0x148] sm:$0xff]
      %v328 = vld [vmem:[%s277 + $0x150] sm:$0xff]
      %v329 = vld [vmem:[%s277 + $0x158] sm:$0xff]
      %v330 = vld [vmem:[%s277 + $0x160] sm:$0xff]
      %v331 = vld [vmem:[%s277 + $0x168] sm:$0xff]
      %v332 = vld [vmem:[%s277 + $0x170] sm:$0xff]
      %v333 = vld [vmem:[%s277 + $0x178] sm:$0xff]
      %v334 = vld [vmem:[%s277 + $0x180] sm:$0xff]
      %v335 = vld [vmem:[%s277 + $0x188] sm:$0xff]
      %v336 = vld [vmem:[%s277 + $0x190] sm:$0xff]
      %v337 = vld [vmem:[%s277 + $0x198] sm:$0xff]
      %v338 = vld [vmem:[%s277 + $0x1a0] sm:$0xff]
      %v339 = vld [vmem:[%s277 + $0x1a8] sm:$0xff]
      %v340 = vld [vmem:[%s277 + $0x1b0] sm:$0xff]
      %v341 = vld [vmem:[%s277 + $0x1b8] sm:$0xff]
      %v342 = vld [vmem:[%s277 + $0x1c0] sm:$0xff]
      %v343 = vld [vmem:[%s277 + $0x1c8] sm:$0xff]
      %v344 = vld [vmem:[%s277 + $0x1d0] sm:$0xff]
      %v345 = vld [vmem:[%s277 + $0x1d8] sm:$0xff]
      %v346 = vld [vmem:[%s277 + $0x1e0] sm:$0xff]
      %v347 = vld [vmem:[%s277 + $0x1e8] sm:$0xff]
      %v348 = vld [vmem:[%s277 + $0x1f0] sm:$0xff]
      %v349 = vld [vmem:[%s277 + $0x1f8] sm:$0xff]
      %v350 = vld [vmem:[%s1] sm:$0xf]
      %v351 = vld [vmem:[%s1 + $0x4] sm:$0xf]
      %v352 = vld [vmem:[%s1 + $0x8] sm:$0xf]
      %v353 = vld [vmem:[%s1 + $0xc] sm:$0xf]
      %v354 = vld [vmem:[%s1 + $0x10] sm:$0xf]
      %v355 = vld [vmem:[%s1 + $0x14] sm:$0xf]
      %v356 = vld [vmem:[%s1 + $0x18] sm:$0xf]
      %v357 = vld [vmem:[%s1 + $0x1c] sm:$0xf]
      %v358 = vld [vmem:[%s1 + $0x20] sm:$0xf]
      %v359 = vld [vmem:[%s1 + $0x24] sm:$0xf]
      %v360 = vld [vmem:[%s1 + $0x28] sm:$0xf]
      %v361 = vld [vmem:[%s1 + $0x2c] sm:$0xf]
      %v362 = vld [vmem:[%s1 + $0x30] sm:$0xf]
      %v363 = vld [vmem:[%s1 + $0x34] sm:$0xf]
      %v364 = vld [vmem:[%s1 + $0x38] sm:$0xf]
      %v365 = vld [vmem:[%s1 + $0x3c] sm:$0xf]
      %v366 = vld [vmem:[%s1 + $0x40] sm:$0xf]
      %v367 = vld [vmem:[%s1 + $0x44] sm:$0xf]
      %v368 = vld [vmem:[%s1 + $0x48] sm:$0xf]
      %v369 = vld [vmem:[%s1 + $0x4c] sm:$0xf]
      %v370 = vld [vmem:[%s1 + $0x50] sm:$0xf]
      %v371 = vld [vmem:[%s1 + $0x54] sm:$0xf]
      %v372 = vld [vmem:[%s1 + $0x58] sm:$0xf]
      %v373 = vld [vmem:[%s1 + $0x5c] sm:$0xf]
      %v374 = vld [vmem:[%s1 + $0x60] sm:$0xf]
      %v375 = vld [vmem:[%s1 + $0x64] sm:$0xf]
      %v376 = vld [vmem:[%s1 + $0x68] sm:$0xf]
      %v377 = vld [vmem:[%s1 + $0x6c] sm:$0xf]
      %v378 = vld [vmem:[%s1 + $0x70] sm:$0xf]
      %v379 = vld [vmem:[%s1 + $0x74] sm:$0xf]
      %v380 = vld [vmem:[%s1 + $0x78] sm:$0xf]
      %v381 = vld [vmem:[%s1 + $0x7c] sm:$0xf]
      %v382 = vld [vmem:[%s1 + $0x80] sm:$0xf]
      %v383 = vld [vmem:[%s1 + $0x84] sm:$0xf]
      %v384 = vld [vmem:[%s1 + $0x88] sm:$0xf]
      %v385 = vld [vmem:[%s1 + $0x8c] sm:$0xf]
      %v386 = vld [vmem:[%s1 + $0x90] sm:$0xf]
      %v387 = vld [vmem:[%s1 + $0x94] sm:$0xf]
      %v388 = vld [vmem:[%s1 + $0x98] sm:$0xf]
      %v389 = vld [vmem:[%s1 + $0x9c] sm:$0xf]
      %v390 = vld [vmem:[%s1 + $0xa0] sm:$0xf]
      %v391 = vld [vmem:[%s1 + $0xa4] sm:$0xf]
      %v392 = vld [vmem:[%s1 + $0xa8] sm:$0xf]
      %v393 = vld [vmem:[%s1 + $0xac] sm:$0xf]
      %v394 = vld [vmem:[%s1 + $0xb0] sm:$0xf]
      %v395 = vld [vmem:[%s1 + $0xb4] sm:$0xf]
      %v396 = vld [vmem:[%s1 + $0xb8] sm:$0xf]
      %v397 = vld [vmem:[%s1 + $0xbc] sm:$0xf]
      %v398 = vld [vmem:[%s1 + $0xc0] sm:$0xf]
      %v399 = vld [vmem:[%s1 + $0xc4] sm:$0xf]
      %v400 = vld [vmem:[%s1 + $0xc8] sm:$0xf]
      %v401 = vld [vmem:[%s1 + $0xcc] sm:$0xf]
      %v402 = vld [vmem:[%s1 + $0xd0] sm:$0xf]
      %v403 = vld [vmem:[%s1 + $0xd4] sm:$0xf]
      %v404 = vld [vmem:[%s1 + $0xd8] sm:$0xf]
      %v405 = vld [vmem:[%s1 + $0xdc] sm:$0xf]
      %v406 = vld [vmem:[%s1 + $0xe0] sm:$0x1]
      %v471 = vunpack.c.l.b16 %v286
      %v472 = vunpack.c.h.b16 %v286
      %v473 = vunpack.c.l.b16 %v287
      %v474 = vunpack.c.h.b16 %v287
      %v475 = vunpack.c.l.b16 %v288
      %v476 = vunpack.c.h.b16 %v288
      %v477 = vunpack.c.l.b16 %v289
      %v478 = vunpack.c.h.b16 %v289
      %v479 = vunpack.c.l.b16 %v290
      %v480 = vunpack.c.h.b16 %v290
      %v481 = vunpack.c.l.b16 %v291
      %v482 = vunpack.c.h.b16 %v291
      %v483 = vunpack.c.l.b16 %v292
      %v484 = vunpack.c.h.b16 %v292
      %v485 = vunpack.c.l.b16 %v293
      %v486 = vunpack.c.h.b16 %v293
      %v487 = vunpack.c.l.b16 %v294
      %v488 = vunpack.c.h.b16 %v294
      %v489 = vunpack.c.l.b16 %v295
      %v490 = vunpack.c.h.b16 %v295
      %v491 = vunpack.c.l.b16 %v296
      %v492 = vunpack.c.h.b16 %v296
      %v493 = vunpack.c.l.b16 %v297
      %v494 = vunpack.c.h.b16 %v297
      %v495 = vunpack.c.l.b16 %v298
      %v496 = vunpack.c.h.b16 %v298
      %v497 = vunpack.c.l.b16 %v299
      %v498 = vunpack.c.h.b16 %v299
      %v499 = vunpack.c.l.b16 %v300
      %v500 = vunpack.c.h.b16 %v300
      %v501 = vunpack.c.l.b16 %v301
      %v502 = vunpack.c.h.b16 %v301
      %v503 = vunpack.c.l.b16 %v302
      %v504 = vunpack.c.h.b16 %v302
      %v505 = vunpack.c.l.b16 %v303
      %v506 = vunpack.c.h.b16 %v303
      %v507 = vunpack.c.l.b16 %v304
      %v508 = vunpack.c.h.b16 %v304
      %v509 = vunpack.c.l.b16 %v305
      %v510 = vunpack.c.h.b16 %v305
      %v511 = vunpack.c.l.b16 %v306
      %v512 = vunpack.c.h.b16 %v306
      %v513 = vunpack.c.l.b16 %v307
      %v514 = vunpack.c.h.b16 %v307
      %v515 = vunpack.c.l.b16 %v308
      %v516 = vunpack.c.h.b16 %v308
      %v517 = vunpack.c.l.b16 %v309
      %v518 = vunpack.c.h.b16 %v309
      %v519 = vunpack.c.l.b16 %v310
      %v520 = vunpack.c.h.b16 %v310
      %v521 = vunpack.c.l.b16 %v311
      %v522 = vunpack.c.h.b16 %v311
      %v523 = vunpack.c.l.b16 %v312
      %v524 = vunpack.c.h.b16 %v312
      %v525 = vunpack.c.l.b16 %v313
      %v526 = vunpack.c.h.b16 %v313
      %v527 = vunpack.c.l.b16 %v314
      %v528 = vunpack.c.h.b16 %v314
      %v529 = vunpack.c.l.b16 %v315
      %v530 = vunpack.c.h.b16 %v315
      %v531 = vunpack.c.l.b16 %v316
      %v532 = vunpack.c.h.b16 %v316
      %v533 = vunpack.c.l.b16 %v317
      %v534 = vunpack.c.h.b16 %v317
      %v535 = vunpack.c.l.b16 %v318
      %v536 = vunpack.c.h.b16 %v318
      %v537 = vunpack.c.l.b16 %v319
      %v538 = vunpack.c.h.b16 %v319
      %v539 = vunpack.c.l.b16 %v320
      %v540 = vunpack.c.h.b16 %v320
      %v541 = vunpack.c.l.b16 %v321
      %v542 = vunpack.c.h.b16 %v321
      %v543 = vunpack.c.l.b16 %v322
      %v544 = vunpack.c.h.b16 %v322
      %v545 = vunpack.c.l.b16 %v323
      %v546 = vunpack.c.h.b16 %v323
      %v547 = vunpack.c.l.b16 %v324
      %v548 = vunpack.c.h.b16 %v324
      %v549 = vunpack.c.l.b16 %v325
      %v550 = vunpack.c.h.b16 %v325
      %v551 = vunpack.c.l.b16 %v326
      %v552 = vunpack.c.h.b16 %v326
      %v553 = vunpack.c.l.b16 %v327
      %v554 = vunpack.c.h.b16 %v327
      %v555 = vunpack.c.l.b16 %v328
      %v556 = vunpack.c.h.b16 %v328
      %v557 = vunpack.c.l.b16 %v329
      %v558 = vunpack.c.h.b16 %v329
      %v559 = vunpack.c.l.b16 %v330
      %v560 = vunpack.c.h.b16 %v330
      %v561 = vunpack.c.l.b16 %v331
      %v562 = vunpack.c.h.b16 %v331
      %v563 = vunpack.c.l.b16 %v332
      %v564 = vunpack.c.h.b16 %v332
      %v565 = vunpack.c.l.b16 %v333
      %v566 = vunpack.c.h.b16 %v333
      %v567 = vunpack.c.l.b16 %v334
      %v568 = vunpack.c.h.b16 %v334
      %v569 = vunpack.c.l.b16 %v335
      %v570 = vunpack.c.h.b16 %v335
      %v571 = vunpack.c.l.b16 %v336
      %v572 = vunpack.c.h.b16 %v336
      %v573 = vunpack.c.l.b16 %v337
      %v574 = vunpack.c.h.b16 %v337
      %v575 = vunpack.c.l.b16 %v338
      %v576 = vunpack.c.h.b16 %v338
      %v577 = vunpack.c.l.b16 %v339
      %v578 = vunpack.c.h.b16 %v339
      %v579 = vunpack.c.l.b16 %v340
      %v580 = vunpack.c.h.b16 %v340
      %v581 = vunpack.c.l.b16 %v341
      %v582 = vunpack.c.h.b16 %v341
      %v583 = vunpack.c.l.b16 %v342
      %v584 = vunpack.c.h.b16 %v342
      %v585 = vunpack.c.l.b16 %v343
      %v586 = vunpack.c.h.b16 %v343
      %v587 = vunpack.c.l.b16 %v344
      %v588 = vunpack.c.h.b16 %v344
      %v589 = vunpack.c.l.b16 %v345
      %v590 = vunpack.c.h.b16 %v345
      %v591 = vunpack.c.l.b16 %v346
      %v592 = vunpack.c.h.b16 %v346
      %v593 = vunpack.c.l.b16 %v347
      %v594 = vunpack.c.h.b16 %v347
      %v595 = vunpack.c.l.b16 %v348
      %v596 = vunpack.c.h.b16 %v348
      %v597 = vunpack.c.l.b16 %v349
      %v598 = vunpack.c.h.b16 %v349
      %v599 = vpack.c.b16 %v475, %v471
      %v600 = vpack.c.b16 %v476, %v472
      %v601 = vpack.c.b16 %v477, %v473
      %v602 = vpack.c.b16 %v478, %v474
      %v603 = vpack.c.b16 %v483, %v479
      %v604 = vpack.c.b16 %v484, %v480
      %v605 = vpack.c.b16 %v485, %v481
      %v606 = vpack.c.b16 %v486, %v482
      %v607 = vpack.c.b16 %v491, %v487
      %v608 = vpack.c.b16 %v492, %v488
      %v609 = vpack.c.b16 %v493, %v489
      %v610 = vpack.c.b16 %v494, %v490
      %v611 = vpack.c.b16 %v499, %v495
      %v612 = vpack.c.b16 %v500, %v496
      %v613 = vpack.c.b16 %v501, %v497
      %v614 = vpack.c.b16 %v502, %v498
      %v615 = vpack.c.b16 %v507, %v503
      %v616 = vpack.c.b16 %v508, %v504
      %v617 = vpack.c.b16 %v509, %v505
      %v618 = vpack.c.b16 %v510, %v506
      %v619 = vpack.c.b16 %v515, %v511
      %v620 = vpack.c.b16 %v516, %v512
      %v621 = vpack.c.b16 %v517, %v513
      %v622 = vpack.c.b16 %v518, %v514
      %v623 = vpack.c.b16 %v523, %v519
      %v624 = vpack.c.b16 %v524, %v520
      %v625 = vpack.c.b16 %v525, %v521
      %v626 = vpack.c.b16 %v526, %v522
      %v627 = vpack.c.b16 %v531, %v527
      %v628 = vpack.c.b16 %v532, %v528
      %v629 = vpack.c.b16 %v533, %v529
      %v630 = vpack.c.b16 %v534, %v530
      %v631 = vpack.c.b16 %v539, %v535
      %v632 = vpack.c.b16 %v540, %v536
      %v633 = vpack.c.b16 %v541, %v537
      %v634 = vpack.c.b16 %v542, %v538
      %v635 = vpack.c.b16 %v547, %v543
      %v636 = vpack.c.b16 %v548, %v544
      %v637 = vpack.c.b16 %v549, %v545
      %v638 = vpack.c.b16 %v550, %v546
      %v639 = vpack.c.b16 %v555, %v551
      %v640 = vpack.c.b16 %v556, %v552
      %v641 = vpack.c.b16 %v557, %v553
      %v642 = vpack.c.b16 %v558, %v554
      %v643 = vpack.c.b16 %v563, %v559
      %v644 = vpack.c.b16 %v564, %v560
      %v645 = vpack.c.b16 %v565, %v561
      %v646 = vpack.c.b16 %v566, %v562
      %v647 = vpack.c.b16 %v571, %v567
      %v648 = vpack.c.b16 %v572, %v568
      %v649 = vpack.c.b16 %v573, %v569
      %v650 = vpack.c.b16 %v574, %v570
      %v651 = vpack.c.b16 %v579, %v575
      %v652 = vpack.c.b16 %v580, %v576
      %v653 = vpack.c.b16 %v581, %v577
      %v654 = vpack.c.b16 %v582, %v578
      %v655 = vpack.c.b16 %v587, %v583
      %v656 = vpack.c.b16 %v588, %v584
      %v657 = vpack.c.b16 %v589, %v585
      %v658 = vpack.c.b16 %v590, %v586
      %v659 = vpack.c.b16 %v595, %v591
      %v660 = vpack.c.b16 %v596, %v592
      %v661 = vpack.c.b16 %v597, %v593
      %v662 = vpack.c.b16 %v598, %v594
      %v768 = vunpack.c.l.b16 %v350
      %v769 = vunpack.c.l.b16 %v351
      %v770 = vunpack.c.l.b16 %v352
      %v771 = vunpack.c.l.b16 %v353
      %v772 = vunpack.c.l.b16 %v354
      %v773 = vunpack.c.l.b16 %v355
      %v774 = vunpack.c.l.b16 %v356
      %v775 = vunpack.c.l.b16 %v357
      %v776 = vunpack.c.l.b16 %v358
      %v777 = vunpack.c.l.b16 %v359
      %v778 = vunpack.c.l.b16 %v360
      %v779 = vunpack.c.l.b16 %v361
      %v780 = vunpack.c.l.b16 %v362
      %v781 = vunpack.c.l.b16 %v363
      %v782 = vunpack.c.l.b16 %v364
      %v783 = vunpack.c.l.b16 %v365
      %v784 = vunpack.c.l.b16 %v366
      %v785 = vunpack.c.l.b16 %v367
      %v786 = vunpack.c.l.b16 %v368
      %v787 = vunpack.c.l.b16 %v369
      %v788 = vunpack.c.l.b16 %v370
      %v789 = vunpack.c.l.b16 %v371
      %v790 = vunpack.c.l.b16 %v372
      %v791 = vunpack.c.l.b16 %v373
      %v792 = vunpack.c.l.b16 %v374
      %v793 = vunpack.c.l.b16 %v375
      %v794 = vunpack.c.l.b16 %v376
      %v795 = vunpack.c.l.b16 %v377
      %v796 = vunpack.c.l.b16 %v378
      %v797 = vunpack.c.l.b16 %v379
      %v798 = vunpack.c.l.b16 %v380
      %v799 = vunpack.c.l.b16 %v381
      %v800 = vunpack.c.l.b16 %v382
      %v801 = vunpack.c.l.b16 %v383
      %v802 = vunpack.c.l.b16 %v384
      %v803 = vunpack.c.l.b16 %v385
      %v804 = vunpack.c.l.b16 %v386
      %v805 = vunpack.c.l.b16 %v387
      %v806 = vunpack.c.l.b16 %v388
      %v807 = vunpack.c.l.b16 %v389
      %v808 = vunpack.c.l.b16 %v390
      %v809 = vunpack.c.l.b16 %v391
      %v810 = vunpack.c.l.b16 %v392
      %v811 = vunpack.c.l.b16 %v393
      %v812 = vunpack.c.l.b16 %v394
      %v813 = vunpack.c.l.b16 %v395
      %v814 = vunpack.c.l.b16 %v396
      %v815 = vunpack.c.l.b16 %v397
      %v816 = vunpack.c.l.b16 %v398
      %v817 = vunpack.c.l.b16 %v399
      %v818 = vunpack.c.l.b16 %v400
      %v819 = vunpack.c.l.b16 %v401
      %v820 = vunpack.c.l.b16 %v402
      %v821 = vunpack.c.l.b16 %v403
      %v822 = vunpack.c.l.b16 %v404
      %v823 = vunpack.c.l.b16 %v405
      %v824 = vunpack.c.l.b16 %v406
      %v825 = vpack.c.b16 %v769, %v768
      %v826 = vpack.c.b16 %v771, %v770
      %v827 = vpack.c.b16 %v773, %v772
      %v828 = vpack.c.b16 %v775, %v774
      %v829 = vpack.c.b16 %v777, %v776
      %v830 = vpack.c.b16 %v779, %v778
      %v831 = vpack.c.b16 %v781, %v780
      %v832 = vpack.c.b16 %v783, %v782
      %v833 = vpack.c.b16 %v785, %v784
      %v834 = vpack.c.b16 %v787, %v786
      %v835 = vpack.c.b16 %v789, %v788
      %v836 = vpack.c.b16 %v791, %v790
      %v837 = vpack.c.b16 %v793, %v792
      %v838 = vpack.c.b16 %v795, %v794
      %v839 = vpack.c.b16 %v797, %v796
      %v840 = vpack.c.b16 %v799, %v798
      %v841 = vpack.c.b16 %v801, %v800
      %v842 = vpack.c.b16 %v803, %v802
      %v843 = vpack.c.b16 %v805, %v804
      %v844 = vpack.c.b16 %v807, %v806
      %v845 = vpack.c.b16 %v809, %v808
      %v846 = vpack.c.b16 %v811, %v810
      %v847 = vpack.c.b16 %v813, %v812
      %v848 = vpack.c.b16 %v815, %v814
      %v849 = vpack.c.b16 %v817, %v816
      %v850 = vpack.c.b16 %v819, %v818
      %v851 = vpack.c.b16 %v821, %v820
      %v852 = vpack.c.b16 %v823, %v822
      %v853 = vpack.c.b16 %v824, %v824
      %vm882 = vcmask 539648
      %v884 = vsel %vm882, %v602, 0
      %v887 = vsel %vm882, %v606, 0
      %v890 = vsel %vm882, %v610, 0
      %v893 = vsel %vm882, %v614, 0
      %v896 = vsel %vm882, %v618, 0
      %v899 = vsel %vm882, %v622, 0
      %v902 = vsel %vm882, %v626, 0
      %v905 = vsel %vm882, %v630, 0
      %v908 = vsel %vm882, %v634, 0
      %v911 = vsel %vm882, %v638, 0
      %v914 = vsel %vm882, %v642, 0
      %v917 = vsel %vm882, %v646, 0
      %v920 = vsel %vm882, %v650, 0
      %v923 = vsel %vm882, %v654, 0
      %v926 = vsel %vm882, %v658, 0
      %v929 = vsel %vm882, %v662, 0
      %vm931 = vcmask 1040384
      %v933 = vsel %vm931, %v853, 0
      %935 = vmatprep.subr.bf16.mxu0 0
      %936 = vmatpush1.bf16.msra.mxu0 %v832
      %937 = vmatprep.subr.bf16.mxu0 0
      %938 = vmatpush1.bf16.msra.mxu0 %v831
      %939 = vmatprep.subr.bf16.mxu0 0
      %940 = vmatpush1.bf16.msra.mxu0 %v830
      %941 = vmatprep.subr.bf16.mxu0 0
      %942 = vmatpush1.bf16.msra.mxu0 %v829
      %943 = vmatprep.subr.bf16.mxu0 0
      %944 = vmatpush1.bf16.msra.mxu0 %v828
      %945 = vmatprep.subr.bf16.mxu0 0
      %946 = vmatpush1.bf16.msra.mxu0 %v827
      %947 = vmatprep.subr.bf16.mxu0 0
      %948 = vmatpush1.bf16.msra.mxu0 %v826
      %949 = vmatprep.subr.bf16.mxu0 0
      %950 = vmatpush1.bf16.msra.mxu0 %v825
      %951 = vmatprep.subr.bf16.mxu0 0
      %952 = vmatpush2.bf16.msra.mxu0 %v840
      %953 = vmatprep.subr.bf16.mxu0 0
      %954 = vmatpush2.bf16.msra.mxu0 %v839
      %955 = vmatprep.subr.bf16.mxu0 0
      %956 = vmatpush2.bf16.msra.mxu0 %v838
      %957 = vmatprep.subr.bf16.mxu0 0
      %958 = vmatpush2.bf16.msra.mxu0 %v837
      %959 = vmatprep.subr.bf16.mxu0 0
      %960 = vmatpush2.bf16.msra.mxu0 %v836
      %961 = vmatprep.subr.bf16.mxu0 0
      %962 = vmatpush2.bf16.msra.mxu0 %v835
      %963 = vmatprep.subr.bf16.mxu0 0
      %964 = vmatpush2.bf16.msra.mxu0 %v834
      %965 = vmatprep.subr.bf16.mxu0 0
      %966 = vmatpush2.bf16.msra.mxu0 %v833
      %967 = vmatprep.mubr.bf16.mxu0 %v600
      %968 = vmatmul.mubr.bf16.gmra.mxu0 %v599
      %v969 = vpop.f32.mrf.mxu0
      %v970 = vadd.f32 0.0, %v969
      %v971 = vpop.f32.mrf.mxu0
      %v972 = vpop.f32.mrf.mxu0
      %v973 = vadd.f32 0.0, %v972
      %v974 = vpop.f32.mrf.mxu0
      %975 = vmatprep.mubr.bf16.mxu0 %v604
      %976 = vmatmul.mubr.bf16.gmra.mxu0 %v603
      %v977 = vpop.f32.mrf.mxu0
      %v978 = vadd.f32 0.0, %v977
      %v979 = vpop.f32.mrf.mxu0
      %v980 = vpop.f32.mrf.mxu0
      %v981 = vadd.f32 0.0, %v980
      %v982 = vpop.f32.mrf.mxu0
      %983 = vmatprep.mubr.bf16.mxu0 %v608
      %984 = vmatmul.mubr.bf16.gmra.mxu0 %v607
      %v985 = vpop.f32.mrf.mxu0
      %v986 = vadd.f32 0.0, %v985
      %v987 = vpop.f32.mrf.mxu0
      %v988 = vpop.f32.mrf.mxu0
      %v989 = vadd.f32 0.0, %v988
      %v990 = vpop.f32.mrf.mxu0
      %991 = vmatprep.mubr.bf16.mxu0 %v612
      %992 = vmatmul.mubr.bf16.gmra.mxu0 %v611
      %v993 = vpop.f32.mrf.mxu0
      %v994 = vadd.f32 0.0, %v993
      %v995 = vpop.f32.mrf.mxu0
      %v996 = vpop.f32.mrf.mxu0
      %v997 = vadd.f32 0.0, %v996
      %v998 = vpop.f32.mrf.mxu0
      %999 = vmatprep.mubr.bf16.mxu0 %v616
      %1000 = vmatmul.mubr.bf16.gmra.mxu0 %v615
      %v1001 = vpop.f32.mrf.mxu0
      %v1002 = vadd.f32 0.0, %v1001
      %v1003 = vpop.f32.mrf.mxu0
      %v1004 = vpop.f32.mrf.mxu0
      %v1005 = vadd.f32 0.0, %v1004
      %v1006 = vpop.f32.mrf.mxu0
      %1007 = vmatprep.mubr.bf16.mxu0 %v620
      %1008 = vmatmul.mubr.bf16.gmra.mxu0 %v619
      %v1009 = vpop.f32.mrf.mxu0
      %v1010 = vadd.f32 0.0, %v1009
      %v1011 = vpop.f32.mrf.mxu0
      %v1012 = vpop.f32.mrf.mxu0
      %v1013 = vadd.f32 0.0, %v1012
      %v1014 = vpop.f32.mrf.mxu0
      %1015 = vmatprep.mubr.bf16.mxu0 %v624
      %1016 = vmatmul.mubr.bf16.gmra.mxu0 %v623
      %v1017 = vpop.f32.mrf.mxu0
      %v1018 = vadd.f32 0.0, %v1017
      %v1019 = vpop.f32.mrf.mxu0
      %v1020 = vpop.f32.mrf.mxu0
      %v1021 = vadd.f32 0.0, %v1020
      %v1022 = vpop.f32.mrf.mxu0
      %1023 = vmatprep.mubr.bf16.mxu0 %v628
      %1024 = vmatmul.mubr.bf16.gmra.mxu0 %v627
      %v1025 = vpop.f32.mrf.mxu0
      %v1026 = vadd.f32 0.0, %v1025
      %v1027 = vpop.f32.mrf.mxu0
      %v1028 = vpop.f32.mrf.mxu0
      %v1029 = vadd.f32 0.0, %v1028
      %v1030 = vpop.f32.mrf.mxu0
      %1031 = vmatprep.mubr.bf16.mxu0 %v632
      %1032 = vmatmul.mubr.bf16.gmra.mxu0 %v631
      %v1033 = vpop.f32.mrf.mxu0
      %v1034 = vadd.f32 0.0, %v1033
      %v1035 = vpop.f32.mrf.mxu0
      %v1036 = vpop.f32.mrf.mxu0
      %v1037 = vadd.f32 0.0, %v1036
      %v1038 = vpop.f32.mrf.mxu0
      %1039 = vmatprep.mubr.bf16.mxu0 %v636
      %1040 = vmatmul.mubr.bf16.gmra.mxu0 %v635
      %v1041 = vpop.f32.mrf.mxu0
      %v1042 = vadd.f32 0.0, %v1041
      %v1043 = vpop.f32.mrf.mxu0
      %v1044 = vpop.f32.mrf.mxu0
      %v1045 = vadd.f32 0.0, %v1044
      %v1046 = vpop.f32.mrf.mxu0
      %1047 = vmatprep.mubr.bf16.mxu0 %v640
      %1048 = vmatmul.mubr.bf16.gmra.mxu0 %v639
      %v1049 = vpop.f32.mrf.mxu0
      %v1050 = vadd.f32 0.0, %v1049
      %v1051 = vpop.f32.mrf.mxu0
      %v1052 = vpop.f32.mrf.mxu0
      %v1053 = vadd.f32 0.0, %v1052
      %v1054 = vpop.f32.mrf.mxu0
      %1055 = vmatprep.mubr.bf16.mxu0 %v644
      %1056 = vmatmul.mubr.bf16.gmra.mxu0 %v643
      %v1057 = vpop.f32.mrf.mxu0
      %v1058 = vadd.f32 0.0, %v1057
      %v1059 = vpop.f32.mrf.mxu0
      %v1060 = vpop.f32.mrf.mxu0
      %v1061 = vadd.f32 0.0, %v1060
      %v1062 = vpop.f32.mrf.mxu0
      %1063 = vmatprep.mubr.bf16.mxu0 %v648
      %1064 = vmatmul.mubr.bf16.gmra.mxu0 %v647
      %v1065 = vpop.f32.mrf.mxu0
      %v1066 = vadd.f32 0.0, %v1065
      %v1067 = vpop.f32.mrf.mxu0
      %v1068 = vpop.f32.mrf.mxu0
      %v1069 = vadd.f32 0.0, %v1068
      %v1070 = vpop.f32.mrf.mxu0
      %1071 = vmatprep.mubr.bf16.mxu0 %v652
      %1072 = vmatmul.mubr.bf16.gmra.mxu0 %v651
      %v1073 = vpop.f32.mrf.mxu0
      %v1074 = vadd.f32 0.0, %v1073
      %v1075 = vpop.f32.mrf.mxu0
      %v1076 = vpop.f32.mrf.mxu0
      %v1077 = vadd.f32 0.0, %v1076
      %v1078 = vpop.f32.mrf.mxu0
      %1079 = vmatprep.mubr.bf16.mxu0 %v656
      %1080 = vmatmul.mubr.bf16.gmra.mxu0 %v655
      %v1081 = vpop.f32.mrf.mxu0
      %v1082 = vadd.f32 0.0, %v1081
      %v1083 = vpop.f32.mrf.mxu0
      %v1084 = vpop.f32.mrf.mxu0
      %v1085 = vadd.f32 0.0, %v1084
      %v1086 = vpop.f32.mrf.mxu0
      %1087 = vmatprep.mubr.bf16.mxu0 %v660
      %1088 = vmatmul.mubr.bf16.gmra.mxu0 %v659
      %v1089 = vpop.f32.mrf.mxu0
      %v1090 = vadd.f32 0.0, %v1089
      %v1091 = vpop.f32.mrf.mxu0
      %v1092 = vpop.f32.mrf.mxu0
      %v1093 = vadd.f32 0.0, %v1092
      %v1094 = vpop.f32.mrf.mxu0
      %1095 = vdwg.mxu0
      %1096 = vmatprep.subr.bf16.mxu0 0
      %1097 = vmatpush1.bf16.msra.mxu0 %v848
      %1098 = vmatprep.subr.bf16.mxu0 0
      %1099 = vmatpush1.bf16.msra.mxu0 %v847
      %1100 = vmatprep.subr.bf16.mxu0 0
      %1101 = vmatpush1.bf16.msra.mxu0 %v846
      %1102 = vmatprep.subr.bf16.mxu0 0
      %1103 = vmatpush1.bf16.msra.mxu0 %v845
      %1104 = vmatprep.subr.bf16.mxu0 0
      %1105 = vmatpush1.bf16.msra.mxu0 %v844
      %1106 = vmatprep.subr.bf16.mxu0 0
      %1107 = vmatpush1.bf16.msra.mxu0 %v843
      %1108 = vmatprep.subr.bf16.mxu0 0
      %1109 = vmatpush1.bf16.msra.mxu0 %v842
      %1110 = vmatprep.subr.bf16.mxu0 0
      %1111 = vmatpush1.bf16.msra.mxu0 %v841
      %1112 = vmatprep.subr.bf16.mxu0 0
      %1113 = vmatpush2.bf16.msra.mxu0 0
      %1114 = vmatprep.subr.bf16.mxu0 0
      %1115 = vmatpush2.bf16.msra.mxu0 0
      %1116 = vmatprep.subr.bf16.mxu0 0
      %1117 = vmatpush2.bf16.msra.mxu0 0
      %1118 = vmatprep.subr.bf16.mxu0 0
      %1119 = vmatpush2.bf16.msra.mxu0 %v933
      %1120 = vmatprep.subr.bf16.mxu0 0
      %1121 = vmatpush2.bf16.msra.mxu0 %v852
      %1122 = vmatprep.subr.bf16.mxu0 0
      %1123 = vmatpush2.bf16.msra.mxu0 %v851
      %1124 = vmatprep.subr.bf16.mxu0 0
      %1125 = vmatpush2.bf16.msra.mxu0 %v850
      %1126 = vmatprep.subr.bf16.mxu0 0
      %1127 = vmatpush2.bf16.msra.mxu0 %v849
      %1128 = vmatprep.mubr.bf16.mxu0 %v884
      %1129 = vmatmul.mubr.bf16.gmra.mxu0 %v601
      %v1130 = vpop.f32.mrf.mxu0
      %v1131 = vadd.f32 %v970, %v1130
      %v1132 = vpop.f32.mrf.mxu0
      %v1133 = vpop.f32.mrf.mxu0
      %v1134 = vadd.f32 %v973, %v1133
      %v1135 = vpop.f32.mrf.mxu0
      %1136 = vmatprep.mubr.bf16.mxu0 %v887
      %1137 = vmatmul.mubr.bf16.gmra.mxu0 %v605
      %v1138 = vpop.f32.mrf.mxu0
      %v1139 = vadd.f32 %v978, %v1138
      %v1140 = vpop.f32.mrf.mxu0
      %v1141 = vpop.f32.mrf.mxu0
      %v1142 = vadd.f32 %v981, %v1141
      %v1143 = vpop.f32.mrf.mxu0
      %1144 = vmatprep.mubr.bf16.mxu0 %v890
      %1145 = vmatmul.mubr.bf16.gmra.mxu0 %v609
      %v1146 = vpop.f32.mrf.mxu0
      %v1147 = vadd.f32 %v986, %v1146
      %v1148 = vpop.f32.mrf.mxu0
      %v1149 = vpop.f32.mrf.mxu0
      %v1150 = vadd.f32 %v989, %v1149
      %v1151 = vpop.f32.mrf.mxu0
      %1152 = vmatprep.mubr.bf16.mxu0 %v893
      %1153 = vmatmul.mubr.bf16.gmra.mxu0 %v613
      %v1154 = vpop.f32.mrf.mxu0
      %v1155 = vadd.f32 %v994, %v1154
      %v1156 = vpop.f32.mrf.mxu0
      %v1157 = vpop.f32.mrf.mxu0
      %v1158 = vadd.f32 %v997, %v1157
      %v1159 = vpop.f32.mrf.mxu0
      %1160 = vmatprep.mubr.bf16.mxu0 %v896
      %1161 = vmatmul.mubr.bf16.gmra.mxu0 %v617
      %v1162 = vpop.f32.mrf.mxu0
      %v1163 = vadd.f32 %v1002, %v1162
      %v1164 = vpop.f32.mrf.mxu0
      %v1165 = vpop.f32.mrf.mxu0
      %v1166 = vadd.f32 %v1005, %v1165
      %v1167 = vpop.f32.mrf.mxu0
      %1168 = vmatprep.mubr.bf16.mxu0 %v899
      %1169 = vmatmul.mubr.bf16.gmra.mxu0 %v621
      %v1170 = vpop.f32.mrf.mxu0
      %v1171 = vadd.f32 %v1010, %v1170
      %v1172 = vpop.f32.mrf.mxu0
      %v1173 = vpop.f32.mrf.mxu0
      %v1174 = vadd.f32 %v1013, %v1173
      %v1175 = vpop.f32.mrf.mxu0
      %1176 = vmatprep.mubr.bf16.mxu0 %v902
      %1177 = vmatmul.mubr.bf16.gmra.mxu0 %v625
      %v1178 = vpop.f32.mrf.mxu0
      %v1179 = vadd.f32 %v1018, %v1178
      %v1180 = vpop.f32.mrf.mxu0
      %v1181 = vpop.f32.mrf.mxu0
      %v1182 = vadd.f32 %v1021, %v1181
      %v1183 = vpop.f32.mrf.mxu0
      %1184 = vmatprep.mubr.bf16.mxu0 %v905
      %1185 = vmatmul.mubr.bf16.gmra.mxu0 %v629
      %v1186 = vpop.f32.mrf.mxu0
      %v1187 = vadd.f32 %v1026, %v1186
      %v1188 = vpop.f32.mrf.mxu0
      %v1189 = vpop.f32.mrf.mxu0
      %v1190 = vadd.f32 %v1029, %v1189
      %v1191 = vpop.f32.mrf.mxu0
      %1192 = vmatprep.mubr.bf16.mxu0 %v908
      %1193 = vmatmul.mubr.bf16.gmra.mxu0 %v633
      %v1194 = vpop.f32.mrf.mxu0
      %v1195 = vadd.f32 %v1034, %v1194
      %v1196 = vpop.f32.mrf.mxu0
      %v1197 = vpop.f32.mrf.mxu0
      %v1198 = vadd.f32 %v1037, %v1197
      %v1199 = vpop.f32.mrf.mxu0
      %1200 = vmatprep.mubr.bf16.mxu0 %v911
      %1201 = vmatmul.mubr.bf16.gmra.mxu0 %v637
      %v1202 = vpop.f32.mrf.mxu0
      %v1203 = vadd.f32 %v1042, %v1202
      %v1204 = vpop.f32.mrf.mxu0
      %v1205 = vpop.f32.mrf.mxu0
      %v1206 = vadd.f32 %v1045, %v1205
      %v1207 = vpop.f32.mrf.mxu0
      %1208 = vmatprep.mubr.bf16.mxu0 %v914
      %1209 = vmatmul.mubr.bf16.gmra.mxu0 %v641
      %v1210 = vpop.f32.mrf.mxu0
      %v1211 = vadd.f32 %v1050, %v1210
      %v1212 = vpop.f32.mrf.mxu0
      %v1213 = vpop.f32.mrf.mxu0
      %v1214 = vadd.f32 %v1053, %v1213
      %v1215 = vpop.f32.mrf.mxu0
      %1216 = vmatprep.mubr.bf16.mxu0 %v917
      %1217 = vmatmul.mubr.bf16.gmra.mxu0 %v645
      %v1218 = vpop.f32.mrf.mxu0
      %v1219 = vadd.f32 %v1058, %v1218
      %v1220 = vpop.f32.mrf.mxu0
      %v1221 = vpop.f32.mrf.mxu0
      %v1222 = vadd.f32 %v1061, %v1221
      %v1223 = vpop.f32.mrf.mxu0
      %1224 = vmatprep.mubr.bf16.mxu0 %v920
      %1225 = vmatmul.mubr.bf16.gmra.mxu0 %v649
      %v1226 = vpop.f32.mrf.mxu0
      %v1227 = vadd.f32 %v1066, %v1226
      %v1228 = vpop.f32.mrf.mxu0
      %v1229 = vpop.f32.mrf.mxu0
      %v1230 = vadd.f32 %v1069, %v1229
      %v1231 = vpop.f32.mrf.mxu0
      %1232 = vmatprep.mubr.bf16.mxu0 %v923
      %1233 = vmatmul.mubr.bf16.gmra.mxu0 %v653
      %v1234 = vpop.f32.mrf.mxu0
      %v1235 = vadd.f32 %v1074, %v1234
      %v1236 = vpop.f32.mrf.mxu0
      %v1237 = vpop.f32.mrf.mxu0
      %v1238 = vadd.f32 %v1077, %v1237
      %v1239 = vpop.f32.mrf.mxu0
      %1240 = vmatprep.mubr.bf16.mxu0 %v926
      %1241 = vmatmul.mubr.bf16.gmra.mxu0 %v657
      %v1242 = vpop.f32.mrf.mxu0
      %v1243 = vadd.f32 %v1082, %v1242
      %v1244 = vpop.f32.mrf.mxu0
      %v1245 = vpop.f32.mrf.mxu0
      %v1246 = vadd.f32 %v1085, %v1245
      %v1247 = vpop.f32.mrf.mxu0
      %1248 = vmatprep.mubr.bf16.mxu0 %v929
      %1249 = vmatmul.mubr.bf16.gmra.mxu0 %v661
      %v1250 = vpop.f32.mrf.mxu0
      %v1251 = vadd.f32 %v1090, %v1250
      %v1252 = vpop.f32.mrf.mxu0
      %v1253 = vpop.f32.mrf.mxu0
      %v1254 = vadd.f32 %v1093, %v1253
      %v1255 = vpop.f32.mrf.mxu0
      %1256 = vdwg.mxu0
      %v1257 = vld [vmem:[%s2] sm:$0x1]
      %v1259 = vlaneseq
      %v1260 = vshrl.u32 %v1259, 7
      %v1261 = vsub.s32 0, %v1260
      %v1262 = vrot.slane %v1257, %v1261
      %v1264 = vmul.f32 %v1131, %v1262
      %v1265 = vmul.f32 %v1134, %v1262
      %v1266 = vmul.f32 %v1139, %v1262
      %v1267 = vmul.f32 %v1142, %v1262
      %v1268 = vmul.f32 %v1147, %v1262
      %v1269 = vmul.f32 %v1150, %v1262
      %v1270 = vmul.f32 %v1155, %v1262
      %v1271 = vmul.f32 %v1158, %v1262
      %v1272 = vmul.f32 %v1163, %v1262
      %v1273 = vmul.f32 %v1166, %v1262
      %v1274 = vmul.f32 %v1171, %v1262
      %v1275 = vmul.f32 %v1174, %v1262
      %v1276 = vmul.f32 %v1179, %v1262
      %v1277 = vmul.f32 %v1182, %v1262
      %v1278 = vmul.f32 %v1187, %v1262
      %v1279 = vmul.f32 %v1190, %v1262
      %v1280 = vmul.f32 %v1195, %v1262
      %v1281 = vmul.f32 %v1198, %v1262
      %v1282 = vmul.f32 %v1203, %v1262
      %v1283 = vmul.f32 %v1206, %v1262
      %v1284 = vmul.f32 %v1211, %v1262
      %v1285 = vmul.f32 %v1214, %v1262
      %v1286 = vmul.f32 %v1219, %v1262
      %v1287 = vmul.f32 %v1222, %v1262
      %v1288 = vmul.f32 %v1227, %v1262
      %v1289 = vmul.f32 %v1230, %v1262
      %v1290 = vmul.f32 %v1235, %v1262
      %v1291 = vmul.f32 %v1238, %v1262
      %v1292 = vmul.f32 %v1243, %v1262
      %v1293 = vmul.f32 %v1246, %v1262
      %v1294 = vmul.f32 %v1251, %v1262
      %v1295 = vmul.f32 %v1254, %v1262
      %v1296 = vld [vmem:[%s3] sm:$0x1]
      %v1298 = vlaneseq
      %v1299 = vshrl.u32 %v1298, 7
      %v1300 = vsub.s32 0, %v1299
      %v1301 = vrot.slane %v1296, %v1300
      %v1303 = vadd.f32 %v1264, %v1301
      %v1304 = vadd.f32 %v1265, %v1301
      %v1305 = vadd.f32 %v1266, %v1301
      %v1306 = vadd.f32 %v1267, %v1301
      %v1307 = vadd.f32 %v1268, %v1301
      %v1308 = vadd.f32 %v1269, %v1301
      %v1309 = vadd.f32 %v1270, %v1301
      %v1310 = vadd.f32 %v1271, %v1301
      %v1311 = vadd.f32 %v1272, %v1301
      %v1312 = vadd.f32 %v1273, %v1301
      %v1313 = vadd.f32 %v1274, %v1301
      %v1314 = vadd.f32 %v1275, %v1301
      %v1315 = vadd.f32 %v1276, %v1301
      %v1316 = vadd.f32 %v1277, %v1301
      %v1317 = vadd.f32 %v1278, %v1301
      %v1318 = vadd.f32 %v1279, %v1301
      %v1319 = vadd.f32 %v1280, %v1301
      %v1320 = vadd.f32 %v1281, %v1301
      %v1321 = vadd.f32 %v1282, %v1301
      %v1322 = vadd.f32 %v1283, %v1301
      %v1323 = vadd.f32 %v1284, %v1301
      %v1324 = vadd.f32 %v1285, %v1301
      %v1325 = vadd.f32 %v1286, %v1301
      %v1326 = vadd.f32 %v1287, %v1301
      %v1327 = vadd.f32 %v1288, %v1301
      %v1328 = vadd.f32 %v1289, %v1301
      %v1329 = vadd.f32 %v1290, %v1301
      %v1330 = vadd.f32 %v1291, %v1301
      %v1331 = vadd.f32 %v1292, %v1301
      %v1332 = vadd.f32 %v1293, %v1301
      %v1333 = vadd.f32 %v1294, %v1301
      %v1334 = vadd.f32 %v1295, %v1301
      %v1335 = vmax.f32 %v1303, 0.0
      %v1336 = vmax.f32 %v1304, 0.0
      %v1337 = vmax.f32 %v1305, 0.0
      %v1338 = vmax.f32 %v1306, 0.0
      %v1339 = vmax.f32 %v1307, 0.0
      %v1340 = vmax.f32 %v1308, 0.0
      %v1341 = vmax.f32 %v1309, 0.0
      %v1342 = vmax.f32 %v1310, 0.0
      %v1343 = vmax.f32 %v1311, 0.0
      %v1344 = vmax.f32 %v1312, 0.0
      %v1345 = vmax.f32 %v1313, 0.0
      %v1346 = vmax.f32 %v1314, 0.0
      %v1347 = vmax.f32 %v1315, 0.0
      %v1348 = vmax.f32 %v1316, 0.0
      %v1349 = vmax.f32 %v1317, 0.0
      %v1350 = vmax.f32 %v1318, 0.0
      %v1351 = vmax.f32 %v1319, 0.0
      %v1352 = vmax.f32 %v1320, 0.0
      %v1353 = vmax.f32 %v1321, 0.0
      %v1354 = vmax.f32 %v1322, 0.0
      %v1355 = vmax.f32 %v1323, 0.0
      %v1356 = vmax.f32 %v1324, 0.0
      %v1357 = vmax.f32 %v1325, 0.0
      %v1358 = vmax.f32 %v1326, 0.0
      %v1359 = vmax.f32 %v1327, 0.0
      %v1360 = vmax.f32 %v1328, 0.0
      %v1361 = vmax.f32 %v1329, 0.0
      %v1362 = vmax.f32 %v1330, 0.0
      %v1363 = vmax.f32 %v1331, 0.0
      %v1364 = vmax.f32 %v1332, 0.0
      %v1365 = vmax.f32 %v1333, 0.0
      %v1366 = vmax.f32 %v1334, 0.0
      %v1367 = vmin.f32 %v1335, 6.0
      %v1368 = vmin.f32 %v1336, 6.0
      %v1369 = vmin.f32 %v1337, 6.0
      %v1370 = vmin.f32 %v1338, 6.0
      %v1371 = vmin.f32 %v1339, 6.0
      %v1372 = vmin.f32 %v1340, 6.0
      %v1373 = vmin.f32 %v1341, 6.0
      %v1374 = vmin.f32 %v1342, 6.0
      %v1375 = vmin.f32 %v1343, 6.0
      %v1376 = vmin.f32 %v1344, 6.0
      %v1377 = vmin.f32 %v1345, 6.0
      %v1378 = vmin.f32 %v1346, 6.0
      %v1379 = vmin.f32 %v1347, 6.0
      %v1380 = vmin.f32 %v1348, 6.0
      %v1381 = vmin.f32 %v1349, 6.0
      %v1382 = vmin.f32 %v1350, 6.0
      %v1383 = vmin.f32 %v1351, 6.0
      %v1384 = vmin.f32 %v1352, 6.0
      %v1385 = vmin.f32 %v1353, 6.0
      %v1386 = vmin.f32 %v1354, 6.0
      %v1387 = vmin.f32 %v1355, 6.0
      %v1388 = vmin.f32 %v1356, 6.0
      %v1389 = vmin.f32 %v1357, 6.0
      %v1390 = vmin.f32 %v1358, 6.0
      %v1391 = vmin.f32 %v1359, 6.0
      %v1392 = vmin.f32 %v1360, 6.0
      %v1393 = vmin.f32 %v1361, 6.0
      %v1394 = vmin.f32 %v1362, 6.0
      %v1395 = vmin.f32 %v1363, 6.0
      %v1396 = vmin.f32 %v1364, 6.0
      %v1397 = vmin.f32 %v1365, 6.0
      %v1398 = vmin.f32 %v1366, 6.0
      %v1399 = vpack.c.bf16 %v1368, %v1367
      %v1400 = vpack.c.bf16 %v1370, %v1369
      %v1401 = vpack.c.bf16 %v1372, %v1371
      %v1402 = vpack.c.bf16 %v1374, %v1373
      %v1403 = vpack.c.bf16 %v1376, %v1375
      %v1404 = vpack.c.bf16 %v1378, %v1377
      %v1405 = vpack.c.bf16 %v1380, %v1379
      %v1406 = vpack.c.bf16 %v1382, %v1381
      %v1407 = vpack.c.bf16 %v1384, %v1383
      %v1408 = vpack.c.bf16 %v1386, %v1385
      %v1409 = vpack.c.bf16 %v1388, %v1387
      %v1410 = vpack.c.bf16 %v1390, %v1389
      %v1411 = vpack.c.bf16 %v1392, %v1391
      %v1412 = vpack.c.bf16 %v1394, %v1393
      %v1413 = vpack.c.bf16 %v1396, %v1395
      %v1414 = vpack.c.bf16 %v1398, %v1397
      %v1415 = vld [vmem:[%s4] sm:$0xf]
      %v1416 = vld [vmem:[%s4 + $0x4] sm:$0xf]
      %v1417 = vld [vmem:[%s4 + $0x8] sm:$0xf]
      %v1418 = vld [vmem:[%s4 + $0xc] sm:$0xf]
      %v1419 = vld [vmem:[%s4 + $0x10] sm:$0xf]
      %v1420 = vld [vmem:[%s4 + $0x14] sm:$0xf]
      %v1421 = vld [vmem:[%s4 + $0x18] sm:$0xf]
      %v1422 = vld [vmem:[%s4 + $0x1c] sm:$0xf]
      %v1423 = vld [vmem:[%s4 + $0x20] sm:$0xf]
      %v1424 = vld [vmem:[%s4 + $0x24] sm:$0xf]
      %v1425 = vld [vmem:[%s4 + $0x28] sm:$0xf]
      %v1426 = vld [vmem:[%s4 + $0x2c] sm:$0xf]
      %v1427 = vld [vmem:[%s4 + $0x30] sm:$0xf]
      %v1428 = vld [vmem:[%s4 + $0x34] sm:$0xf]
      %v1429 = vld [vmem:[%s4 + $0x38] sm:$0xf]
      %v1430 = vld [vmem:[%s4 + $0x3c] sm:$0xf]
      %v1447 = vunpack.c.l.b16 %v1415
      %v1448 = vunpack.c.l.b16 %v1416
      %v1449 = vunpack.c.l.b16 %v1417
      %v1450 = vunpack.c.l.b16 %v1418
      %v1451 = vunpack.c.l.b16 %v1419
      %v1452 = vunpack.c.l.b16 %v1420
      %v1453 = vunpack.c.l.b16 %v1421
      %v1454 = vunpack.c.l.b16 %v1422
      %v1455 = vunpack.c.l.b16 %v1423
      %v1456 = vunpack.c.l.b16 %v1424
      %v1457 = vunpack.c.l.b16 %v1425
      %v1458 = vunpack.c.l.b16 %v1426
      %v1459 = vunpack.c.l.b16 %v1427
      %v1460 = vunpack.c.l.b16 %v1428
      %v1461 = vunpack.c.l.b16 %v1429
      %v1462 = vunpack.c.l.b16 %v1430
      %v1463 = vpack.c.b16 %v1448, %v1447
      %v1464 = vpack.c.b16 %v1450, %v1449
      %v1465 = vpack.c.b16 %v1452, %v1451
      %v1466 = vpack.c.b16 %v1454, %v1453
      %v1467 = vpack.c.b16 %v1456, %v1455
      %v1468 = vpack.c.b16 %v1458, %v1457
      %v1469 = vpack.c.b16 %v1460, %v1459
      %v1470 = vpack.c.b16 %v1462, %v1461
      %1479 = vmatprep.subr.bf16.mxu0 0
      %1480 = vmatpush1.bf16.msra.mxu0 %v1470
      %1481 = vmatprep.subr.bf16.mxu0 0
      %1482 = vmatpush1.bf16.msra.mxu0 %v1469
      %1483 = vmatprep.subr.bf16.mxu0 0
      %1484 = vmatpush1.bf16.msra.mxu0 %v1468
      %1485 = vmatprep.subr.bf16.mxu0 0
      %1486 = vmatpush1.bf16.msra.mxu0 %v1467
      %1487 = vmatprep.subr.bf16.mxu0 0
      %1488 = vmatpush1.bf16.msra.mxu0 %v1466
      %1489 = vmatprep.subr.bf16.mxu0 0
      %1490 = vmatpush1.bf16.msra.mxu0 %v1465
      %1491 = vmatprep.subr.bf16.mxu0 0
      %1492 = vmatpush1.bf16.msra.mxu0 %v1464
      %1493 = vmatprep.subr.bf16.mxu0 0
      %1494 = vmatpush1.bf16.msra.mxu0 %v1463
      %1495 = vmatprep.subr.bf16.mxu0 0
      %1496 = vmatpush2.bf16.msra.mxu0 0
      %1497 = vmatprep.subr.bf16.mxu0 0
      %1498 = vmatpush2.bf16.msra.mxu0 0
      %1499 = vmatprep.subr.bf16.mxu0 0
      %1500 = vmatpush2.bf16.msra.mxu0 0
      %1501 = vmatprep.subr.bf16.mxu0 0
      %1502 = vmatpush2.bf16.msra.mxu0 0
      %1503 = vmatprep.subr.bf16.mxu0 0
      %1504 = vmatpush2.bf16.msra.mxu0 0
      %1505 = vmatprep.subr.bf16.mxu0 0
      %1506 = vmatpush2.bf16.msra.mxu0 0
      %1507 = vmatprep.subr.bf16.mxu0 0
      %1508 = vmatpush2.bf16.msra.mxu0 0
      %1509 = vmatprep.subr.bf16.mxu0 0
      %1510 = vmatpush2.bf16.msra.mxu0 0
      %1511 = vmatprep.mubr.bf16.mxu0 0
      %1512 = vmatmul.mubr.bf16.gmra.mxu0 %v1399
      %v1513 = vpop.f32.mrf.mxu0
      %v1514 = vadd.f32 0.0, %v1513
      %v1515 = vpop.f32.mrf.mxu0
      %v1516 = vpop.f32.mrf.mxu0
      %v1517 = vadd.f32 0.0, %v1516
      %v1518 = vpop.f32.mrf.mxu0
      %1519 = vmatprep.mubr.bf16.mxu0 0
      %1520 = vmatmul.mubr.bf16.gmra.mxu0 %v1400
      %v1521 = vpop.f32.mrf.mxu0
      %v1522 = vadd.f32 0.0, %v1521
      %v1523 = vpop.f32.mrf.mxu0
      %v1524 = vpop.f32.mrf.mxu0
      %v1525 = vadd.f32 0.0, %v1524
      %v1526 = vpop.f32.mrf.mxu0
      %1527 = vmatprep.mubr.bf16.mxu0 0
      %1528 = vmatmul.mubr.bf16.gmra.mxu0 %v1401
      %v1529 = vpop.f32.mrf.mxu0
      %v1530 = vadd.f32 0.0, %v1529
      %v1531 = vpop.f32.mrf.mxu0
      %v1532 = vpop.f32.mrf.mxu0
      %v1533 = vadd.f32 0.0, %v1532
      %v1534 = vpop.f32.mrf.mxu0
      %1535 = vmatprep.mubr.bf16.mxu0 0
      %1536 = vmatmul.mubr.bf16.gmra.mxu0 %v1402
      %v1537 = vpop.f32.mrf.mxu0
      %v1538 = vadd.f32 0.0, %v1537
      %v1539 = vpop.f32.mrf.mxu0
      %v1540 = vpop.f32.mrf.mxu0
      %v1541 = vadd.f32 0.0, %v1540
      %v1542 = vpop.f32.mrf.mxu0
      %1543 = vmatprep.mubr.bf16.mxu0 0
      %1544 = vmatmul.mubr.bf16.gmra.mxu0 %v1403
      %v1545 = vpop.f32.mrf.mxu0
      %v1546 = vadd.f32 0.0, %v1545
      %v1547 = vpop.f32.mrf.mxu0
      %v1548 = vpop.f32.mrf.mxu0
      %v1549 = vadd.f32 0.0, %v1548
      %v1550 = vpop.f32.mrf.mxu0
      %1551 = vmatprep.mubr.bf16.mxu0 0
      %1552 = vmatmul.mubr.bf16.gmra.mxu0 %v1404
      %v1553 = vpop.f32.mrf.mxu0
      %v1554 = vadd.f32 0.0, %v1553
      %v1555 = vpop.f32.mrf.mxu0
      %v1556 = vpop.f32.mrf.mxu0
      %v1557 = vadd.f32 0.0, %v1556
      %v1558 = vpop.f32.mrf.mxu0
      %1559 = vmatprep.mubr.bf16.mxu0 0
      %1560 = vmatmul.mubr.bf16.gmra.mxu0 %v1405
      %v1561 = vpop.f32.mrf.mxu0
      %v1562 = vadd.f32 0.0, %v1561
      %v1563 = vpop.f32.mrf.mxu0
      %v1564 = vpop.f32.mrf.mxu0
      %v1565 = vadd.f32 0.0, %v1564
      %v1566 = vpop.f32.mrf.mxu0
      %1567 = vmatprep.mubr.bf16.mxu0 0
      %1568 = vmatmul.mubr.bf16.gmra.mxu0 %v1406
      %v1569 = vpop.f32.mrf.mxu0
      %v1570 = vadd.f32 0.0, %v1569
      %v1571 = vpop.f32.mrf.mxu0
      %v1572 = vpop.f32.mrf.mxu0
      %v1573 = vadd.f32 0.0, %v1572
      %v1574 = vpop.f32.mrf.mxu0
      %1575 = vmatprep.mubr.bf16.mxu0 0
      %1576 = vmatmul.mubr.bf16.gmra.mxu0 %v1407
      %v1577 = vpop.f32.mrf.mxu0
      %v1578 = vadd.f32 0.0, %v1577
      %v1579 = vpop.f32.mrf.mxu0
      %v1580 = vpop.f32.mrf.mxu0
      %v1581 = vadd.f32 0.0, %v1580
      %v1582 = vpop.f32.mrf.mxu0
      %1583 = vmatprep.mubr.bf16.mxu0 0
      %1584 = vmatmul.mubr.bf16.gmra.mxu0 %v1408
      %v1585 = vpop.f32.mrf.mxu0
      %v1586 = vadd.f32 0.0, %v1585
      %v1587 = vpop.f32.mrf.mxu0
      %v1588 = vpop.f32.mrf.mxu0
      %v1589 = vadd.f32 0.0, %v1588
      %v1590 = vpop.f32.mrf.mxu0
      %1591 = vmatprep.mubr.bf16.mxu0 0
      %1592 = vmatmul.mubr.bf16.gmra.mxu0 %v1409
      %v1593 = vpop.f32.mrf.mxu0
      %v1594 = vadd.f32 0.0, %v1593
      %v1595 = vpop.f32.mrf.mxu0
      %v1596 = vpop.f32.mrf.mxu0
      %v1597 = vadd.f32 0.0, %v1596
      %v1598 = vpop.f32.mrf.mxu0
      %1599 = vmatprep.mubr.bf16.mxu0 0
      %1600 = vmatmul.mubr.bf16.gmra.mxu0 %v1410
      %v1601 = vpop.f32.mrf.mxu0
      %v1602 = vadd.f32 0.0, %v1601
      %v1603 = vpop.f32.mrf.mxu0
      %v1604 = vpop.f32.mrf.mxu0
      %v1605 = vadd.f32 0.0, %v1604
      %v1606 = vpop.f32.mrf.mxu0
      %1607 = vmatprep.mubr.bf16.mxu0 0
      %1608 = vmatmul.mubr.bf16.gmra.mxu0 %v1411
      %v1609 = vpop.f32.mrf.mxu0
      %v1610 = vadd.f32 0.0, %v1609
      %v1611 = vpop.f32.mrf.mxu0
      %v1612 = vpop.f32.mrf.mxu0
      %v1613 = vadd.f32 0.0, %v1612
      %v1614 = vpop.f32.mrf.mxu0
      %1615 = vmatprep.mubr.bf16.mxu0 0
      %1616 = vmatmul.mubr.bf16.gmra.mxu0 %v1412
      %v1617 = vpop.f32.mrf.mxu0
      %v1618 = vadd.f32 0.0, %v1617
      %v1619 = vpop.f32.mrf.mxu0
      %v1620 = vpop.f32.mrf.mxu0
      %v1621 = vadd.f32 0.0, %v1620
      %v1622 = vpop.f32.mrf.mxu0
      %1623 = vmatprep.mubr.bf16.mxu0 0
      %1624 = vmatmul.mubr.bf16.gmra.mxu0 %v1413
      %v1625 = vpop.f32.mrf.mxu0
      %v1626 = vadd.f32 0.0, %v1625
      %v1627 = vpop.f32.mrf.mxu0
      %v1628 = vpop.f32.mrf.mxu0
      %v1629 = vadd.f32 0.0, %v1628
      %v1630 = vpop.f32.mrf.mxu0
      %1631 = vmatprep.mubr.bf16.mxu0 0
      %1632 = vmatmul.mubr.bf16.gmra.mxu0 %v1414
      %v1633 = vpop.f32.mrf.mxu0
      %v1634 = vadd.f32 0.0, %v1633
      %v1635 = vpop.f32.mrf.mxu0
      %v1636 = vpop.f32.mrf.mxu0
      %v1637 = vadd.f32 0.0, %v1636
      %v1638 = vpop.f32.mrf.mxu0
      %1639 = vdwg.mxu0
      %v1640 = vld [vmem:[%s5] sm:$0x1]
      %v1642 = vlaneseq
      %v1643 = vshrl.u32 %v1642, 7
      %v1644 = vsub.s32 0, %v1643
      %v1645 = vrot.slane %v1640, %v1644
      %v1647 = vmul.f32 %v1514, %v1645
      %v1648 = vmul.f32 %v1517, %v1645
      %v1649 = vmul.f32 %v1522, %v1645
      %v1650 = vmul.f32 %v1525, %v1645
      %v1651 = vmul.f32 %v1530, %v1645
      %v1652 = vmul.f32 %v1533, %v1645
      %v1653 = vmul.f32 %v1538, %v1645
      %v1654 = vmul.f32 %v1541, %v1645
      %v1655 = vmul.f32 %v1546, %v1645
      %v1656 = vmul.f32 %v1549, %v1645
      %v1657 = vmul.f32 %v1554, %v1645
      %v1658 = vmul.f32 %v1557, %v1645
      %v1659 = vmul.f32 %v1562, %v1645
      %v1660 = vmul.f32 %v1565, %v1645
      %v1661 = vmul.f32 %v1570, %v1645
      %v1662 = vmul.f32 %v1573, %v1645
      %v1663 = vmul.f32 %v1578, %v1645
      %v1664 = vmul.f32 %v1581, %v1645
      %v1665 = vmul.f32 %v1586, %v1645
      %v1666 = vmul.f32 %v1589, %v1645
      %v1667 = vmul.f32 %v1594, %v1645
      %v1668 = vmul.f32 %v1597, %v1645
      %v1669 = vmul.f32 %v1602, %v1645
      %v1670 = vmul.f32 %v1605, %v1645
      %v1671 = vmul.f32 %v1610, %v1645
      %v1672 = vmul.f32 %v1613, %v1645
      %v1673 = vmul.f32 %v1618, %v1645
      %v1674 = vmul.f32 %v1621, %v1645
      %v1675 = vmul.f32 %v1626, %v1645
      %v1676 = vmul.f32 %v1629, %v1645
      %v1677 = vmul.f32 %v1634, %v1645
      %v1678 = vmul.f32 %v1637, %v1645
      %v1679 = vld [vmem:[%s6] sm:$0x1]
      %v1681 = vlaneseq
      %v1682 = vshrl.u32 %v1681, 7
      %v1683 = vsub.s32 0, %v1682
      %v1684 = vrot.slane %v1679, %v1683
      %v1686 = vadd.f32 %v1647, %v1684
      %v1687 = vadd.f32 %v1648, %v1684
      %v1688 = vadd.f32 %v1649, %v1684
      %v1689 = vadd.f32 %v1650, %v1684
      %v1690 = vadd.f32 %v1651, %v1684
      %v1691 = vadd.f32 %v1652, %v1684
      %v1692 = vadd.f32 %v1653, %v1684
      %v1693 = vadd.f32 %v1654, %v1684
      %v1694 = vadd.f32 %v1655, %v1684
      %v1695 = vadd.f32 %v1656, %v1684
      %v1696 = vadd.f32 %v1657, %v1684
      %v1697 = vadd.f32 %v1658, %v1684
      %v1698 = vadd.f32 %v1659, %v1684
      %v1699 = vadd.f32 %v1660, %v1684
      %v1700 = vadd.f32 %v1661, %v1684
      %v1701 = vadd.f32 %v1662, %v1684
      %v1702 = vadd.f32 %v1663, %v1684
      %v1703 = vadd.f32 %v1664, %v1684
      %v1704 = vadd.f32 %v1665, %v1684
      %v1705 = vadd.f32 %v1666, %v1684
      %v1706 = vadd.f32 %v1667, %v1684
      %v1707 = vadd.f32 %v1668, %v1684
      %v1708 = vadd.f32 %v1669, %v1684
      %v1709 = vadd.f32 %v1670, %v1684
      %v1710 = vadd.f32 %v1671, %v1684
      %v1711 = vadd.f32 %v1672, %v1684
      %v1712 = vadd.f32 %v1673, %v1684
      %v1713 = vadd.f32 %v1674, %v1684
      %v1714 = vadd.f32 %v1675, %v1684
      %v1715 = vadd.f32 %v1676, %v1684
      %v1716 = vadd.f32 %v1677, %v1684
      %v1717 = vadd.f32 %v1678, %v1684
      %v1718 = vmax.f32 %v1686, 0.0
      %v1719 = vmax.f32 %v1687, 0.0
      %v1720 = vmax.f32 %v1688, 0.0
      %v1721 = vmax.f32 %v1689, 0.0
      %v1722 = vmax.f32 %v1690, 0.0
      %v1723 = vmax.f32 %v1691, 0.0
      %v1724 = vmax.f32 %v1692, 0.0
      %v1725 = vmax.f32 %v1693, 0.0
      %v1726 = vmax.f32 %v1694, 0.0
      %v1727 = vmax.f32 %v1695, 0.0
      %v1728 = vmax.f32 %v1696, 0.0
      %v1729 = vmax.f32 %v1697, 0.0
      %v1730 = vmax.f32 %v1698, 0.0
      %v1731 = vmax.f32 %v1699, 0.0
      %v1732 = vmax.f32 %v1700, 0.0
      %v1733 = vmax.f32 %v1701, 0.0
      %v1734 = vmax.f32 %v1702, 0.0
      %v1735 = vmax.f32 %v1703, 0.0
      %v1736 = vmax.f32 %v1704, 0.0
      %v1737 = vmax.f32 %v1705, 0.0
      %v1738 = vmax.f32 %v1706, 0.0
      %v1739 = vmax.f32 %v1707, 0.0
      %v1740 = vmax.f32 %v1708, 0.0
      %v1741 = vmax.f32 %v1709, 0.0
      %v1742 = vmax.f32 %v1710, 0.0
      %v1743 = vmax.f32 %v1711, 0.0
      %v1744 = vmax.f32 %v1712, 0.0
      %v1745 = vmax.f32 %v1713, 0.0
      %v1746 = vmax.f32 %v1714, 0.0
      %v1747 = vmax.f32 %v1715, 0.0
      %v1748 = vmax.f32 %v1716, 0.0
      %v1749 = vmax.f32 %v1717, 0.0
      %v1750 = vmin.f32 %v1718, 6.0
      %v1751 = vmin.f32 %v1719, 6.0
      %v1752 = vmin.f32 %v1720, 6.0
      %v1753 = vmin.f32 %v1721, 6.0
      %v1754 = vmin.f32 %v1722, 6.0
      %v1755 = vmin.f32 %v1723, 6.0
      %v1756 = vmin.f32 %v1724, 6.0
      %v1757 = vmin.f32 %v1725, 6.0
      %v1758 = vmin.f32 %v1726, 6.0
      %v1759 = vmin.f32 %v1727, 6.0
      %v1760 = vmin.f32 %v1728, 6.0
      %v1761 = vmin.f32 %v1729, 6.0
      %v1762 = vmin.f32 %v1730, 6.0
      %v1763 = vmin.f32 %v1731, 6.0
      %v1764 = vmin.f32 %v1732, 6.0
      %v1765 = vmin.f32 %v1733, 6.0
      %v1766 = vmin.f32 %v1734, 6.0
      %v1767 = vmin.f32 %v1735, 6.0
      %v1768 = vmin.f32 %v1736, 6.0
      %v1769 = vmin.f32 %v1737, 6.0
      %v1770 = vmin.f32 %v1738, 6.0
      %v1771 = vmin.f32 %v1739, 6.0
      %v1772 = vmin.f32 %v1740, 6.0
      %v1773 = vmin.f32 %v1741, 6.0
      %v1774 = vmin.f32 %v1742, 6.0
      %v1775 = vmin.f32 %v1743, 6.0
      %v1776 = vmin.f32 %v1744, 6.0
      %v1777 = vmin.f32 %v1745, 6.0
      %v1778 = vmin.f32 %v1746, 6.0
      %v1779 = vmin.f32 %v1747, 6.0
      %v1780 = vmin.f32 %v1748, 6.0
      %v1781 = vmin.f32 %v1749, 6.0
      %v1782 = vpack.c.bf16 %v1751, %v1750
      %v1783 = vpack.c.bf16 %v1753, %v1752
      %v1784 = vpack.c.bf16 %v1755, %v1754
      %v1785 = vpack.c.bf16 %v1757, %v1756
      %v1786 = vpack.c.bf16 %v1759, %v1758
      %v1787 = vpack.c.bf16 %v1761, %v1760
      %v1788 = vpack.c.bf16 %v1763, %v1762
      %v1789 = vpack.c.bf16 %v1765, %v1764
      %v1790 = vpack.c.bf16 %v1767, %v1766
      %v1791 = vpack.c.bf16 %v1769, %v1768
      %v1792 = vpack.c.bf16 %v1771, %v1770
      %v1793 = vpack.c.bf16 %v1773, %v1772
      %v1794 = vpack.c.bf16 %v1775, %v1774
      %v1795 = vpack.c.bf16 %v1777, %v1776
      %v1796 = vpack.c.bf16 %v1779, %v1778
      %v1797 = vpack.c.bf16 %v1781, %v1780
      %v1814 = vunpack.c.l.b16 %v1782
      %v1815 = vunpack.c.h.b16 %v1782
      %v1816 = vunpack.c.l.b16 %v1783
      %v1817 = vunpack.c.h.b16 %v1783
      %v1818 = vunpack.c.l.b16 %v1784
      %v1819 = vunpack.c.h.b16 %v1784
      %v1820 = vunpack.c.l.b16 %v1785
      %v1821 = vunpack.c.h.b16 %v1785
      %v1822 = vunpack.c.l.b16 %v1786
      %v1823 = vunpack.c.h.b16 %v1786
      %v1824 = vunpack.c.l.b16 %v1787
      %v1825 = vunpack.c.h.b16 %v1787
      %v1826 = vunpack.c.l.b16 %v1788
      %v1827 = vunpack.c.h.b16 %v1788
      %v1828 = vunpack.c.l.b16 %v1789
      %v1829 = vunpack.c.h.b16 %v1789
      %v1830 = vunpack.c.l.b16 %v1790
      %v1831 = vunpack.c.h.b16 %v1790
      %v1832 = vunpack.c.l.b16 %v1791
      %v1833 = vunpack.c.h.b16 %v1791
      %v1834 = vunpack.c.l.b16 %v1792
      %v1835 = vunpack.c.h.b16 %v1792
      %v1836 = vunpack.c.l.b16 %v1793
      %v1837 = vunpack.c.h.b16 %v1793
      %v1838 = vunpack.c.l.b16 %v1794
      %v1839 = vunpack.c.h.b16 %v1794
      %v1840 = vunpack.c.l.b16 %v1795
      %v1841 = vunpack.c.h.b16 %v1795
      %v1842 = vunpack.c.l.b16 %v1796
      %v1843 = vunpack.c.h.b16 %v1796
      %v1844 = vunpack.c.l.b16 %v1797
      %v1845 = vunpack.c.h.b16 %v1797
      %v1846 = vpack.c.b16 %v1814, %v1814
      %v1847 = vpack.c.b16 %v1815, %v1815
      %v1848 = vpack.c.b16 %v1816, %v1816
      %v1849 = vpack.c.b16 %v1817, %v1817
      %v1850 = vpack.c.b16 %v1818, %v1818
      %v1851 = vpack.c.b16 %v1819, %v1819
      %v1852 = vpack.c.b16 %v1820, %v1820
      %v1853 = vpack.c.b16 %v1821, %v1821
      %v1854 = vpack.c.b16 %v1822, %v1822
      %v1855 = vpack.c.b16 %v1823, %v1823
      %v1856 = vpack.c.b16 %v1824, %v1824
      %v1857 = vpack.c.b16 %v1825, %v1825
      %v1858 = vpack.c.b16 %v1826, %v1826
      %v1859 = vpack.c.b16 %v1827, %v1827
      %v1860 = vpack.c.b16 %v1828, %v1828
      %v1861 = vpack.c.b16 %v1829, %v1829
      %v1862 = vpack.c.b16 %v1830, %v1830
      %v1863 = vpack.c.b16 %v1831, %v1831
      %v1864 = vpack.c.b16 %v1832, %v1832
      %v1865 = vpack.c.b16 %v1833, %v1833
      %v1866 = vpack.c.b16 %v1834, %v1834
      %v1867 = vpack.c.b16 %v1835, %v1835
      %v1868 = vpack.c.b16 %v1836, %v1836
      %v1869 = vpack.c.b16 %v1837, %v1837
      %v1870 = vpack.c.b16 %v1838, %v1838
      %v1871 = vpack.c.b16 %v1839, %v1839
      %v1872 = vpack.c.b16 %v1840, %v1840
      %v1873 = vpack.c.b16 %v1841, %v1841
      %v1874 = vpack.c.b16 %v1842, %v1842
      %v1875 = vpack.c.b16 %v1843, %v1843
      %v1876 = vpack.c.b16 %v1844, %v1844
      %v1877 = vpack.c.b16 %v1845, %v1845
      %1910 = vst [vmem:[%s283] sm:$0xf] %v1846
      %1911 = vst [vmem:[%s283 + $0x4] sm:$0xf] %v1847
      %1912 = vst [vmem:[%s283 + $0x8] sm:$0xf] %v1848
      %1913 = vst [vmem:[%s283 + $0xc] sm:$0xf] %v1849
      %1914 = vst [vmem:[%s283 + $0x10] sm:$0xf] %v1850
      %1915 = vst [vmem:[%s283 + $0x14] sm:$0xf] %v1851
      %1916 = vst [vmem:[%s283 + $0x18] sm:$0xf] %v1852
      %1917 = vst [vmem:[%s283 + $0x1c] sm:$0xf] %v1853
      %1918 = vst [vmem:[%s283 + $0x20] sm:$0xf] %v1854
      %1919 = vst [vmem:[%s283 + $0x24] sm:$0xf] %v1855
      %1920 = vst [vmem:[%s283 + $0x28] sm:$0xf] %v1856
      %1921 = vst [vmem:[%s283 + $0x2c] sm:$0xf] %v1857
      %1922 = vst [vmem:[%s283 + $0x30] sm:$0xf] %v1858
      %1923 = vst [vmem:[%s283 + $0x34] sm:$0xf] %v1859
      %1924 = vst [vmem:[%s283 + $0x38] sm:$0xf] %v1860
      %1925 = vst [vmem:[%s283 + $0x3c] sm:$0xf] %v1861
      %1926 = vst [vmem:[%s283 + $0x40] sm:$0xf] %v1862
      %1927 = vst [vmem:[%s283 + $0x44] sm:$0xf] %v1863
      %1928 = vst [vmem:[%s283 + $0x48] sm:$0xf] %v1864
      %1929 = vst [vmem:[%s283 + $0x4c] sm:$0xf] %v1865
      %1930 = vst [vmem:[%s283 + $0x50] sm:$0xf] %v1866
      %1931 = vst [vmem:[%s283 + $0x54] sm:$0xf] %v1867
      %1932 = vst [vmem:[%s283 + $0x58] sm:$0xf] %v1868
      %1933 = vst [vmem:[%s283 + $0x5c] sm:$0xf] %v1869
      %1934 = vst [vmem:[%s283 + $0x60] sm:$0xf] %v1870
      %1935 = vst [vmem:[%s283 + $0x64] sm:$0xf] %v1871
      %1936 = vst [vmem:[%s283 + $0x68] sm:$0xf] %v1872
      %1937 = vst [vmem:[%s283 + $0x6c] sm:$0xf] %v1873
      %1938 = vst [vmem:[%s283 + $0x70] sm:$0xf] %v1874
      %1939 = vst [vmem:[%s283 + $0x74] sm:$0xf] %v1875
      %1940 = vst [vmem:[%s283 + $0x78] sm:$0xf] %v1876
      %1941 = vst [vmem:[%s283 + $0x7c] sm:$0xf] %v1877
      %s1942 = smul.u32 32, %s18
      %p1943 = scmp.lt.s32.totalorder %s1942, 63
      %s1944 = scalar_select %p1943, %s1942, 63
      %s1945 = smul.addr %s1944, 4
      %s1946 = scalar_lea.vmem %s7, %s1945
      // Predicated region
      $region49: #{vae_forward.7} parent=47 // pred_check
        %p1947 = pneg %p188
      $region50: #{vae_forward.7} parent=47 // pred_check_branch
        %1949 = sbr.rel (%p1947) target = $region52
      $region51: #{vae_forward.7} parent=47 // pred_region
        %s1950 = smul.u32 32, %s18
      $region52: #{vae_forward.7} parent=47 // pred_fallthru
        _
    $region48: #{vae_forward.7} parent=5 // pred_fallthru
      _
    %p1951 = scmp.le.s32.totalorder 2, %s13
    // Predicated region
    $region53: #{vae_forward.7} parent=5 // pred_check
      %p1952 = pneg %p1951
    $region54: #{vae_forward.7} parent=5 // pred_check_branch
      %1954 = sbr.rel (%p1952) target = $region56
    $region55: #{vae_forward.7} parent=5 // pred_region
      %s1955 = ssub.s32 %s13, 2
      // Predicated region
      $region57: #{vae_forward.7} parent=55 // pred_check
        %p1956 = pneg %p194
      $region58: #{vae_forward.7} parent=55 // pred_check_branch
        %1958 = sbr.rel (%p1956) target = $region60
      $region59: #{vae_forward.7} parent=55 // pred_region
        %s1959 = smul.u32 32, %s19
        %p1960 = scmp.lt.s32.totalorder %s1959, 63
        %s1961 = scalar_select %p1960, %s1959, 63
        %s1962 = smul.addr %s1961, 4
        %s1963 = scalar_lea.vmem %s7, %s1962
      $region60: #{vae_forward.7} parent=55 // pred_fallthru
        _
    $region56: #{vae_forward.7} parent=5 // pred_fallthru
      _
  $region6: #{vae_forward.7} parent=0 // loop_footer
    %s17 = sadd.s32 1, %s13
  $region7: #{vae_forward.7} parent=0 // loop_footer_branch
    %12 = sbr.rel target = $region3
  $region8: #{vae_forward.7} parent=0 // loop_exit
    _

// kernel: vae_forward.10
$region0: #{vae_forward.10}
  #allocation0 [shape = 'u32[]', space=smem, size = 0x4, offset = 0x4, fixed_abs, tag = 'smem constant byte address 0x4 - core index']
  #allocation1 [shape = 'u32[144,128]{1,0:T(1,128)}', space=vmem, size = 0x12000, scoped, tag = 'internal scratch']
  %s0 = inlined_call_operand.vmem [shape: bf16[128,16], index: 0, kind: input, shape index: {}]
  %s1 = inlined_call_operand.vmem [shape: bf16[16,128], index: 1, kind: input, shape index: {}]
  %s2 = inlined_call_operand.vmem [shape: f32[1,128], index: 2, kind: input, shape index: {}]
  %s3 = inlined_call_operand.vmem [shape: f32[1,128], index: 3, kind: input, shape index: {}]
  %s4 = inlined_call_operand.vmem [shape: bf16[128,128], index: 4, kind: output, shape index: {}]
  %s5 = sld [smem:[#allocation0]]
  $region49: #{vae_forward.10} parent=0
    _
  %s7 = ssub.s32 1, %s5
  %s8 = scalar_select 0, %s7, %s5
  loop: start=0, step=1, limit=4
  $region2: #{vae_forward.10} parent=0 // loop_pre_header
    _
  $region3: #{vae_forward.10} parent=0 // loop_header
    %s10 = sphi 0, %s14
    %p11 = scmp.ge.s32.totalorder %s10, 4
    %s20 = sphi 0, %s22
    %s23 = sphi 0, %s20
    %s24 = sphi 0, %s23
    %s40 = sphi 0, %s24
    %s44 = sphi 0, %s44
    %s46 = sphi 0, %s44
    %s47 = sphi 0, %s46
    %s61 = sphi 0, %s47
    %s65 = sphi 0, %s65
    %s67 = sphi 0, %s65
    %s68 = sphi 0, %s67
    %s82 = sphi 0, %s68
    %s86 = sphi 0, %s86
    %s88 = sphi 0, %s86
    %s89 = sphi 0, %s88
    %s103 = sphi 0, %s89
    %s109 = sphi 0, %s111
    %s112 = sphi 0, %s109
    %s113 = sphi 0, %s112
    %s129 = sphi 0, %s113
  $region4: #{vae_forward.10} parent=0 // loop_header_branch
    %13 = sbr.rel (%p11) target = $region8
  $region5: #{vae_forward.10} parent=0 // loop_body
    %s15 = ssub.s32 %s10, 1
    %s16 = ssub.s32 %s10, 2
    %s17 = sadd.s32 %s10, 1
    %s18 = ssub.s32 %s10, %s17
    %p19 = scmp.eq.s32.totalorder %s18, 0
    %s21 = sadd.s32 %s20, 1
    %s22 = scalar_select %p19, %s20, %s21
    %p25 = pneg %p19
    %p26 = scmp.eq.s32.totalorder %s10, 1
    %p27 = por %p25, %p26
    %p28 = scmp.ne.s32.totalorder %s20, %s23
    %p29 = scmp.eq.s32.totalorder %s10, 0
    %p30 = por %p28, %p29
    %p31 = scmp.ne.s32.totalorder %s20, %s23
    %p32 = scmp.eq.s32.totalorder %s15, 1
    %p33 = por %p31, %p32
    %p34 = scmp.ne.s32.totalorder %s23, %s24
    %p35 = scmp.eq.s32.totalorder %s15, 0
    %p36 = por %p34, %p35
    %p37 = scmp.ne.s32.totalorder %s23, %s24
    %p38 = scmp.eq.s32.totalorder %s16, 1
    %p39 = por %p37, %p38
    %p41 = scmp.ne.s32.totalorder %s24, %s40
    %p42 = scmp.eq.s32.totalorder %s16, 0
    %p43 = por %p41, %p42
    %s45 = sadd.s32 %s44, 1
    %p48 = scmp.eq.s32.totalorder %s10, 1
    %p49 = scmp.ne.s32.totalorder %s44, %s46
    %p50 = scmp.eq.s32.totalorder %s10, 0
    %p51 = por %p49, %p50
    %p52 = scmp.ne.s32.totalorder %s44, %s46
    %p53 = scmp.eq.s32.totalorder %s15, 1
    %p54 = por %p52, %p53
    %p55 = scmp.ne.s32.totalorder %s46, %s47
    %p56 = scmp.eq.s32.totalorder %s15, 0
    %p57 = por %p55, %p56
    %p58 = scmp.ne.s32.totalorder %s46, %s47
    %p59 = scmp.eq.s32.totalorder %s16, 1
    %p60 = por %p58, %p59
    %p62 = scmp.ne.s32.totalorder %s47, %s61
    %p63 = scmp.eq.s32.totalorder %s16, 0
    %p64 = por %p62, %p63
    %s66 = sadd.s32 %s65, 1
    %p69 = scmp.eq.s32.totalorder %s10, 1
    %p70 = scmp.ne.s32.totalorder %s65, %s67
    %p71 = scmp.eq.s32.totalorder %s10, 0
    %p72 = por %p70, %p71
    %p73 = scmp.ne.s32.totalorder %s65, %s67
    %p74 = scmp.eq.s32.totalorder %s15, 1
    %p75 = por %p73, %p74
    %p76 = scmp.ne.s32.totalorder %s67, %s68
    %p77 = scmp.eq.s32.totalorder %s15, 0
    %p78 = por %p76, %p77
    %p79 = scmp.ne.s32.totalorder %s67, %s68
    %p80 = scmp.eq.s32.totalorder %s16, 1
    %p81 = por %p79, %p80
    %p83 = scmp.ne.s32.totalorder %s68, %s82
    %p84 = scmp.eq.s32.totalorder %s16, 0
    %p85 = por %p83, %p84
    %s87 = sadd.s32 %s86, 1
    %p90 = scmp.eq.s32.totalorder %s10, 1
    %p91 = scmp.ne.s32.totalorder %s86, %s88
    %p92 = scmp.eq.s32.totalorder %s10, 0
    %p93 = por %p91, %p92
    %p94 = scmp.ne.s32.totalorder %s86, %s88
    %p95 = scmp.eq.s32.totalorder %s15, 1
    %p96 = por %p94, %p95
    %p97 = scmp.ne.s32.totalorder %s88, %s89
    %p98 = scmp.eq.s32.totalorder %s15, 0
    %p99 = por %p97, %p98
    %p100 = scmp.ne.s32.totalorder %s88, %s89
    %p101 = scmp.eq.s32.totalorder %s16, 1
    %p102 = por %p100, %p101
    %p104 = scmp.ne.s32.totalorder %s89, %s103
    %p105 = scmp.eq.s32.totalorder %s16, 0
    %p106 = por %p104, %p105
    %s107 = ssub.s32 %s10, %s17
    %p108 = scmp.eq.s32.totalorder %s107, 0
    %s110 = sadd.s32 %s109, 1
    %s111 = scalar_select %p108, %s109, %s110
    %p114 = pneg %p108
    %p115 = scmp.eq.s32.totalorder %s10, 1
    %p116 = por %p114, %p115
    %p117 = scmp.ne.s32.totalorder %s109, %s112
    %p118 = scmp.eq.s32.totalorder %s10, 0
    %p119 = por %p117, %p118
    %p120 = scmp.ne.s32.totalorder %s109, %s112
    %p121 = scmp.eq.s32.totalorder %s15, 1
    %p122 = por %p120, %p121
    %p123 = scmp.ne.s32.totalorder %s112, %s113
    %p124 = scmp.eq.s32.totalorder %s15, 0
    %p125 = por %p123, %p124
    %p126 = scmp.ne.s32.totalorder %s112, %s113
    %p127 = scmp.eq.s32.totalorder %s16, 1
    %p128 = por %p126, %p127
    %p130 = scmp.ne.s32.totalorder %s113, %s129
    %p131 = scmp.eq.s32.totalorder %s16, 0
    %p132 = por %p130, %p131
    %p133 = scmp.le.s32.totalorder 1, %s10
    %p134 = scmp.lt.s32.totalorder %s10, 3
    %p135 = pnand %p133, %p134
    %p136 = pneg %p135
    // Predicated region
    $region9: #{vae_forward.10} parent=5 // pred_check
      _
    $region10: #{vae_forward.10} parent=5 // pred_check_branch
      %138 = sbr.rel (%p135) target = $region12
    $region11: #{vae_forward.10} parent=5 // pred_region
      %s139 = ssub.s32 %s10, 1
      // Predicated region
      $region13: #{vae_forward.10} parent=11 // pred_check
        %p140 = pneg %p57
      $region14: #{vae_forward.10} parent=11 // pred_check_branch
        %142 = sbr.rel (%p140) target = $region16
      $region15: #{vae_forward.10} parent=11 // pred_region
        _
      $region16: #{vae_forward.10} parent=11 // pred_fallthru
        _
      // Predicated region
      $region17: #{vae_forward.10} parent=11 // pred_check
        %p143 = pneg %p78
      $region18: #{vae_forward.10} parent=11 // pred_check_branch
        %145 = sbr.rel (%p143) target = $region20
      $region19: #{vae_forward.10} parent=11 // pred_region
        _
      $region20: #{vae_forward.10} parent=11 // pred_fallthru
        _
      // Predicated region
      $region21: #{vae_forward.10} parent=11 // pred_check
        %p146 = pneg %p99
      $region22: #{vae_forward.10} parent=11 // pred_check_branch
        %148 = sbr.rel (%p146) target = $region24
      $region23: #{vae_forward.10} parent=11 // pred_region
        _
      $region24: #{vae_forward.10} parent=11 // pred_fallthru
        _
    $region12: #{vae_forward.10} parent=5 // pred_fallthru
      _
    %p149 = scmp.lt.s32.totalorder %s10, 2
    // Predicated region
    $region25: #{vae_forward.10} parent=5 // pred_check
      %p150 = pneg %p149
    $region26: #{vae_forward.10} parent=5 // pred_check_branch
      %152 = sbr.rel (%p150) target = $region28
    $region27: #{vae_forward.10} parent=5 // pred_region
      // Predicated region
      $region29: #{vae_forward.10} parent=27 // pred_check
        %p153 = pneg %p30
      $region30: #{vae_forward.10} parent=27 // pred_check_branch
        %155 = sbr.rel (%p153) target = $region32
      $region31: #{vae_forward.10} parent=27 // pred_region
        %s156 = smul.u32 8, %s10
        %p157 = scmp.lt.s32.totalorder %s156, 15
        %s158 = scalar_select %p157, %s156, 15
        %s159 = smul.addr %s158, 4
        %s160 = scalar_lea.vmem %s0, %s159
        %s161 = smul.u32 8, %s10
      $region32: #{vae_forward.10} parent=27 // pred_fallthru
        _
    $region28: #{vae_forward.10} parent=5 // pred_fallthru
      _
    %p162 = scmp.le.s32.totalorder 1, %s10
    %p163 = scmp.lt.s32.totalorder %s10, 3
    %p164 = pnand %p162, %p163
    %p165 = pneg %p164
    // Predicated region
    $region33: #{vae_forward.10} parent=5 // pred_check
      _
    $region34: #{vae_forward.10} parent=5 // pred_check_branch
      %167 = sbr.rel (%p164) target = $region36
    $region35: #{vae_forward.10} parent=5 // pred_region
      %s168 = ssub.s32 %s10, 1
      %s169 = smul.u32 8, %s15
      %p170 = scmp.lt.s32.totalorder %s169, 15
      %s171 = scalar_select %p170, %s169, 15
      %s172 = smul.addr %s171, 4
      %s173 = scalar_lea.vmem %s0, %s172
      %p174 = pneg %p36
      %p175 = pneg %p33
      %p176 = pneg %p57
      %p177 = pneg %p54
      %p178 = pneg %p78
      %p179 = pneg %p75
      %p180 = pneg %p99
      %p181 = pneg %p96
      %p182 = pneg %p125
      %p183 = pneg %p122
      %s184 = smul.u32 8, %s15
      %p185 = scmp.lt.s32.totalorder %s184, 15
      %s186 = scalar_select %p185, %s184, 15
      %s187 = smul.addr %s186, 4
      %s188 = scalar_lea.vmem %s4, %s187
      %s189 = smul.u32 8, %s15
      %p190 = scmp.lt.s32.totalorder %s189, 15
      %s191 = scalar_select %p190, %s189, 15
      %s192 = smul.addr %s191, 4
      %s193 = scalar_lea.vmem %s0, %s192
      %s194 = smul.u32 8, %s15
      %s195 = smul.u32 8, %s15
      %p196 = scmp.lt.s32.totalorder %s195, 15
      %s197 = scalar_select %p196, %s195, 15
      %s198 = smul.addr %s197, 4
      %s199 = scalar_lea.vmem %s4, %s198
      %s200 = smul.u32 8, %s15
      %v202 = vld [vmem:[%s193] sm:$0xf]
      %v203 = vld [vmem:[%s193 + $0x4] sm:$0xf]
      %v204 = vld [vmem:[%s193 + $0x8] sm:$0xf]
      %v205 = vld [vmem:[%s193 + $0xc] sm:$0xf]
      %v206 = vld [vmem:[%s193 + $0x10] sm:$0xf]
      %v207 = vld [vmem:[%s193 + $0x14] sm:$0xf]
      %v208 = vld [vmem:[%s193 + $0x18] sm:$0xf]
      %v209 = vld [vmem:[%s193 + $0x1c] sm:$0xf]
      %v210 = vld [vmem:[%s1] sm:$0xf]
      %v211 = vld [vmem:[%s1 + $0x4] sm:$0xf]
      %v220 = vunpack.c.l.b16 %v202
      %v221 = vunpack.c.l.b16 %v203
      %v222 = vunpack.c.l.b16 %v204
      %v223 = vunpack.c.l.b16 %v205
      %v224 = vunpack.c.l.b16 %v206
      %v225 = vunpack.c.l.b16 %v207
      %v226 = vunpack.c.l.b16 %v208
      %v227 = vunpack.c.l.b16 %v209
      %v228 = vpack.c.b16 %v221, %v220
      %v229 = vpack.c.b16 %v223, %v222
      %v230 = vpack.c.b16 %v225, %v224
      %v231 = vpack.c.b16 %v227, %v226
      %v234 = vunpack.c.l.b16 %v210
      %v235 = vunpack.c.l.b16 %v211
      %v236 = vpack.c.b16 %v235, %v234
      %vm238 = vcmask 130048
      %v240 = vsel %vm238, %v228, 0
      %v243 = vsel %vm238, %v229, 0
      %v246 = vsel %vm238, %v230, 0
      %v249 = vsel %vm238, %v231, 0
      %251 = vmatprep.subr.bf16.mxu0 0
      %252 = vmatpush1.bf16.msra.mxu0 0
      %253 = vmatprep.subr.bf16.mxu0 0
      %254 = vmatpush1.bf16.msra.mxu0 0
      %255 = vmatprep.subr.bf16.mxu0 0
      %256 = vmatpush1.bf16.msra.mxu0 0
      %257 = vmatprep.subr.bf16.mxu0 0
      %258 = vmatpush1.bf16.msra.mxu0 0
      %259 = vmatprep.subr.bf16.mxu0 0
      %260 = vmatpush1.bf16.msra.mxu0 0
      %261 = vmatprep.subr.bf16.mxu0 0
      %262 = vmatpush1.bf16.msra.mxu0 0
      %263 = vmatprep.subr.bf16.mxu0 0
      %264 = vmatpush1.bf16.msra.mxu0 0
      %265 = vmatprep.subr.bf16.mxu0 0
      %266 = vmatpush1.bf16.msra.mxu0 %v236
      %267 = vmatprep.subr.bf16.mxu0 0
      %268 = vmatpush2.bf16.msra.mxu0 0
      %269 = vmatprep.subr.bf16.mxu0 0
      %270 = vmatpush2.bf16.msra.mxu0 0
      %271 = vmatprep.subr.bf16.mxu0 0
      %272 = vmatpush2.bf16.msra.mxu0 0
      %273 = vmatprep.subr.bf16.mxu0 0
      %274 = vmatpush2.bf16.msra.mxu0 0
      %275 = vmatprep.subr.bf16.mxu0 0
      %276 = vmatpush2.bf16.msra.mxu0 0
      %277 = vmatprep.subr.bf16.mxu0 0
      %278 = vmatpush2.bf16.msra.mxu0 0
      %279 = vmatprep.subr.bf16.mxu0 0
      %280 = vmatpush2.bf16.msra.mxu0 0
      %281 = vmatprep.subr.bf16.mxu0 0
      %282 = vmatpush2.bf16.msra.mxu0 0
      %283 = vmatprep.mubr.bf16.mxu0 0
      %284 = vmatmul.mubr.bf16.gmra.mxu0 %v240
      %v285 = vpop.f32.mrf.mxu0
      %v286 = vadd.f32 0.0, %v285
      %v287 = vpop.f32.mrf.mxu0
      %v288 = vpop.f32.mrf.mxu0
      %v289 = vadd.f32 0.0, %v288
      %v290 = vpop.f32.mrf.mxu0
      %291 = vmatprep.mubr.bf16.mxu0 0
      %292 = vmatmul.mubr.bf16.gmra.mxu0 %v243
      %v293 = vpop.f32.mrf.mxu0
      %v294 = vadd.f32 0.0, %v293
      %v295 = vpop.f32.mrf.mxu0
      %v296 = vpop.f32.mrf.mxu0
      %v297 = vadd.f32 0.0, %v296
      %v298 = vpop.f32.mrf.mxu0
      %299 = vmatprep.mubr.bf16.mxu0 0
      %300 = vmatmul.mubr.bf16.gmra.mxu0 %v246
      %v301 = vpop.f32.mrf.mxu0
      %v302 = vadd.f32 0.0, %v301
      %v303 = vpop.f32.mrf.mxu0
      %v304 = vpop.f32.mrf.mxu0
      %v305 = vadd.f32 0.0, %v304
      %v306 = vpop.f32.mrf.mxu0
      %307 = vmatprep.mubr.bf16.mxu0 0
      %308 = vmatmul.mubr.bf16.gmra.mxu0 %v249
      %v309 = vpop.f32.mrf.mxu0
      %v310 = vadd.f32 0.0, %v309
      %v311 = vpop.f32.mrf.mxu0
      %v312 = vpop.f32.mrf.mxu0
      %v313 = vadd.f32 0.0, %v312
      %v314 = vpop.f32.mrf.mxu0
      %315 = vdwg.mxu0
      %v316 = vld [vmem:[%s2] sm:$0x1]
      %v318 = vlaneseq
      %v319 = vshrl.u32 %v318, 7
      %v320 = vsub.s32 0, %v319
      %v321 = vrot.slane %v316, %v320
      %v323 = vmul.f32 %v286, %v321
      %v324 = vmul.f32 %v289, %v321
      %v325 = vmul.f32 %v294, %v321
      %v326 = vmul.f32 %v297, %v321
      %v327 = vmul.f32 %v302, %v321
      %v328 = vmul.f32 %v305, %v321
      %v329 = vmul.f32 %v310, %v321
      %v330 = vmul.f32 %v313, %v321
      %v331 = vld [vmem:[%s3] sm:$0x1]
      %v333 = vlaneseq
      %v334 = vshrl.u32 %v333, 7
      %v335 = vsub.s32 0, %v334
      %v336 = vrot.slane %v331, %v335
      %v338 = vadd.f32 %v323, %v336
      %v339 = vadd.f32 %v324, %v336
      %v340 = vadd.f32 %v325, %v336
      %v341 = vadd.f32 %v326, %v336
      %v342 = vadd.f32 %v327, %v336
      %v343 = vadd.f32 %v328, %v336
      %v344 = vadd.f32 %v329, %v336
      %v345 = vadd.f32 %v330, %v336
      %v346 = vmax.f32 %v338, 0.0
      %v347 = vmax.f32 %v339, 0.0
      %v348 = vmax.f32 %v340, 0.0
      %v349 = vmax.f32 %v341, 0.0
      %v350 = vmax.f32 %v342, 0.0
      %v351 = vmax.f32 %v343, 0.0
      %v352 = vmax.f32 %v344, 0.0
      %v353 = vmax.f32 %v345, 0.0
      %v354 = vmin.f32 %v346, 6.0
      %v355 = vmin.f32 %v347, 6.0
      %v356 = vmin.f32 %v348, 6.0
      %v357 = vmin.f32 %v349, 6.0
      %v358 = vmin.f32 %v350, 6.0
      %v359 = vmin.f32 %v351, 6.0
      %v360 = vmin.f32 %v352, 6.0
      %v361 = vmin.f32 %v353, 6.0
      %v362 = vpack.c.bf16 %v355, %v354
      %v363 = vpack.c.bf16 %v357, %v356
      %v364 = vpack.c.bf16 %v359, %v358
      %v365 = vpack.c.bf16 %v361, %v360
      %v370 = vunpack.c.l.b16 %v362
      %v371 = vunpack.c.h.b16 %v362
      %v372 = vunpack.c.l.b16 %v363
      %v373 = vunpack.c.h.b16 %v363
      %v374 = vunpack.c.l.b16 %v364
      %v375 = vunpack.c.h.b16 %v364
      %v376 = vunpack.c.l.b16 %v365
      %v377 = vunpack.c.h.b16 %v365
      %v378 = vpack.c.b16 %v370, %v370
      %v379 = vpack.c.b16 %v371, %v371
      %v380 = vpack.c.b16 %v372, %v372
      %v381 = vpack.c.b16 %v373, %v373
      %v382 = vpack.c.b16 %v374, %v374
      %v383 = vpack.c.b16 %v375, %v375
      %v384 = vpack.c.b16 %v376, %v376
      %v385 = vpack.c.b16 %v377, %v377
      %394 = vst [vmem:[%s199] sm:$0xf] %v378
      %395 = vst [vmem:[%s199 + $0x4] sm:$0xf] %v379
      %396 = vst [vmem:[%s199 + $0x8] sm:$0xf] %v380
      %397 = vst [vmem:[%s199 + $0xc] sm:$0xf] %v381
      %398 = vst [vmem:[%s199 + $0x10] sm:$0xf] %v382
      %399 = vst [vmem:[%s199 + $0x14] sm:$0xf] %v383
      %400 = vst [vmem:[%s199 + $0x18] sm:$0xf] %v384
      %401 = vst [vmem:[%s199 + $0x1c] sm:$0xf] %v385
      %s402 = smul.u32 8, %s15
      %p403 = scmp.lt.s32.totalorder %s402, 15
      %s404 = scalar_select %p403, %s402, 15
      %s405 = smul.addr %s404, 4
      %s406 = scalar_lea.vmem %s4, %s405
      // Predicated region
      $region37: #{vae_forward.10} parent=35 // pred_check
        %p407 = pneg %p122
      $region38: #{vae_forward.10} parent=35 // pred_check_branch
        %409 = sbr.rel (%p407) target = $region40
      $region39: #{vae_forward.10} parent=35 // pred_region
        %s410 = smul.u32 8, %s15
      $region40: #{vae_forward.10} parent=35 // pred_fallthru
        _
    $region36: #{vae_forward.10} parent=5 // pred_fallthru
      _
    %p411 = scmp.le.s32.totalorder 2, %s10
    // Predicated region
    $region41: #{vae_forward.10} parent=5 // pred_check
      %p412 = pneg %p411
    $region42: #{vae_forward.10} parent=5 // pred_check_branch
      %414 = sbr.rel (%p412) target = $region44
    $region43: #{vae_forward.10} parent=5 // pred_region
      %s415 = ssub.s32 %s10, 2
      // Predicated region
      $region45: #{vae_forward.10} parent=43 // pred_check
        %p416 = pneg %p128
      $region46: #{vae_forward.10} parent=43 // pred_check_branch
        %418 = sbr.rel (%p416) target = $region48
      $region47: #{vae_forward.10} parent=43 // pred_region
        %s419 = smul.u32 8, %s16
        %p420 = scmp.lt.s32.totalorder %s419, 15
        %s421 = scalar_select %p420, %s419, 15
        %s422 = smul.addr %s421, 4
        %s423 = scalar_lea.vmem %s4, %s422
      $region48: #{vae_forward.10} parent=43 // pred_fallthru
        _
    $region44: #{vae_forward.10} parent=5 // pred_fallthru
      _
  $region6: #{vae_forward.10} parent=0 // loop_footer
    %s14 = sadd.s32 1, %s10
  $region7: #{vae_forward.10} parent=0 // loop_footer_branch
    %9 = sbr.rel target = $region3
  $region8: #{vae_forward.10} parent=0 // loop_exit
    _

// kernel: vae_forward.9
$region0: #{vae_forward.9}
  #allocation0 [shape = 'u32[]', space=smem, size = 0x4, offset = 0x4, fixed_abs, tag = 'smem constant byte address 0x4 - core index']
  #allocation1 [shape = 'u32[144,128]{1,0:T(1,128)}', space=vmem, size = 0x12000, scoped, tag = 'internal scratch']
  %s0 = inlined_call_operand.vmem [shape: bf16[128,1200], index: 0, kind: input, shape index: {}]
  %s1 = inlined_call_operand.vmem [shape: bf16[1200,128], index: 1, kind: input, shape index: {}]
  %s2 = inlined_call_operand.vmem [shape: f32[1,128], index: 2, kind: input, shape index: {}]
  %s3 = inlined_call_operand.vmem [shape: f32[1,128], index: 3, kind: input, shape index: {}]
  %s4 = inlined_call_operand.vmem [shape: bf16[128,128], index: 4, kind: input, shape index: {}]
  %s5 = inlined_call_operand.vmem [shape: f32[1,128], index: 5, kind: input, shape index: {}]
  %s6 = inlined_call_operand.vmem [shape: f32[1,128], index: 6, kind: input, shape index: {}]
  %s7 = inlined_call_operand.vmem [shape: bf16[128,128], index: 7, kind: output, shape index: {}]
  %s8 = sld [smem:[#allocation0]]
  $region61: #{vae_forward.9} parent=0
    _
  %s10 = ssub.s32 1, %s8
  %s11 = scalar_select 0, %s10, %s8
  loop: start=0, step=1, limit=4
  $region2: #{vae_forward.9} parent=0 // loop_pre_header
    _
  $region3: #{vae_forward.9} parent=0 // loop_header
    %s13 = sphi 0, %s17
    %p14 = scmp.ge.s32.totalorder %s13, 4
    %s23 = sphi 0, %s25
    %s26 = sphi 0, %s23
    %s27 = sphi 0, %s26
    %s43 = sphi 0, %s27
    %s47 = sphi 0, %s47
    %s49 = sphi 0, %s47
    %s50 = sphi 0, %s49
    %s64 = sphi 0, %s50
    %s68 = sphi 0, %s68
    %s70 = sphi 0, %s68
    %s71 = sphi 0, %s70
    %s85 = sphi 0, %s71
    %s89 = sphi 0, %s89
    %s91 = sphi 0, %s89
    %s92 = sphi 0, %s91
    %s106 = sphi 0, %s92
    %s110 = sphi 0, %s110
    %s112 = sphi 0, %s110
    %s113 = sphi 0, %s112
    %s127 = sphi 0, %s113
    %s131 = sphi 0, %s131
    %s133 = sphi 0, %s131
    %s134 = sphi 0, %s133
    %s148 = sphi 0, %s134
    %s152 = sphi 0, %s152
    %s154 = sphi 0, %s152
    %s155 = sphi 0, %s154
    %s169 = sphi 0, %s155
    %s175 = sphi 0, %s177
    %s178 = sphi 0, %s175
    %s179 = sphi 0, %s178
    %s195 = sphi 0, %s179
  $region4: #{vae_forward.9} parent=0 // loop_header_branch
    %16 = sbr.rel (%p14) target = $region8
  $region5: #{vae_forward.9} parent=0 // loop_body
    %s18 = ssub.s32 %s13, 1
    %s19 = ssub.s32 %s13, 2
    %s20 = sadd.s32 %s13, 1
    %s21 = ssub.s32 %s13, %s20
    %p22 = scmp.eq.s32.totalorder %s21, 0
    %s24 = sadd.s32 %s23, 1
    %s25 = scalar_select %p22, %s23, %s24
    %p28 = pneg %p22
    %p29 = scmp.eq.s32.totalorder %s13, 1
    %p30 = por %p28, %p29
    %p31 = scmp.ne.s32.totalorder %s23, %s26
    %p32 = scmp.eq.s32.totalorder %s13, 0
    %p33 = por %p31, %p32
    %p34 = scmp.ne.s32.totalorder %s23, %s26
    %p35 = scmp.eq.s32.totalorder %s18, 1
    %p36 = por %p34, %p35
    %p37 = scmp.ne.s32.totalorder %s26, %s27
    %p38 = scmp.eq.s32.totalorder %s18, 0
    %p39 = por %p37, %p38
    %p40 = scmp.ne.s32.totalorder %s26, %s27
    %p41 = scmp.eq.s32.totalorder %s19, 1
    %p42 = por %p40, %p41
    %p44 = scmp.ne.s32.totalorder %s27, %s43
    %p45 = scmp.eq.s32.totalorder %s19, 0
    %p46 = por %p44, %p45
    %s48 = sadd.s32 %s47, 1
    %p51 = scmp.eq.s32.totalorder %s13, 1
    %p52 = scmp.ne.s32.totalorder %s47, %s49
    %p53 = scmp.eq.s32.totalorder %s13, 0
    %p54 = por %p52, %p53
    %p55 = scmp.ne.s32.totalorder %s47, %s49
    %p56 = scmp.eq.s32.totalorder %s18, 1
    %p57 = por %p55, %p56
    %p58 = scmp.ne.s32.totalorder %s49, %s50
    %p59 = scmp.eq.s32.totalorder %s18, 0
    %p60 = por %p58, %p59
    %p61 = scmp.ne.s32.totalorder %s49, %s50
    %p62 = scmp.eq.s32.totalorder %s19, 1
    %p63 = por %p61, %p62
    %p65 = scmp.ne.s32.totalorder %s50, %s64
    %p66 = scmp.eq.s32.totalorder %s19, 0
    %p67 = por %p65, %p66
    %s69 = sadd.s32 %s68, 1
    %p72 = scmp.eq.s32.totalorder %s13, 1
    %p73 = scmp.ne.s32.totalorder %s68, %s70
    %p74 = scmp.eq.s32.totalorder %s13, 0
    %p75 = por %p73, %p74
    %p76 = scmp.ne.s32.totalorder %s68, %s70
    %p77 = scmp.eq.s32.totalorder %s18, 1
    %p78 = por %p76, %p77
    %p79 = scmp.ne.s32.totalorder %s70, %s71
    %p80 = scmp.eq.s32.totalorder %s18, 0
    %p81 = por %p79, %p80
    %p82 = scmp.ne.s32.totalorder %s70, %s71
    %p83 = scmp.eq.s32.totalorder %s19, 1
    %p84 = por %p82, %p83
    %p86 = scmp.ne.s32.totalorder %s71, %s85
    %p87 = scmp.eq.s32.totalorder %s19, 0
    %p88 = por %p86, %p87
    %s90 = sadd.s32 %s89, 1
    %p93 = scmp.eq.s32.totalorder %s13, 1
    %p94 = scmp.ne.s32.totalorder %s89, %s91
    %p95 = scmp.eq.s32.totalorder %s13, 0
    %p96 = por %p94, %p95
    %p97 = scmp.ne.s32.totalorder %s89, %s91
    %p98 = scmp.eq.s32.totalorder %s18, 1
    %p99 = por %p97, %p98
    %p100 = scmp.ne.s32.totalorder %s91, %s92
    %p101 = scmp.eq.s32.totalorder %s18, 0
    %p102 = por %p100, %p101
    %p103 = scmp.ne.s32.totalorder %s91, %s92
    %p104 = scmp.eq.s32.totalorder %s19, 1
    %p105 = por %p103, %p104
    %p107 = scmp.ne.s32.totalorder %s92, %s106
    %p108 = scmp.eq.s32.totalorder %s19, 0
    %p109 = por %p107, %p108
    %s111 = sadd.s32 %s110, 1
    %p114 = scmp.eq.s32.totalorder %s13, 1
    %p115 = scmp.ne.s32.totalorder %s110, %s112
    %p116 = scmp.eq.s32.totalorder %s13, 0
    %p117 = por %p115, %p116
    %p118 = scmp.ne.s32.totalorder %s110, %s112
    %p119 = scmp.eq.s32.totalorder %s18, 1
    %p120 = por %p118, %p119
    %p121 = scmp.ne.s32.totalorder %s112, %s113
    %p122 = scmp.eq.s32.totalorder %s18, 0
    %p123 = por %p121, %p122
    %p124 = scmp.ne.s32.totalorder %s112, %s113
    %p125 = scmp.eq.s32.totalorder %s19, 1
    %p126 = por %p124, %p125
    %p128 = scmp.ne.s32.totalorder %s113, %s127
    %p129 = scmp.eq.s32.totalorder %s19, 0
    %p130 = por %p128, %p129
    %s132 = sadd.s32 %s131, 1
    %p135 = scmp.eq.s32.totalorder %s13, 1
    %p136 = scmp.ne.s32.totalorder %s131, %s133
    %p137 = scmp.eq.s32.totalorder %s13, 0
    %p138 = por %p136, %p137
    %p139 = scmp.ne.s32.totalorder %s131, %s133
    %p140 = scmp.eq.s32.totalorder %s18, 1
    %p141 = por %p139, %p140
    %p142 = scmp.ne.s32.totalorder %s133, %s134
    %p143 = scmp.eq.s32.totalorder %s18, 0
    %p144 = por %p142, %p143
    %p145 = scmp.ne.s32.totalorder %s133, %s134
    %p146 = scmp.eq.s32.totalorder %s19, 1
    %p147 = por %p145, %p146
    %p149 = scmp.ne.s32.totalorder %s134, %s148
    %p150 = scmp.eq.s32.totalorder %s19, 0
    %p151 = por %p149, %p150
    %s153 = sadd.s32 %s152, 1
    %p156 = scmp.eq.s32.totalorder %s13, 1
    %p157 = scmp.ne.s32.totalorder %s152, %s154
    %p158 = scmp.eq.s32.totalorder %s13, 0
    %p159 = por %p157, %p158
    %p160 = scmp.ne.s32.totalorder %s152, %s154
    %p161 = scmp.eq.s32.totalorder %s18, 1
    %p162 = por %p160, %p161
    %p163 = scmp.ne.s32.totalorder %s154, %s155
    %p164 = scmp.eq.s32.totalorder %s18, 0
    %p165 = por %p163, %p164
    %p166 = scmp.ne.s32.totalorder %s154, %s155
    %p167 = scmp.eq.s32.totalorder %s19, 1
    %p168 = por %p166, %p167
    %p170 = scmp.ne.s32.totalorder %s155, %s169
    %p171 = scmp.eq.s32.totalorder %s19, 0
    %p172 = por %p170, %p171
    %s173 = ssub.s32 %s13, %s20
    %p174 = scmp.eq.s32.totalorder %s173, 0
    %s176 = sadd.s32 %s175, 1
    %s177 = scalar_select %p174, %s175, %s176
    %p180 = pneg %p174
    %p181 = scmp.eq.s32.totalorder %s13, 1
    %p182 = por %p180, %p181
    %p183 = scmp.ne.s32.totalorder %s175, %s178
    %p184 = scmp.eq.s32.totalorder %s13, 0
    %p185 = por %p183, %p184
    %p186 = scmp.ne.s32.totalorder %s175, %s178
    %p187 = scmp.eq.s32.totalorder %s18, 1
    %p188 = por %p186, %p187
    %p189 = scmp.ne.s32.totalorder %s178, %s179
    %p190 = scmp.eq.s32.totalorder %s18, 0
    %p191 = por %p189, %p190
    %p192 = scmp.ne.s32.totalorder %s178, %s179
    %p193 = scmp.eq.s32.totalorder %s19, 1
    %p194 = por %p192, %p193
    %p196 = scmp.ne.s32.totalorder %s179, %s195
    %p197 = scmp.eq.s32.totalorder %s19, 0
    %p198 = por %p196, %p197
    %p199 = scmp.le.s32.totalorder 1, %s13
    %p200 = scmp.lt.s32.totalorder %s13, 3
    %p201 = pnand %p199, %p200
    %p202 = pneg %p201
    // Predicated region
    $region9: #{vae_forward.9} parent=5 // pred_check
      _
    $region10: #{vae_forward.9} parent=5 // pred_check_branch
      %204 = sbr.rel (%p201) target = $region12
    $region11: #{vae_forward.9} parent=5 // pred_region
      %s205 = ssub.s32 %s13, 1
      // Predicated region
      $region13: #{vae_forward.9} parent=11 // pred_check
        %p206 = pneg %p60
      $region14: #{vae_forward.9} parent=11 // pred_check_branch
        %208 = sbr.rel (%p206) target = $region16
      $region15: #{vae_forward.9} parent=11 // pred_region
        _
      $region16: #{vae_forward.9} parent=11 // pred_fallthru
        _
      // Predicated region
      $region17: #{vae_forward.9} parent=11 // pred_check
        %p209 = pneg %p81
      $region18: #{vae_forward.9} parent=11 // pred_check_branch
        %211 = sbr.rel (%p209) target = $region20
      $region19: #{vae_forward.9} parent=11 // pred_region
        _
      $region20: #{vae_forward.9} parent=11 // pred_fallthru
        _
      // Predicated region
      $region21: #{vae_forward.9} parent=11 // pred_check
        %p212 = pneg %p102
      $region22: #{vae_forward.9} parent=11 // pred_check_branch
        %214 = sbr.rel (%p212) target = $region24
      $region23: #{vae_forward.9} parent=11 // pred_region
        _
      $region24: #{vae_forward.9} parent=11 // pred_fallthru
        _
      // Predicated region
      $region25: #{vae_forward.9} parent=11 // pred_check
        %p215 = pneg %p123
      $region26: #{vae_forward.9} parent=11 // pred_check_branch
        %217 = sbr.rel (%p215) target = $region28
      $region27: #{vae_forward.9} parent=11 // pred_region
        _
      $region28: #{vae_forward.9} parent=11 // pred_fallthru
        _
      // Predicated region
      $region29: #{vae_forward.9} parent=11 // pred_check
        %p218 = pneg %p144
      $region30: #{vae_forward.9} parent=11 // pred_check_branch
        %220 = sbr.rel (%p218) target = $region32
      $region31: #{vae_forward.9} parent=11 // pred_region
        _
      $region32: #{vae_forward.9} parent=11 // pred_fallthru
        _
      // Predicated region
      $region33: #{vae_forward.9} parent=11 // pred_check
        %p221 = pneg %p165
      $region34: #{vae_forward.9} parent=11 // pred_check_branch
        %223 = sbr.rel (%p221) target = $region36
      $region35: #{vae_forward.9} parent=11 // pred_region
        _
      $region36: #{vae_forward.9} parent=11 // pred_fallthru
        _
    $region12: #{vae_forward.9} parent=5 // pred_fallthru
      _
    %p224 = scmp.lt.s32.totalorder %s13, 2
    // Predicated region
    $region37: #{vae_forward.9} parent=5 // pred_check
      %p225 = pneg %p224
    $region38: #{vae_forward.9} parent=5 // pred_check_branch
      %227 = sbr.rel (%p225) target = $region40
    $region39: #{vae_forward.9} parent=5 // pred_region
      // Predicated region
      $region41: #{vae_forward.9} parent=39 // pred_check
        %p228 = pneg %p33
      $region42: #{vae_forward.9} parent=39 // pred_check_branch
        %230 = sbr.rel (%p228) target = $region44
      $region43: #{vae_forward.9} parent=39 // pred_region
        %s231 = smul.u32 8, %s13
        %p232 = scmp.lt.s32.totalorder %s231, 15
        %s233 = scalar_select %p232, %s231, 15
        %s234 = smul.addr %s233, 10
        %s235 = smul.addr %s234, 4
        %s236 = scalar_lea.vmem %s0, %s235
        %s237 = smul.u32 8, %s13
      $region44: #{vae_forward.9} parent=39 // pred_fallthru
        _
    $region40: #{vae_forward.9} parent=5 // pred_fallthru
      _
    %p238 = scmp.le.s32.totalorder 1, %s13
    %p239 = scmp.lt.s32.totalorder %s13, 3
    %p240 = pnand %p238, %p239
    %p241 = pneg %p240
    // Predicated region
    $region45: #{vae_forward.9} parent=5 // pred_check
      _
    $region46: #{vae_forward.9} parent=5 // pred_check_branch
      %243 = sbr.rel (%p240) target = $region48
    $region47: #{vae_forward.9} parent=5 // pred_region
      %s244 = ssub.s32 %s13, 1
      %s245 = smul.u32 8, %s18
      %p246 = scmp.lt.s32.totalorder %s245, 15
      %s247 = scalar_select %p246, %s245, 15
      %s248 = smul.addr %s247, 10
      %s249 = smul.addr %s248, 4
      %s250 = scalar_lea.vmem %s0, %s249
      %p251 = pneg %p39
      %p252 = pneg %p36
      %p253 = pneg %p60
      %p254 = pneg %p57
      %p255 = pneg %p81
      %p256 = pneg %p78
      %p257 = pneg %p102
      %p258 = pneg %p99
      %p259 = pneg %p123
      %p260 = pneg %p120
      %p261 = pneg %p144
      %p262 = pneg %p141
      %p263 = pneg %p165
      %p264 = pneg %p162
      %p265 = pneg %p191
      %p266 = pneg %p188
      %s267 = smul.u32 8, %s18
      %p268 = scmp.lt.s32.totalorder %s267, 15
      %s269 = scalar_select %p268, %s267, 15
      %s270 = smul.addr %s269, 4
      %s271 = scalar_lea.vmem %s7, %s270
      %s272 = smul.u32 8, %s18
      %p273 = scmp.lt.s32.totalorder %s272, 15
      %s274 = scalar_select %p273, %s272, 15
      %s275 = smul.addr %s274, 10
      %s276 = smul.addr %s275, 4
      %s277 = scalar_lea.vmem %s0, %s276
      %s278 = smul.u32 8, %s18
      %s279 = smul.u32 8, %s18
      %p280 = scmp.lt.s32.totalorder %s279, 15
      %s281 = scalar_select %p280, %s279, 15
      %s282 = smul.addr %s281, 4
      %s283 = scalar_lea.vmem %s7, %s282
      %s284 = smul.u32 8, %s18
      %v286 = vld [vmem:[%s277] sm:$0xff]
      %v287 = vld [vmem:[%s277 + $0x8] sm:$0xff]
      %v288 = vld [vmem:[%s277 + $0x10] sm:$0xff]
      %v289 = vld [vmem:[%s277 + $0x18] sm:$0xff]
      %v290 = vld [vmem:[%s277 + $0x20] sm:$0xff]
      %v291 = vld [vmem:[%s277 + $0x28] sm:$0xff]
      %v292 = vld [vmem:[%s277 + $0x30] sm:$0xff]
      %v293 = vld [vmem:[%s277 + $0x38] sm:$0xff]
      %v294 = vld [vmem:[%s277 + $0x40] sm:$0xff]
      %v295 = vld [vmem:[%s277 + $0x48] sm:$0xff]
      %v296 = vld [vmem:[%s277 + $0x50] sm:$0xff]
      %v297 = vld [vmem:[%s277 + $0x58] sm:$0xff]
      %v298 = vld [vmem:[%s277 + $0x60] sm:$0xff]
      %v299 = vld [vmem:[%s277 + $0x68] sm:$0xff]
      %v300 = vld [vmem:[%s277 + $0x70] sm:$0xff]
      %v301 = vld [vmem:[%s277 + $0x78] sm:$0xff]
      %v302 = vld [vmem:[%s277 + $0x80] sm:$0xff]
      %v303 = vld [vmem:[%s277 + $0x88] sm:$0xff]
      %v304 = vld [vmem:[%s277 + $0x90] sm:$0xff]
      %v305 = vld [vmem:[%s277 + $0x98] sm:$0xff]
      %v306 = vld [vmem:[%s277 + $0xa0] sm:$0xff]
      %v307 = vld [vmem:[%s277 + $0xa8] sm:$0xff]
      %v308 = vld [vmem:[%s277 + $0xb0] sm:$0xff]
      %v309 = vld [vmem:[%s277 + $0xb8] sm:$0xff]
      %v310 = vld [vmem:[%s277 + $0xc0] sm:$0xff]
      %v311 = vld [vmem:[%s277 + $0xc8] sm:$0xff]
      %v312 = vld [vmem:[%s277 + $0xd0] sm:$0xff]
      %v313 = vld [vmem:[%s277 + $0xd8] sm:$0xff]
      %v314 = vld [vmem:[%s277 + $0xe0] sm:$0xff]
      %v315 = vld [vmem:[%s277 + $0xe8] sm:$0xff]
      %v316 = vld [vmem:[%s277 + $0xf0] sm:$0xff]
      %v317 = vld [vmem:[%s277 + $0xf8] sm:$0xff]
      %v318 = vld [vmem:[%s277 + $0x100] sm:$0xff]
      %v319 = vld [vmem:[%s277 + $0x108] sm:$0xff]
      %v320 = vld [vmem:[%s277 + $0x110] sm:$0xff]
      %v321 = vld [vmem:[%s277 + $0x118] sm:$0xff]
      %v322 = vld [vmem:[%s277 + $0x120] sm:$0xff]
      %v323 = vld [vmem:[%s277 + $0x128] sm:$0xff]
      %v324 = vld [vmem:[%s277 + $0x130] sm:$0xff]
      %v325 = vld [vmem:[%s277 + $0x138] sm:$0xff]
      %v326 = vld [vmem:[%s1] sm:$0xf]
      %v327 = vld [vmem:[%s1 + $0x4] sm:$0xf]
      %v328 = vld [vmem:[%s1 + $0x8] sm:$0xf]
      %v329 = vld [vmem:[%s1 + $0xc] sm:$0xf]
      %v330 = vld [vmem:[%s1 + $0x10] sm:$0xf]
      %v331 = vld [vmem:[%s1 + $0x14] sm:$0xf]
      %v332 = vld [vmem:[%s1 + $0x18] sm:$0xf]
      %v333 = vld [vmem:[%s1 + $0x1c] sm:$0xf]
      %v334 = vld [vmem:[%s1 + $0x20] sm:$0xf]
      %v335 = vld [vmem:[%s1 + $0x24] sm:$0xf]
      %v336 = vld [vmem:[%s1 + $0x28] sm:$0xf]
      %v337 = vld [vmem:[%s1 + $0x2c] sm:$0xf]
      %v338 = vld [vmem:[%s1 + $0x30] sm:$0xf]
      %v339 = vld [vmem:[%s1 + $0x34] sm:$0xf]
      %v340 = vld [vmem:[%s1 + $0x38] sm:$0xf]
      %v341 = vld [vmem:[%s1 + $0x3c] sm:$0xf]
      %v342 = vld [vmem:[%s1 + $0x40] sm:$0xf]
      %v343 = vld [vmem:[%s1 + $0x44] sm:$0xf]
      %v344 = vld [vmem:[%s1 + $0x48] sm:$0xf]
      %v345 = vld [vmem:[%s1 + $0x4c] sm:$0xf]
      %v346 = vld [vmem:[%s1 + $0x50] sm:$0xf]
      %v347 = vld [vmem:[%s1 + $0x54] sm:$0xf]
      %v348 = vld [vmem:[%s1 + $0x58] sm:$0xf]
      %v349 = vld [vmem:[%s1 + $0x5c] sm:$0xf]
      %v350 = vld [vmem:[%s1 + $0x60] sm:$0xf]
      %v351 = vld [vmem:[%s1 + $0x64] sm:$0xf]
      %v352 = vld [vmem:[%s1 + $0x68] sm:$0xf]
      %v353 = vld [vmem:[%s1 + $0x6c] sm:$0xf]
      %v354 = vld [vmem:[%s1 + $0x70] sm:$0xf]
      %v355 = vld [vmem:[%s1 + $0x74] sm:$0xf]
      %v356 = vld [vmem:[%s1 + $0x78] sm:$0xf]
      %v357 = vld [vmem:[%s1 + $0x7c] sm:$0xf]
      %v358 = vld [vmem:[%s1 + $0x80] sm:$0xf]
      %v359 = vld [vmem:[%s1 + $0x84] sm:$0xf]
      %v360 = vld [vmem:[%s1 + $0x88] sm:$0xf]
      %v361 = vld [vmem:[%s1 + $0x8c] sm:$0xf]
      %v362 = vld [vmem:[%s1 + $0x90] sm:$0xf]
      %v363 = vld [vmem:[%s1 + $0x94] sm:$0xf]
      %v364 = vld [vmem:[%s1 + $0x98] sm:$0xf]
      %v365 = vld [vmem:[%s1 + $0x9c] sm:$0xf]
      %v366 = vld [vmem:[%s1 + $0xa0] sm:$0xf]
      %v367 = vld [vmem:[%s1 + $0xa4] sm:$0xf]
      %v368 = vld [vmem:[%s1 + $0xa8] sm:$0xf]
      %v369 = vld [vmem:[%s1 + $0xac] sm:$0xf]
      %v370 = vld [vmem:[%s1 + $0xb0] sm:$0xf]
      %v371 = vld [vmem:[%s1 + $0xb4] sm:$0xf]
      %v372 = vld [vmem:[%s1 + $0xb8] sm:$0xf]
      %v373 = vld [vmem:[%s1 + $0xbc] sm:$0xf]
      %v374 = vld [vmem:[%s1 + $0xc0] sm:$0xf]
      %v375 = vld [vmem:[%s1 + $0xc4] sm:$0xf]
      %v376 = vld [vmem:[%s1 + $0xc8] sm:$0xf]
      %v377 = vld [vmem:[%s1 + $0xcc] sm:$0xf]
      %v378 = vld [vmem:[%s1 + $0xd0] sm:$0xf]
      %v379 = vld [vmem:[%s1 + $0xd4] sm:$0xf]
      %v380 = vld [vmem:[%s1 + $0xd8] sm:$0xf]
      %v381 = vld [vmem:[%s1 + $0xdc] sm:$0xf]
      %v382 = vld [vmem:[%s1 + $0xe0] sm:$0xf]
      %v383 = vld [vmem:[%s1 + $0xe4] sm:$0xf]
      %v384 = vld [vmem:[%s1 + $0xe8] sm:$0xf]
      %v385 = vld [vmem:[%s1 + $0xec] sm:$0xf]
      %v386 = vld [vmem:[%s1 + $0xf0] sm:$0xf]
      %v387 = vld [vmem:[%s1 + $0xf4] sm:$0xf]
      %v388 = vld [vmem:[%s1 + $0xf8] sm:$0xf]
      %v389 = vld [vmem:[%s1 + $0xfc] sm:$0xf]
      %v390 = vld [vmem:[%s1 + $0x100] sm:$0xf]
      %v391 = vld [vmem:[%s1 + $0x104] sm:$0xf]
      %v392 = vld [vmem:[%s1 + $0x108] sm:$0xf]
      %v393 = vld [vmem:[%s1 + $0x10c] sm:$0xf]
      %v394 = vld [vmem:[%s1 + $0x110] sm:$0xf]
      %v395 = vld [vmem:[%s1 + $0x114] sm:$0xf]
      %v396 = vld [vmem:[%s1 + $0x118] sm:$0xf]
      %v397 = vld [vmem:[%s1 + $0x11c] sm:$0xf]
      %v398 = vld [vmem:[%s1 + $0x120] sm:$0xf]
      %v399 = vld [vmem:[%s1 + $0x124] sm:$0xf]
      %v400 = vld [vmem:[%s1 + $0x128] sm:$0xf]
      %v401 = vld [vmem:[%s1 + $0x12c] sm:$0xf]
      %v402 = vld [vmem:[%s1 + $0x130] sm:$0xf]
      %v403 = vld [vmem:[%s1 + $0x134] sm:$0xf]
      %v404 = vld [vmem:[%s1 + $0x138] sm:$0xf]
      %v405 = vld [vmem:[%s1 + $0x13c] sm:$0xf]
      %v406 = vld [vmem:[%s1 + $0x140] sm:$0xf]
      %v407 = vld [vmem:[%s1 + $0x144] sm:$0xf]
      %v408 = vld [vmem:[%s1 + $0x148] sm:$0xf]
      %v409 = vld [vmem:[%s1 + $0x14c] sm:$0xf]
      %v410 = vld [vmem:[%s1 + $0x150] sm:$0xf]
      %v411 = vld [vmem:[%s1 + $0x154] sm:$0xf]
      %v412 = vld [vmem:[%s1 + $0x158] sm:$0xf]
      %v413 = vld [vmem:[%s1 + $0x15c] sm:$0xf]
      %v414 = vld [vmem:[%s1 + $0x160] sm:$0xf]
      %v415 = vld [vmem:[%s1 + $0x164] sm:$0xf]
      %v416 = vld [vmem:[%s1 + $0x168] sm:$0xf]
      %v417 = vld [vmem:[%s1 + $0x16c] sm:$0xf]
      %v418 = vld [vmem:[%s1 + $0x170] sm:$0xf]
      %v419 = vld [vmem:[%s1 + $0x174] sm:$0xf]
      %v420 = vld [vmem:[%s1 + $0x178] sm:$0xf]
      %v421 = vld [vmem:[%s1 + $0x17c] sm:$0xf]
      %v422 = vld [vmem:[%s1 + $0x180] sm:$0xf]
      %v423 = vld [vmem:[%s1 + $0x184] sm:$0xf]
      %v424 = vld [vmem:[%s1 + $0x188] sm:$0xf]
      %v425 = vld [vmem:[%s1 + $0x18c] sm:$0xf]
      %v426 = vld [vmem:[%s1 + $0x190] sm:$0xf]
      %v427 = vld [vmem:[%s1 + $0x194] sm:$0xf]
      %v428 = vld [vmem:[%s1 + $0x198] sm:$0xf]
      %v429 = vld [vmem:[%s1 + $0x19c] sm:$0xf]
      %v430 = vld [vmem:[%s1 + $0x1a0] sm:$0xf]
      %v431 = vld [vmem:[%s1 + $0x1a4] sm:$0xf]
      %v432 = vld [vmem:[%s1 + $0x1a8] sm:$0xf]
      %v433 = vld [vmem:[%s1 + $0x1ac] sm:$0xf]
      %v434 = vld [vmem:[%s1 + $0x1b0] sm:$0xf]
      %v435 = vld [vmem:[%s1 + $0x1b4] sm:$0xf]
      %v436 = vld [vmem:[%s1 + $0x1b8] sm:$0xf]
      %v437 = vld [vmem:[%s1 + $0x1bc] sm:$0xf]
      %v438 = vld [vmem:[%s1 + $0x1c0] sm:$0xf]
      %v439 = vld [vmem:[%s1 + $0x1c4] sm:$0xf]
      %v440 = vld [vmem:[%s1 + $0x1c8] sm:$0xf]
      %v441 = vld [vmem:[%s1 + $0x1cc] sm:$0xf]
      %v442 = vld [vmem:[%s1 + $0x1d0] sm:$0xf]
      %v443 = vld [vmem:[%s1 + $0x1d4] sm:$0xf]
      %v444 = vld [vmem:[%s1 + $0x1d8] sm:$0xf]
      %v445 = vld [vmem:[%s1 + $0x1dc] sm:$0xf]
      %v446 = vld [vmem:[%s1 + $0x1e0] sm:$0xf]
      %v447 = vld [vmem:[%s1 + $0x1e4] sm:$0xf]
      %v448 = vld [vmem:[%s1 + $0x1e8] sm:$0xf]
      %v449 = vld [vmem:[%s1 + $0x1ec] sm:$0xf]
      %v450 = vld [vmem:[%s1 + $0x1f0] sm:$0xf]
      %v451 = vld [vmem:[%s1 + $0x1f4] sm:$0xf]
      %v452 = vld [vmem:[%s1 + $0x1f8] sm:$0xf]
      %v453 = vld [vmem:[%s1 + $0x1fc] sm:$0xf]
      %v454 = vld [vmem:[%s1 + $0x200] sm:$0xf]
      %v455 = vld [vmem:[%s1 + $0x204] sm:$0xf]
      %v456 = vld [vmem:[%s1 + $0x208] sm:$0xf]
      %v457 = vld [vmem:[%s1 + $0x20c] sm:$0xf]
      %v458 = vld [vmem:[%s1 + $0x210] sm:$0xf]
      %v459 = vld [vmem:[%s1 + $0x214] sm:$0xf]
      %v460 = vld [vmem:[%s1 + $0x218] sm:$0xf]
      %v461 = vld [vmem:[%s1 + $0x21c] sm:$0xf]
      %v462 = vld [vmem:[%s1 + $0x220] sm:$0xf]
      %v463 = vld [vmem:[%s1 + $0x224] sm:$0xf]
      %v464 = vld [vmem:[%s1 + $0x228] sm:$0xf]
      %v465 = vld [vmem:[%s1 + $0x22c] sm:$0xf]
      %v466 = vld [vmem:[%s1 + $0x230] sm:$0xf]
      %v467 = vld [vmem:[%s1 + $0x234] sm:$0xf]
      %v468 = vld [vmem:[%s1 + $0x238] sm:$0xf]
      %v469 = vld [vmem:[%s1 + $0x23c] sm:$0xf]
      %v470 = vld [vmem:[%s1 + $0x240] sm:$0xf]
      %v471 = vld [vmem:[%s1 + $0x244] sm:$0xf]
      %v472 = vld [vmem:[%s1 + $0x248] sm:$0xf]
      %v473 = vld [vmem:[%s1 + $0x24c] sm:$0xf]
      %v474 = vld [vmem:[%s1 + $0x250] sm:$0xf]
      %v475 = vld [vmem:[%s1 + $0x254] sm:$0xf]
      %v516 = vunpack.c.l.b16 %v286
      %v517 = vunpack.c.h.b16 %v286
      %v518 = vunpack.c.l.b16 %v287
      %v519 = vunpack.c.h.b16 %v287
      %v520 = vunpack.c.l.b16 %v288
      %v521 = vunpack.c.h.b16 %v288
      %v522 = vunpack.c.l.b16 %v289
      %v523 = vunpack.c.h.b16 %v289
      %v524 = vunpack.c.l.b16 %v290
      %v525 = vunpack.c.h.b16 %v290
      %v526 = vunpack.c.l.b16 %v291
      %v527 = vunpack.c.h.b16 %v291
      %v528 = vunpack.c.l.b16 %v292
      %v529 = vunpack.c.h.b16 %v292
      %v530 = vunpack.c.l.b16 %v293
      %v531 = vunpack.c.h.b16 %v293
      %v532 = vunpack.c.l.b16 %v294
      %v533 = vunpack.c.h.b16 %v294
      %v534 = vunpack.c.l.b16 %v295
      %v535 = vunpack.c.h.b16 %v295
      %v536 = vunpack.c.l.b16 %v296
      %v537 = vunpack.c.h.b16 %v296
      %v538 = vunpack.c.l.b16 %v297
      %v539 = vunpack.c.h.b16 %v297
      %v540 = vunpack.c.l.b16 %v298
      %v541 = vunpack.c.h.b16 %v298
      %v542 = vunpack.c.l.b16 %v299
      %v543 = vunpack.c.h.b16 %v299
      %v544 = vunpack.c.l.b16 %v300
      %v545 = vunpack.c.h.b16 %v300
      %v546 = vunpack.c.l.b16 %v301
      %v547 = vunpack.c.h.b16 %v301
      %v548 = vunpack.c.l.b16 %v302
      %v549 = vunpack.c.h.b16 %v302
      %v550 = vunpack.c.l.b16 %v303
      %v551 = vunpack.c.h.b16 %v303
      %v552 = vunpack.c.l.b16 %v304
      %v553 = vunpack.c.h.b16 %v304
      %v554 = vunpack.c.l.b16 %v305
      %v555 = vunpack.c.h.b16 %v305
      %v556 = vunpack.c.l.b16 %v306
      %v557 = vunpack.c.h.b16 %v306
      %v558 = vunpack.c.l.b16 %v307
      %v559 = vunpack.c.h.b16 %v307
      %v560 = vunpack.c.l.b16 %v308
      %v561 = vunpack.c.h.b16 %v308
      %v562 = vunpack.c.l.b16 %v309
      %v563 = vunpack.c.h.b16 %v309
      %v564 = vunpack.c.l.b16 %v310
      %v565 = vunpack.c.h.b16 %v310
      %v566 = vunpack.c.l.b16 %v311
      %v567 = vunpack.c.h.b16 %v311
      %v568 = vunpack.c.l.b16 %v312
      %v569 = vunpack.c.h.b16 %v312
      %v570 = vunpack.c.l.b16 %v313
      %v571 = vunpack.c.h.b16 %v313
      %v572 = vunpack.c.l.b16 %v314
      %v573 = vunpack.c.h.b16 %v314
      %v574 = vunpack.c.l.b16 %v315
      %v575 = vunpack.c.h.b16 %v315
      %v576 = vunpack.c.l.b16 %v316
      %v577 = vunpack.c.h.b16 %v316
      %v578 = vunpack.c.l.b16 %v317
      %v579 = vunpack.c.h.b16 %v317
      %v580 = vunpack.c.l.b16 %v318
      %v581 = vunpack.c.h.b16 %v318
      %v582 = vunpack.c.l.b16 %v319
      %v583 = vunpack.c.h.b16 %v319
      %v584 = vunpack.c.l.b16 %v320
      %v585 = vunpack.c.h.b16 %v320
      %v586 = vunpack.c.l.b16 %v321
      %v587 = vunpack.c.h.b16 %v321
      %v588 = vunpack.c.l.b16 %v322
      %v589 = vunpack.c.h.b16 %v322
      %v590 = vunpack.c.l.b16 %v323
      %v591 = vunpack.c.h.b16 %v323
      %v592 = vunpack.c.l.b16 %v324
      %v593 = vunpack.c.h.b16 %v324
      %v594 = vunpack.c.l.b16 %v325
      %v595 = vunpack.c.h.b16 %v325
      %v596 = vpack.c.b16 %v526, %v516
      %v597 = vpack.c.b16 %v527, %v517
      %v598 = vpack.c.b16 %v528, %v518
      %v599 = vpack.c.b16 %v529, %v519
      %v600 = vpack.c.b16 %v530, %v520
      %v601 = vpack.c.b16 %v531, %v521
      %v602 = vpack.c.b16 %v532, %v522
      %v603 = vpack.c.b16 %v533, %v523
      %v604 = vpack.c.b16 %v534, %v524
      %v605 = vpack.c.b16 %v535, %v525
      %v606 = vpack.c.b16 %v546, %v536
      %v607 = vpack.c.b16 %v547, %v537
      %v608 = vpack.c.b16 %v548, %v538
      %v609 = vpack.c.b16 %v549, %v539
      %v610 = vpack.c.b16 %v550, %v540
      %v611 = vpack.c.b16 %v551, %v541
      %v612 = vpack.c.b16 %v552, %v542
      %v613 = vpack.c.b16 %v553, %v543
      %v614 = vpack.c.b16 %v554, %v544
      %v615 = vpack.c.b16 %v555, %v545
      %v616 = vpack.c.b16 %v566, %v556
      %v617 = vpack.c.b16 %v567, %v557
      %v618 = vpack.c.b16 %v568, %v558
      %v619 = vpack.c.b16 %v569, %v559
      %v620 = vpack.c.b16 %v570, %v560
      %v621 = vpack.c.b16 %v571, %v561
      %v622 = vpack.c.b16 %v572, %v562
      %v623 = vpack.c.b16 %v573, %v563
      %v624 = vpack.c.b16 %v574, %v564
      %v625 = vpack.c.b16 %v575, %v565
      %v626 = vpack.c.b16 %v586, %v576
      %v627 = vpack.c.b16 %v587, %v577
      %v628 = vpack.c.b16 %v588, %v578
      %v629 = vpack.c.b16 %v589, %v579
      %v630 = vpack.c.b16 %v590, %v580
      %v631 = vpack.c.b16 %v591, %v581
      %v632 = vpack.c.b16 %v592, %v582
      %v633 = vpack.c.b16 %v593, %v583
      %v634 = vpack.c.b16 %v594, %v584
      %v635 = vpack.c.b16 %v595, %v585
      %v822 = vunpack.c.l.b16 %v326
      %v823 = vunpack.c.l.b16 %v327
      %v824 = vunpack.c.l.b16 %v328
      %v825 = vunpack.c.l.b16 %v329
      %v826 = vunpack.c.l.b16 %v330
      %v827 = vunpack.c.l.b16 %v331
      %v828 = vunpack.c.l.b16 %v332
      %v829 = vunpack.c.l.b16 %v333
      %v830 = vunpack.c.l.b16 %v334
      %v831 = vunpack.c.l.b16 %v335
      %v832 = vunpack.c.l.b16 %v336
      %v833 = vunpack.c.l.b16 %v337
      %v834 = vunpack.c.l.b16 %v338
      %v835 = vunpack.c.l.b16 %v339
      %v836 = vunpack.c.l.b16 %v340
      %v837 = vunpack.c.l.b16 %v341
      %v838 = vunpack.c.l.b16 %v342
      %v839 = vunpack.c.l.b16 %v343
      %v840 = vunpack.c.l.b16 %v344
      %v841 = vunpack.c.l.b16 %v345
      %v842 = vunpack.c.l.b16 %v346
      %v843 = vunpack.c.l.b16 %v347
      %v844 = vunpack.c.l.b16 %v348
      %v845 = vunpack.c.l.b16 %v349
      %v846 = vunpack.c.l.b16 %v350
      %v847 = vunpack.c.l.b16 %v351
      %v848 = vunpack.c.l.b16 %v352
      %v849 = vunpack.c.l.b16 %v353
      %v850 = vunpack.c.l.b16 %v354
      %v851 = vunpack.c.l.b16 %v355
      %v852 = vunpack.c.l.b16 %v356
      %v853 = vunpack.c.l.b16 %v357
      %v854 = vunpack.c.l.b16 %v358
      %v855 = vunpack.c.l.b16 %v359
      %v856 = vunpack.c.l.b16 %v360
      %v857 = vunpack.c.l.b16 %v361
      %v858 = vunpack.c.l.b16 %v362
      %v859 = vunpack.c.l.b16 %v363
      %v860 = vunpack.c.l.b16 %v364
      %v861 = vunpack.c.l.b16 %v365
      %v862 = vunpack.c.l.b16 %v366
      %v863 = vunpack.c.l.b16 %v367
      %v864 = vunpack.c.l.b16 %v368
      %v865 = vunpack.c.l.b16 %v369
      %v866 = vunpack.c.l.b16 %v370
      %v867 = vunpack.c.l.b16 %v371
      %v868 = vunpack.c.l.b16 %v372
      %v869 = vunpack.c.l.b16 %v373
      %v870 = vunpack.c.l.b16 %v374
      %v871 = vunpack.c.l.b16 %v375
      %v872 = vunpack.c.l.b16 %v376
      %v873 = vunpack.c.l.b16 %v377
      %v874 = vunpack.c.l.b16 %v378
      %v875 = vunpack.c.l.b16 %v379
      %v876 = vunpack.c.l.b16 %v380
      %v877 = vunpack.c.l.b16 %v381
      %v878 = vunpack.c.l.b16 %v382
      %v879 = vunpack.c.l.b16 %v383
      %v880 = vunpack.c.l.b16 %v384
      %v881 = vunpack.c.l.b16 %v385
      %v882 = vunpack.c.l.b16 %v386
      %v883 = vunpack.c.l.b16 %v387
      %v884 = vunpack.c.l.b16 %v388
      %v885 = vunpack.c.l.b16 %v389
      %v886 = vunpack.c.l.b16 %v390
      %v887 = vunpack.c.l.b16 %v391
      %v888 = vunpack.c.l.b16 %v392
      %v889 = vunpack.c.l.b16 %v393
      %v890 = vunpack.c.l.b16 %v394
      %v891 = vunpack.c.l.b16 %v395
      %v892 = vunpack.c.l.b16 %v396
      %v893 = vunpack.c.l.b16 %v397
      %v894 = vunpack.c.l.b16 %v398
      %v895 = vunpack.c.l.b16 %v399
      %v896 = vunpack.c.l.b16 %v400
      %v897 = vunpack.c.l.b16 %v401
      %v898 = vunpack.c.l.b16 %v402
      %v899 = vunpack.c.l.b16 %v403
      %v900 = vunpack.c.l.b16 %v404
      %v901 = vunpack.c.l.b16 %v405
      %v902 = vunpack.c.l.b16 %v406
      %v903 = vunpack.c.l.b16 %v407
      %v904 = vunpack.c.l.b16 %v408
      %v905 = vunpack.c.l.b16 %v409
      %v906 = vunpack.c.l.b16 %v410
      %v907 = vunpack.c.l.b16 %v411
      %v908 = vunpack.c.l.b16 %v412
      %v909 = vunpack.c.l.b16 %v413
      %v910 = vunpack.c.l.b16 %v414
      %v911 = vunpack.c.l.b16 %v415
      %v912 = vunpack.c.l.b16 %v416
      %v913 = vunpack.c.l.b16 %v417
      %v914 = vunpack.c.l.b16 %v418
      %v915 = vunpack.c.l.b16 %v419
      %v916 = vunpack.c.l.b16 %v420
      %v917 = vunpack.c.l.b16 %v421
      %v918 = vunpack.c.l.b16 %v422
      %v919 = vunpack.c.l.b16 %v423
      %v920 = vunpack.c.l.b16 %v424
      %v921 = vunpack.c.l.b16 %v425
      %v922 = vunpack.c.l.b16 %v426
      %v923 = vunpack.c.l.b16 %v427
      %v924 = vunpack.c.l.b16 %v428
      %v925 = vunpack.c.l.b16 %v429
      %v926 = vunpack.c.l.b16 %v430
      %v927 = vunpack.c.l.b16 %v431
      %v928 = vunpack.c.l.b16 %v432
      %v929 = vunpack.c.l.b16 %v433
      %v930 = vunpack.c.l.b16 %v434
      %v931 = vunpack.c.l.b16 %v435
      %v932 = vunpack.c.l.b16 %v436
      %v933 = vunpack.c.l.b16 %v437
      %v934 = vunpack.c.l.b16 %v438
      %v935 = vunpack.c.l.b16 %v439
      %v936 = vunpack.c.l.b16 %v440
      %v937 = vunpack.c.l.b16 %v441
      %v938 = vunpack.c.l.b16 %v442
      %v939 = vunpack.c.l.b16 %v443
      %v940 = vunpack.c.l.b16 %v444
      %v941 = vunpack.c.l.b16 %v445
      %v942 = vunpack.c.l.b16 %v446
      %v943 = vunpack.c.l.b16 %v447
      %v944 = vunpack.c.l.b16 %v448
      %v945 = vunpack.c.l.b16 %v449
      %v946 = vunpack.c.l.b16 %v450
      %v947 = vunpack.c.l.b16 %v451
      %v948 = vunpack.c.l.b16 %v452
      %v949 = vunpack.c.l.b16 %v453
      %v950 = vunpack.c.l.b16 %v454
      %v951 = vunpack.c.l.b16 %v455
      %v952 = vunpack.c.l.b16 %v456
      %v953 = vunpack.c.l.b16 %v457
      %v954 = vunpack.c.l.b16 %v458
      %v955 = vunpack.c.l.b16 %v459
      %v956 = vunpack.c.l.b16 %v460
      %v957 = vunpack.c.l.b16 %v461
      %v958 = vunpack.c.l.b16 %v462
      %v959 = vunpack.c.l.b16 %v463
      %v960 = vunpack.c.l.b16 %v464
      %v961 = vunpack.c.l.b16 %v465
      %v962 = vunpack.c.l.b16 %v466
      %v963 = vunpack.c.l.b16 %v467
      %v964 = vunpack.c.l.b16 %v468
      %v965 = vunpack.c.l.b16 %v469
      %v966 = vunpack.c.l.b16 %v470
      %v967 = vunpack.c.l.b16 %v471
      %v968 = vunpack.c.l.b16 %v472
      %v969 = vunpack.c.l.b16 %v473
      %v970 = vunpack.c.l.b16 %v474
      %v971 = vunpack.c.l.b16 %v475
      %v972 = vpack.c.b16 %v823, %v822
      %v973 = vpack.c.b16 %v825, %v824
      %v974 = vpack.c.b16 %v827, %v826
      %v975 = vpack.c.b16 %v829, %v828
      %v976 = vpack.c.b16 %v831, %v830
      %v977 = vpack.c.b16 %v833, %v832
      %v978 = vpack.c.b16 %v835, %v834
      %v979 = vpack.c.b16 %v837, %v836
      %v980 = vpack.c.b16 %v839, %v838
      %v981 = vpack.c.b16 %v841, %v840
      %v982 = vpack.c.b16 %v843, %v842
      %v983 = vpack.c.b16 %v845, %v844
      %v984 = vpack.c.b16 %v847, %v846
      %v985 = vpack.c.b16 %v849, %v848
      %v986 = vpack.c.b16 %v851, %v850
      %v987 = vpack.c.b16 %v853, %v852
      %v988 = vpack.c.b16 %v855, %v854
      %v989 = vpack.c.b16 %v857, %v856
      %v990 = vpack.c.b16 %v859, %v858
      %v991 = vpack.c.b16 %v861, %v860
      %v992 = vpack.c.b16 %v863, %v862
      %v993 = vpack.c.b16 %v865, %v864
      %v994 = vpack.c.b16 %v867, %v866
      %v995 = vpack.c.b16 %v869, %v868
      %v996 = vpack.c.b16 %v871, %v870
      %v997 = vpack.c.b16 %v873, %v872
      %v998 = vpack.c.b16 %v875, %v874
      %v999 = vpack.c.b16 %v877, %v876
      %v1000 = vpack.c.b16 %v879, %v878
      %v1001 = vpack.c.b16 %v881, %v880
      %v1002 = vpack.c.b16 %v883, %v882
      %v1003 = vpack.c.b16 %v885, %v884
      %v1004 = vpack.c.b16 %v887, %v886
      %v1005 = vpack.c.b16 %v889, %v888
      %v1006 = vpack.c.b16 %v891, %v890
      %v1007 = vpack.c.b16 %v893, %v892
      %v1008 = vpack.c.b16 %v895, %v894
      %v1009 = vpack.c.b16 %v897, %v896
      %v1010 = vpack.c.b16 %v899, %v898
      %v1011 = vpack.c.b16 %v901, %v900
      %v1012 = vpack.c.b16 %v903, %v902
      %v1013 = vpack.c.b16 %v905, %v904
      %v1014 = vpack.c.b16 %v907, %v906
      %v1015 = vpack.c.b16 %v909, %v908
      %v1016 = vpack.c.b16 %v911, %v910
      %v1017 = vpack.c.b16 %v913, %v912
      %v1018 = vpack.c.b16 %v915, %v914
      %v1019 = vpack.c.b16 %v917, %v916
      %v1020 = vpack.c.b16 %v919, %v918
      %v1021 = vpack.c.b16 %v921, %v920
      %v1022 = vpack.c.b16 %v923, %v922
      %v1023 = vpack.c.b16 %v925, %v924
      %v1024 = vpack.c.b16 %v927, %v926
      %v1025 = vpack.c.b16 %v929, %v928
      %v1026 = vpack.c.b16 %v931, %v930
      %v1027 = vpack.c.b16 %v933, %v932
      %v1028 = vpack.c.b16 %v935, %v934
      %v1029 = vpack.c.b16 %v937, %v936
      %v1030 = vpack.c.b16 %v939, %v938
      %v1031 = vpack.c.b16 %v941, %v940
      %v1032 = vpack.c.b16 %v943, %v942
      %v1033 = vpack.c.b16 %v945, %v944
      %v1034 = vpack.c.b16 %v947, %v946
      %v1035 = vpack.c.b16 %v949, %v948
      %v1036 = vpack.c.b16 %v951, %v950
      %v1037 = vpack.c.b16 %v953, %v952
      %v1038 = vpack.c.b16 %v955, %v954
      %v1039 = vpack.c.b16 %v957, %v956
      %v1040 = vpack.c.b16 %v959, %v958
      %v1041 = vpack.c.b16 %v961, %v960
      %v1042 = vpack.c.b16 %v963, %v962
      %v1043 = vpack.c.b16 %v965, %v964
      %v1044 = vpack.c.b16 %v967, %v966
      %v1045 = vpack.c.b16 %v969, %v968
      %v1046 = vpack.c.b16 %v971, %v970
      %vm1122 = vcmask 392192
      %v1124 = vsel %vm1122, %v605, 0
      %v1127 = vsel %vm1122, %v615, 0
      %v1130 = vsel %vm1122, %v625, 0
      %v1133 = vsel %vm1122, %v635, 0
      %1135 = vmatprep.subr.bf16.mxu0 0
      %1136 = vmatpush1.bf16.msra.mxu0 %v979
      %1137 = vmatprep.subr.bf16.mxu0 0
      %1138 = vmatpush1.bf16.msra.mxu0 %v978
      %1139 = vmatprep.subr.bf16.mxu0 0
      %1140 = vmatpush1.bf16.msra.mxu0 %v977
      %1141 = vmatprep.subr.bf16.mxu0 0
      %1142 = vmatpush1.bf16.msra.mxu0 %v976
      %1143 = vmatprep.subr.bf16.mxu0 0
      %1144 = vmatpush1.bf16.msra.mxu0 %v975
      %1145 = vmatprep.subr.bf16.mxu0 0
      %1146 = vmatpush1.bf16.msra.mxu0 %v974
      %1147 = vmatprep.subr.bf16.mxu0 0
      %1148 = vmatpush1.bf16.msra.mxu0 %v973
      %1149 = vmatprep.subr.bf16.mxu0 0
      %1150 = vmatpush1.bf16.msra.mxu0 %v972
      %1151 = vmatprep.subr.bf16.mxu0 0
      %1152 = vmatpush2.bf16.msra.mxu0 %v987
      %1153 = vmatprep.subr.bf16.mxu0 0
      %1154 = vmatpush2.bf16.msra.mxu0 %v986
      %1155 = vmatprep.subr.bf16.mxu0 0
      %1156 = vmatpush2.bf16.msra.mxu0 %v985
      %1157 = vmatprep.subr.bf16.mxu0 0
      %1158 = vmatpush2.bf16.msra.mxu0 %v984
      %1159 = vmatprep.subr.bf16.mxu0 0
      %1160 = vmatpush2.bf16.msra.mxu0 %v983
      %1161 = vmatprep.subr.bf16.mxu0 0
      %1162 = vmatpush2.bf16.msra.mxu0 %v982
      %1163 = vmatprep.subr.bf16.mxu0 0
      %1164 = vmatpush2.bf16.msra.mxu0 %v981
      %1165 = vmatprep.subr.bf16.mxu0 0
      %1166 = vmatpush2.bf16.msra.mxu0 %v980
      %1167 = vmatprep.mubr.bf16.mxu0 %v597
      %1168 = vmatmul.mubr.bf16.gmra.mxu0 %v596
      %v1169 = vpop.f32.mrf.mxu0
      %v1170 = vadd.f32 0.0, %v1169
      %v1171 = vpop.f32.mrf.mxu0
      %v1172 = vpop.f32.mrf.mxu0
      %v1173 = vadd.f32 0.0, %v1172
      %v1174 = vpop.f32.mrf.mxu0
      %1175 = vmatprep.mubr.bf16.mxu0 %v607
      %1176 = vmatmul.mubr.bf16.gmra.mxu0 %v606
      %v1177 = vpop.f32.mrf.mxu0
      %v1178 = vadd.f32 0.0, %v1177
      %v1179 = vpop.f32.mrf.mxu0
      %v1180 = vpop.f32.mrf.mxu0
      %v1181 = vadd.f32 0.0, %v1180
      %v1182 = vpop.f32.mrf.mxu0
      %1183 = vmatprep.mubr.bf16.mxu0 %v617
      %1184 = vmatmul.mubr.bf16.gmra.mxu0 %v616
      %v1185 = vpop.f32.mrf.mxu0
      %v1186 = vadd.f32 0.0, %v1185
      %v1187 = vpop.f32.mrf.mxu0
      %v1188 = vpop.f32.mrf.mxu0
      %v1189 = vadd.f32 0.0, %v1188
      %v1190 = vpop.f32.mrf.mxu0
      %1191 = vmatprep.mubr.bf16.mxu0 %v627
      %1192 = vmatmul.mubr.bf16.gmra.mxu0 %v626
      %v1193 = vpop.f32.mrf.mxu0
      %v1194 = vadd.f32 0.0, %v1193
      %v1195 = vpop.f32.mrf.mxu0
      %v1196 = vpop.f32.mrf.mxu0
      %v1197 = vadd.f32 0.0, %v1196
      %v1198 = vpop.f32.mrf.mxu0
      %1199 = vdwg.mxu0
      %1200 = vmatprep.subr.bf16.mxu0 0
      %1201 = vmatpush1.bf16.msra.mxu0 %v995
      %1202 = vmatprep.subr.bf16.mxu0 0
      %1203 = vmatpush1.bf16.msra.mxu0 %v994
      %1204 = vmatprep.subr.bf16.mxu0 0
      %1205 = vmatpush1.bf16.msra.mxu0 %v993
      %1206 = vmatprep.subr.bf16.mxu0 0
      %1207 = vmatpush1.bf16.msra.mxu0 %v992
      %1208 = vmatprep.subr.bf16.mxu0 0
      %1209 = vmatpush1.bf16.msra.mxu0 %v991
      %1210 = vmatprep.subr.bf16.mxu0 0
      %1211 = vmatpush1.bf16.msra.mxu0 %v990
      %1212 = vmatprep.subr.bf16.mxu0 0
      %1213 = vmatpush1.bf16.msra.mxu0 %v989
      %1214 = vmatprep.subr.bf16.mxu0 0
      %1215 = vmatpush1.bf16.msra.mxu0 %v988
      %1216 = vmatprep.subr.bf16.mxu0 0
      %1217 = vmatpush2.bf16.msra.mxu0 %v1003
      %1218 = vmatprep.subr.bf16.mxu0 0
      %1219 = vmatpush2.bf16.msra.mxu0 %v1002
      %1220 = vmatprep.subr.bf16.mxu0 0
      %1221 = vmatpush2.bf16.msra.mxu0 %v1001
      %1222 = vmatprep.subr.bf16.mxu0 0
      %1223 = vmatpush2.bf16.msra.mxu0 %v1000
      %1224 = vmatprep.subr.bf16.mxu0 0
      %1225 = vmatpush2.bf16.msra.mxu0 %v999
      %1226 = vmatprep.subr.bf16.mxu0 0
      %1227 = vmatpush2.bf16.msra.mxu0 %v998
      %1228 = vmatprep.subr.bf16.mxu0 0
      %1229 = vmatpush2.bf16.msra.mxu0 %v997
      %1230 = vmatprep.subr.bf16.mxu0 0
      %1231 = vmatpush2.bf16.msra.mxu0 %v996
      %1232 = vmatprep.mubr.bf16.mxu0 %v599
      %1233 = vmatmul.mubr.bf16.gmra.mxu0 %v598
      %v1234 = vpop.f32.mrf.mxu0
      %v1235 = vadd.f32 %v1170, %v1234
      %v1236 = vpop.f32.mrf.mxu0
      %v1237 = vpop.f32.mrf.mxu0
      %v1238 = vadd.f32 %v1173, %v1237
      %v1239 = vpop.f32.mrf.mxu0
      %1240 = vmatprep.mubr.bf16.mxu0 %v609
      %1241 = vmatmul.mubr.bf16.gmra.mxu0 %v608
      %v1242 = vpop.f32.mrf.mxu0
      %v1243 = vadd.f32 %v1178, %v1242
      %v1244 = vpop.f32.mrf.mxu0
      %v1245 = vpop.f32.mrf.mxu0
      %v1246 = vadd.f32 %v1181, %v1245
      %v1247 = vpop.f32.mrf.mxu0
      %1248 = vmatprep.mubr.bf16.mxu0 %v619
      %1249 = vmatmul.mubr.bf16.gmra.mxu0 %v618
      %v1250 = vpop.f32.mrf.mxu0
      %v1251 = vadd.f32 %v1186, %v1250
      %v1252 = vpop.f32.mrf.mxu0
      %v1253 = vpop.f32.mrf.mxu0
      %v1254 = vadd.f32 %v1189, %v1253
      %v1255 = vpop.f32.mrf.mxu0
      %1256 = vmatprep.mubr.bf16.mxu0 %v629
      %1257 = vmatmul.mubr.bf16.gmra.mxu0 %v628
      %v1258 = vpop.f32.mrf.mxu0
      %v1259 = vadd.f32 %v1194, %v1258
      %v1260 = vpop.f32.mrf.mxu0
      %v1261 = vpop.f32.mrf.mxu0
      %v1262 = vadd.f32 %v1197, %v1261
      %v1263 = vpop.f32.mrf.mxu0
      %1264 = vdwg.mxu0
      %1265 = vmatprep.subr.bf16.mxu0 0
      %1266 = vmatpush1.bf16.msra.mxu0 %v1011
      %1267 = vmatprep.subr.bf16.mxu0 0
      %1268 = vmatpush1.bf16.msra.mxu0 %v1010
      %1269 = vmatprep.subr.bf16.mxu0 0
      %1270 = vmatpush1.bf16.msra.mxu0 %v1009
      %1271 = vmatprep.subr.bf16.mxu0 0
      %1272 = vmatpush1.bf16.msra.mxu0 %v1008
      %1273 = vmatprep.subr.bf16.mxu0 0
      %1274 = vmatpush1.bf16.msra.mxu0 %v1007
      %1275 = vmatprep.subr.bf16.mxu0 0
      %1276 = vmatpush1.bf16.msra.mxu0 %v1006
      %1277 = vmatprep.subr.bf16.mxu0 0
      %1278 = vmatpush1.bf16.msra.mxu0 %v1005
      %1279 = vmatprep.subr.bf16.mxu0 0
      %1280 = vmatpush1.bf16.msra.mxu0 %v1004
      %1281 = vmatprep.subr.bf16.mxu0 0
      %1282 = vmatpush2.bf16.msra.mxu0 %v1019
      %1283 = vmatprep.subr.bf16.mxu0 0
      %1284 = vmatpush2.bf16.msra.mxu0 %v1018
      %1285 = vmatprep.subr.bf16.mxu0 0
      %1286 = vmatpush2.bf16.msra.mxu0 %v1017
      %1287 = vmatprep.subr.bf16.mxu0 0
      %1288 = vmatpush2.bf16.msra.mxu0 %v1016
      %1289 = vmatprep.subr.bf16.mxu0 0
      %1290 = vmatpush2.bf16.msra.mxu0 %v1015
      %1291 = vmatprep.subr.bf16.mxu0 0
      %1292 = vmatpush2.bf16.msra.mxu0 %v1014
      %1293 = vmatprep.subr.bf16.mxu0 0
      %1294 = vmatpush2.bf16.msra.mxu0 %v1013
      %1295 = vmatprep.subr.bf16.mxu0 0
      %1296 = vmatpush2.bf16.msra.mxu0 %v1012
      %1297 = vmatprep.mubr.bf16.mxu0 %v601
      %1298 = vmatmul.mubr.bf16.gmra.mxu0 %v600
      %v1299 = vpop.f32.mrf.mxu0
      %v1300 = vadd.f32 %v1235, %v1299
      %v1301 = vpop.f32.mrf.mxu0
      %v1302 = vpop.f32.mrf.mxu0
      %v1303 = vadd.f32 %v1238, %v1302
      %v1304 = vpop.f32.mrf.mxu0
      %1305 = vmatprep.mubr.bf16.mxu0 %v611
      %1306 = vmatmul.mubr.bf16.gmra.mxu0 %v610
      %v1307 = vpop.f32.mrf.mxu0
      %v1308 = vadd.f32 %v1243, %v1307
      %v1309 = vpop.f32.mrf.mxu0
      %v1310 = vpop.f32.mrf.mxu0
      %v1311 = vadd.f32 %v1246, %v1310
      %v1312 = vpop.f32.mrf.mxu0
      %1313 = vmatprep.mubr.bf16.mxu0 %v621
      %1314 = vmatmul.mubr.bf16.gmra.mxu0 %v620
      %v1315 = vpop.f32.mrf.mxu0
      %v1316 = vadd.f32 %v1251, %v1315
      %v1317 = vpop.f32.mrf.mxu0
      %v1318 = vpop.f32.mrf.mxu0
      %v1319 = vadd.f32 %v1254, %v1318
      %v1320 = vpop.f32.mrf.mxu0
      %1321 = vmatprep.mubr.bf16.mxu0 %v631
      %1322 = vmatmul.mubr.bf16.gmra.mxu0 %v630
      %v1323 = vpop.f32.mrf.mxu0
      %v1324 = vadd.f32 %v1259, %v1323
      %v1325 = vpop.f32.mrf.mxu0
      %v1326 = vpop.f32.mrf.mxu0
      %v1327 = vadd.f32 %v1262, %v1326
      %v1328 = vpop.f32.mrf.mxu0
      %1329 = vdwg.mxu0
      %1330 = vmatprep.subr.bf16.mxu0 0
      %1331 = vmatpush1.bf16.msra.mxu0 %v1027
      %1332 = vmatprep.subr.bf16.mxu0 0
      %1333 = vmatpush1.bf16.msra.mxu0 %v1026
      %1334 = vmatprep.subr.bf16.mxu0 0
      %1335 = vmatpush1.bf16.msra.mxu0 %v1025
      %1336 = vmatprep.subr.bf16.mxu0 0
      %1337 = vmatpush1.bf16.msra.mxu0 %v1024
      %1338 = vmatprep.subr.bf16.mxu0 0
      %1339 = vmatpush1.bf16.msra.mxu0 %v1023
      %1340 = vmatprep.subr.bf16.mxu0 0
      %1341 = vmatpush1.bf16.msra.mxu0 %v1022
      %1342 = vmatprep.subr.bf16.mxu0 0
      %1343 = vmatpush1.bf16.msra.mxu0 %v1021
      %1344 = vmatprep.subr.bf16.mxu0 0
      %1345 = vmatpush1.bf16.msra.mxu0 %v1020
      %1346 = vmatprep.subr.bf16.mxu0 0
      %1347 = vmatpush2.bf16.msra.mxu0 %v1035
      %1348 = vmatprep.subr.bf16.mxu0 0
      %1349 = vmatpush2.bf16.msra.mxu0 %v1034
      %1350 = vmatprep.subr.bf16.mxu0 0
      %1351 = vmatpush2.bf16.msra.mxu0 %v1033
      %1352 = vmatprep.subr.bf16.mxu0 0
      %1353 = vmatpush2.bf16.msra.mxu0 %v1032
      %1354 = vmatprep.subr.bf16.mxu0 0
      %1355 = vmatpush2.bf16.msra.mxu0 %v1031
      %1356 = vmatprep.subr.bf16.mxu0 0
      %1357 = vmatpush2.bf16.msra.mxu0 %v1030
      %1358 = vmatprep.subr.bf16.mxu0 0
      %1359 = vmatpush2.bf16.msra.mxu0 %v1029
      %1360 = vmatprep.subr.bf16.mxu0 0
      %1361 = vmatpush2.bf16.msra.mxu0 %v1028
      %1362 = vmatprep.mubr.bf16.mxu0 %v603
      %1363 = vmatmul.mubr.bf16.gmra.mxu0 %v602
      %v1364 = vpop.f32.mrf.mxu0
      %v1365 = vadd.f32 %v1300, %v1364
      %v1366 = vpop.f32.mrf.mxu0
      %v1367 = vpop.f32.mrf.mxu0
      %v1368 = vadd.f32 %v1303, %v1367
      %v1369 = vpop.f32.mrf.mxu0
      %1370 = vmatprep.mubr.bf16.mxu0 %v613
      %1371 = vmatmul.mubr.bf16.gmra.mxu0 %v612
      %v1372 = vpop.f32.mrf.mxu0
      %v1373 = vadd.f32 %v1308, %v1372
      %v1374 = vpop.f32.mrf.mxu0
      %v1375 = vpop.f32.mrf.mxu0
      %v1376 = vadd.f32 %v1311, %v1375
      %v1377 = vpop.f32.mrf.mxu0
      %1378 = vmatprep.mubr.bf16.mxu0 %v623
      %1379 = vmatmul.mubr.bf16.gmra.mxu0 %v622
      %v1380 = vpop.f32.mrf.mxu0
      %v1381 = vadd.f32 %v1316, %v1380
      %v1382 = vpop.f32.mrf.mxu0
      %v1383 = vpop.f32.mrf.mxu0
      %v1384 = vadd.f32 %v1319, %v1383
      %v1385 = vpop.f32.mrf.mxu0
      %1386 = vmatprep.mubr.bf16.mxu0 %v633
      %1387 = vmatmul.mubr.bf16.gmra.mxu0 %v632
      %v1388 = vpop.f32.mrf.mxu0
      %v1389 = vadd.f32 %v1324, %v1388
      %v1390 = vpop.f32.mrf.mxu0
      %v1391 = vpop.f32.mrf.mxu0
      %v1392 = vadd.f32 %v1327, %v1391
      %v1393 = vpop.f32.mrf.mxu0
      %1394 = vdwg.mxu0
      %1395 = vmatprep.subr.bf16.mxu0 0
      %1396 = vmatpush1.bf16.msra.mxu0 %v1043
      %1397 = vmatprep.subr.bf16.mxu0 0
      %1398 = vmatpush1.bf16.msra.mxu0 %v1042
      %1399 = vmatprep.subr.bf16.mxu0 0
      %1400 = vmatpush1.bf16.msra.mxu0 %v1041
      %1401 = vmatprep.subr.bf16.mxu0 0
      %1402 = vmatpush1.bf16.msra.mxu0 %v1040
      %1403 = vmatprep.subr.bf16.mxu0 0
      %1404 = vmatpush1.bf16.msra.mxu0 %v1039
      %1405 = vmatprep.subr.bf16.mxu0 0
      %1406 = vmatpush1.bf16.msra.mxu0 %v1038
      %1407 = vmatprep.subr.bf16.mxu0 0
      %1408 = vmatpush1.bf16.msra.mxu0 %v1037
      %1409 = vmatprep.subr.bf16.mxu0 0
      %1410 = vmatpush1.bf16.msra.mxu0 %v1036
      %1411 = vmatprep.subr.bf16.mxu0 0
      %1412 = vmatpush2.bf16.msra.mxu0 0
      %1413 = vmatprep.subr.bf16.mxu0 0
      %1414 = vmatpush2.bf16.msra.mxu0 0
      %1415 = vmatprep.subr.bf16.mxu0 0
      %1416 = vmatpush2.bf16.msra.mxu0 0
      %1417 = vmatprep.subr.bf16.mxu0 0
      %1418 = vmatpush2.bf16.msra.mxu0 0
      %1419 = vmatprep.subr.bf16.mxu0 0
      %1420 = vmatpush2.bf16.msra.mxu0 0
      %1421 = vmatprep.subr.bf16.mxu0 0
      %1422 = vmatpush2.bf16.msra.mxu0 %v1046
      %1423 = vmatprep.subr.bf16.mxu0 0
      %1424 = vmatpush2.bf16.msra.mxu0 %v1045
      %1425 = vmatprep.subr.bf16.mxu0 0
      %1426 = vmatpush2.bf16.msra.mxu0 %v1044
      %1427 = vmatprep.mubr.bf16.mxu0 %v1124
      %1428 = vmatmul.mubr.bf16.gmra.mxu0 %v604
      %v1429 = vpop.f32.mrf.mxu0
      %v1430 = vadd.f32 %v1365, %v1429
      %v1431 = vpop.f32.mrf.mxu0
      %v1432 = vpop.f32.mrf.mxu0
      %v1433 = vadd.f32 %v1368, %v1432
      %v1434 = vpop.f32.mrf.mxu0
      %1435 = vmatprep.mubr.bf16.mxu0 %v1127
      %1436 = vmatmul.mubr.bf16.gmra.mxu0 %v614
      %v1437 = vpop.f32.mrf.mxu0
      %v1438 = vadd.f32 %v1373, %v1437
      %v1439 = vpop.f32.mrf.mxu0
      %v1440 = vpop.f32.mrf.mxu0
      %v1441 = vadd.f32 %v1376, %v1440
      %v1442 = vpop.f32.mrf.mxu0
      %1443 = vmatprep.mubr.bf16.mxu0 %v1130
      %1444 = vmatmul.mubr.bf16.gmra.mxu0 %v624
      %v1445 = vpop.f32.mrf.mxu0
      %v1446 = vadd.f32 %v1381, %v1445
      %v1447 = vpop.f32.mrf.mxu0
      %v1448 = vpop.f32.mrf.mxu0
      %v1449 = vadd.f32 %v1384, %v1448
      %v1450 = vpop.f32.mrf.mxu0
      %1451 = vmatprep.mubr.bf16.mxu0 %v1133
      %1452 = vmatmul.mubr.bf16.gmra.mxu0 %v634
      %v1453 = vpop.f32.mrf.mxu0
      %v1454 = vadd.f32 %v1389, %v1453
      %v1455 = vpop.f32.mrf.mxu0
      %v1456 = vpop.f32.mrf.mxu0
      %v1457 = vadd.f32 %v1392, %v1456
      %v1458 = vpop.f32.mrf.mxu0
      %1459 = vdwg.mxu0
      %v1460 = vld [vmem:[%s2] sm:$0x1]
      %v1462 = vlaneseq
      %v1463 = vshrl.u32 %v1462, 7
      %v1464 = vsub.s32 0, %v1463
      %v1465 = vrot.slane %v1460, %v1464
      %v1467 = vmul.f32 %v1430, %v1465
      %v1468 = vmul.f32 %v1433, %v1465
      %v1469 = vmul.f32 %v1438, %v1465
      %v1470 = vmul.f32 %v1441, %v1465
      %v1471 = vmul.f32 %v1446, %v1465
      %v1472 = vmul.f32 %v1449, %v1465
      %v1473 = vmul.f32 %v1454, %v1465
      %v1474 = vmul.f32 %v1457, %v1465
      %v1475 = vld [vmem:[%s3] sm:$0x1]
      %v1477 = vlaneseq
      %v1478 = vshrl.u32 %v1477, 7
      %v1479 = vsub.s32 0, %v1478
      %v1480 = vrot.slane %v1475, %v1479
      %v1482 = vadd.f32 %v1467, %v1480
      %v1483 = vadd.f32 %v1468, %v1480
      %v1484 = vadd.f32 %v1469, %v1480
      %v1485 = vadd.f32 %v1470, %v1480
      %v1486 = vadd.f32 %v1471, %v1480
      %v1487 = vadd.f32 %v1472, %v1480
      %v1488 = vadd.f32 %v1473, %v1480
      %v1489 = vadd.f32 %v1474, %v1480
      %v1490 = vmax.f32 %v1482, 0.0
      %v1491 = vmax.f32 %v1483, 0.0
      %v1492 = vmax.f32 %v1484, 0.0
      %v1493 = vmax.f32 %v1485, 0.0
      %v1494 = vmax.f32 %v1486, 0.0
      %v1495 = vmax.f32 %v1487, 0.0
      %v1496 = vmax.f32 %v1488, 0.0
      %v1497 = vmax.f32 %v1489, 0.0
      %v1498 = vmin.f32 %v1490, 6.0
      %v1499 = vmin.f32 %v1491, 6.0
      %v1500 = vmin.f32 %v1492, 6.0
      %v1501 = vmin.f32 %v1493, 6.0
      %v1502 = vmin.f32 %v1494, 6.0
      %v1503 = vmin.f32 %v1495, 6.0
      %v1504 = vmin.f32 %v1496, 6.0
      %v1505 = vmin.f32 %v1497, 6.0
      %v1506 = vpack.c.bf16 %v1499, %v1498
      %v1507 = vpack.c.bf16 %v1501, %v1500
      %v1508 = vpack.c.bf16 %v1503, %v1502
      %v1509 = vpack.c.bf16 %v1505, %v1504
      %v1510 = vld [vmem:[%s4] sm:$0xf]
      %v1511 = vld [vmem:[%s4 + $0x4] sm:$0xf]
      %v1512 = vld [vmem:[%s4 + $0x8] sm:$0xf]
      %v1513 = vld [vmem:[%s4 + $0xc] sm:$0xf]
      %v1514 = vld [vmem:[%s4 + $0x10] sm:$0xf]
      %v1515 = vld [vmem:[%s4 + $0x14] sm:$0xf]
      %v1516 = vld [vmem:[%s4 + $0x18] sm:$0xf]
      %v1517 = vld [vmem:[%s4 + $0x1c] sm:$0xf]
      %v1518 = vld [vmem:[%s4 + $0x20] sm:$0xf]
      %v1519 = vld [vmem:[%s4 + $0x24] sm:$0xf]
      %v1520 = vld [vmem:[%s4 + $0x28] sm:$0xf]
      %v1521 = vld [vmem:[%s4 + $0x2c] sm:$0xf]
      %v1522 = vld [vmem:[%s4 + $0x30] sm:$0xf]
      %v1523 = vld [vmem:[%s4 + $0x34] sm:$0xf]
      %v1524 = vld [vmem:[%s4 + $0x38] sm:$0xf]
      %v1525 = vld [vmem:[%s4 + $0x3c] sm:$0xf]
      %v1542 = vunpack.c.l.b16 %v1510
      %v1543 = vunpack.c.l.b16 %v1511
      %v1544 = vunpack.c.l.b16 %v1512
      %v1545 = vunpack.c.l.b16 %v1513
      %v1546 = vunpack.c.l.b16 %v1514
      %v1547 = vunpack.c.l.b16 %v1515
      %v1548 = vunpack.c.l.b16 %v1516
      %v1549 = vunpack.c.l.b16 %v1517
      %v1550 = vunpack.c.l.b16 %v1518
      %v1551 = vunpack.c.l.b16 %v1519
      %v1552 = vunpack.c.l.b16 %v1520
      %v1553 = vunpack.c.l.b16 %v1521
      %v1554 = vunpack.c.l.b16 %v1522
      %v1555 = vunpack.c.l.b16 %v1523
      %v1556 = vunpack.c.l.b16 %v1524
      %v1557 = vunpack.c.l.b16 %v1525
      %v1558 = vpack.c.b16 %v1543, %v1542
      %v1559 = vpack.c.b16 %v1545, %v1544
      %v1560 = vpack.c.b16 %v1547, %v1546
      %v1561 = vpack.c.b16 %v1549, %v1548
      %v1562 = vpack.c.b16 %v1551, %v1550
      %v1563 = vpack.c.b16 %v1553, %v1552
      %v1564 = vpack.c.b16 %v1555, %v1554
      %v1565 = vpack.c.b16 %v1557, %v1556
      %1574 = vmatprep.subr.bf16.mxu0 0
      %1575 = vmatpush1.bf16.msra.mxu0 %v1565
      %1576 = vmatprep.subr.bf16.mxu0 0
      %1577 = vmatpush1.bf16.msra.mxu0 %v1564
      %1578 = vmatprep.subr.bf16.mxu0 0
      %1579 = vmatpush1.bf16.msra.mxu0 %v1563
      %1580 = vmatprep.subr.bf16.mxu0 0
      %1581 = vmatpush1.bf16.msra.mxu0 %v1562
      %1582 = vmatprep.subr.bf16.mxu0 0
      %1583 = vmatpush1.bf16.msra.mxu0 %v1561
      %1584 = vmatprep.subr.bf16.mxu0 0
      %1585 = vmatpush1.bf16.msra.mxu0 %v1560
      %1586 = vmatprep.subr.bf16.mxu0 0
      %1587 = vmatpush1.bf16.msra.mxu0 %v1559
      %1588 = vmatprep.subr.bf16.mxu0 0
      %1589 = vmatpush1.bf16.msra.mxu0 %v1558
      %1590 = vmatprep.subr.bf16.mxu0 0
      %1591 = vmatpush2.bf16.msra.mxu0 0
      %1592 = vmatprep.subr.bf16.mxu0 0
      %1593 = vmatpush2.bf16.msra.mxu0 0
      %1594 = vmatprep.subr.bf16.mxu0 0
      %1595 = vmatpush2.bf16.msra.mxu0 0
      %1596 = vmatprep.subr.bf16.mxu0 0
      %1597 = vmatpush2.bf16.msra.mxu0 0
      %1598 = vmatprep.subr.bf16.mxu0 0
      %1599 = vmatpush2.bf16.msra.mxu0 0
      %1600 = vmatprep.subr.bf16.mxu0 0
      %1601 = vmatpush2.bf16.msra.mxu0 0
      %1602 = vmatprep.subr.bf16.mxu0 0
      %1603 = vmatpush2.bf16.msra.mxu0 0
      %1604 = vmatprep.subr.bf16.mxu0 0
      %1605 = vmatpush2.bf16.msra.mxu0 0
      %1606 = vmatprep.mubr.bf16.mxu0 0
      %1607 = vmatmul.mubr.bf16.gmra.mxu0 %v1506
      %v1608 = vpop.f32.mrf.mxu0
      %v1609 = vadd.f32 0.0, %v1608
      %v1610 = vpop.f32.mrf.mxu0
      %v1611 = vpop.f32.mrf.mxu0
      %v1612 = vadd.f32 0.0, %v1611
      %v1613 = vpop.f32.mrf.mxu0
      %1614 = vmatprep.mubr.bf16.mxu0 0
      %1615 = vmatmul.mubr.bf16.gmra.mxu0 %v1507
      %v1616 = vpop.f32.mrf.mxu0
      %v1617 = vadd.f32 0.0, %v1616
      %v1618 = vpop.f32.mrf.mxu0
      %v1619 = vpop.f32.mrf.mxu0
      %v1620 = vadd.f32 0.0, %v1619
      %v1621 = vpop.f32.mrf.mxu0
      %1622 = vmatprep.mubr.bf16.mxu0 0
      %1623 = vmatmul.mubr.bf16.gmra.mxu0 %v1508
      %v1624 = vpop.f32.mrf.mxu0
      %v1625 = vadd.f32 0.0, %v1624
      %v1626 = vpop.f32.mrf.mxu0
      %v1627 = vpop.f32.mrf.mxu0
      %v1628 = vadd.f32 0.0, %v1627
      %v1629 = vpop.f32.mrf.mxu0
      %1630 = vmatprep.mubr.bf16.mxu0 0
      %1631 = vmatmul.mubr.bf16.gmra.mxu0 %v1509
      %v1632 = vpop.f32.mrf.mxu0
      %v1633 = vadd.f32 0.0, %v1632
      %v1634 = vpop.f32.mrf.mxu0
      %v1635 = vpop.f32.mrf.mxu0
      %v1636 = vadd.f32 0.0, %v1635
      %v1637 = vpop.f32.mrf.mxu0
      %1638 = vdwg.mxu0
      %v1639 = vld [vmem:[%s5] sm:$0x1]
      %v1641 = vlaneseq
      %v1642 = vshrl.u32 %v1641, 7
      %v1643 = vsub.s32 0, %v1642
      %v1644 = vrot.slane %v1639, %v1643
      %v1646 = vmul.f32 %v1609, %v1644
      %v1647 = vmul.f32 %v1612, %v1644
      %v1648 = vmul.f32 %v1617, %v1644
      %v1649 = vmul.f32 %v1620, %v1644
      %v1650 = vmul.f32 %v1625, %v1644
      %v1651 = vmul.f32 %v1628, %v1644
      %v1652 = vmul.f32 %v1633, %v1644
      %v1653 = vmul.f32 %v1636, %v1644
      %v1654 = vld [vmem:[%s6] sm:$0x1]
      %v1656 = vlaneseq
      %v1657 = vshrl.u32 %v1656, 7
      %v1658 = vsub.s32 0, %v1657
      %v1659 = vrot.slane %v1654, %v1658
      %v1661 = vadd.f32 %v1646, %v1659
      %v1662 = vadd.f32 %v1647, %v1659
      %v1663 = vadd.f32 %v1648, %v1659
      %v1664 = vadd.f32 %v1649, %v1659
      %v1665 = vadd.f32 %v1650, %v1659
      %v1666 = vadd.f32 %v1651, %v1659
      %v1667 = vadd.f32 %v1652, %v1659
      %v1668 = vadd.f32 %v1653, %v1659
      %v1669 = vmax.f32 %v1661, 0.0
      %v1670 = vmax.f32 %v1662, 0.0
      %v1671 = vmax.f32 %v1663, 0.0
      %v1672 = vmax.f32 %v1664, 0.0
      %v1673 = vmax.f32 %v1665, 0.0
      %v1674 = vmax.f32 %v1666, 0.0
      %v1675 = vmax.f32 %v1667, 0.0
      %v1676 = vmax.f32 %v1668, 0.0
      %v1677 = vmin.f32 %v1669, 6.0
      %v1678 = vmin.f32 %v1670, 6.0
      %v1679 = vmin.f32 %v1671, 6.0
      %v1680 = vmin.f32 %v1672, 6.0
      %v1681 = vmin.f32 %v1673, 6.0
      %v1682 = vmin.f32 %v1674, 6.0
      %v1683 = vmin.f32 %v1675, 6.0
      %v1684 = vmin.f32 %v1676, 6.0
      %v1685 = vpack.c.bf16 %v1678, %v1677
      %v1686 = vpack.c.bf16 %v1680, %v1679
      %v1687 = vpack.c.bf16 %v1682, %v1681
      %v1688 = vpack.c.bf16 %v1684, %v1683
      %v1693 = vunpack.c.l.b16 %v1685
      %v1694 = vunpack.c.h.b16 %v1685
      %v1695 = vunpack.c.l.b16 %v1686
      %v1696 = vunpack.c.h.b16 %v1686
      %v1697 = vunpack.c.l.b16 %v1687
      %v1698 = vunpack.c.h.b16 %v1687
      %v1699 = vunpack.c.l.b16 %v1688
      %v1700 = vunpack.c.h.b16 %v1688
      %v1701 = vpack.c.b16 %v1693, %v1693
      %v1702 = vpack.c.b16 %v1694, %v1694
      %v1703 = vpack.c.b16 %v1695, %v1695
      %v1704 = vpack.c.b16 %v1696, %v1696
      %v1705 = vpack.c.b16 %v1697, %v1697
      %v1706 = vpack.c.b16 %v1698, %v1698
      %v1707 = vpack.c.b16 %v1699, %v1699
      %v1708 = vpack.c.b16 %v1700, %v1700
      %1717 = vst [vmem:[%s283] sm:$0xf] %v1701
      %1718 = vst [vmem:[%s283 + $0x4] sm:$0xf] %v1702
      %1719 = vst [vmem:[%s283 + $0x8] sm:$0xf] %v1703
      %1720 = vst [vmem:[%s283 + $0xc] sm:$0xf] %v1704
      %1721 = vst [vmem:[%s283 + $0x10] sm:$0xf] %v1705
      %1722 = vst [vmem:[%s283 + $0x14] sm:$0xf] %v1706
      %1723 = vst [vmem:[%s283 + $0x18] sm:$0xf] %v1707
      %1724 = vst [vmem:[%s283 + $0x1c] sm:$0xf] %v1708
      %s1725 = smul.u32 8, %s18
      %p1726 = scmp.lt.s32.totalorder %s1725, 15
      %s1727 = scalar_select %p1726, %s1725, 15
      %s1728 = smul.addr %s1727, 4
      %s1729 = scalar_lea.vmem %s7, %s1728
      // Predicated region
      $region49: #{vae_forward.9} parent=47 // pred_check
        %p1730 = pneg %p188
      $region50: #{vae_forward.9} parent=47 // pred_check_branch
        %1732 = sbr.rel (%p1730) target = $region52
      $region51: #{vae_forward.9} parent=47 // pred_region
        %s1733 = smul.u32 8, %s18
      $region52: #{vae_forward.9} parent=47 // pred_fallthru
        _
    $region48: #{vae_forward.9} parent=5 // pred_fallthru
      _
    %p1734 = scmp.le.s32.totalorder 2, %s13
    // Predicated region
    $region53: #{vae_forward.9} parent=5 // pred_check
      %p1735 = pneg %p1734
    $region54: #{vae_forward.9} parent=5 // pred_check_branch
      %1737 = sbr.rel (%p1735) target = $region56
    $region55: #{vae_forward.9} parent=5 // pred_region
      %s1738 = ssub.s32 %s13, 2
      // Predicated region
      $region57: #{vae_forward.9} parent=55 // pred_check
        %p1739 = pneg %p194
      $region58: #{vae_forward.9} parent=55 // pred_check_branch
        %1741 = sbr.rel (%p1739) target = $region60
      $region59: #{vae_forward.9} parent=55 // pred_region
        %s1742 = smul.u32 8, %s19
        %p1743 = scmp.lt.s32.totalorder %s1742, 15
        %s1744 = scalar_select %p1743, %s1742, 15
        %s1745 = smul.addr %s1744, 4
        %s1746 = scalar_lea.vmem %s7, %s1745
      $region60: #{vae_forward.9} parent=55 // pred_fallthru
        _
    $region56: #{vae_forward.9} parent=5 // pred_fallthru
      _
  $region6: #{vae_forward.9} parent=0 // loop_footer
    %s17 = sadd.s32 1, %s13
  $region7: #{vae_forward.9} parent=0 // loop_footer_branch
    %12 = sbr.rel target = $region3
  $region8: #{vae_forward.9} parent=0 // loop_exit
    _

// kernel: tile.8
$region0: #{tile.8}
  #allocation0 [shape = 's32[1]{0}', space=sflag, size = 0x4, scoped, tag = 'scoped memory for tile.8']
  %s0 = inlined_call_operand.vmem [shape: bf16[32], index: 0, kind: input, shape index: {}]
  %s1 = inlined_call_operand.vmem [shape: bf16[32,32], index: 1, kind: output, shape index: {}]
  // Predicated region
  $region2: #{tile.8} parent=0 // pred_check
    _
  $region3: #{tile.8} parent=0 // pred_check_branch
    %3 = sbr.rel (0) target = $region5
  $region4: #{tile.8} parent=0 // pred_region
    _
  $region5: #{tile.8} parent=0 // pred_fallthru
    _
  %v4 = vld [vmem:[%s0] ss:$0 sm:$0xff]
  %v5 = vunpack.i.l.bf16 %v4
  %v7 = vunpack.i.h.bf16 %v4
  %v9 = vpack.c.bf16 0.0, %v5
  %10 = vst [vmem:[%s1] sm:$0xf] %v9
  %s11 = scalar_lea.vmem %s1, 4
  %v12 = vpack.c.bf16 0.0, %v5
  %13 = vst [vmem:[%s11] sm:$0xf] %v12
  %s14 = scalar_lea.vmem %s1, 8
  %v15 = vpack.c.bf16 0.0, %v5
  %16 = vst [vmem:[%s14] sm:$0xf] %v15
  %s17 = scalar_lea.vmem %s1, 12
  %v18 = vpack.c.bf16 0.0, %v5
  %19 = vst [vmem:[%s17] sm:$0xf] %v18

// kernel: vae_forward.11
$region0: #{vae_forward.11}
  #allocation0 [shape = 'u32[]', space=smem, size = 0x4, offset = 0x4, fixed_abs, tag = 'smem constant byte address 0x4 - core index']
  #allocation1 [shape = 'u32[144,128]{1,0:T(1,128)}', space=vmem, size = 0x12000, scoped, tag = 'internal scratch']
  %s0 = inlined_call_operand.vmem [shape: f32[1024,128], index: 0, kind: input, shape index: {}]
  %s1 = inlined_call_operand.vmem [shape: f32[2,1,128], index: 1, kind: input, shape index: {}]
  %s2 = inlined_call_operand.vmem [shape: bf16[128,256], index: 2, kind: input, shape index: {}]
  %s3 = inlined_call_operand.vmem [shape: f32[1,256], index: 3, kind: input, shape index: {}]
  %s4 = inlined_call_operand.vmem [shape: bf16[256,128], index: 4, kind: input, shape index: {}]
  %s5 = inlined_call_operand.vmem [shape: f32[1,128], index: 5, kind: input, shape index: {}]
  %s6 = inlined_call_operand.vmem [shape: bf16[128,128], index: 6, kind: input, shape index: {}]
  %s7 = inlined_call_operand.vmem [shape: f32[1,128], index: 7, kind: input, shape index: {}]
  %s8 = inlined_call_operand.vmem [shape: f32[2,1024,128], index: 8, kind: output, shape index: {}]
  %s9 = sld [smem:[#allocation0]]
  $region65: #{vae_forward.11} parent=0
    _
  %s11 = ssub.s32 1, %s9
  %s12 = scalar_select 0, %s11, %s9
  loop: start=0, step=1, limit=10
  $region2: #{vae_forward.11} parent=0 // loop_pre_header
    _
  $region3: #{vae_forward.11} parent=0 // loop_header
    %s14 = sphi 0, %s18
    %p15 = scmp.ge.s32.totalorder %s14, 10
    %s21 = sphi 0, %s33
    %s22 = sphi 0, %s29
    %s23 = sphi 0, %s21
    %s24 = sphi 0, %s22
    %s25 = sphi 0, %s23
    %s26 = sphi 0, %s24
    %s36 = sphi 0, %s38
    %s39 = sphi 0, %s36
    %s40 = sphi 0, %s39
    %s56 = sphi 0, %s40
    %s62 = sphi 0, %s64
    %s65 = sphi 0, %s62
    %s66 = sphi 0, %s65
    %s82 = sphi 0, %s66
    %s86 = sphi 0, %s86
    %s88 = sphi 0, %s86
    %s89 = sphi 0, %s88
    %s103 = sphi 0, %s89
    %s107 = sphi 0, %s107
    %s109 = sphi 0, %s107
    %s110 = sphi 0, %s109
    %s124 = sphi 0, %s110
    %s128 = sphi 0, %s128
    %s130 = sphi 0, %s128
    %s131 = sphi 0, %s130
    %s145 = sphi 0, %s131
    %s149 = sphi 0, %s149
    %s151 = sphi 0, %s149
    %s152 = sphi 0, %s151
    %s166 = sphi 0, %s152
    %s170 = sphi 0, %s170
    %s172 = sphi 0, %s170
    %s173 = sphi 0, %s172
    %s187 = sphi 0, %s173
    %s191 = sphi 0, %s191
    %s193 = sphi 0, %s191
    %s194 = sphi 0, %s193
    %s208 = sphi 0, %s194
    %s216 = sphi 0, %s218
    %s219 = sphi 0, %s216
    %s220 = sphi 0, %s219
    %s236 = sphi 0, %s220
  $region4: #{vae_forward.11} parent=0 // loop_header_branch
    %17 = sbr.rel (%p15) target = $region8
  $region5: #{vae_forward.11} parent=0 // loop_body
    %s19 = ssub.s32 %s14, 1
    %s20 = ssub.s32 %s14, 2
    %s27 = sadd.s32 1, %s22
    %p28 = scmp.ge.s32.totalorder %s27, 4
    %s29 = scalar_select %p28, 0, %s27
    %s30 = sadd.s32 1, %s21
    %s31 = scalar_select %p28, %s30, %s21
    %p32 = scmp.ge.s32.totalorder %s31, 2
    %s33 = scalar_select %p32, 0, %s31
    %s34 = ssub.s32 %s22, %s29
    %p35 = scmp.eq.s32.totalorder %s34, 0
    %s37 = sadd.s32 %s36, 1
    %s38 = scalar_select %p35, %s36, %s37
    %p41 = pneg %p35
    %p42 = scmp.eq.s32.totalorder %s14, 7
    %p43 = por %p41, %p42
    %p44 = scmp.ne.s32.totalorder %s36, %s39
    %p45 = scmp.eq.s32.totalorder %s14, 0
    %p46 = por %p44, %p45
    %p47 = scmp.ne.s32.totalorder %s36, %s39
    %p48 = scmp.eq.s32.totalorder %s19, 7
    %p49 = por %p47, %p48
    %p50 = scmp.ne.s32.totalorder %s39, %s40
    %p51 = scmp.eq.s32.totalorder %s19, 0
    %p52 = por %p50, %p51
    %p53 = scmp.ne.s32.totalorder %s39, %s40
    %p54 = scmp.eq.s32.totalorder %s20, 7
    %p55 = por %p53, %p54
    %p57 = scmp.ne.s32.totalorder %s40, %s56
    %p58 = scmp.eq.s32.totalorder %s20, 0
    %p59 = por %p57, %p58
    %s60 = ssub.s32 %s21, %s33
    %p61 = scmp.eq.s32.totalorder %s60, 0
    %s63 = sadd.s32 %s62, 1
    %s64 = scalar_select %p61, %s62, %s63
    %p67 = pneg %p61
    %p68 = scmp.eq.s32.totalorder %s14, 7
    %p69 = por %p67, %p68
    %p70 = scmp.ne.s32.totalorder %s62, %s65
    %p71 = scmp.eq.s32.totalorder %s14, 0
    %p72 = por %p70, %p71
    %p73 = scmp.ne.s32.totalorder %s62, %s65
    %p74 = scmp.eq.s32.totalorder %s19, 7
    %p75 = por %p73, %p74
    %p76 = scmp.ne.s32.totalorder %s65, %s66
    %p77 = scmp.eq.s32.totalorder %s19, 0
    %p78 = por %p76, %p77
    %p79 = scmp.ne.s32.totalorder %s65, %s66
    %p80 = scmp.eq.s32.totalorder %s20, 7
    %p81 = por %p79, %p80
    %p83 = scmp.ne.s32.totalorder %s66, %s82
    %p84 = scmp.eq.s32.totalorder %s20, 0
    %p85 = por %p83, %p84
    %s87 = sadd.s32 %s86, 1
    %p90 = scmp.eq.s32.totalorder %s14, 7
    %p91 = scmp.ne.s32.totalorder %s86, %s88
    %p92 = scmp.eq.s32.totalorder %s14, 0
    %p93 = por %p91, %p92
    %p94 = scmp.ne.s32.totalorder %s86, %s88
    %p95 = scmp.eq.s32.totalorder %s19, 7
    %p96 = por %p94, %p95
    %p97 = scmp.ne.s32.totalorder %s88, %s89
    %p98 = scmp.eq.s32.totalorder %s19, 0
    %p99 = por %p97, %p98
    %p100 = scmp.ne.s32.totalorder %s88, %s89
    %p101 = scmp.eq.s32.totalorder %s20, 7
    %p102 = por %p100, %p101
    %p104 = scmp.ne.s32.totalorder %s89, %s103
    %p105 = scmp.eq.s32.totalorder %s20, 0
    %p106 = por %p104, %p105
    %s108 = sadd.s32 %s107, 1
    %p111 = scmp.eq.s32.totalorder %s14, 7
    %p112 = scmp.ne.s32.totalorder %s107, %s109
    %p113 = scmp.eq.s32.totalorder %s14, 0
    %p114 = por %p112, %p113
    %p115 = scmp.ne.s32.totalorder %s107, %s109
    %p116 = scmp.eq.s32.totalorder %s19, 7
    %p117 = por %p115, %p116
    %p118 = scmp.ne.s32.totalorder %s109, %s110
    %p119 = scmp.eq.s32.totalorder %s19, 0
    %p120 = por %p118, %p119
    %p121 = scmp.ne.s32.totalorder %s109, %s110
    %p122 = scmp.eq.s32.totalorder %s20, 7
    %p123 = por %p121, %p122
    %p125 = scmp.ne.s32.totalorder %s110, %s124
    %p126 = scmp.eq.s32.totalorder %s20, 0
    %p127 = por %p125, %p126
    %s129 = sadd.s32 %s128, 1
    %p132 = scmp.eq.s32.totalorder %s14, 7
    %p133 = scmp.ne.s32.totalorder %s128, %s130
    %p134 = scmp.eq.s32.totalorder %s14, 0
    %p135 = por %p133, %p134
    %p136 = scmp.ne.s32.totalorder %s128, %s130
    %p137 = scmp.eq.s32.totalorder %s19, 7
    %p138 = por %p136, %p137
    %p139 = scmp.ne.s32.totalorder %s130, %s131
    %p140 = scmp.eq.s32.totalorder %s19, 0
    %p141 = por %p139, %p140
    %p142 = scmp.ne.s32.totalorder %s130, %s131
    %p143 = scmp.eq.s32.totalorder %s20, 7
    %p144 = por %p142, %p143
    %p146 = scmp.ne.s32.totalorder %s131, %s145
    %p147 = scmp.eq.s32.totalorder %s20, 0
    %p148 = por %p146, %p147
    %s150 = sadd.s32 %s149, 1
    %p153 = scmp.eq.s32.totalorder %s14, 7
    %p154 = scmp.ne.s32.totalorder %s149, %s151
    %p155 = scmp.eq.s32.totalorder %s14, 0
    %p156 = por %p154, %p155
    %p157 = scmp.ne.s32.totalorder %s149, %s151
    %p158 = scmp.eq.s32.totalorder %s19, 7
    %p159 = por %p157, %p158
    %p160 = scmp.ne.s32.totalorder %s151, %s152
    %p161 = scmp.eq.s32.totalorder %s19, 0
    %p162 = por %p160, %p161
    %p163 = scmp.ne.s32.totalorder %s151, %s152
    %p164 = scmp.eq.s32.totalorder %s20, 7
    %p165 = por %p163, %p164
    %p167 = scmp.ne.s32.totalorder %s152, %s166
    %p168 = scmp.eq.s32.totalorder %s20, 0
    %p169 = por %p167, %p168
    %s171 = sadd.s32 %s170, 1
    %p174 = scmp.eq.s32.totalorder %s14, 7
    %p175 = scmp.ne.s32.totalorder %s170, %s172
    %p176 = scmp.eq.s32.totalorder %s14, 0
    %p177 = por %p175, %p176
    %p178 = scmp.ne.s32.totalorder %s170, %s172
    %p179 = scmp.eq.s32.totalorder %s19, 7
    %p180 = por %p178, %p179
    %p181 = scmp.ne.s32.totalorder %s172, %s173
    %p182 = scmp.eq.s32.totalorder %s19, 0
    %p183 = por %p181, %p182
    %p184 = scmp.ne.s32.totalorder %s172, %s173
    %p185 = scmp.eq.s32.totalorder %s20, 7
    %p186 = por %p184, %p185
    %p188 = scmp.ne.s32.totalorder %s173, %s187
    %p189 = scmp.eq.s32.totalorder %s20, 0
    %p190 = por %p188, %p189
    %s192 = sadd.s32 %s191, 1
    %p195 = scmp.eq.s32.totalorder %s14, 7
    %p196 = scmp.ne.s32.totalorder %s191, %s193
    %p197 = scmp.eq.s32.totalorder %s14, 0
    %p198 = por %p196, %p197
    %p199 = scmp.ne.s32.totalorder %s191, %s193
    %p200 = scmp.eq.s32.totalorder %s19, 7
    %p201 = por %p199, %p200
    %p202 = scmp.ne.s32.totalorder %s193, %s194
    %p203 = scmp.eq.s32.totalorder %s19, 0
    %p204 = por %p202, %p203
    %p205 = scmp.ne.s32.totalorder %s193, %s194
    %p206 = scmp.eq.s32.totalorder %s20, 7
    %p207 = por %p205, %p206
    %p209 = scmp.ne.s32.totalorder %s194, %s208
    %p210 = scmp.eq.s32.totalorder %s20, 0
    %p211 = por %p209, %p210
    %s212 = ssub.s32 %s21, %s33
    %s213 = ssub.s32 %s22, %s29
    %s214 = sor.u32 %s212, %s213
    %p215 = scmp.eq.s32.totalorder %s214, 0
    %s217 = sadd.s32 %s216, 1
    %s218 = scalar_select %p215, %s216, %s217
    %p221 = pneg %p215
    %p222 = scmp.eq.s32.totalorder %s14, 7
    %p223 = por %p221, %p222
    %p224 = scmp.ne.s32.totalorder %s216, %s219
    %p225 = scmp.eq.s32.totalorder %s14, 0
    %p226 = por %p224, %p225
    %p227 = scmp.ne.s32.totalorder %s216, %s219
    %p228 = scmp.eq.s32.totalorder %s19, 7
    %p229 = por %p227, %p228
    %p230 = scmp.ne.s32.totalorder %s219, %s220
    %p231 = scmp.eq.s32.totalorder %s19, 0
    %p232 = por %p230, %p231
    %p233 = scmp.ne.s32.totalorder %s219, %s220
    %p234 = scmp.eq.s32.totalorder %s20, 7
    %p235 = por %p233, %p234
    %p237 = scmp.ne.s32.totalorder %s220, %s236
    %p238 = scmp.eq.s32.totalorder %s20, 0
    %p239 = por %p237, %p238
    %p240 = scmp.le.s32.totalorder 1, %s14
    %p241 = scmp.lt.s32.totalorder %s14, 9
    %p242 = pnand %p240, %p241
    %p243 = pneg %p242
    // Predicated region
    $region9: #{vae_forward.11} parent=5 // pred_check
      _
    $region10: #{vae_forward.11} parent=5 // pred_check_branch
      %245 = sbr.rel (%p242) target = $region12
    $region11: #{vae_forward.11} parent=5 // pred_region
      %s246 = ssub.s32 %s14, 1
      // Predicated region
      $region13: #{vae_forward.11} parent=11 // pred_check
        %p247 = pneg %p99
      $region14: #{vae_forward.11} parent=11 // pred_check_branch
        %249 = sbr.rel (%p247) target = $region16
      $region15: #{vae_forward.11} parent=11 // pred_region
        _
      $region16: #{vae_forward.11} parent=11 // pred_fallthru
        _
      // Predicated region
      $region17: #{vae_forward.11} parent=11 // pred_check
        %p250 = pneg %p120
      $region18: #{vae_forward.11} parent=11 // pred_check_branch
        %252 = sbr.rel (%p250) target = $region20
      $region19: #{vae_forward.11} parent=11 // pred_region
        _
      $region20: #{vae_forward.11} parent=11 // pred_fallthru
        _
      // Predicated region
      $region21: #{vae_forward.11} parent=11 // pred_check
        %p253 = pneg %p141
      $region22: #{vae_forward.11} parent=11 // pred_check_branch
        %255 = sbr.rel (%p253) target = $region24
      $region23: #{vae_forward.11} parent=11 // pred_region
        _
      $region24: #{vae_forward.11} parent=11 // pred_fallthru
        _
      // Predicated region
      $region25: #{vae_forward.11} parent=11 // pred_check
        %p256 = pneg %p162
      $region26: #{vae_forward.11} parent=11 // pred_check_branch
        %258 = sbr.rel (%p256) target = $region28
      $region27: #{vae_forward.11} parent=11 // pred_region
        _
      $region28: #{vae_forward.11} parent=11 // pred_fallthru
        _
      // Predicated region
      $region29: #{vae_forward.11} parent=11 // pred_check
        %p259 = pneg %p183
      $region30: #{vae_forward.11} parent=11 // pred_check_branch
        %261 = sbr.rel (%p259) target = $region32
      $region31: #{vae_forward.11} parent=11 // pred_region
        _
      $region32: #{vae_forward.11} parent=11 // pred_fallthru
        _
      // Predicated region
      $region33: #{vae_forward.11} parent=11 // pred_check
        %p262 = pneg %p204
      $region34: #{vae_forward.11} parent=11 // pred_check_branch
        %264 = sbr.rel (%p262) target = $region36
      $region35: #{vae_forward.11} parent=11 // pred_region
        _
      $region36: #{vae_forward.11} parent=11 // pred_fallthru
        _
    $region12: #{vae_forward.11} parent=5 // pred_fallthru
      _
    %p265 = scmp.lt.s32.totalorder %s14, 8
    // Predicated region
    $region37: #{vae_forward.11} parent=5 // pred_check
      %p266 = pneg %p265
    $region38: #{vae_forward.11} parent=5 // pred_check_branch
      %268 = sbr.rel (%p266) target = $region40
    $region39: #{vae_forward.11} parent=5 // pred_region
      // Predicated region
      $region41: #{vae_forward.11} parent=39 // pred_check
        %p269 = pneg %p46
      $region42: #{vae_forward.11} parent=39 // pred_check_branch
        %271 = sbr.rel (%p269) target = $region44
      $region43: #{vae_forward.11} parent=39 // pred_region
        %s272 = smul.u32 32, %s22
        %p273 = scmp.lt.s32.totalorder %s272, 127
        %s274 = scalar_select %p273, %s272, 127
        %s275 = smul.addr %s274, 8
        %s276 = scalar_lea.vmem %s0, %s275
        %s277 = smul.u32 32, %s22
      $region44: #{vae_forward.11} parent=39 // pred_fallthru
        _
      // Predicated region
      $region45: #{vae_forward.11} parent=39 // pred_check
        %p278 = pneg %p72
      $region46: #{vae_forward.11} parent=39 // pred_check_branch
        %280 = sbr.rel (%p278) target = $region48
      $region47: #{vae_forward.11} parent=39 // pred_region
        %p281 = scmp.lt.s32.totalorder %s21, 1
        %s282 = scalar_select %p281, %s21, 1
        %s283 = scalar_lea.vmem %s1, %s282
      $region48: #{vae_forward.11} parent=39 // pred_fallthru
        _
    $region40: #{vae_forward.11} parent=5 // pred_fallthru
      _
    %p284 = scmp.le.s32.totalorder 1, %s14
    %p285 = scmp.lt.s32.totalorder %s14, 9
    %p286 = pnand %p284, %p285
    %p287 = pneg %p286
    // Predicated region
    $region49: #{vae_forward.11} parent=5 // pred_check
      _
    $region50: #{vae_forward.11} parent=5 // pred_check_branch
      %289 = sbr.rel (%p286) target = $region52
    $region51: #{vae_forward.11} parent=5 // pred_region
      %s290 = ssub.s32 %s14, 1
      %s291 = smul.u32 32, %s24
      %p292 = scmp.lt.s32.totalorder %s291, 127
      %s293 = scalar_select %p292, %s291, 127
      %s294 = smul.addr %s293, 8
      %s295 = scalar_lea.vmem %s0, %s294
      %p296 = pneg %p52
      %p297 = pneg %p49
      %p298 = scmp.lt.s32.totalorder %s23, 1
      %s299 = scalar_select %p298, %s23, 1
      %s300 = scalar_lea.vmem %s1, %s299
      %p301 = pneg %p78
      %p302 = pneg %p75
      %p303 = pneg %p99
      %p304 = pneg %p96
      %p305 = pneg %p120
      %p306 = pneg %p117
      %p307 = pneg %p141
      %p308 = pneg %p138
      %p309 = pneg %p162
      %p310 = pneg %p159
      %p311 = pneg %p183
      %p312 = pneg %p180
      %p313 = pneg %p204
      %p314 = pneg %p201
      %p315 = pneg %p232
      %p316 = pneg %p229
      %s317 = smul.u32 32, %s24
      %p318 = scmp.lt.s32.totalorder %s23, 1
      %s319 = scalar_select %p318, %s23, 1
      %p320 = scmp.lt.s32.totalorder %s317, 127
      %s321 = scalar_select %p320, %s317, 127
      %s322 = smul.addr %s319, 128
      %s323 = sadd.s32 %s321, %s322
      %s324 = smul.addr %s323, 8
      %s325 = scalar_lea.vmem %s8, %s324
      %s326 = smul.u32 32, %s24
      %p327 = scmp.lt.s32.totalorder %s326, 127
      %s328 = scalar_select %p327, %s326, 127
      %s329 = smul.addr %s328, 8
      %s330 = scalar_lea.vmem %s0, %s329
      %s331 = smul.u32 32, %s24
      %p332 = scmp.lt.s32.totalorder %s23, 1
      %s333 = scalar_select %p332, %s23, 1
      %s334 = scalar_lea.vmem %s1, %s333
      %s335 = smul.u32 32, %s24
      %p336 = scmp.lt.s32.totalorder %s23, 1
      %s337 = scalar_select %p336, %s23, 1
      %p338 = scmp.lt.s32.totalorder %s335, 127
      %s339 = scalar_select %p338, %s335, 127
      %s340 = smul.addr %s337, 128
      %s341 = sadd.s32 %s339, %s340
      %s342 = smul.addr %s341, 8
      %s343 = scalar_lea.vmem %s8, %s342
      %s344 = smul.u32 32, %s24
      %v346 = vld [vmem:[%s330] sm:$0xff]
      %v347 = vld [vmem:[%s330 + $0x8] sm:$0xff]
      %v348 = vld [vmem:[%s330 + $0x10] sm:$0xff]
      %v349 = vld [vmem:[%s330 + $0x18] sm:$0xff]
      %v350 = vld [vmem:[%s330 + $0x20] sm:$0xff]
      %v351 = vld [vmem:[%s330 + $0x28] sm:$0xff]
      %v352 = vld [vmem:[%s330 + $0x30] sm:$0xff]
      %v353 = vld [vmem:[%s330 + $0x38] sm:$0xff]
      %v354 = vld [vmem:[%s330 + $0x40] sm:$0xff]
      %v355 = vld [vmem:[%s330 + $0x48] sm:$0xff]
      %v356 = vld [vmem:[%s330 + $0x50] sm:$0xff]
      %v357 = vld [vmem:[%s330 + $0x58] sm:$0xff]
      %v358 = vld [vmem:[%s330 + $0x60] sm:$0xff]
      %v359 = vld [vmem:[%s330 + $0x68] sm:$0xff]
      %v360 = vld [vmem:[%s330 + $0x70] sm:$0xff]
      %v361 = vld [vmem:[%s330 + $0x78] sm:$0xff]
      %v362 = vld [vmem:[%s330 + $0x80] sm:$0xff]
      %v363 = vld [vmem:[%s330 + $0x88] sm:$0xff]
      %v364 = vld [vmem:[%s330 + $0x90] sm:$0xff]
      %v365 = vld [vmem:[%s330 + $0x98] sm:$0xff]
      %v366 = vld [vmem:[%s330 + $0xa0] sm:$0xff]
      %v367 = vld [vmem:[%s330 + $0xa8] sm:$0xff]
      %v368 = vld [vmem:[%s330 + $0xb0] sm:$0xff]
      %v369 = vld [vmem:[%s330 + $0xb8] sm:$0xff]
      %v370 = vld [vmem:[%s330 + $0xc0] sm:$0xff]
      %v371 = vld [vmem:[%s330 + $0xc8] sm:$0xff]
      %v372 = vld [vmem:[%s330 + $0xd0] sm:$0xff]
      %v373 = vld [vmem:[%s330 + $0xd8] sm:$0xff]
      %v374 = vld [vmem:[%s330 + $0xe0] sm:$0xff]
      %v375 = vld [vmem:[%s330 + $0xe8] sm:$0xff]
      %v376 = vld [vmem:[%s330 + $0xf0] sm:$0xff]
      %v377 = vld [vmem:[%s330 + $0xf8] sm:$0xff]
      %v378 = vld [vmem:[%s334] sm:$0x1]
      %v380 = vlaneseq
      %v381 = vshrl.u32 %v380, 7
      %v382 = vsub.s32 0, %v381
      %v383 = vrot.slane %v378, %v382
      %v385 = vadd.f32 %v346, %v383
      %v386 = vadd.f32 %v347, %v383
      %v387 = vadd.f32 %v348, %v383
      %v388 = vadd.f32 %v349, %v383
      %v389 = vadd.f32 %v350, %v383
      %v390 = vadd.f32 %v351, %v383
      %v391 = vadd.f32 %v352, %v383
      %v392 = vadd.f32 %v353, %v383
      %v393 = vadd.f32 %v354, %v383
      %v394 = vadd.f32 %v355, %v383
      %v395 = vadd.f32 %v356, %v383
      %v396 = vadd.f32 %v357, %v383
      %v397 = vadd.f32 %v358, %v383
      %v398 = vadd.f32 %v359, %v383
      %v399 = vadd.f32 %v360, %v383
      %v400 = vadd.f32 %v361, %v383
      %v401 = vadd.f32 %v362, %v383
      %v402 = vadd.f32 %v363, %v383
      %v403 = vadd.f32 %v364, %v383
      %v404 = vadd.f32 %v365, %v383
      %v405 = vadd.f32 %v366, %v383
      %v406 = vadd.f32 %v367, %v383
      %v407 = vadd.f32 %v368, %v383
      %v408 = vadd.f32 %v369, %v383
      %v409 = vadd.f32 %v370, %v383
      %v410 = vadd.f32 %v371, %v383
      %v411 = vadd.f32 %v372, %v383
      %v412 = vadd.f32 %v373, %v383
      %v413 = vadd.f32 %v374, %v383
      %v414 = vadd.f32 %v375, %v383
      %v415 = vadd.f32 %v376, %v383
      %v416 = vadd.f32 %v377, %v383
      %v417 = vmax.f32 %v385, 0.0
      %v418 = vmax.f32 %v386, 0.0
      %v419 = vmax.f32 %v387, 0.0
      %v420 = vmax.f32 %v388, 0.0
      %v421 = vmax.f32 %v389, 0.0
      %v422 = vmax.f32 %v390, 0.0
      %v423 = vmax.f32 %v391, 0.0
      %v424 = vmax.f32 %v392, 0.0
      %v425 = vmax.f32 %v393, 0.0
      %v426 = vmax.f32 %v394, 0.0
      %v427 = vmax.f32 %v395, 0.0
      %v428 = vmax.f32 %v396, 0.0
      %v429 = vmax.f32 %v397, 0.0
      %v430 = vmax.f32 %v398, 0.0
      %v431 = vmax.f32 %v399, 0.0
      %v432 = vmax.f32 %v400, 0.0
      %v433 = vmax.f32 %v401, 0.0
      %v434 = vmax.f32 %v402, 0.0
      %v435 = vmax.f32 %v403, 0.0
      %v436 = vmax.f32 %v404, 0.0
      %v437 = vmax.f32 %v405, 0.0
      %v438 = vmax.f32 %v406, 0.0
      %v439 = vmax.f32 %v407, 0.0
      %v440 = vmax.f32 %v408, 0.0
      %v441 = vmax.f32 %v409, 0.0
      %v442 = vmax.f32 %v410, 0.0
      %v443 = vmax.f32 %v411, 0.0
      %v444 = vmax.f32 %v412, 0.0
      %v445 = vmax.f32 %v413, 0.0
      %v446 = vmax.f32 %v414, 0.0
      %v447 = vmax.f32 %v415, 0.0
      %v448 = vmax.f32 %v416, 0.0
      %v449 = vpack.c.bf16 %v418, %v417
      %v450 = vpack.c.bf16 %v420, %v419
      %v451 = vpack.c.bf16 %v422, %v421
      %v452 = vpack.c.bf16 %v424, %v423
      %v453 = vpack.c.bf16 %v426, %v425
      %v454 = vpack.c.bf16 %v428, %v427
      %v455 = vpack.c.bf16 %v430, %v429
      %v456 = vpack.c.bf16 %v432, %v431
      %v457 = vpack.c.bf16 %v434, %v433
      %v458 = vpack.c.bf16 %v436, %v435
      %v459 = vpack.c.bf16 %v438, %v437
      %v460 = vpack.c.bf16 %v440, %v439
      %v461 = vpack.c.bf16 %v442, %v441
      %v462 = vpack.c.bf16 %v444, %v443
      %v463 = vpack.c.bf16 %v446, %v445
      %v464 = vpack.c.bf16 %v448, %v447
      %v465 = vld [vmem:[%s2] sm:$0xff]
      %v466 = vld [vmem:[%s2 + $0x8] sm:$0xff]
      %v467 = vld [vmem:[%s2 + $0x10] sm:$0xff]
      %v468 = vld [vmem:[%s2 + $0x18] sm:$0xff]
      %v469 = vld [vmem:[%s2 + $0x20] sm:$0xff]
      %v470 = vld [vmem:[%s2 + $0x28] sm:$0xff]
      %v471 = vld [vmem:[%s2 + $0x30] sm:$0xff]
      %v472 = vld [vmem:[%s2 + $0x38] sm:$0xff]
      %v473 = vld [vmem:[%s2 + $0x40] sm:$0xff]
      %v474 = vld [vmem:[%s2 + $0x48] sm:$0xff]
      %v475 = vld [vmem:[%s2 + $0x50] sm:$0xff]
      %v476 = vld [vmem:[%s2 + $0x58] sm:$0xff]
      %v477 = vld [vmem:[%s2 + $0x60] sm:$0xff]
      %v478 = vld [vmem:[%s2 + $0x68] sm:$0xff]
      %v479 = vld [vmem:[%s2 + $0x70] sm:$0xff]
      %v480 = vld [vmem:[%s2 + $0x78] sm:$0xff]
      %v481 = vld [vmem:[%s3] sm:$0x3]
      %v483 = vlaneseq
      %v484 = vshrl.u32 %v483, 7
      %v485 = vsub.s32 0, %v484
      %v486 = vrot.slane %v481, %v485
      %v487 = vlaneseq
      %v488 = vshrl.u32 %v487, 7
      %v489 = vsub.s32 1, %v488
      %v490 = vrot.slane %v481, %v489
      %v509 = vunpack.c.l.b16 %v465
      %v510 = vunpack.c.h.b16 %v465
      %v511 = vunpack.c.l.b16 %v466
      %v512 = vunpack.c.h.b16 %v466
      %v513 = vunpack.c.l.b16 %v467
      %v514 = vunpack.c.h.b16 %v467
      %v515 = vunpack.c.l.b16 %v468
      %v516 = vunpack.c.h.b16 %v468
      %v517 = vunpack.c.l.b16 %v469
      %v518 = vunpack.c.h.b16 %v469
      %v519 = vunpack.c.l.b16 %v470
      %v520 = vunpack.c.h.b16 %v470
      %v521 = vunpack.c.l.b16 %v471
      %v522 = vunpack.c.h.b16 %v471
      %v523 = vunpack.c.l.b16 %v472
      %v524 = vunpack.c.h.b16 %v472
      %v525 = vunpack.c.l.b16 %v473
      %v526 = vunpack.c.h.b16 %v473
      %v527 = vunpack.c.l.b16 %v474
      %v528 = vunpack.c.h.b16 %v474
      %v529 = vunpack.c.l.b16 %v475
      %v530 = vunpack.c.h.b16 %v475
      %v531 = vunpack.c.l.b16 %v476
      %v532 = vunpack.c.h.b16 %v476
      %v533 = vunpack.c.l.b16 %v477
      %v534 = vunpack.c.h.b16 %v477
      %v535 = vunpack.c.l.b16 %v478
      %v536 = vunpack.c.h.b16 %v478
      %v537 = vunpack.c.l.b16 %v479
      %v538 = vunpack.c.h.b16 %v479
      %v539 = vunpack.c.l.b16 %v480
      %v540 = vunpack.c.h.b16 %v480
      %v541 = vpack.c.b16 %v511, %v509
      %v542 = vpack.c.b16 %v512, %v510
      %v543 = vpack.c.b16 %v515, %v513
      %v544 = vpack.c.b16 %v516, %v514
      %v545 = vpack.c.b16 %v519, %v517
      %v546 = vpack.c.b16 %v520, %v518
      %v547 = vpack.c.b16 %v523, %v521
      %v548 = vpack.c.b16 %v524, %v522
      %v549 = vpack.c.b16 %v527, %v525
      %v550 = vpack.c.b16 %v528, %v526
      %v551 = vpack.c.b16 %v531, %v529
      %v552 = vpack.c.b16 %v532, %v530
      %v553 = vpack.c.b16 %v535, %v533
      %v554 = vpack.c.b16 %v536, %v534
      %v555 = vpack.c.b16 %v539, %v537
      %v556 = vpack.c.b16 %v540, %v538
      %573 = vmatprep.subr.bf16.mxu0 %v556
      %574 = vmatpush1.bf16.msra.mxu0 %v555
      %575 = vmatprep.subr.bf16.mxu0 %v554
      %576 = vmatpush1.bf16.msra.mxu0 %v553
      %577 = vmatprep.subr.bf16.mxu0 %v552
      %578 = vmatpush1.bf16.msra.mxu0 %v551
      %579 = vmatprep.subr.bf16.mxu0 %v550
      %580 = vmatpush1.bf16.msra.mxu0 %v549
      %581 = vmatprep.subr.bf16.mxu0 %v548
      %582 = vmatpush1.bf16.msra.mxu0 %v547
      %583 = vmatprep.subr.bf16.mxu0 %v546
      %584 = vmatpush1.bf16.msra.mxu0 %v545
      %585 = vmatprep.subr.bf16.mxu0 %v544
      %586 = vmatpush1.bf16.msra.mxu0 %v543
      %587 = vmatprep.subr.bf16.mxu0 %v542
      %588 = vmatpush1.bf16.msra.mxu0 %v541
      %589 = vmatprep.subr.bf16.mxu0 0
      %590 = vmatpush2.bf16.msra.mxu0 0
      %591 = vmatprep.subr.bf16.mxu0 0
      %592 = vmatpush2.bf16.msra.mxu0 0
      %593 = vmatprep.subr.bf16.mxu0 0
      %594 = vmatpush2.bf16.msra.mxu0 0
      %595 = vmatprep.subr.bf16.mxu0 0
      %596 = vmatpush2.bf16.msra.mxu0 0
      %597 = vmatprep.subr.bf16.mxu0 0
      %598 = vmatpush2.bf16.msra.mxu0 0
      %599 = vmatprep.subr.bf16.mxu0 0
      %600 = vmatpush2.bf16.msra.mxu0 0
      %601 = vmatprep.subr.bf16.mxu0 0
      %602 = vmatpush2.bf16.msra.mxu0 0
      %603 = vmatprep.subr.bf16.mxu0 0
      %604 = vmatpush2.bf16.msra.mxu0 0
      %605 = vmatprep.mubr.bf16.mxu0 0
      %606 = vmatmul.mubr.bf16.gmra.mxu0 %v449
      %v607 = vpop.f32.mrf.mxu0
      %v608 = vadd.f32 %v486, %v607
      %v609 = vpop.f32.mrf.mxu0
      %v610 = vadd.f32 %v490, %v609
      %v611 = vpop.f32.mrf.mxu0
      %v612 = vadd.f32 %v486, %v611
      %v613 = vpop.f32.mrf.mxu0
      %v614 = vadd.f32 %v490, %v613
      %615 = vmatprep.mubr.bf16.mxu0 0
      %616 = vmatmul.mubr.bf16.gmra.mxu0 %v450
      %v617 = vpop.f32.mrf.mxu0
      %v618 = vadd.f32 %v486, %v617
      %v619 = vpop.f32.mrf.mxu0
      %v620 = vadd.f32 %v490, %v619
      %v621 = vpop.f32.mrf.mxu0
      %v622 = vadd.f32 %v486, %v621
      %v623 = vpop.f32.mrf.mxu0
      %v624 = vadd.f32 %v490, %v623
      %625 = vmatprep.mubr.bf16.mxu0 0
      %626 = vmatmul.mubr.bf16.gmra.mxu0 %v451
      %v627 = vpop.f32.mrf.mxu0
      %v628 = vadd.f32 %v486, %v627
      %v629 = vpop.f32.mrf.mxu0
      %v630 = vadd.f32 %v490, %v629
      %v631 = vpop.f32.mrf.mxu0
      %v632 = vadd.f32 %v486, %v631
      %v633 = vpop.f32.mrf.mxu0
      %v634 = vadd.f32 %v490, %v633
      %635 = vmatprep.mubr.bf16.mxu0 0
      %636 = vmatmul.mubr.bf16.gmra.mxu0 %v452
      %v637 = vpop.f32.mrf.mxu0
      %v638 = vadd.f32 %v486, %v637
      %v639 = vpop.f32.mrf.mxu0
      %v640 = vadd.f32 %v490, %v639
      %v641 = vpop.f32.mrf.mxu0
      %v642 = vadd.f32 %v486, %v641
      %v643 = vpop.f32.mrf.mxu0
      %v644 = vadd.f32 %v490, %v643
      %645 = vmatprep.mubr.bf16.mxu0 0
      %646 = vmatmul.mubr.bf16.gmra.mxu0 %v453
      %v647 = vpop.f32.mrf.mxu0
      %v648 = vadd.f32 %v486, %v647
      %v649 = vpop.f32.mrf.mxu0
      %v650 = vadd.f32 %v490, %v649
      %v651 = vpop.f32.mrf.mxu0
      %v652 = vadd.f32 %v486, %v651
      %v653 = vpop.f32.mrf.mxu0
      %v654 = vadd.f32 %v490, %v653
      %655 = vmatprep.mubr.bf16.mxu0 0
      %656 = vmatmul.mubr.bf16.gmra.mxu0 %v454
      %v657 = vpop.f32.mrf.mxu0
      %v658 = vadd.f32 %v486, %v657
      %v659 = vpop.f32.mrf.mxu0
      %v660 = vadd.f32 %v490, %v659
      %v661 = vpop.f32.mrf.mxu0
      %v662 = vadd.f32 %v486, %v661
      %v663 = vpop.f32.mrf.mxu0
      %v664 = vadd.f32 %v490, %v663
      %665 = vmatprep.mubr.bf16.mxu0 0
      %666 = vmatmul.mubr.bf16.gmra.mxu0 %v455
      %v667 = vpop.f32.mrf.mxu0
      %v668 = vadd.f32 %v486, %v667
      %v669 = vpop.f32.mrf.mxu0
      %v670 = vadd.f32 %v490, %v669
      %v671 = vpop.f32.mrf.mxu0
      %v672 = vadd.f32 %v486, %v671
      %v673 = vpop.f32.mrf.mxu0
      %v674 = vadd.f32 %v490, %v673
      %675 = vmatprep.mubr.bf16.mxu0 0
      %676 = vmatmul.mubr.bf16.gmra.mxu0 %v456
      %v677 = vpop.f32.mrf.mxu0
      %v678 = vadd.f32 %v486, %v677
      %v679 = vpop.f32.mrf.mxu0
      %v680 = vadd.f32 %v490, %v679
      %v681 = vpop.f32.mrf.mxu0
      %v682 = vadd.f32 %v486, %v681
      %v683 = vpop.f32.mrf.mxu0
      %v684 = vadd.f32 %v490, %v683
      %685 = vmatprep.mubr.bf16.mxu0 0
      %686 = vmatmul.mubr.bf16.gmra.mxu0 %v457
      %v687 = vpop.f32.mrf.mxu0
      %v688 = vadd.f32 %v486, %v687
      %v689 = vpop.f32.mrf.mxu0
      %v690 = vadd.f32 %v490, %v689
      %v691 = vpop.f32.mrf.mxu0
      %v692 = vadd.f32 %v486, %v691
      %v693 = vpop.f32.mrf.mxu0
      %v694 = vadd.f32 %v490, %v693
      %695 = vmatprep.mubr.bf16.mxu0 0
      %696 = vmatmul.mubr.bf16.gmra.mxu0 %v458
      %v697 = vpop.f32.mrf.mxu0
      %v698 = vadd.f32 %v486, %v697
      %v699 = vpop.f32.mrf.mxu0
      %v700 = vadd.f32 %v490, %v699
      %v701 = vpop.f32.mrf.mxu0
      %v702 = vadd.f32 %v486, %v701
      %v703 = vpop.f32.mrf.mxu0
      %v704 = vadd.f32 %v490, %v703
      %705 = vmatprep.mubr.bf16.mxu0 0
      %706 = vmatmul.mubr.bf16.gmra.mxu0 %v459
      %v707 = vpop.f32.mrf.mxu0
      %v708 = vadd.f32 %v486, %v707
      %v709 = vpop.f32.mrf.mxu0
      %v710 = vadd.f32 %v490, %v709
      %v711 = vpop.f32.mrf.mxu0
      %v712 = vadd.f32 %v486, %v711
      %v713 = vpop.f32.mrf.mxu0
      %v714 = vadd.f32 %v490, %v713
      %715 = vmatprep.mubr.bf16.mxu0 0
      %716 = vmatmul.mubr.bf16.gmra.mxu0 %v460
      %v717 = vpop.f32.mrf.mxu0
      %v718 = vadd.f32 %v486, %v717
      %v719 = vpop.f32.mrf.mxu0
      %v720 = vadd.f32 %v490, %v719
      %v721 = vpop.f32.mrf.mxu0
      %v722 = vadd.f32 %v486, %v721
      %v723 = vpop.f32.mrf.mxu0
      %v724 = vadd.f32 %v490, %v723
      %725 = vmatprep.mubr.bf16.mxu0 0
      %726 = vmatmul.mubr.bf16.gmra.mxu0 %v461
      %v727 = vpop.f32.mrf.mxu0
      %v728 = vadd.f32 %v486, %v727
      %v729 = vpop.f32.mrf.mxu0
      %v730 = vadd.f32 %v490, %v729
      %v731 = vpop.f32.mrf.mxu0
      %v732 = vadd.f32 %v486, %v731
      %v733 = vpop.f32.mrf.mxu0
      %v734 = vadd.f32 %v490, %v733
      %735 = vmatprep.mubr.bf16.mxu0 0
      %736 = vmatmul.mubr.bf16.gmra.mxu0 %v462
      %v737 = vpop.f32.mrf.mxu0
      %v738 = vadd.f32 %v486, %v737
      %v739 = vpop.f32.mrf.mxu0
      %v740 = vadd.f32 %v490, %v739
      %v741 = vpop.f32.mrf.mxu0
      %v742 = vadd.f32 %v486, %v741
      %v743 = vpop.f32.mrf.mxu0
      %v744 = vadd.f32 %v490, %v743
      %745 = vmatprep.mubr.bf16.mxu0 0
      %746 = vmatmul.mubr.bf16.gmra.mxu0 %v463
      %v747 = vpop.f32.mrf.mxu0
      %v748 = vadd.f32 %v486, %v747
      %v749 = vpop.f32.mrf.mxu0
      %v750 = vadd.f32 %v490, %v749
      %v751 = vpop.f32.mrf.mxu0
      %v752 = vadd.f32 %v486, %v751
      %v753 = vpop.f32.mrf.mxu0
      %v754 = vadd.f32 %v490, %v753
      %755 = vmatprep.mubr.bf16.mxu0 0
      %756 = vmatmul.mubr.bf16.gmra.mxu0 %v464
      %v757 = vpop.f32.mrf.mxu0
      %v758 = vadd.f32 %v486, %v757
      %v759 = vpop.f32.mrf.mxu0
      %v760 = vadd.f32 %v490, %v759
      %v761 = vpop.f32.mrf.mxu0
      %v762 = vadd.f32 %v486, %v761
      %v763 = vpop.f32.mrf.mxu0
      %v764 = vadd.f32 %v490, %v763
      %765 = vdwg.mxu0
      %v766 = vmax.f32 %v608, 0.0
      %v767 = vmax.f32 %v610, 0.0
      %v768 = vmax.f32 %v612, 0.0
      %v769 = vmax.f32 %v614, 0.0
      %v770 = vmax.f32 %v618, 0.0
      %v771 = vmax.f32 %v620, 0.0
      %v772 = vmax.f32 %v622, 0.0
      %v773 = vmax.f32 %v624, 0.0
      %v774 = vmax.f32 %v628, 0.0
      %v775 = vmax.f32 %v630, 0.0
      %v776 = vmax.f32 %v632, 0.0
      %v777 = vmax.f32 %v634, 0.0
      %v778 = vmax.f32 %v638, 0.0
      %v779 = vmax.f32 %v640, 0.0
      %v780 = vmax.f32 %v642, 0.0
      %v781 = vmax.f32 %v644, 0.0
      %v782 = vmax.f32 %v648, 0.0
      %v783 = vmax.f32 %v650, 0.0
      %v784 = vmax.f32 %v652, 0.0
      %v785 = vmax.f32 %v654, 0.0
      %v786 = vmax.f32 %v658, 0.0
      %v787 = vmax.f32 %v660, 0.0
      %v788 = vmax.f32 %v662, 0.0
      %v789 = vmax.f32 %v664, 0.0
      %v790 = vmax.f32 %v668, 0.0
      %v791 = vmax.f32 %v670, 0.0
      %v792 = vmax.f32 %v672, 0.0
      %v793 = vmax.f32 %v674, 0.0
      %v794 = vmax.f32 %v678, 0.0
      %v795 = vmax.f32 %v680, 0.0
      %v796 = vmax.f32 %v682, 0.0
      %v797 = vmax.f32 %v684, 0.0
      %v798 = vmax.f32 %v688, 0.0
      %v799 = vmax.f32 %v690, 0.0
      %v800 = vmax.f32 %v692, 0.0
      %v801 = vmax.f32 %v694, 0.0
      %v802 = vmax.f32 %v698, 0.0
      %v803 = vmax.f32 %v700, 0.0
      %v804 = vmax.f32 %v702, 0.0
      %v805 = vmax.f32 %v704, 0.0
      %v806 = vmax.f32 %v708, 0.0
      %v807 = vmax.f32 %v710, 0.0
      %v808 = vmax.f32 %v712, 0.0
      %v809 = vmax.f32 %v714, 0.0
      %v810 = vmax.f32 %v718, 0.0
      %v811 = vmax.f32 %v720, 0.0
      %v812 = vmax.f32 %v722, 0.0
      %v813 = vmax.f32 %v724, 0.0
      %v814 = vmax.f32 %v728, 0.0
      %v815 = vmax.f32 %v730, 0.0
      %v816 = vmax.f32 %v732, 0.0
      %v817 = vmax.f32 %v734, 0.0
      %v818 = vmax.f32 %v738, 0.0
      %v819 = vmax.f32 %v740, 0.0
      %v820 = vmax.f32 %v742, 0.0
      %v821 = vmax.f32 %v744, 0.0
      %v822 = vmax.f32 %v748, 0.0
      %v823 = vmax.f32 %v750, 0.0
      %v824 = vmax.f32 %v752, 0.0
      %v825 = vmax.f32 %v754, 0.0
      %v826 = vmax.f32 %v758, 0.0
      %v827 = vmax.f32 %v760, 0.0
      %v828 = vmax.f32 %v762, 0.0
      %v829 = vmax.f32 %v764, 0.0
      %v830 = vpack.c.bf16 %v768, %v766
      %v831 = vpack.c.bf16 %v769, %v767
      %v832 = vpack.c.bf16 %v772, %v770
      %v833 = vpack.c.bf16 %v773, %v771
      %v834 = vpack.c.bf16 %v776, %v774
      %v835 = vpack.c.bf16 %v777, %v775
      %v836 = vpack.c.bf16 %v780, %v778
      %v837 = vpack.c.bf16 %v781, %v779
      %v838 = vpack.c.bf16 %v784, %v782
      %v839 = vpack.c.bf16 %v785, %v783
      %v840 = vpack.c.bf16 %v788, %v786
      %v841 = vpack.c.bf16 %v789, %v787
      %v842 = vpack.c.bf16 %v792, %v790
      %v843 = vpack.c.bf16 %v793, %v791
      %v844 = vpack.c.bf16 %v796, %v794
      %v845 = vpack.c.bf16 %v797, %v795
      %v846 = vpack.c.bf16 %v800, %v798
      %v847 = vpack.c.bf16 %v801, %v799
      %v848 = vpack.c.bf16 %v804, %v802
      %v849 = vpack.c.bf16 %v805, %v803
      %v850 = vpack.c.bf16 %v808, %v806
      %v851 = vpack.c.bf16 %v809, %v807
      %v852 = vpack.c.bf16 %v812, %v810
      %v853 = vpack.c.bf16 %v813, %v811
      %v854 = vpack.c.bf16 %v816, %v814
      %v855 = vpack.c.bf16 %v817, %v815
      %v856 = vpack.c.bf16 %v820, %v818
      %v857 = vpack.c.bf16 %v821, %v819
      %v858 = vpack.c.bf16 %v824, %v822
      %v859 = vpack.c.bf16 %v825, %v823
      %v860 = vpack.c.bf16 %v828, %v826
      %v861 = vpack.c.bf16 %v829, %v827
      %v862 = vld [vmem:[%s4] sm:$0xf]
      %v863 = vld [vmem:[%s4 + $0x4] sm:$0xf]
      %v864 = vld [vmem:[%s4 + $0x8] sm:$0xf]
      %v865 = vld [vmem:[%s4 + $0xc] sm:$0xf]
      %v866 = vld [vmem:[%s4 + $0x10] sm:$0xf]
      %v867 = vld [vmem:[%s4 + $0x14] sm:$0xf]
      %v868 = vld [vmem:[%s4 + $0x18] sm:$0xf]
      %v869 = vld [vmem:[%s4 + $0x1c] sm:$0xf]
      %v870 = vld [vmem:[%s4 + $0x20] sm:$0xf]
      %v871 = vld [vmem:[%s4 + $0x24] sm:$0xf]
      %v872 = vld [vmem:[%s4 + $0x28] sm:$0xf]
      %v873 = vld [vmem:[%s4 + $0x2c] sm:$0xf]
      %v874 = vld [vmem:[%s4 + $0x30] sm:$0xf]
      %v875 = vld [vmem:[%s4 + $0x34] sm:$0xf]
      %v876 = vld [vmem:[%s4 + $0x38] sm:$0xf]
      %v877 = vld [vmem:[%s4 + $0x3c] sm:$0xf]
      %v878 = vld [vmem:[%s4 + $0x40] sm:$0xf]
      %v879 = vld [vmem:[%s4 + $0x44] sm:$0xf]
      %v880 = vld [vmem:[%s4 + $0x48] sm:$0xf]
      %v881 = vld [vmem:[%s4 + $0x4c] sm:$0xf]
      %v882 = vld [vmem:[%s4 + $0x50] sm:$0xf]
      %v883 = vld [vmem:[%s4 + $0x54] sm:$0xf]
      %v884 = vld [vmem:[%s4 + $0x58] sm:$0xf]
      %v885 = vld [vmem:[%s4 + $0x5c] sm:$0xf]
      %v886 = vld [vmem:[%s4 + $0x60] sm:$0xf]
      %v887 = vld [vmem:[%s4 + $0x64] sm:$0xf]
      %v888 = vld [vmem:[%s4 + $0x68] sm:$0xf]
      %v889 = vld [vmem:[%s4 + $0x6c] sm:$0xf]
      %v890 = vld [vmem:[%s4 + $0x70] sm:$0xf]
      %v891 = vld [vmem:[%s4 + $0x74] sm:$0xf]
      %v892 = vld [vmem:[%s4 + $0x78] sm:$0xf]
      %v893 = vld [vmem:[%s4 + $0x7c] sm:$0xf]
      %v894 = vld [vmem:[%s5] sm:$0x1]
      %v896 = vlaneseq
      %v897 = vshrl.u32 %v896, 7
      %v898 = vsub.s32 0, %v897
      %v899 = vrot.slane %v894, %v898
      %v933 = vunpack.c.l.b16 %v862
      %v934 = vunpack.c.l.b16 %v863
      %v935 = vunpack.c.l.b16 %v864
      %v936 = vunpack.c.l.b16 %v865
      %v937 = vunpack.c.l.b16 %v866
      %v938 = vunpack.c.l.b16 %v867
      %v939 = vunpack.c.l.b16 %v868
      %v940 = vunpack.c.l.b16 %v869
      %v941 = vunpack.c.l.b16 %v870
      %v942 = vunpack.c.l.b16 %v871
      %v943 = vunpack.c.l.b16 %v872
      %v944 = vunpack.c.l.b16 %v873
      %v945 = vunpack.c.l.b16 %v874
      %v946 = vunpack.c.l.b16 %v875
      %v947 = vunpack.c.l.b16 %v876
      %v948 = vunpack.c.l.b16 %v877
      %v949 = vunpack.c.l.b16 %v878
      %v950 = vunpack.c.l.b16 %v879
      %v951 = vunpack.c.l.b16 %v880
      %v952 = vunpack.c.l.b16 %v881
      %v953 = vunpack.c.l.b16 %v882
      %v954 = vunpack.c.l.b16 %v883
      %v955 = vunpack.c.l.b16 %v884
      %v956 = vunpack.c.l.b16 %v885
      %v957 = vunpack.c.l.b16 %v886
      %v958 = vunpack.c.l.b16 %v887
      %v959 = vunpack.c.l.b16 %v888
      %v960 = vunpack.c.l.b16 %v889
      %v961 = vunpack.c.l.b16 %v890
      %v962 = vunpack.c.l.b16 %v891
      %v963 = vunpack.c.l.b16 %v892
      %v964 = vunpack.c.l.b16 %v893
      %v965 = vpack.c.b16 %v934, %v933
      %v966 = vpack.c.b16 %v936, %v935
      %v967 = vpack.c.b16 %v938, %v937
      %v968 = vpack.c.b16 %v940, %v939
      %v969 = vpack.c.b16 %v942, %v941
      %v970 = vpack.c.b16 %v944, %v943
      %v971 = vpack.c.b16 %v946, %v945
      %v972 = vpack.c.b16 %v948, %v947
      %v973 = vpack.c.b16 %v950, %v949
      %v974 = vpack.c.b16 %v952, %v951
      %v975 = vpack.c.b16 %v954, %v953
      %v976 = vpack.c.b16 %v956, %v955
      %v977 = vpack.c.b16 %v958, %v957
      %v978 = vpack.c.b16 %v960, %v959
      %v979 = vpack.c.b16 %v962, %v961
      %v980 = vpack.c.b16 %v964, %v963
      %997 = vmatprep.subr.bf16.mxu0 0
      %998 = vmatpush1.bf16.msra.mxu0 %v972
      %999 = vmatprep.subr.bf16.mxu0 0
      %1000 = vmatpush1.bf16.msra.mxu0 %v971
      %1001 = vmatprep.subr.bf16.mxu0 0
      %1002 = vmatpush1.bf16.msra.mxu0 %v970
      %1003 = vmatprep.subr.bf16.mxu0 0
      %1004 = vmatpush1.bf16.msra.mxu0 %v969
      %1005 = vmatprep.subr.bf16.mxu0 0
      %1006 = vmatpush1.bf16.msra.mxu0 %v968
      %1007 = vmatprep.subr.bf16.mxu0 0
      %1008 = vmatpush1.bf16.msra.mxu0 %v967
      %1009 = vmatprep.subr.bf16.mxu0 0
      %1010 = vmatpush1.bf16.msra.mxu0 %v966
      %1011 = vmatprep.subr.bf16.mxu0 0
      %1012 = vmatpush1.bf16.msra.mxu0 %v965
      %1013 = vmatprep.subr.bf16.mxu0 0
      %1014 = vmatpush2.bf16.msra.mxu0 %v980
      %1015 = vmatprep.subr.bf16.mxu0 0
      %1016 = vmatpush2.bf16.msra.mxu0 %v979
      %1017 = vmatprep.subr.bf16.mxu0 0
      %1018 = vmatpush2.bf16.msra.mxu0 %v978
      %1019 = vmatprep.subr.bf16.mxu0 0
      %1020 = vmatpush2.bf16.msra.mxu0 %v977
      %1021 = vmatprep.subr.bf16.mxu0 0
      %1022 = vmatpush2.bf16.msra.mxu0 %v976
      %1023 = vmatprep.subr.bf16.mxu0 0
      %1024 = vmatpush2.bf16.msra.mxu0 %v975
      %1025 = vmatprep.subr.bf16.mxu0 0
      %1026 = vmatpush2.bf16.msra.mxu0 %v974
      %1027 = vmatprep.subr.bf16.mxu0 0
      %1028 = vmatpush2.bf16.msra.mxu0 %v973
      %1029 = vmatprep.mubr.bf16.mxu0 %v831
      %1030 = vmatmul.mubr.bf16.gmra.mxu0 %v830
      %v1031 = vpop.f32.mrf.mxu0
      %v1032 = vadd.f32 %v899, %v1031
      %v1033 = vpop.f32.mrf.mxu0
      %v1034 = vpop.f32.mrf.mxu0
      %v1035 = vadd.f32 %v899, %v1034
      %v1036 = vpop.f32.mrf.mxu0
      %1037 = vmatprep.mubr.bf16.mxu0 %v833
      %1038 = vmatmul.mubr.bf16.gmra.mxu0 %v832
      %v1039 = vpop.f32.mrf.mxu0
      %v1040 = vadd.f32 %v899, %v1039
      %v1041 = vpop.f32.mrf.mxu0
      %v1042 = vpop.f32.mrf.mxu0
      %v1043 = vadd.f32 %v899, %v1042
      %v1044 = vpop.f32.mrf.mxu0
      %1045 = vmatprep.mubr.bf16.mxu0 %v835
      %1046 = vmatmul.mubr.bf16.gmra.mxu0 %v834
      %v1047 = vpop.f32.mrf.mxu0
      %v1048 = vadd.f32 %v899, %v1047
      %v1049 = vpop.f32.mrf.mxu0
      %v1050 = vpop.f32.mrf.mxu0
      %v1051 = vadd.f32 %v899, %v1050
      %v1052 = vpop.f32.mrf.mxu0
      %1053 = vmatprep.mubr.bf16.mxu0 %v837
      %1054 = vmatmul.mubr.bf16.gmra.mxu0 %v836
      %v1055 = vpop.f32.mrf.mxu0
      %v1056 = vadd.f32 %v899, %v1055
      %v1057 = vpop.f32.mrf.mxu0
      %v1058 = vpop.f32.mrf.mxu0
      %v1059 = vadd.f32 %v899, %v1058
      %v1060 = vpop.f32.mrf.mxu0
      %1061 = vmatprep.mubr.bf16.mxu0 %v839
      %1062 = vmatmul.mubr.bf16.gmra.mxu0 %v838
      %v1063 = vpop.f32.mrf.mxu0
      %v1064 = vadd.f32 %v899, %v1063
      %v1065 = vpop.f32.mrf.mxu0
      %v1066 = vpop.f32.mrf.mxu0
      %v1067 = vadd.f32 %v899, %v1066
      %v1068 = vpop.f32.mrf.mxu0
      %1069 = vmatprep.mubr.bf16.mxu0 %v841
      %1070 = vmatmul.mubr.bf16.gmra.mxu0 %v840
      %v1071 = vpop.f32.mrf.mxu0
      %v1072 = vadd.f32 %v899, %v1071
      %v1073 = vpop.f32.mrf.mxu0
      %v1074 = vpop.f32.mrf.mxu0
      %v1075 = vadd.f32 %v899, %v1074
      %v1076 = vpop.f32.mrf.mxu0
      %1077 = vmatprep.mubr.bf16.mxu0 %v843
      %1078 = vmatmul.mubr.bf16.gmra.mxu0 %v842
      %v1079 = vpop.f32.mrf.mxu0
      %v1080 = vadd.f32 %v899, %v1079
      %v1081 = vpop.f32.mrf.mxu0
      %v1082 = vpop.f32.mrf.mxu0
      %v1083 = vadd.f32 %v899, %v1082
      %v1084 = vpop.f32.mrf.mxu0
      %1085 = vmatprep.mubr.bf16.mxu0 %v845
      %1086 = vmatmul.mubr.bf16.gmra.mxu0 %v844
      %v1087 = vpop.f32.mrf.mxu0
      %v1088 = vadd.f32 %v899, %v1087
      %v1089 = vpop.f32.mrf.mxu0
      %v1090 = vpop.f32.mrf.mxu0
      %v1091 = vadd.f32 %v899, %v1090
      %v1092 = vpop.f32.mrf.mxu0
      %1093 = vmatprep.mubr.bf16.mxu0 %v847
      %1094 = vmatmul.mubr.bf16.gmra.mxu0 %v846
      %v1095 = vpop.f32.mrf.mxu0
      %v1096 = vadd.f32 %v899, %v1095
      %v1097 = vpop.f32.mrf.mxu0
      %v1098 = vpop.f32.mrf.mxu0
      %v1099 = vadd.f32 %v899, %v1098
      %v1100 = vpop.f32.mrf.mxu0
      %1101 = vmatprep.mubr.bf16.mxu0 %v849
      %1102 = vmatmul.mubr.bf16.gmra.mxu0 %v848
      %v1103 = vpop.f32.mrf.mxu0
      %v1104 = vadd.f32 %v899, %v1103
      %v1105 = vpop.f32.mrf.mxu0
      %v1106 = vpop.f32.mrf.mxu0
      %v1107 = vadd.f32 %v899, %v1106
      %v1108 = vpop.f32.mrf.mxu0
      %1109 = vmatprep.mubr.bf16.mxu0 %v851
      %1110 = vmatmul.mubr.bf16.gmra.mxu0 %v850
      %v1111 = vpop.f32.mrf.mxu0
      %v1112 = vadd.f32 %v899, %v1111
      %v1113 = vpop.f32.mrf.mxu0
      %v1114 = vpop.f32.mrf.mxu0
      %v1115 = vadd.f32 %v899, %v1114
      %v1116 = vpop.f32.mrf.mxu0
      %1117 = vmatprep.mubr.bf16.mxu0 %v853
      %1118 = vmatmul.mubr.bf16.gmra.mxu0 %v852
      %v1119 = vpop.f32.mrf.mxu0
      %v1120 = vadd.f32 %v899, %v1119
      %v1121 = vpop.f32.mrf.mxu0
      %v1122 = vpop.f32.mrf.mxu0
      %v1123 = vadd.f32 %v899, %v1122
      %v1124 = vpop.f32.mrf.mxu0
      %1125 = vmatprep.mubr.bf16.mxu0 %v855
      %1126 = vmatmul.mubr.bf16.gmra.mxu0 %v854
      %v1127 = vpop.f32.mrf.mxu0
      %v1128 = vadd.f32 %v899, %v1127
      %v1129 = vpop.f32.mrf.mxu0
      %v1130 = vpop.f32.mrf.mxu0
      %v1131 = vadd.f32 %v899, %v1130
      %v1132 = vpop.f32.mrf.mxu0
      %1133 = vmatprep.mubr.bf16.mxu0 %v857
      %1134 = vmatmul.mubr.bf16.gmra.mxu0 %v856
      %v1135 = vpop.f32.mrf.mxu0
      %v1136 = vadd.f32 %v899, %v1135
      %v1137 = vpop.f32.mrf.mxu0
      %v1138 = vpop.f32.mrf.mxu0
      %v1139 = vadd.f32 %v899, %v1138
      %v1140 = vpop.f32.mrf.mxu0
      %1141 = vmatprep.mubr.bf16.mxu0 %v859
      %1142 = vmatmul.mubr.bf16.gmra.mxu0 %v858
      %v1143 = vpop.f32.mrf.mxu0
      %v1144 = vadd.f32 %v899, %v1143
      %v1145 = vpop.f32.mrf.mxu0
      %v1146 = vpop.f32.mrf.mxu0
      %v1147 = vadd.f32 %v899, %v1146
      %v1148 = vpop.f32.mrf.mxu0
      %1149 = vmatprep.mubr.bf16.mxu0 %v861
      %1150 = vmatmul.mubr.bf16.gmra.mxu0 %v860
      %v1151 = vpop.f32.mrf.mxu0
      %v1152 = vadd.f32 %v899, %v1151
      %v1153 = vpop.f32.mrf.mxu0
      %v1154 = vpop.f32.mrf.mxu0
      %v1155 = vadd.f32 %v899, %v1154
      %v1156 = vpop.f32.mrf.mxu0
      %1157 = vdwg.mxu0
      %v1158 = vmax.f32 %v1032, 0.0
      %v1159 = vmax.f32 %v1035, 0.0
      %v1160 = vmax.f32 %v1040, 0.0
      %v1161 = vmax.f32 %v1043, 0.0
      %v1162 = vmax.f32 %v1048, 0.0
      %v1163 = vmax.f32 %v1051, 0.0
      %v1164 = vmax.f32 %v1056, 0.0
      %v1165 = vmax.f32 %v1059, 0.0
      %v1166 = vmax.f32 %v1064, 0.0
      %v1167 = vmax.f32 %v1067, 0.0
      %v1168 = vmax.f32 %v1072, 0.0
      %v1169 = vmax.f32 %v1075, 0.0
      %v1170 = vmax.f32 %v1080, 0.0
      %v1171 = vmax.f32 %v1083, 0.0
      %v1172 = vmax.f32 %v1088, 0.0
      %v1173 = vmax.f32 %v1091, 0.0
      %v1174 = vmax.f32 %v1096, 0.0
      %v1175 = vmax.f32 %v1099, 0.0
      %v1176 = vmax.f32 %v1104, 0.0
      %v1177 = vmax.f32 %v1107, 0.0
      %v1178 = vmax.f32 %v1112, 0.0
      %v1179 = vmax.f32 %v1115, 0.0
      %v1180 = vmax.f32 %v1120, 0.0
      %v1181 = vmax.f32 %v1123, 0.0
      %v1182 = vmax.f32 %v1128, 0.0
      %v1183 = vmax.f32 %v1131, 0.0
      %v1184 = vmax.f32 %v1136, 0.0
      %v1185 = vmax.f32 %v1139, 0.0
      %v1186 = vmax.f32 %v1144, 0.0
      %v1187 = vmax.f32 %v1147, 0.0
      %v1188 = vmax.f32 %v1152, 0.0
      %v1189 = vmax.f32 %v1155, 0.0
      %v1190 = vpack.c.bf16 %v1159, %v1158
      %v1191 = vpack.c.bf16 %v1161, %v1160
      %v1192 = vpack.c.bf16 %v1163, %v1162
      %v1193 = vpack.c.bf16 %v1165, %v1164
      %v1194 = vpack.c.bf16 %v1167, %v1166
      %v1195 = vpack.c.bf16 %v1169, %v1168
      %v1196 = vpack.c.bf16 %v1171, %v1170
      %v1197 = vpack.c.bf16 %v1173, %v1172
      %v1198 = vpack.c.bf16 %v1175, %v1174
      %v1199 = vpack.c.bf16 %v1177, %v1176
      %v1200 = vpack.c.bf16 %v1179, %v1178
      %v1201 = vpack.c.bf16 %v1181, %v1180
      %v1202 = vpack.c.bf16 %v1183, %v1182
      %v1203 = vpack.c.bf16 %v1185, %v1184
      %v1204 = vpack.c.bf16 %v1187, %v1186
      %v1205 = vpack.c.bf16 %v1189, %v1188
      %v1206 = vld [vmem:[%s6] sm:$0xf]
      %v1207 = vld [vmem:[%s6 + $0x4] sm:$0xf]
      %v1208 = vld [vmem:[%s6 + $0x8] sm:$0xf]
      %v1209 = vld [vmem:[%s6 + $0xc] sm:$0xf]
      %v1210 = vld [vmem:[%s6 + $0x10] sm:$0xf]
      %v1211 = vld [vmem:[%s6 + $0x14] sm:$0xf]
      %v1212 = vld [vmem:[%s6 + $0x18] sm:$0xf]
      %v1213 = vld [vmem:[%s6 + $0x1c] sm:$0xf]
      %v1214 = vld [vmem:[%s6 + $0x20] sm:$0xf]
      %v1215 = vld [vmem:[%s6 + $0x24] sm:$0xf]
      %v1216 = vld [vmem:[%s6 + $0x28] sm:$0xf]
      %v1217 = vld [vmem:[%s6 + $0x2c] sm:$0xf]
      %v1218 = vld [vmem:[%s6 + $0x30] sm:$0xf]
      %v1219 = vld [vmem:[%s6 + $0x34] sm:$0xf]
      %v1220 = vld [vmem:[%s6 + $0x38] sm:$0xf]
      %v1221 = vld [vmem:[%s6 + $0x3c] sm:$0xf]
      %v1222 = vld [vmem:[%s7] sm:$0x1]
      %v1224 = vlaneseq
      %v1225 = vshrl.u32 %v1224, 7
      %v1226 = vsub.s32 0, %v1225
      %v1227 = vrot.slane %v1222, %v1226
      %v1245 = vunpack.c.l.b16 %v1206
      %v1246 = vunpack.c.l.b16 %v1207
      %v1247 = vunpack.c.l.b16 %v1208
      %v1248 = vunpack.c.l.b16 %v1209
      %v1249 = vunpack.c.l.b16 %v1210
      %v1250 = vunpack.c.l.b16 %v1211
      %v1251 = vunpack.c.l.b16 %v1212
      %v1252 = vunpack.c.l.b16 %v1213
      %v1253 = vunpack.c.l.b16 %v1214
      %v1254 = vunpack.c.l.b16 %v1215
      %v1255 = vunpack.c.l.b16 %v1216
      %v1256 = vunpack.c.l.b16 %v1217
      %v1257 = vunpack.c.l.b16 %v1218
      %v1258 = vunpack.c.l.b16 %v1219
      %v1259 = vunpack.c.l.b16 %v1220
      %v1260 = vunpack.c.l.b16 %v1221
      %v1261 = vpack.c.b16 %v1246, %v1245
      %v1262 = vpack.c.b16 %v1248, %v1247
      %v1263 = vpack.c.b16 %v1250, %v1249
      %v1264 = vpack.c.b16 %v1252, %v1251
      %v1265 = vpack.c.b16 %v1254, %v1253
      %v1266 = vpack.c.b16 %v1256, %v1255
      %v1267 = vpack.c.b16 %v1258, %v1257
      %v1268 = vpack.c.b16 %v1260, %v1259
      %1277 = vmatprep.subr.bf16.mxu0 0
      %1278 = vmatpush1.bf16.msra.mxu0 %v1268
      %1279 = vmatprep.subr.bf16.mxu0 0
      %1280 = vmatpush1.bf16.msra.mxu0 %v1267
      %1281 = vmatprep.subr.bf16.mxu0 0
      %1282 = vmatpush1.bf16.msra.mxu0 %v1266
      %1283 = vmatprep.subr.bf16.mxu0 0
      %1284 = vmatpush1.bf16.msra.mxu0 %v1265
      %1285 = vmatprep.subr.bf16.mxu0 0
      %1286 = vmatpush1.bf16.msra.mxu0 %v1264
      %1287 = vmatprep.subr.bf16.mxu0 0
      %1288 = vmatpush1.bf16.msra.mxu0 %v1263
      %1289 = vmatprep.subr.bf16.mxu0 0
      %1290 = vmatpush1.bf16.msra.mxu0 %v1262
      %1291 = vmatprep.subr.bf16.mxu0 0
      %1292 = vmatpush1.bf16.msra.mxu0 %v1261
      %1293 = vmatprep.subr.bf16.mxu0 0
      %1294 = vmatpush2.bf16.msra.mxu0 0
      %1295 = vmatprep.subr.bf16.mxu0 0
      %1296 = vmatpush2.bf16.msra.mxu0 0
      %1297 = vmatprep.subr.bf16.mxu0 0
      %1298 = vmatpush2.bf16.msra.mxu0 0
      %1299 = vmatprep.subr.bf16.mxu0 0
      %1300 = vmatpush2.bf16.msra.mxu0 0
      %1301 = vmatprep.subr.bf16.mxu0 0
      %1302 = vmatpush2.bf16.msra.mxu0 0
      %1303 = vmatprep.subr.bf16.mxu0 0
      %1304 = vmatpush2.bf16.msra.mxu0 0
      %1305 = vmatprep.subr.bf16.mxu0 0
      %1306 = vmatpush2.bf16.msra.mxu0 0
      %1307 = vmatprep.subr.bf16.mxu0 0
      %1308 = vmatpush2.bf16.msra.mxu0 0
      %1309 = vmatprep.mubr.bf16.mxu0 0
      %1310 = vmatmul.mubr.bf16.gmra.mxu0 %v1190
      %v1311 = vpop.f32.mrf.mxu0
      %v1312 = vadd.f32 %v1227, %v1311
      %v1313 = vpop.f32.mrf.mxu0
      %v1314 = vpop.f32.mrf.mxu0
      %v1315 = vadd.f32 %v1227, %v1314
      %v1316 = vpop.f32.mrf.mxu0
      %1317 = vmatprep.mubr.bf16.mxu0 0
      %1318 = vmatmul.mubr.bf16.gmra.mxu0 %v1191
      %v1319 = vpop.f32.mrf.mxu0
      %v1320 = vadd.f32 %v1227, %v1319
      %v1321 = vpop.f32.mrf.mxu0
      %v1322 = vpop.f32.mrf.mxu0
      %v1323 = vadd.f32 %v1227, %v1322
      %v1324 = vpop.f32.mrf.mxu0
      %1325 = vmatprep.mubr.bf16.mxu0 0
      %1326 = vmatmul.mubr.bf16.gmra.mxu0 %v1192
      %v1327 = vpop.f32.mrf.mxu0
      %v1328 = vadd.f32 %v1227, %v1327
      %v1329 = vpop.f32.mrf.mxu0
      %v1330 = vpop.f32.mrf.mxu0
      %v1331 = vadd.f32 %v1227, %v1330
      %v1332 = vpop.f32.mrf.mxu0
      %1333 = vmatprep.mubr.bf16.mxu0 0
      %1334 = vmatmul.mubr.bf16.gmra.mxu0 %v1193
      %v1335 = vpop.f32.mrf.mxu0
      %v1336 = vadd.f32 %v1227, %v1335
      %v1337 = vpop.f32.mrf.mxu0
      %v1338 = vpop.f32.mrf.mxu0
      %v1339 = vadd.f32 %v1227, %v1338
      %v1340 = vpop.f32.mrf.mxu0
      %1341 = vmatprep.mubr.bf16.mxu0 0
      %1342 = vmatmul.mubr.bf16.gmra.mxu0 %v1194
      %v1343 = vpop.f32.mrf.mxu0
      %v1344 = vadd.f32 %v1227, %v1343
      %v1345 = vpop.f32.mrf.mxu0
      %v1346 = vpop.f32.mrf.mxu0
      %v1347 = vadd.f32 %v1227, %v1346
      %v1348 = vpop.f32.mrf.mxu0
      %1349 = vmatprep.mubr.bf16.mxu0 0
      %1350 = vmatmul.mubr.bf16.gmra.mxu0 %v1195
      %v1351 = vpop.f32.mrf.mxu0
      %v1352 = vadd.f32 %v1227, %v1351
      %v1353 = vpop.f32.mrf.mxu0
      %v1354 = vpop.f32.mrf.mxu0
      %v1355 = vadd.f32 %v1227, %v1354
      %v1356 = vpop.f32.mrf.mxu0
      %1357 = vmatprep.mubr.bf16.mxu0 0
      %1358 = vmatmul.mubr.bf16.gmra.mxu0 %v1196
      %v1359 = vpop.f32.mrf.mxu0
      %v1360 = vadd.f32 %v1227, %v1359
      %v1361 = vpop.f32.mrf.mxu0
      %v1362 = vpop.f32.mrf.mxu0
      %v1363 = vadd.f32 %v1227, %v1362
      %v1364 = vpop.f32.mrf.mxu0
      %1365 = vmatprep.mubr.bf16.mxu0 0
      %1366 = vmatmul.mubr.bf16.gmra.mxu0 %v1197
      %v1367 = vpop.f32.mrf.mxu0
      %v1368 = vadd.f32 %v1227, %v1367
      %v1369 = vpop.f32.mrf.mxu0
      %v1370 = vpop.f32.mrf.mxu0
      %v1371 = vadd.f32 %v1227, %v1370
      %v1372 = vpop.f32.mrf.mxu0
      %1373 = vmatprep.mubr.bf16.mxu0 0
      %1374 = vmatmul.mubr.bf16.gmra.mxu0 %v1198
      %v1375 = vpop.f32.mrf.mxu0
      %v1376 = vadd.f32 %v1227, %v1375
      %v1377 = vpop.f32.mrf.mxu0
      %v1378 = vpop.f32.mrf.mxu0
      %v1379 = vadd.f32 %v1227, %v1378
      %v1380 = vpop.f32.mrf.mxu0
      %1381 = vmatprep.mubr.bf16.mxu0 0
      %1382 = vmatmul.mubr.bf16.gmra.mxu0 %v1199
      %v1383 = vpop.f32.mrf.mxu0
      %v1384 = vadd.f32 %v1227, %v1383
      %v1385 = vpop.f32.mrf.mxu0
      %v1386 = vpop.f32.mrf.mxu0
      %v1387 = vadd.f32 %v1227, %v1386
      %v1388 = vpop.f32.mrf.mxu0
      %1389 = vmatprep.mubr.bf16.mxu0 0
      %1390 = vmatmul.mubr.bf16.gmra.mxu0 %v1200
      %v1391 = vpop.f32.mrf.mxu0
      %v1392 = vadd.f32 %v1227, %v1391
      %v1393 = vpop.f32.mrf.mxu0
      %v1394 = vpop.f32.mrf.mxu0
      %v1395 = vadd.f32 %v1227, %v1394
      %v1396 = vpop.f32.mrf.mxu0
      %1397 = vmatprep.mubr.bf16.mxu0 0
      %1398 = vmatmul.mubr.bf16.gmra.mxu0 %v1201
      %v1399 = vpop.f32.mrf.mxu0
      %v1400 = vadd.f32 %v1227, %v1399
      %v1401 = vpop.f32.mrf.mxu0
      %v1402 = vpop.f32.mrf.mxu0
      %v1403 = vadd.f32 %v1227, %v1402
      %v1404 = vpop.f32.mrf.mxu0
      %1405 = vmatprep.mubr.bf16.mxu0 0
      %1406 = vmatmul.mubr.bf16.gmra.mxu0 %v1202
      %v1407 = vpop.f32.mrf.mxu0
      %v1408 = vadd.f32 %v1227, %v1407
      %v1409 = vpop.f32.mrf.mxu0
      %v1410 = vpop.f32.mrf.mxu0
      %v1411 = vadd.f32 %v1227, %v1410
      %v1412 = vpop.f32.mrf.mxu0
      %1413 = vmatprep.mubr.bf16.mxu0 0
      %1414 = vmatmul.mubr.bf16.gmra.mxu0 %v1203
      %v1415 = vpop.f32.mrf.mxu0
      %v1416 = vadd.f32 %v1227, %v1415
      %v1417 = vpop.f32.mrf.mxu0
      %v1418 = vpop.f32.mrf.mxu0
      %v1419 = vadd.f32 %v1227, %v1418
      %v1420 = vpop.f32.mrf.mxu0
      %1421 = vmatprep.mubr.bf16.mxu0 0
      %1422 = vmatmul.mubr.bf16.gmra.mxu0 %v1204
      %v1423 = vpop.f32.mrf.mxu0
      %v1424 = vadd.f32 %v1227, %v1423
      %v1425 = vpop.f32.mrf.mxu0
      %v1426 = vpop.f32.mrf.mxu0
      %v1427 = vadd.f32 %v1227, %v1426
      %v1428 = vpop.f32.mrf.mxu0
      %1429 = vmatprep.mubr.bf16.mxu0 0
      %1430 = vmatmul.mubr.bf16.gmra.mxu0 %v1205
      %v1431 = vpop.f32.mrf.mxu0
      %v1432 = vadd.f32 %v1227, %v1431
      %v1433 = vpop.f32.mrf.mxu0
      %v1434 = vpop.f32.mrf.mxu0
      %v1435 = vadd.f32 %v1227, %v1434
      %v1436 = vpop.f32.mrf.mxu0
      %1437 = vdwg.mxu0
      %v1438 = vxor.u32 %v1312, 2147483648
      %v1439 = vxor.u32 %v1315, 2147483648
      %v1440 = vxor.u32 %v1320, 2147483648
      %v1441 = vxor.u32 %v1323, 2147483648
      %v1442 = vxor.u32 %v1328, 2147483648
      %v1443 = vxor.u32 %v1331, 2147483648
      %v1444 = vxor.u32 %v1336, 2147483648
      %v1445 = vxor.u32 %v1339, 2147483648
      %v1446 = vxor.u32 %v1344, 2147483648
      %v1447 = vxor.u32 %v1347, 2147483648
      %v1448 = vxor.u32 %v1352, 2147483648
      %v1449 = vxor.u32 %v1355, 2147483648
      %v1450 = vxor.u32 %v1360, 2147483648
      %v1451 = vxor.u32 %v1363, 2147483648
      %v1452 = vxor.u32 %v1368, 2147483648
      %v1453 = vxor.u32 %v1371, 2147483648
      %v1454 = vxor.u32 %v1376, 2147483648
      %v1455 = vxor.u32 %v1379, 2147483648
      %v1456 = vxor.u32 %v1384, 2147483648
      %v1457 = vxor.u32 %v1387, 2147483648
      %v1458 = vxor.u32 %v1392, 2147483648
      %v1459 = vxor.u32 %v1395, 2147483648
      %v1460 = vxor.u32 %v1400, 2147483648
      %v1461 = vxor.u32 %v1403, 2147483648
      %v1462 = vxor.u32 %v1408, 2147483648
      %v1463 = vxor.u32 %v1411, 2147483648
      %v1464 = vxor.u32 %v1416, 2147483648
      %v1465 = vxor.u32 %v1419, 2147483648
      %v1466 = vxor.u32 %v1424, 2147483648
      %v1467 = vxor.u32 %v1427, 2147483648
      %v1468 = vxor.u32 %v1432, 2147483648
      %v1469 = vxor.u32 %v1435, 2147483648
      %v1470 = vmul.f32 %v1438, 1.442695
      %v1471 = vpow.pop %v1470
      %v1472 = vmul.f32 %v1439, 1.442695
      %v1473 = vpow.pop %v1472
      %v1474 = vmul.f32 %v1440, 1.442695
      %v1475 = vpow.pop %v1474
      %v1476 = vmul.f32 %v1441, 1.442695
      %v1477 = vpow.pop %v1476
      %v1478 = vmul.f32 %v1442, 1.442695
      %v1479 = vpow.pop %v1478
      %v1480 = vmul.f32 %v1443, 1.442695
      %v1481 = vpow.pop %v1480
      %v1482 = vmul.f32 %v1444, 1.442695
      %v1483 = vpow.pop %v1482
      %v1484 = vmul.f32 %v1445, 1.442695
      %v1485 = vpow.pop %v1484
      %v1486 = vmul.f32 %v1446, 1.442695
      %v1487 = vpow.pop %v1486
      %v1488 = vmul.f32 %v1447, 1.442695
      %v1489 = vpow.pop %v1488
      %v1490 = vmul.f32 %v1448, 1.442695
      %v1491 = vpow.pop %v1490
      %v1492 = vmul.f32 %v1449, 1.442695
      %v1493 = vpow.pop %v1492
      %v1494 = vmul.f32 %v1450, 1.442695
      %v1495 = vpow.pop %v1494
      %v1496 = vmul.f32 %v1451, 1.442695
      %v1497 = vpow.pop %v1496
      %v1498 = vmul.f32 %v1452, 1.442695
      %v1499 = vpow.pop %v1498
      %v1500 = vmul.f32 %v1453, 1.442695
      %v1501 = vpow.pop %v1500
      %v1502 = vmul.f32 %v1454, 1.442695
      %v1503 = vpow.pop %v1502
      %v1504 = vmul.f32 %v1455, 1.442695
      %v1505 = vpow.pop %v1504
      %v1506 = vmul.f32 %v1456, 1.442695
      %v1507 = vpow.pop %v1506
      %v1508 = vmul.f32 %v1457, 1.442695
      %v1509 = vpow.pop %v1508
      %v1510 = vmul.f32 %v1458, 1.442695
      %v1511 = vpow.pop %v1510
      %v1512 = vmul.f32 %v1459, 1.442695
      %v1513 = vpow.pop %v1512
      %v1514 = vmul.f32 %v1460, 1.442695
      %v1515 = vpow.pop %v1514
      %v1516 = vmul.f32 %v1461, 1.442695
      %v1517 = vpow.pop %v1516
      %v1518 = vmul.f32 %v1462, 1.442695
      %v1519 = vpow.pop %v1518
      %v1520 = vmul.f32 %v1463, 1.442695
      %v1521 = vpow.pop %v1520
      %v1522 = vmul.f32 %v1464, 1.442695
      %v1523 = vpow.pop %v1522
      %v1524 = vmul.f32 %v1465, 1.442695
      %v1525 = vpow.pop %v1524
      %v1526 = vmul.f32 %v1466, 1.442695
      %v1527 = vpow.pop %v1526
      %v1528 = vmul.f32 %v1467, 1.442695
      %v1529 = vpow.pop %v1528
      %v1530 = vmul.f32 %v1468, 1.442695
      %v1531 = vpow.pop %v1530
      %v1532 = vmul.f32 %v1469, 1.442695
      %v1533 = vpow.pop %v1532
      %v1534 = vadd.f32 %v1471, 1.0
      %v1535 = vadd.f32 %v1473, 1.0
      %v1536 = vadd.f32 %v1475, 1.0
      %v1537 = vadd.f32 %v1477, 1.0
      %v1538 = vadd.f32 %v1479, 1.0
      %v1539 = vadd.f32 %v1481, 1.0
      %v1540 = vadd.f32 %v1483, 1.0
      %v1541 = vadd.f32 %v1485, 1.0
      %v1542 = vadd.f32 %v1487, 1.0
      %v1543 = vadd.f32 %v1489, 1.0
      %v1544 = vadd.f32 %v1491, 1.0
      %v1545 = vadd.f32 %v1493, 1.0
      %v1546 = vadd.f32 %v1495, 1.0
      %v1547 = vadd.f32 %v1497, 1.0
      %v1548 = vadd.f32 %v1499, 1.0
      %v1549 = vadd.f32 %v1501, 1.0
      %v1550 = vadd.f32 %v1503, 1.0
      %v1551 = vadd.f32 %v1505, 1.0
      %v1552 = vadd.f32 %v1507, 1.0
      %v1553 = vadd.f32 %v1509, 1.0
      %v1554 = vadd.f32 %v1511, 1.0
      %v1555 = vadd.f32 %v1513, 1.0
      %v1556 = vadd.f32 %v1515, 1.0
      %v1557 = vadd.f32 %v1517, 1.0
      %v1558 = vadd.f32 %v1519, 1.0
      %v1559 = vadd.f32 %v1521, 1.0
      %v1560 = vadd.f32 %v1523, 1.0
      %v1561 = vadd.f32 %v1525, 1.0
      %v1562 = vadd.f32 %v1527, 1.0
      %v1563 = vadd.f32 %v1529, 1.0
      %v1564 = vadd.f32 %v1531, 1.0
      %v1565 = vadd.f32 %v1533, 1.0
      %v1566 = vrcp.pop %v1534
      %v1567 = vmul.f32 1.0, %v1566
      %v1568 = vrcp.pop %v1535
      %v1569 = vmul.f32 1.0, %v1568
      %v1570 = vrcp.pop %v1536
      %v1571 = vmul.f32 1.0, %v1570
      %v1572 = vrcp.pop %v1537
      %v1573 = vmul.f32 1.0, %v1572
      %v1574 = vrcp.pop %v1538
      %v1575 = vmul.f32 1.0, %v1574
      %v1576 = vrcp.pop %v1539
      %v1577 = vmul.f32 1.0, %v1576
      %v1578 = vrcp.pop %v1540
      %v1579 = vmul.f32 1.0, %v1578
      %v1580 = vrcp.pop %v1541
      %v1581 = vmul.f32 1.0, %v1580
      %v1582 = vrcp.pop %v1542
      %v1583 = vmul.f32 1.0, %v1582
      %v1584 = vrcp.pop %v1543
      %v1585 = vmul.f32 1.0, %v1584
      %v1586 = vrcp.pop %v1544
      %v1587 = vmul.f32 1.0, %v1586
      %v1588 = vrcp.pop %v1545
      %v1589 = vmul.f32 1.0, %v1588
      %v1590 = vrcp.pop %v1546
      %v1591 = vmul.f32 1.0, %v1590
      %v1592 = vrcp.pop %v1547
      %v1593 = vmul.f32 1.0, %v1592
      %v1594 = vrcp.pop %v1548
      %v1595 = vmul.f32 1.0, %v1594
      %v1596 = vrcp.pop %v1549
      %v1597 = vmul.f32 1.0, %v1596
      %v1598 = vrcp.pop %v1550
      %v1599 = vmul.f32 1.0, %v1598
      %v1600 = vrcp.pop %v1551
      %v1601 = vmul.f32 1.0, %v1600
      %v1602 = vrcp.pop %v1552
      %v1603 = vmul.f32 1.0, %v1602
      %v1604 = vrcp.pop %v1553
      %v1605 = vmul.f32 1.0, %v1604
      %v1606 = vrcp.pop %v1554
      %v1607 = vmul.f32 1.0, %v1606
      %v1608 = vrcp.pop %v1555
      %v1609 = vmul.f32 1.0, %v1608
      %v1610 = vrcp.pop %v1556
      %v1611 = vmul.f32 1.0, %v1610
      %v1612 = vrcp.pop %v1557
      %v1613 = vmul.f32 1.0, %v1612
      %v1614 = vrcp.pop %v1558
      %v1615 = vmul.f32 1.0, %v1614
      %v1616 = vrcp.pop %v1559
      %v1617 = vmul.f32 1.0, %v1616
      %v1618 = vrcp.pop %v1560
      %v1619 = vmul.f32 1.0, %v1618
      %v1620 = vrcp.pop %v1561
      %v1621 = vmul.f32 1.0, %v1620
      %v1622 = vrcp.pop %v1562
      %v1623 = vmul.f32 1.0, %v1622
      %v1624 = vrcp.pop %v1563
      %v1625 = vmul.f32 1.0, %v1624
      %v1626 = vrcp.pop %v1564
      %v1627 = vmul.f32 1.0, %v1626
      %v1628 = vrcp.pop %v1565
      %v1629 = vmul.f32 1.0, %v1628
      %1630 = vst [vmem:[%s343] sm:$0xff] %v1567
      %1631 = vst [vmem:[%s343 + $0x8] sm:$0xff] %v1569
      %1632 = vst [vmem:[%s343 + $0x10] sm:$0xff] %v1571
      %1633 = vst [vmem:[%s343 + $0x18] sm:$0xff] %v1573
      %1634 = vst [vmem:[%s343 + $0x20] sm:$0xff] %v1575
      %1635 = vst [vmem:[%s343 + $0x28] sm:$0xff] %v1577
      %1636 = vst [vmem:[%s343 + $0x30] sm:$0xff] %v1579
      %1637 = vst [vmem:[%s343 + $0x38] sm:$0xff] %v1581
      %1638 = vst [vmem:[%s343 + $0x40] sm:$0xff] %v1583
      %1639 = vst [vmem:[%s343 + $0x48] sm:$0xff] %v1585
      %1640 = vst [vmem:[%s343 + $0x50] sm:$0xff] %v1587
      %1641 = vst [vmem:[%s343 + $0x58] sm:$0xff] %v1589
      %1642 = vst [vmem:[%s343 + $0x60] sm:$0xff] %v1591
      %1643 = vst [vmem:[%s343 + $0x68] sm:$0xff] %v1593
      %1644 = vst [vmem:[%s343 + $0x70] sm:$0xff] %v1595
      %1645 = vst [vmem:[%s343 + $0x78] sm:$0xff] %v1597
      %1646 = vst [vmem:[%s343 + $0x80] sm:$0xff] %v1599
      %1647 = vst [vmem:[%s343 + $0x88] sm:$0xff] %v1601
      %1648 = vst [vmem:[%s343 + $0x90] sm:$0xff] %v1603
      %1649 = vst [vmem:[%s343 + $0x98] sm:$0xff] %v1605
      %1650 = vst [vmem:[%s343 + $0xa0] sm:$0xff] %v1607
      %1651 = vst [vmem:[%s343 + $0xa8] sm:$0xff] %v1609
      %1652 = vst [vmem:[%s343 + $0xb0] sm:$0xff] %v1611
      %1653 = vst [vmem:[%s343 + $0xb8] sm:$0xff] %v1613
      %1654 = vst [vmem:[%s343 + $0xc0] sm:$0xff] %v1615
      %1655 = vst [vmem:[%s343 + $0xc8] sm:$0xff] %v1617
      %1656 = vst [vmem:[%s343 + $0xd0] sm:$0xff] %v1619
      %1657 = vst [vmem:[%s343 + $0xd8] sm:$0xff] %v1621
      %1658 = vst [vmem:[%s343 + $0xe0] sm:$0xff] %v1623
      %1659 = vst [vmem:[%s343 + $0xe8] sm:$0xff] %v1625
      %1660 = vst [vmem:[%s343 + $0xf0] sm:$0xff] %v1627
      %1661 = vst [vmem:[%s343 + $0xf8] sm:$0xff] %v1629
      %s1662 = smul.u32 32, %s24
      %p1663 = scmp.lt.s32.totalorder %s23, 1
      %s1664 = scalar_select %p1663, %s23, 1
      %p1665 = scmp.lt.s32.totalorder %s1662, 127
      %s1666 = scalar_select %p1665, %s1662, 127
      %s1667 = smul.addr %s1664, 128
      %s1668 = sadd.s32 %s1666, %s1667
      %s1669 = smul.addr %s1668, 8
      %s1670 = scalar_lea.vmem %s8, %s1669
      // Predicated region
      $region53: #{vae_forward.11} parent=51 // pred_check
        %p1671 = pneg %p229
      $region54: #{vae_forward.11} parent=51 // pred_check_branch
        %1673 = sbr.rel (%p1671) target = $region56
      $region55: #{vae_forward.11} parent=51 // pred_region
        %s1674 = smul.u32 32, %s24
      $region56: #{vae_forward.11} parent=51 // pred_fallthru
        _
    $region52: #{vae_forward.11} parent=5 // pred_fallthru
      _
    %p1675 = scmp.le.s32.totalorder 2, %s14
    // Predicated region
    $region57: #{vae_forward.11} parent=5 // pred_check
      %p1676 = pneg %p1675
    $region58: #{vae_forward.11} parent=5 // pred_check_branch
      %1678 = sbr.rel (%p1676) target = $region60
    $region59: #{vae_forward.11} parent=5 // pred_region
      %s1679 = ssub.s32 %s14, 2
      // Predicated region
      $region61: #{vae_forward.11} parent=59 // pred_check
        %p1680 = pneg %p235
      $region62: #{vae_forward.11} parent=59 // pred_check_branch
        %1682 = sbr.rel (%p1680) target = $region64
      $region63: #{vae_forward.11} parent=59 // pred_region
        %s1683 = smul.u32 32, %s26
        %p1684 = scmp.lt.s32.totalorder %s25, 1
        %s1685 = scalar_select %p1684, %s25, 1
        %p1686 = scmp.lt.s32.totalorder %s1683, 127
        %s1687 = scalar_select %p1686, %s1683, 127
        %s1688 = smul.addr %s1685, 128
        %s1689 = sadd.s32 %s1687, %s1688
        %s1690 = smul.addr %s1689, 8
        %s1691 = scalar_lea.vmem %s8, %s1690
      $region64: #{vae_forward.11} parent=59 // pred_fallthru
        _
    $region60: #{vae_forward.11} parent=5 // pred_fallthru
      _
  $region6: #{vae_forward.11} parent=0 // loop_footer
    %s18 = sadd.s32 1, %s14
  $region7: #{vae_forward.11} parent=0 // loop_footer_branch
    %13 = sbr.rel target = $region3
  $region8: #{vae_forward.11} parent=0 // loop_exit
    _

</llo_original>
